<compile_context>
chip_gen: v5e
topology: v5e:2x2
jax: 0.10.0
libtpu: 0.0.40
codegen_flags: <defaults>
</compile_context>

<pallas_src>
import functools
import math

import numpy as np
import jax
import jax.numpy as jnp
from jax.experimental import pallas as pl
from jax.experimental.pallas import tpu as pltpu

# ----------------------------- model config (small, synthetic) ---------------
B = 2              # batch
L = 128            # sequence length
IN_CH = 1          # in_channels
RES_CH = 64        # res_channels
SKIP_CH = 64       # skip_channels
OUT_CH = 1         # out_channels
NUM_LAYERS = 4     # num_res_layers
DILATION_CYCLE = 2
EMB_IN = 32        # diffusion_step_embed_dim_in
EMB_MID = 64       # diffusion_step_embed_dim_mid
EMB_OUT = 64       # diffusion_step_embed_dim_out
COND_CH = 32       # conditioner_channels (unconditional=False)

_SQRT_HALF = np.float32(math.sqrt(0.5))


# ------------------------------ fused Pallas kernel ---------------------------
def _diffwave_kernel(num_layers, dilation_cycle, seq_len, nb, C, Cs,
                     # inputs
                     x_in_ref, cond_ref, e_ref,
                     w_init_ref, b_init_ref,
                     w_conv_ref, b_conv_ref, w_cond_ref,
                     w_out_ref, b_out_ref,
                     w_f1_ref, b_f1_ref, w_zero_ref, b_zero_ref,
                     # outputs
                     y_ref, xs_ref):
    rows = nb * seq_len
    CS = C + Cs
    dot = functools.partial(jnp.dot, preferred_element_type=jnp.float32)

    lane = jax.lax.broadcasted_iota(jnp.int32, (1, CS), 1)
    res_scale = jnp.where(lane < C, _SQRT_HALF, np.float32(1.0))

    # ---- fused init_conv (1x1 conv + ReLU).  Weights are zero-padded on the
    #      skip lanes so the merged state xs = [x | skip] starts as
    #      [relu(init_conv(x)) | 0] in one 128-lane value. ---------------------
    xi = x_in_ref[...]                                    # (rows, in_ch)
    if xi.shape[-1] == 1:                                 # K=1 -> VPU broadcast
        xs = xi * w_init_ref[...] + b_init_ref[...]
    else:
        xs = dot(xi, w_init_ref[...]) + b_init_ref[...]
    xs = jnp.maximum(xs, 0.0)                             # (rows, CS)

    # Position within each sequence segment: masks the dilated-conv taps at the
    # sequence edges AND at folded-batch segment boundaries (rows % seq_len==0).
    if (seq_len & (seq_len - 1)) == 0:
        row = jax.lax.broadcasted_iota(jnp.int32, (rows, 1), 0)
        pos = jnp.bitwise_and(row, seq_len - 1)
    else:
        pos = jax.lax.broadcasted_iota(
            jnp.int32, (nb, seq_len, 1), 1).reshape(rows, 1)

    cond = cond_ref[...]                                  # (rows, Cc)
    e_all = e_ref[...]                                    # (nb, NL, CS)

    # ---- statically unrolled residual layers (weights stay VMEM-resident) ----
    for n in range(num_layers):
        d = 2 ** (n % dilation_cycle)                     # static dilation

        e_n = e_all[:, n]                                 # (nb, CS), skip lanes 0
        if nb == 1:
            h = xs + e_n
        else:
            h = (xs.reshape(nb, seq_len, CS)
                 + e_n[:, None, :]).reshape(rows, CS)

        # dilated-conv taps via pltpu.roll (XLU) + boundary mask.
        left = jnp.where(pos >= d, pltpu.roll(h, shift=d, axis=0), 0.0)
        right = jnp.where(pos < seq_len - d,
                          pltpu.roll(h, shift=rows - d, axis=0), 0.0)

        # dilated_conv (k=3) + local_conditioner (k=1): [filter|gate] merged so
        # N = 2C = 128 lanes; conv K zero-padded to CS so no slice of h/xs is
        # needed; conditioner bias pre-folded into b_conv.
        acc = (b_conv_ref[n]
               + dot(left, w_conv_ref[n, 0])
               + dot(h, w_conv_ref[n, 1])
               + dot(right, w_conv_ref[n, 2])
               + dot(cond, w_cond_ref[n]))                # (rows, 2C)

        # gate/filter extraction without a lane-64 slice: roll gate onto the
        # filter lanes; w_out's K is zero on the garbage half.
        out = jnp.tanh(acc) * jax.nn.sigmoid(pltpu.roll(acc, shift=C, axis=1))

        # res_conv | skip_conv merged -> one (2C, C+Cs) = (128,128) matmul; the
        # residual / skip-accumulate update is a single scaled 128-lane add.
        rs = dot(out, w_out_ref[n]) + b_out_ref[n]        # (rows, CS)
        xs = (xs + rs) * res_scale

    # ---- finalize: scale skip half, single 128-lane state store, fused
    #      final_conv (1x1 conv + ReLU + ZeroConv1d, out_channels == 1). -------
    out_scale = jnp.where(lane < C, np.float32(1.0),
                          np.float32(math.sqrt(1.0 / num_layers)))
    xs = xs * out_scale
    xs_ref[...] = xs
    hf = jnp.maximum(dot(xs, w_f1_ref[...]) + b_f1_ref[...], 0.0)  # K padded
    y_ref[...] = (jnp.sum(hf * w_zero_ref[...], axis=-1, keepdims=True)
                  + b_zero_ref[...])


# ---------------------------------- wrapper -----------------------------------
def diffwave_forward(kp, x_ncl, diffusion_steps, cond_ncl, m_blocks=1):
    """x_ncl: (B, in_ch, L); diffusion_steps: (B, 1); cond_ncl: (B, Ccond, >=L).

    m_blocks: batch blocks on the single grid axis.  One block (whole batch
    folded into matmul M, single grid step) is fastest at this size on
    v5e/v6e/v7x; pass m_blocks=B to shard across v7x's two TensorCores once
    B*L is large enough to amortize the extra grid step.
    """
    assert OUT_CH == 1
    Bn, Cin, Ln = x_ncl.shape
    C, Cs = RES_CH, SKIP_CH
    CS = C + Cs
    Cc = kp["w_cond"].shape[1]
    num_layers = kp["w_conv"].shape[0]
    assert 2 ** (DILATION_CYCLE - 1) < Ln      # roll-based taps require d < L

    if m_blocks not in (1, Bn) or Bn % m_blocks != 0:
        m_blocks = 1
    nb = Bn // m_blocks                        # batch elements per grid block
    R = nb * Ln                                # matmul M per grid step

    # channels-last, flattened to (B*L, .) so the batch folds into matmul M.
    x_flat = jnp.transpose(x_ncl, (0, 2, 1)).reshape(Bn * Ln, Cin).astype(jnp.float32)
    cond = jnp.transpose(cond_ncl, (0, 2, 1))[:, :Ln, :]      # torch: [:, :, :L]
    cond_flat = cond.reshape(Bn * Ln, Cc).astype(jnp.float32)

    # Diffusion-step embedding MLP + per-layer Linear hoisted out of the kernel
    # (depends only on t; a few KB).  Skip lanes zero-padded so it adds
    # directly onto the merged xs = [x | skip] state.
    hp = jax.lax.Precision.HIGHEST
    t = diffusion_steps.astype(jnp.float32).reshape(Bn, 1)
    arg = t * kp["freq"]
    e = (jnp.dot(jnp.sin(arg), kp["w1_sin"], precision=hp)
         + jnp.dot(jnp.cos(arg), kp["w1_cos"], precision=hp) + kp["b1"])
    e = e * jax.nn.sigmoid(e)
    e = jnp.dot(e, kp["w2"], precision=hp) + kp["b2"]
    e = e * jax.nn.sigmoid(e)                                  # (B, EMB_OUT)
    e_layers = (jnp.einsum("be,nec->bnc", e, kp["w_emb"], precision=hp)
                + jnp.transpose(kp["b_emb"], (1, 0, 2)))       # (B, NL, C)
    e_layers = jnp.pad(e_layers, ((0, 0), (0, 0), (0, Cs)))    # (B, NL, CS)

    const = lambda shape: pl.BlockSpec(shape, lambda mb: (0,) * len(shape))
    per_block = lambda shape: pl.BlockSpec(
        shape, lambda mb: (mb,) + (0,) * (len(shape) - 1))

    kern = functools.partial(_diffwave_kernel, num_layers, DILATION_CYCLE,
                             Ln, nb, C, Cs)

    y_flat, xs_flat = pl.pallas_call(
        kern,
        grid=(m_blocks,),
        in_specs=[
            per_block((R, Cin)),                            # x (flattened NLC)
            per_block((R, Cc)),                             # conditioner input
            per_block((nb, num_layers, CS)),                # per-layer embedding
            const((Cin, CS)), const((1, CS)),               # init_conv (padded)
            const((num_layers, 3, CS, 2 * C)),              # dilated conv (K padded)
            const((num_layers, 1, 2 * C)),
            const((num_layers, Cc, 2 * C)),                 # conditioner
            const((num_layers, 2 * C, CS)),                 # res|skip (K padded)
            const((num_layers, 1, CS)),
            const((CS, Cs)), const((1, Cs)),                # final_conv (K padded)
            const((1, Cs)), const((1, 1)),                  # zero conv
        ],
        out_specs=(per_block((R, OUT_CH)), per_block((R, CS))),
        out_shape=(jax.ShapeDtypeStruct((Bn * Ln, OUT_CH), jnp.float32),
                   jax.ShapeDtypeStruct((Bn * Ln, CS), jnp.float32)),
        compiler_params=pltpu.CompilerParams(
            dimension_semantics=("parallel",)),
    )(x_flat, cond_flat, e_layers,
      kp["w_init"], kp["b_init"],
      kp["w_conv"], kp["b_conv"], kp["w_cond"],
      kp["w_out"], kp["b_out"],
      kp["w_f1"], kp["b_f1"], kp["w_zero"], kp["b_zero"])

    y = jnp.transpose(y_flat.reshape(Bn, Ln, OUT_CH), (0, 2, 1))   # back to NCL
    x_out = xs_flat[:, :C].reshape(Bn, Ln, C)
    skip = xs_flat[:, C:].reshape(Bn, Ln, Cs)
    return y, x_out, skip


# ----------------------------- parameter setup --------------------------------
def init_params(key):
    keys = iter(jax.random.split(key, 256))

    def nrm(shape, scale=0.1):
        return scale * jax.random.normal(next(keys), shape, jnp.float32)

    params = {"init": {"w": nrm((IN_CH, RES_CH)), "b": nrm((1, RES_CH), 0.01)}}

    half = EMB_IN // 2
    params["freq"] = jnp.exp(
        -jnp.arange(half, dtype=jnp.float32) * (math.log(10000.0) / (half - 1)))[None, :]
    params["embed"] = {
        "w1_sin": nrm((half, EMB_MID)), "w1_cos": nrm((half, EMB_MID)),
        "b1": nrm((1, EMB_MID), 0.01),
        "w2": nrm((EMB_MID, EMB_OUT)), "b2": nrm((1, EMB_OUT), 0.01)}

    layers = []
    for _ in range(NUM_LAYERS):
        layers.append({
            "w_emb": nrm((EMB_OUT, RES_CH)), "b_emb": nrm((1, RES_CH), 0.01),
            "w_conv_f": nrm((3, RES_CH, RES_CH)), "w_conv_g": nrm((3, RES_CH, RES_CH)),
            "b_conv_f": nrm((1, RES_CH), 0.01), "b_conv_g": nrm((1, RES_CH), 0.01),
            "w_cond_f": nrm((COND_CH, RES_CH)), "w_cond_g": nrm((COND_CH, RES_CH)),
            "b_cond_f": nrm((1, RES_CH), 0.01), "b_cond_g": nrm((1, RES_CH), 0.01),
            "w_res": nrm((RES_CH, RES_CH)), "b_res": nrm((1, RES_CH), 0.01),
            "w_skip": nrm((RES_CH, SKIP_CH)), "b_skip": nrm((1, SKIP_CH), 0.01),
        })
    params["layers"] = layers

    params["final"] = {
        "w1": nrm((SKIP_CH, SKIP_CH)), "b1": nrm((1, SKIP_CH), 0.01),
        # ZeroConv1d: zero-initialized weights/bias (out_channels == 1)
        "w_zero": jnp.zeros((1, SKIP_CH), jnp.float32),
        "b_zero": jnp.zeros((1, 1), jnp.float32)}
    return params


def prepare_kernel_params(params):
    """Stack per-layer weights, merge them into lane-dense (128-lane) matrices,
    fold the conditioner bias into the conv bias, and zero-pad every K
    dimension that multiplies the merged xs = [x | skip] (or rolled gate|filter)
    so the kernel never slices a 128-lane value at lane 64.  Done once."""
    C, Cs = RES_CH, SKIP_CH
    layers = params["layers"]
    st = lambda k: jnp.stack([lp[k] for lp in layers], axis=0)

    # merged [filter | gate] -> (NL, 3, C, 2C); K padded to C+Cs (skip lanes 0).
    w_conv = jnp.concatenate([st("w_conv_f"), st("w_conv_g")], axis=-1)
    w_conv = jnp.pad(w_conv, ((0, 0), (0, 0), (0, Cs), (0, 0)))
    b_conv = jnp.concatenate([st("b_conv_f") + st("b_cond_f"),
                              st("b_conv_g") + st("b_cond_g")], axis=-1)
    w_cond = jnp.concatenate([st("w_cond_f"), st("w_cond_g")], axis=-1)
    # merged [res | skip] -> (NL, C, C+Cs); K padded to 2C (the rolled-gate
    # garbage half of `out` must hit zero weights).
    w_out = jnp.concatenate([st("w_res"), st("w_skip")], axis=-1)
    w_out = jnp.pad(w_out, ((0, 0), (0, C), (0, 0)))
    b_out = jnp.concatenate([st("b_res"), st("b_skip")], axis=-1)

    return {
        # embedding MLP params (consumed in the wrapper, not the kernel)
        "freq": params["freq"],
        "w1_sin": params["embed"]["w1_sin"], "w1_cos": params["embed"]["w1_cos"],
        "b1": params["embed"]["b1"],
        "w2": params["embed"]["w2"], "b2": params["embed"]["b2"],
        "w_emb": st("w_emb"), "b_emb": st("b_emb"),
        # init conv padded to [x | skip] lanes (skip lanes zero)
        "w_init": jnp.pad(params["init"]["w"], ((0, 0), (0, Cs))),
        "b_init": jnp.pad(params["init"]["b"], ((0, 0), (0, Cs))),
        "w_conv": w_conv, "b_conv": b_conv, "w_cond": w_cond,
        "w_out": w_out, "b_out": b_out,
        # final 1x1 conv: K padded so it reads the skip half of xs directly
        "w_f1": jnp.pad(params["final"]["w1"], ((C, 0), (0, 0))),
        "b_f1": params["final"]["b1"],
        "w_zero": params["final"]["w_zero"], "b_zero": params["final"]["b_zero"],
    }


# --------------------------- pure-JAX reference --------------------------------
def reference_forward(params, x_ncl, t, cond_ncl):
    hp = jax.lax.Precision.HIGHEST
    mm = lambda a, b: jnp.dot(a, b, precision=hp)

    x = jnp.transpose(x_ncl, (0, 2, 1)).astype(jnp.float32)
    cond = jnp.transpose(cond_ncl, (0, 2, 1)).astype(jnp.float32)
    Ln = x.shape[1]
    cond = cond[:, :Ln, :]

    p = params["init"]
    x = jnp.maximum(mm(x, p["w"]) + p["b"], 0.0)

    arg = t.astype(jnp.float32) * params["freq"]
    pe = params["embed"]
    e = mm(jnp.sin(arg), pe["w1_sin"]) + mm(jnp.cos(arg), pe["w1_cos"]) + pe["b1"]
    e = e * jax.nn.sigmoid(e)
    e = mm(e, pe["w2"]) + pe["b2"]
    e = e * jax.nn.sigmoid(e)

    skip = jnp.zeros((x.shape[0], Ln, SKIP_CH), jnp.float32)
    for n, lp in enumerate(params["layers"]):
        d = 2 ** (n % DILATION_CYCLE)
        eb = mm(e, lp["w_emb"]) + lp["b_emb"]          # (B, C)
        h = x + eb[:, None, :]
        hpad = jnp.pad(h, ((0, 0), (d, d), (0, 0)))
        filt = lp["b_conv_f"][None, :, :]
        gate = lp["b_conv_g"][None, :, :]
        for k in range(3):
            tap = hpad[:, k * d:k * d + Ln, :]
            filt = filt + mm(tap, lp["w_conv_f"][k])
            gate = gate + mm(tap, lp["w_conv_g"][k])
        filt = filt + mm(cond, lp["w_cond_f"]) + lp["b_cond_f"]
        gate = gate + mm(cond, lp["w_cond_g"]) + lp["b_cond_g"]
        out = jax.nn.sigmoid(gate) * jnp.tanh(filt)
        res = mm(out, lp["w_res"]) + lp["b_res"]
        x = (x + res) * math.sqrt(0.5)
        skip = skip + mm(out, lp["w_skip"]) + lp["b_skip"]

    skip = skip * math.sqrt(1.0 / NUM_LAYERS)
    pf = params["final"]
    h = jnp.maximum(mm(skip, pf["w1"]) + pf["b1"], 0.0)
    y = jnp.sum(h * pf["w_zero"], axis=-1, keepdims=True) + pf["b_zero"]
    return jnp.transpose(y, (0, 2, 1)), x, skip


# ---------------------------------- main ---------------------------------------
if __name__ == "__main__":
    key = jax.random.PRNGKey(0)
    k_param, kx, kt, kc = jax.random.split(key, 4)
    params = init_params(k_param)
    kparams = prepare_kernel_params(params)

    x_ncl = jax.random.normal(kx, (B, IN_CH, L), jnp.float32)
    diffusion_steps = jax.random.randint(kt, (B, 1), 0, 200).astype(jnp.float32)
    cond_ncl = jax.random.normal(kc, (B, COND_CH, L), jnp.float32)

    fwd = jax.jit(diffwave_forward, static_argnames=("m_blocks",))
    y, x_last, skip_sum = fwd(kparams, x_ncl, diffusion_steps, cond_ncl)
    jax.block_until_ready((y, x_last, skip_sum))

    y_ref, x_ref_out, skip_ref_out = reference_forward(
        params, x_ncl, diffusion_steps, cond_ncl)

    ok = (y.shape == (B, OUT_CH, L)
          and np.allclose(np.asarray(y), np.asarray(y_ref), atol=5e-2, rtol=5e-2)
          and np.allclose(np.asarray(x_last), np.asarray(x_ref_out), atol=5e-2, rtol=5e-2)
          and np.allclose(np.asarray(skip_sum), np.asarray(skip_ref_out), atol=5e-2, rtol=5e-2)
          and bool(np.all(np.isfinite(np.asarray(y))))
          and bool(np.all(np.isfinite(np.asarray(x_last)))))
    if ok:
        print("KERNEL_OK")
    else:
        print("MISMATCH",
              float(np.max(np.abs(np.asarray(x_last) - np.asarray(x_ref_out)))),
              float(np.max(np.abs(np.asarray(skip_sum) - np.asarray(skip_ref_out)))))
</pallas_src>

<mosaic_0001>
module attributes {stable_mosaic.version = 11 : i64} {
  func.func @_diffwave_kernel(%arg0: i32, %arg1: memref<256x1xf32, #tpu.memory_space<vmem>>, %arg2: memref<256x32xf32, #tpu.memory_space<vmem>>, %arg3: memref<2x4x128xf32, #tpu.memory_space<vmem>>, %arg4: memref<1x128xf32, #tpu.memory_space<vmem>>, %arg5: memref<1x128xf32, #tpu.memory_space<vmem>>, %arg6: memref<4x3x128x128xf32, #tpu.memory_space<vmem>>, %arg7: memref<4x1x128xf32, #tpu.memory_space<vmem>>, %arg8: memref<4x32x128xf32, #tpu.memory_space<vmem>>, %arg9: memref<4x128x128xf32, #tpu.memory_space<vmem>>, %arg10: memref<4x1x128xf32, #tpu.memory_space<vmem>>, %arg11: memref<128x64xf32, #tpu.memory_space<vmem>>, %arg12: memref<1x64xf32, #tpu.memory_space<vmem>>, %arg13: memref<1x64xf32, #tpu.memory_space<vmem>>, %arg14: memref<1x1xf32, #tpu.memory_space<vmem>>, %arg15: memref<256x1xf32, #tpu.memory_space<vmem>>, %arg16: memref<256x128xf32, #tpu.memory_space<vmem>>) attributes {dimension_semantics = [#tpu.dimension_semantics<parallel>], iteration_bounds = array<i64: 1>, scalar_prefetch = 0 : i64, scratch_operands = 0 : i64, tpu.core_type = #tpu.core_type<tc>, window_params = [{transform_indices = @transform_0, window_bounds = array<i64: 256, 1>}, {transform_indices = @transform_1, window_bounds = array<i64: 256, 32>}, {transform_indices = @transform_2, window_bounds = array<i64: 2, 4, 128>}, {pipeline_mode = #tpu.pipeline_mode<synchronous>, transform_indices = @transform_3, window_bounds = array<i64: 1, 128>}, {pipeline_mode = #tpu.pipeline_mode<synchronous>, transform_indices = @transform_4, window_bounds = array<i64: 1, 128>}, {pipeline_mode = #tpu.pipeline_mode<synchronous>, transform_indices = @transform_5, window_bounds = array<i64: 4, 3, 128, 128>}, {pipeline_mode = #tpu.pipeline_mode<synchronous>, transform_indices = @transform_6, window_bounds = array<i64: 4, 1, 128>}, {pipeline_mode = #tpu.pipeline_mode<synchronous>, transform_indices = @transform_7, window_bounds = array<i64: 4, 32, 128>}, {pipeline_mode = #tpu.pipeline_mode<synchronous>, transform_indices = @transform_8, window_bounds = array<i64: 4, 128, 128>}, {pipeline_mode = #tpu.pipeline_mode<synchronous>, transform_indices = @transform_9, window_bounds = array<i64: 4, 1, 128>}, {pipeline_mode = #tpu.pipeline_mode<synchronous>, transform_indices = @transform_10, window_bounds = array<i64: 128, 64>}, {pipeline_mode = #tpu.pipeline_mode<synchronous>, transform_indices = @transform_11, window_bounds = array<i64: 1, 64>}, {pipeline_mode = #tpu.pipeline_mode<synchronous>, transform_indices = @transform_12, window_bounds = array<i64: 1, 64>}, {pipeline_mode = #tpu.pipeline_mode<synchronous>, transform_indices = @transform_13, window_bounds = array<i64: 1, 1>}, {transform_indices = @transform_14, window_bounds = array<i64: 256, 1>}, {transform_indices = @transform_15, window_bounds = array<i64: 256, 128>}]} {
    %0 = tpu.iota {dimensions = array<i32: 1>} : vector<1x128xi32>
    %c64_i32 = arith.constant 64 : i32
    %1 = vector.broadcast %c64_i32 : i32 to vector<1x128xi32>
    %2 = arith.cmpi slt, %0, %1 : vector<1x128xi32>
    %cst = arith.constant 0.707106769 : f32
    %cst_0 = arith.constant 1.000000e+00 : f32
    %3 = vector.broadcast %cst : f32 to vector<1x128xf32>
    %4 = vector.broadcast %cst_0 : f32 to vector<1x128xf32>
    %5 = arith.select %2, %3, %4 : vector<1x128xi1>, vector<1x128xf32>
    %c0 = arith.constant 0 : index
    %c0_1 = arith.constant 0 : index
    %6 = vector.load %arg1[%c0, %c0_1] : memref<256x1xf32, #tpu.memory_space<vmem>>, vector<256x1xf32>
    %c0_2 = arith.constant 0 : index
    %c0_3 = arith.constant 0 : index
    %7 = vector.load %arg4[%c0_2, %c0_3] : memref<1x128xf32, #tpu.memory_space<vmem>>, vector<1x128xf32>
    %8 = vector.broadcast %6 : vector<256x1xf32> to vector<256x128xf32>
    %9 = vector.broadcast %7 : vector<1x128xf32> to vector<256x128xf32>
    %10 = arith.mulf %8, %9 : vector<256x128xf32>
    %c0_4 = arith.constant 0 : index
    %c0_5 = arith.constant 0 : index
    %11 = vector.load %arg5[%c0_4, %c0_5] : memref<1x128xf32, #tpu.memory_space<vmem>>, vector<1x128xf32>
    %12 = vector.broadcast %11 : vector<1x128xf32> to vector<256x128xf32>
    %13 = arith.addf %10, %12 : vector<256x128xf32>
    %cst_6 = arith.constant 0.000000e+00 : f32
    %14 = vector.broadcast %cst_6 : f32 to vector<256x128xf32>
    %15 = arith.maximumf %13, %14 : vector<256x128xf32>
    %16 = tpu.iota {dimensions = array<i32: 0>} : vector<256x1xi32>
    %c127_i32 = arith.constant 127 : i32
    %17 = vector.broadcast %c127_i32 : i32 to vector<256x1xi32>
    %18 = arith.andi %16, %17 : vector<256x1xi32>
    %c0_7 = arith.constant 0 : index
    %c0_8 = arith.constant 0 : index
    %19 = vector.load %arg2[%c0_7, %c0_8] : memref<256x32xf32, #tpu.memory_space<vmem>>, vector<256x32xf32>
    %c0_9 = arith.constant 0 : index
    %c0_10 = arith.constant 0 : index
    %c0_11 = arith.constant 0 : index
    %20 = vector.load %arg3[%c0_9, %c0_10, %c0_11] : memref<2x4x128xf32, #tpu.memory_space<vmem>>, vector<2x4x128xf32>
    %21 = vector.extract_strided_slice %20 {offsets = [0, 0, 0], sizes = [2, 1, 128], strides = [1, 1, 1]} : vector<2x4x128xf32> to vector<2x1x128xf32>
    %22 = vector.shape_cast %21 : vector<2x1x128xf32> to vector<2x128xf32>
    %23 = vector.shape_cast %15 : vector<256x128xf32> to vector<2x128x128xf32>
    %24 = vector.shape_cast %22 : vector<2x128xf32> to vector<2x1x128xf32>
    %25 = vector.broadcast %24 : vector<2x1x128xf32> to vector<2x128x128xf32>
    %26 = arith.addf %23, %25 : vector<2x128x128xf32>
    %27 = vector.shape_cast %26 : vector<2x128x128xf32> to vector<256x128xf32>
    %c1_i32 = arith.constant 1 : i32
    %28 = vector.broadcast %c1_i32 : i32 to vector<256x1xi32>
    %29 = arith.cmpi sge, %18, %28 : vector<256x1xi32>
    %c1_i32_12 = arith.constant 1 : i32
    %30 = tpu.dynamic_rotate %27 by %c1_i32_12 dim 0 : vector<256x128xf32>, i32 -> vector<256x128xf32>
    %cst_13 = arith.constant 0.000000e+00 : f32
    %31 = vector.shape_cast %29 : vector<256x1xi1> to vector<256x1xi1>
    %32 = vector.broadcast %31 : vector<256x1xi1> to vector<256x128xi1>
    %33 = vector.broadcast %cst_13 : f32 to vector<256x128xf32>
    %34 = arith.select %32, %30, %33 : vector<256x128xi1>, vector<256x128xf32>
    %c127_i32_14 = arith.constant 127 : i32
    %35 = vector.broadcast %c127_i32_14 : i32 to vector<256x1xi32>
    %36 = arith.cmpi slt, %18, %35 : vector<256x1xi32>
    %c255_i32 = arith.constant 255 : i32
    %37 = tpu.dynamic_rotate %27 by %c255_i32 dim 0 : vector<256x128xf32>, i32 -> vector<256x128xf32>
    %cst_15 = arith.constant 0.000000e+00 : f32
    %38 = vector.shape_cast %36 : vector<256x1xi1> to vector<256x1xi1>
    %39 = vector.broadcast %38 : vector<256x1xi1> to vector<256x128xi1>
    %40 = vector.broadcast %cst_15 : f32 to vector<256x128xf32>
    %41 = arith.select %39, %37, %40 : vector<256x128xi1>, vector<256x128xf32>
    %c0_16 = arith.constant 0 : index
    %c0_17 = arith.constant 0 : index
    %c0_18 = arith.constant 0 : index
    %42 = vector.load %arg7[%c0_16, %c0_17, %c0_18] : memref<4x1x128xf32, #tpu.memory_space<vmem>>, vector<1x1x128xf32>
    %43 = vector.shape_cast %42 : vector<1x1x128xf32> to vector<1x128xf32>
    %c0_19 = arith.constant 0 : index
    %c0_20 = arith.constant 0 : index
    %c0_21 = arith.constant 0 : index
    %c0_22 = arith.constant 0 : index
    %44 = vector.load %arg6[%c0_19, %c0_20, %c0_21, %c0_22] : memref<4x3x128x128xf32, #tpu.memory_space<vmem>>, vector<1x1x128x128xf32>
    %45 = vector.shape_cast %44 : vector<1x1x128x128xf32> to vector<128x128xf32>
    %cst_23 = arith.constant dense<0.000000e+00> : vector<256x128xf32>
    %46 = tpu.matmul %34, %45, %cst_23 {dimension_numbers = #tpu.dot_dimension_numbers<[1], [0], [0], [1], [0, 0, 1, 1], [], []>} : vector<256x128xf32>, vector<128x128xf32>, vector<256x128xf32> -> vector<256x128xf32>
    %47 = vector.broadcast %43 : vector<1x128xf32> to vector<256x128xf32>
    %48 = arith.addf %47, %46 : vector<256x128xf32>
    %c0_24 = arith.constant 0 : index
    %c1 = arith.constant 1 : index
    %c0_25 = arith.constant 0 : index
    %c0_26 = arith.constant 0 : index
    %49 = vector.load %arg6[%c0_24, %c1, %c0_25, %c0_26] : memref<4x3x128x128xf32, #tpu.memory_space<vmem>>, vector<1x1x128x128xf32>
    %50 = vector.shape_cast %49 : vector<1x1x128x128xf32> to vector<128x128xf32>
    %cst_27 = arith.constant dense<0.000000e+00> : vector<256x128xf32>
    %51 = tpu.matmul %27, %50, %cst_27 {dimension_numbers = #tpu.dot_dimension_numbers<[1], [0], [0], [1], [0, 0, 1, 1], [], []>} : vector<256x128xf32>, vector<128x128xf32>, vector<256x128xf32> -> vector<256x128xf32>
    %52 = arith.addf %48, %51 : vector<256x128xf32>
    %c0_28 = arith.constant 0 : index
    %c2 = arith.constant 2 : index
    %c0_29 = arith.constant 0 : index
    %c0_30 = arith.constant 0 : index
    %53 = vector.load %arg6[%c0_28, %c2, %c0_29, %c0_30] : memref<4x3x128x128xf32, #tpu.memory_space<vmem>>, vector<1x1x128x128xf32>
    %54 = vector.shape_cast %53 : vector<1x1x128x128xf32> to vector<128x128xf32>
    %cst_31 = arith.constant dense<0.000000e+00> : vector<256x128xf32>
    %55 = tpu.matmul %41, %54, %cst_31 {dimension_numbers = #tpu.dot_dimension_numbers<[1], [0], [0], [1], [0, 0, 1, 1], [], []>} : vector<256x128xf32>, vector<128x128xf32>, vector<256x128xf32> -> vector<256x128xf32>
    %56 = arith.addf %52, %55 : vector<256x128xf32>
    %c0_32 = arith.constant 0 : index
    %c0_33 = arith.constant 0 : index
    %c0_34 = arith.constant 0 : index
    %57 = vector.load %arg8[%c0_32, %c0_33, %c0_34] : memref<4x32x128xf32, #tpu.memory_space<vmem>>, vector<1x32x128xf32>
    %58 = vector.shape_cast %57 : vector<1x32x128xf32> to vector<32x128xf32>
    %cst_35 = arith.constant dense<0.000000e+00> : vector<256x128xf32>
    %59 = tpu.matmul %19, %58, %cst_35 {dimension_numbers = #tpu.dot_dimension_numbers<[1], [0], [0], [1], [0, 0, 1, 1], [], []>} : vector<256x32xf32>, vector<32x128xf32>, vector<256x128xf32> -> vector<256x128xf32>
    %60 = arith.addf %56, %59 : vector<256x128xf32>
    %61 = math.tanh %60 : vector<256x128xf32>
    %c64_i32_36 = arith.constant 64 : i32
    %62 = tpu.dynamic_rotate %60 by %c64_i32_36 dim 1 : vector<256x128xf32>, i32 -> vector<256x128xf32>
    %63 = arith.negf %62 : vector<256x128xf32>
    %64 = math.exp %63 : vector<256x128xf32>
    %cst_37 = arith.constant 1.000000e+00 : f32
    %65 = vector.broadcast %cst_37 : f32 to vector<256x128xf32>
    %66 = arith.addf %65, %64 : vector<256x128xf32>
    %67 = arith.divf %65, %66 : vector<256x128xf32>
    %68 = arith.mulf %61, %67 : vector<256x128xf32>
    %c0_38 = arith.constant 0 : index
    %c0_39 = arith.constant 0 : index
    %c0_40 = arith.constant 0 : index
    %69 = vector.load %arg9[%c0_38, %c0_39, %c0_40] : memref<4x128x128xf32, #tpu.memory_space<vmem>>, vector<1x128x128xf32>
    %70 = vector.shape_cast %69 : vector<1x128x128xf32> to vector<128x128xf32>
    %cst_41 = arith.constant dense<0.000000e+00> : vector<256x128xf32>
    %71 = tpu.matmul %68, %70, %cst_41 {dimension_numbers = #tpu.dot_dimension_numbers<[1], [0], [0], [1], [0, 0, 1, 1], [], []>} : vector<256x128xf32>, vector<128x128xf32>, vector<256x128xf32> -> vector<256x128xf32>
    %c0_42 = arith.constant 0 : index
    %c0_43 = arith.constant 0 : index
    %c0_44 = arith.constant 0 : index
    %72 = vector.load %arg10[%c0_42, %c0_43, %c0_44] : memref<4x1x128xf32, #tpu.memory_space<vmem>>, vector<1x1x128xf32>
    %73 = vector.shape_cast %72 : vector<1x1x128xf32> to vector<1x128xf32>
    %74 = vector.broadcast %73 : vector<1x128xf32> to vector<256x128xf32>
    %75 = arith.addf %71, %74 : vector<256x128xf32>
    %76 = arith.addf %15, %75 : vector<256x128xf32>
    %77 = vector.broadcast %5 : vector<1x128xf32> to vector<256x128xf32>
    %78 = arith.mulf %76, %77 : vector<256x128xf32>
    %79 = vector.extract_strided_slice %20 {offsets = [0, 1, 0], sizes = [2, 1, 128], strides = [1, 1, 1]} : vector<2x4x128xf32> to vector<2x1x128xf32>
    %80 = vector.shape_cast %79 : vector<2x1x128xf32> to vector<2x128xf32>
    %81 = vector.shape_cast %78 : vector<256x128xf32> to vector<2x128x128xf32>
    %82 = vector.shape_cast %80 : vector<2x128xf32> to vector<2x1x128xf32>
    %83 = vector.broadcast %82 : vector<2x1x128xf32> to vector<2x128x128xf32>
    %84 = arith.addf %81, %83 : vector<2x128x128xf32>
    %85 = vector.shape_cast %84 : vector<2x128x128xf32> to vector<256x128xf32>
    %c2_i32 = arith.constant 2 : i32
    %86 = vector.broadcast %c2_i32 : i32 to vector<256x1xi32>
    %87 = arith.cmpi sge, %18, %86 : vector<256x1xi32>
    %c2_i32_45 = arith.constant 2 : i32
    %88 = tpu.dynamic_rotate %85 by %c2_i32_45 dim 0 : vector<256x128xf32>, i32 -> vector<256x128xf32>
    %cst_46 = arith.constant 0.000000e+00 : f32
    %89 = vector.shape_cast %87 : vector<256x1xi1> to vector<256x1xi1>
    %90 = vector.broadcast %89 : vector<256x1xi1> to vector<256x128xi1>
    %91 = vector.broadcast %cst_46 : f32 to vector<256x128xf32>
    %92 = arith.select %90, %88, %91 : vector<256x128xi1>, vector<256x128xf32>
    %c126_i32 = arith.constant 126 : i32
    %93 = vector.broadcast %c126_i32 : i32 to vector<256x1xi32>
    %94 = arith.cmpi slt, %18, %93 : vector<256x1xi32>
    %c254_i32 = arith.constant 254 : i32
    %95 = tpu.dynamic_rotate %85 by %c254_i32 dim 0 : vector<256x128xf32>, i32 -> vector<256x128xf32>
    %cst_47 = arith.constant 0.000000e+00 : f32
    %96 = vector.shape_cast %94 : vector<256x1xi1> to vector<256x1xi1>
    %97 = vector.broadcast %96 : vector<256x1xi1> to vector<256x128xi1>
    %98 = vector.broadcast %cst_47 : f32 to vector<256x128xf32>
    %99 = arith.select %97, %95, %98 : vector<256x128xi1>, vector<256x128xf32>
    %c1_48 = arith.constant 1 : index
    %c0_49 = arith.constant 0 : index
    %c0_50 = arith.constant 0 : index
    %100 = vector.load %arg7[%c1_48, %c0_49, %c0_50] : memref<4x1x128xf32, #tpu.memory_space<vmem>>, vector<1x1x128xf32>
    %101 = vector.shape_cast %100 : vector<1x1x128xf32> to vector<1x128xf32>
    %c1_51 = arith.constant 1 : index
    %c0_52 = arith.constant 0 : index
    %c0_53 = arith.constant 0 : index
    %c0_54 = arith.constant 0 : index
    %102 = vector.load %arg6[%c1_51, %c0_52, %c0_53, %c0_54] : memref<4x3x128x128xf32, #tpu.memory_space<vmem>>, vector<1x1x128x128xf32>
    %103 = vector.shape_cast %102 : vector<1x1x128x128xf32> to vector<128x128xf32>
    %cst_55 = arith.constant dense<0.000000e+00> : vector<256x128xf32>
    %104 = tpu.matmul %92, %103, %cst_55 {dimension_numbers = #tpu.dot_dimension_numbers<[1], [0], [0], [1], [0, 0, 1, 1], [], []>} : vector<256x128xf32>, vector<128x128xf32>, vector<256x128xf32> -> vector<256x128xf32>
    %105 = vector.broadcast %101 : vector<1x128xf32> to vector<256x128xf32>
    %106 = arith.addf %105, %104 : vector<256x128xf32>
    %c1_56 = arith.constant 1 : index
    %c1_57 = arith.constant 1 : index
    %c0_58 = arith.constant 0 : index
    %c0_59 = arith.constant 0 : index
    %107 = vector.load %arg6[%c1_56, %c1_57, %c0_58, %c0_59] : memref<4x3x128x128xf32, #tpu.memory_space<vmem>>, vector<1x1x128x128xf32>
    %108 = vector.shape_cast %107 : vector<1x1x128x128xf32> to vector<128x128xf32>
    %cst_60 = arith.constant dense<0.000000e+00> : vector<256x128xf32>
    %109 = tpu.matmul %85, %108, %cst_60 {dimension_numbers = #tpu.dot_dimension_numbers<[1], [0], [0], [1], [0, 0, 1, 1], [], []>} : vector<256x128xf32>, vector<128x128xf32>, vector<256x128xf32> -> vector<256x128xf32>
    %110 = arith.addf %106, %109 : vector<256x128xf32>
    %c1_61 = arith.constant 1 : index
    %c2_62 = arith.constant 2 : index
    %c0_63 = arith.constant 0 : index
    %c0_64 = arith.constant 0 : index
    %111 = vector.load %arg6[%c1_61, %c2_62, %c0_63, %c0_64] : memref<4x3x128x128xf32, #tpu.memory_space<vmem>>, vector<1x1x128x128xf32>
    %112 = vector.shape_cast %111 : vector<1x1x128x128xf32> to vector<128x128xf32>
    %cst_65 = arith.constant dense<0.000000e+00> : vector<256x128xf32>
    %113 = tpu.matmul %99, %112, %cst_65 {dimension_numbers = #tpu.dot_dimension_numbers<[1], [0], [0], [1], [0, 0, 1, 1], [], []>} : vector<256x128xf32>, vector<128x128xf32>, vector<256x128xf32> -> vector<256x128xf32>
    %114 = arith.addf %110, %113 : vector<256x128xf32>
    %c1_66 = arith.constant 1 : index
    %c0_67 = arith.constant 0 : index
    %c0_68 = arith.constant 0 : index
    %115 = vector.load %arg8[%c1_66, %c0_67, %c0_68] : memref<4x32x128xf32, #tpu.memory_space<vmem>>, vector<1x32x128xf32>
    %116 = vector.shape_cast %115 : vector<1x32x128xf32> to vector<32x128xf32>
    %cst_69 = arith.constant dense<0.000000e+00> : vector<256x128xf32>
    %117 = tpu.matmul %19, %116, %cst_69 {dimension_numbers = #tpu.dot_dimension_numbers<[1], [0], [0], [1], [0, 0, 1, 1], [], []>} : vector<256x32xf32>, vector<32x128xf32>, vector<256x128xf32> -> vector<256x128xf32>
    %118 = arith.addf %114, %117 : vector<256x128xf32>
    %119 = math.tanh %118 : vector<256x128xf32>
    %c64_i32_70 = arith.constant 64 : i32
    %120 = tpu.dynamic_rotate %118 by %c64_i32_70 dim 1 : vector<256x128xf32>, i32 -> vector<256x128xf32>
    %121 = arith.negf %120 : vector<256x128xf32>
    %122 = math.exp %121 : vector<256x128xf32>
    %cst_71 = arith.constant 1.000000e+00 : f32
    %123 = vector.broadcast %cst_71 : f32 to vector<256x128xf32>
    %124 = arith.addf %123, %122 : vector<256x128xf32>
    %125 = arith.divf %123, %124 : vector<256x128xf32>
    %126 = arith.mulf %119, %125 : vector<256x128xf32>
    %c1_72 = arith.constant 1 : index
    %c0_73 = arith.constant 0 : index
    %c0_74 = arith.constant 0 : index
    %127 = vector.load %arg9[%c1_72, %c0_73, %c0_74] : memref<4x128x128xf32, #tpu.memory_space<vmem>>, vector<1x128x128xf32>
    %128 = vector.shape_cast %127 : vector<1x128x128xf32> to vector<128x128xf32>
    %cst_75 = arith.constant dense<0.000000e+00> : vector<256x128xf32>
    %129 = tpu.matmul %126, %128, %cst_75 {dimension_numbers = #tpu.dot_dimension_numbers<[1], [0], [0], [1], [0, 0, 1, 1], [], []>} : vector<256x128xf32>, vector<128x128xf32>, vector<256x128xf32> -> vector<256x128xf32>
    %c1_76 = arith.constant 1 : index
    %c0_77 = arith.constant 0 : index
    %c0_78 = arith.constant 0 : index
    %130 = vector.load %arg10[%c1_76, %c0_77, %c0_78] : memref<4x1x128xf32, #tpu.memory_space<vmem>>, vector<1x1x128xf32>
    %131 = vector.shape_cast %130 : vector<1x1x128xf32> to vector<1x128xf32>
    %132 = vector.broadcast %131 : vector<1x128xf32> to vector<256x128xf32>
    %133 = arith.addf %129, %132 : vector<256x128xf32>
    %134 = arith.addf %78, %133 : vector<256x128xf32>
    %135 = vector.broadcast %5 : vector<1x128xf32> to vector<256x128xf32>
    %136 = arith.mulf %134, %135 : vector<256x128xf32>
    %137 = vector.extract_strided_slice %20 {offsets = [0, 2, 0], sizes = [2, 1, 128], strides = [1, 1, 1]} : vector<2x4x128xf32> to vector<2x1x128xf32>
    %138 = vector.shape_cast %137 : vector<2x1x128xf32> to vector<2x128xf32>
    %139 = vector.shape_cast %136 : vector<256x128xf32> to vector<2x128x128xf32>
    %140 = vector.shape_cast %138 : vector<2x128xf32> to vector<2x1x128xf32>
    %141 = vector.broadcast %140 : vector<2x1x128xf32> to vector<2x128x128xf32>
    %142 = arith.addf %139, %141 : vector<2x128x128xf32>
    %143 = vector.shape_cast %142 : vector<2x128x128xf32> to vector<256x128xf32>
    %c1_i32_79 = arith.constant 1 : i32
    %144 = vector.broadcast %c1_i32_79 : i32 to vector<256x1xi32>
    %145 = arith.cmpi sge, %18, %144 : vector<256x1xi32>
    %c1_i32_80 = arith.constant 1 : i32
    %146 = tpu.dynamic_rotate %143 by %c1_i32_80 dim 0 : vector<256x128xf32>, i32 -> vector<256x128xf32>
    %cst_81 = arith.constant 0.000000e+00 : f32
    %147 = vector.shape_cast %145 : vector<256x1xi1> to vector<256x1xi1>
    %148 = vector.broadcast %147 : vector<256x1xi1> to vector<256x128xi1>
    %149 = vector.broadcast %cst_81 : f32 to vector<256x128xf32>
    %150 = arith.select %148, %146, %149 : vector<256x128xi1>, vector<256x128xf32>
    %c127_i32_82 = arith.constant 127 : i32
    %151 = vector.broadcast %c127_i32_82 : i32 to vector<256x1xi32>
    %152 = arith.cmpi slt, %18, %151 : vector<256x1xi32>
    %c255_i32_83 = arith.constant 255 : i32
    %153 = tpu.dynamic_rotate %143 by %c255_i32_83 dim 0 : vector<256x128xf32>, i32 -> vector<256x128xf32>
    %cst_84 = arith.constant 0.000000e+00 : f32
    %154 = vector.shape_cast %152 : vector<256x1xi1> to vector<256x1xi1>
    %155 = vector.broadcast %154 : vector<256x1xi1> to vector<256x128xi1>
    %156 = vector.broadcast %cst_84 : f32 to vector<256x128xf32>
    %157 = arith.select %155, %153, %156 : vector<256x128xi1>, vector<256x128xf32>
    %c2_85 = arith.constant 2 : index
    %c0_86 = arith.constant 0 : index
    %c0_87 = arith.constant 0 : index
    %158 = vector.load %arg7[%c2_85, %c0_86, %c0_87] : memref<4x1x128xf32, #tpu.memory_space<vmem>>, vector<1x1x128xf32>
    %159 = vector.shape_cast %158 : vector<1x1x128xf32> to vector<1x128xf32>
    %c2_88 = arith.constant 2 : index
    %c0_89 = arith.constant 0 : index
    %c0_90 = arith.constant 0 : index
    %c0_91 = arith.constant 0 : index
    %160 = vector.load %arg6[%c2_88, %c0_89, %c0_90, %c0_91] : memref<4x3x128x128xf32, #tpu.memory_space<vmem>>, vector<1x1x128x128xf32>
    %161 = vector.shape_cast %160 : vector<1x1x128x128xf32> to vector<128x128xf32>
    %cst_92 = arith.constant dense<0.000000e+00> : vector<256x128xf32>
    %162 = tpu.matmul %150, %161, %cst_92 {dimension_numbers = #tpu.dot_dimension_numbers<[1], [0], [0], [1], [0, 0, 1, 1], [], []>} : vector<256x128xf32>, vector<128x128xf32>, vector<256x128xf32> -> vector<256x128xf32>
    %163 = vector.broadcast %159 : vector<1x128xf32> to vector<256x128xf32>
    %164 = arith.addf %163, %162 : vector<256x128xf32>
    %c2_93 = arith.constant 2 : index
    %c1_94 = arith.constant 1 : index
    %c0_95 = arith.constant 0 : index
    %c0_96 = arith.constant 0 : index
    %165 = vector.load %arg6[%c2_93, %c1_94, %c0_95, %c0_96] : memref<4x3x128x128xf32, #tpu.memory_space<vmem>>, vector<1x1x128x128xf32>
    %166 = vector.shape_cast %165 : vector<1x1x128x128xf32> to vector<128x128xf32>
    %cst_97 = arith.constant dense<0.000000e+00> : vector<256x128xf32>
    %167 = tpu.matmul %143, %166, %cst_97 {dimension_numbers = #tpu.dot_dimension_numbers<[1], [0], [0], [1], [0, 0, 1, 1], [], []>} : vector<256x128xf32>, vector<128x128xf32>, vector<256x128xf32> -> vector<256x128xf32>
    %168 = arith.addf %164, %167 : vector<256x128xf32>
    %c2_98 = arith.constant 2 : index
    %c2_99 = arith.constant 2 : index
    %c0_100 = arith.constant 0 : index
    %c0_101 = arith.constant 0 : index
    %169 = vector.load %arg6[%c2_98, %c2_99, %c0_100, %c0_101] : memref<4x3x128x128xf32, #tpu.memory_space<vmem>>, vector<1x1x128x128xf32>
    %170 = vector.shape_cast %169 : vector<1x1x128x128xf32> to vector<128x128xf32>
    %cst_102 = arith.constant dense<0.000000e+00> : vector<256x128xf32>
    %171 = tpu.matmul %157, %170, %cst_102 {dimension_numbers = #tpu.dot_dimension_numbers<[1], [0], [0], [1], [0, 0, 1, 1], [], []>} : vector<256x128xf32>, vector<128x128xf32>, vector<256x128xf32> -> vector<256x128xf32>
    %172 = arith.addf %168, %171 : vector<256x128xf32>
    %c2_103 = arith.constant 2 : index
    %c0_104 = arith.constant 0 : index
    %c0_105 = arith.constant 0 : index
    %173 = vector.load %arg8[%c2_103, %c0_104, %c0_105] : memref<4x32x128xf32, #tpu.memory_space<vmem>>, vector<1x32x128xf32>
    %174 = vector.shape_cast %173 : vector<1x32x128xf32> to vector<32x128xf32>
    %cst_106 = arith.constant dense<0.000000e+00> : vector<256x128xf32>
    %175 = tpu.matmul %19, %174, %cst_106 {dimension_numbers = #tpu.dot_dimension_numbers<[1], [0], [0], [1], [0, 0, 1, 1], [], []>} : vector<256x32xf32>, vector<32x128xf32>, vector<256x128xf32> -> vector<256x128xf32>
    %176 = arith.addf %172, %175 : vector<256x128xf32>
    %177 = math.tanh %176 : vector<256x128xf32>
    %c64_i32_107 = arith.constant 64 : i32
    %178 = tpu.dynamic_rotate %176 by %c64_i32_107 dim 1 : vector<256x128xf32>, i32 -> vector<256x128xf32>
    %179 = arith.negf %178 : vector<256x128xf32>
    %180 = math.exp %179 : vector<256x128xf32>
    %cst_108 = arith.constant 1.000000e+00 : f32
    %181 = vector.broadcast %cst_108 : f32 to vector<256x128xf32>
    %182 = arith.addf %181, %180 : vector<256x128xf32>
    %183 = arith.divf %181, %182 : vector<256x128xf32>
    %184 = arith.mulf %177, %183 : vector<256x128xf32>
    %c2_109 = arith.constant 2 : index
    %c0_110 = arith.constant 0 : index
    %c0_111 = arith.constant 0 : index
    %185 = vector.load %arg9[%c2_109, %c0_110, %c0_111] : memref<4x128x128xf32, #tpu.memory_space<vmem>>, vector<1x128x128xf32>
    %186 = vector.shape_cast %185 : vector<1x128x128xf32> to vector<128x128xf32>
    %cst_112 = arith.constant dense<0.000000e+00> : vector<256x128xf32>
    %187 = tpu.matmul %184, %186, %cst_112 {dimension_numbers = #tpu.dot_dimension_numbers<[1], [0], [0], [1], [0, 0, 1, 1], [], []>} : vector<256x128xf32>, vector<128x128xf32>, vector<256x128xf32> -> vector<256x128xf32>
    %c2_113 = arith.constant 2 : index
    %c0_114 = arith.constant 0 : index
    %c0_115 = arith.constant 0 : index
    %188 = vector.load %arg10[%c2_113, %c0_114, %c0_115] : memref<4x1x128xf32, #tpu.memory_space<vmem>>, vector<1x1x128xf32>
    %189 = vector.shape_cast %188 : vector<1x1x128xf32> to vector<1x128xf32>
    %190 = vector.broadcast %189 : vector<1x128xf32> to vector<256x128xf32>
    %191 = arith.addf %187, %190 : vector<256x128xf32>
    %192 = arith.addf %136, %191 : vector<256x128xf32>
    %193 = vector.broadcast %5 : vector<1x128xf32> to vector<256x128xf32>
    %194 = arith.mulf %192, %193 : vector<256x128xf32>
    %195 = vector.extract_strided_slice %20 {offsets = [0, 3, 0], sizes = [2, 1, 128], strides = [1, 1, 1]} : vector<2x4x128xf32> to vector<2x1x128xf32>
    %196 = vector.shape_cast %195 : vector<2x1x128xf32> to vector<2x128xf32>
    %197 = vector.shape_cast %194 : vector<256x128xf32> to vector<2x128x128xf32>
    %198 = vector.shape_cast %196 : vector<2x128xf32> to vector<2x1x128xf32>
    %199 = vector.broadcast %198 : vector<2x1x128xf32> to vector<2x128x128xf32>
    %200 = arith.addf %197, %199 : vector<2x128x128xf32>
    %201 = vector.shape_cast %200 : vector<2x128x128xf32> to vector<256x128xf32>
    %c2_i32_116 = arith.constant 2 : i32
    %202 = vector.broadcast %c2_i32_116 : i32 to vector<256x1xi32>
    %203 = arith.cmpi sge, %18, %202 : vector<256x1xi32>
    %c2_i32_117 = arith.constant 2 : i32
    %204 = tpu.dynamic_rotate %201 by %c2_i32_117 dim 0 : vector<256x128xf32>, i32 -> vector<256x128xf32>
    %cst_118 = arith.constant 0.000000e+00 : f32
    %205 = vector.shape_cast %203 : vector<256x1xi1> to vector<256x1xi1>
    %206 = vector.broadcast %205 : vector<256x1xi1> to vector<256x128xi1>
    %207 = vector.broadcast %cst_118 : f32 to vector<256x128xf32>
    %208 = arith.select %206, %204, %207 : vector<256x128xi1>, vector<256x128xf32>
    %c126_i32_119 = arith.constant 126 : i32
    %209 = vector.broadcast %c126_i32_119 : i32 to vector<256x1xi32>
    %210 = arith.cmpi slt, %18, %209 : vector<256x1xi32>
    %c254_i32_120 = arith.constant 254 : i32
    %211 = tpu.dynamic_rotate %201 by %c254_i32_120 dim 0 : vector<256x128xf32>, i32 -> vector<256x128xf32>
    %cst_121 = arith.constant 0.000000e+00 : f32
    %212 = vector.shape_cast %210 : vector<256x1xi1> to vector<256x1xi1>
    %213 = vector.broadcast %212 : vector<256x1xi1> to vector<256x128xi1>
    %214 = vector.broadcast %cst_121 : f32 to vector<256x128xf32>
    %215 = arith.select %213, %211, %214 : vector<256x128xi1>, vector<256x128xf32>
    %c3 = arith.constant 3 : index
    %c0_122 = arith.constant 0 : index
    %c0_123 = arith.constant 0 : index
    %216 = vector.load %arg7[%c3, %c0_122, %c0_123] : memref<4x1x128xf32, #tpu.memory_space<vmem>>, vector<1x1x128xf32>
    %217 = vector.shape_cast %216 : vector<1x1x128xf32> to vector<1x128xf32>
    %c3_124 = arith.constant 3 : index
    %c0_125 = arith.constant 0 : index
    %c0_126 = arith.constant 0 : index
    %c0_127 = arith.constant 0 : index
    %218 = vector.load %arg6[%c3_124, %c0_125, %c0_126, %c0_127] : memref<4x3x128x128xf32, #tpu.memory_space<vmem>>, vector<1x1x128x128xf32>
    %219 = vector.shape_cast %218 : vector<1x1x128x128xf32> to vector<128x128xf32>
    %cst_128 = arith.constant dense<0.000000e+00> : vector<256x128xf32>
    %220 = tpu.matmul %208, %219, %cst_128 {dimension_numbers = #tpu.dot_dimension_numbers<[1], [0], [0], [1], [0, 0, 1, 1], [], []>} : vector<256x128xf32>, vector<128x128xf32>, vector<256x128xf32> -> vector<256x128xf32>
    %221 = vector.broadcast %217 : vector<1x128xf32> to vector<256x128xf32>
    %222 = arith.addf %221, %220 : vector<256x128xf32>
    %c3_129 = arith.constant 3 : index
    %c1_130 = arith.constant 1 : index
    %c0_131 = arith.constant 0 : index
    %c0_132 = arith.constant 0 : index
    %223 = vector.load %arg6[%c3_129, %c1_130, %c0_131, %c0_132] : memref<4x3x128x128xf32, #tpu.memory_space<vmem>>, vector<1x1x128x128xf32>
    %224 = vector.shape_cast %223 : vector<1x1x128x128xf32> to vector<128x128xf32>
    %cst_133 = arith.constant dense<0.000000e+00> : vector<256x128xf32>
    %225 = tpu.matmul %201, %224, %cst_133 {dimension_numbers = #tpu.dot_dimension_numbers<[1], [0], [0], [1], [0, 0, 1, 1], [], []>} : vector<256x128xf32>, vector<128x128xf32>, vector<256x128xf32> -> vector<256x128xf32>
    %226 = arith.addf %222, %225 : vector<256x128xf32>
    %c3_134 = arith.constant 3 : index
    %c2_135 = arith.constant 2 : index
    %c0_136 = arith.constant 0 : index
    %c0_137 = arith.constant 0 : index
    %227 = vector.load %arg6[%c3_134, %c2_135, %c0_136, %c0_137] : memref<4x3x128x128xf32, #tpu.memory_space<vmem>>, vector<1x1x128x128xf32>
    %228 = vector.shape_cast %227 : vector<1x1x128x128xf32> to vector<128x128xf32>
    %cst_138 = arith.constant dense<0.000000e+00> : vector<256x128xf32>
    %229 = tpu.matmul %215, %228, %cst_138 {dimension_numbers = #tpu.dot_dimension_numbers<[1], [0], [0], [1], [0, 0, 1, 1], [], []>} : vector<256x128xf32>, vector<128x128xf32>, vector<256x128xf32> -> vector<256x128xf32>
    %230 = arith.addf %226, %229 : vector<256x128xf32>
    %c3_139 = arith.constant 3 : index
    %c0_140 = arith.constant 0 : index
    %c0_141 = arith.constant 0 : index
    %231 = vector.load %arg8[%c3_139, %c0_140, %c0_141] : memref<4x32x128xf32, #tpu.memory_space<vmem>>, vector<1x32x128xf32>
    %232 = vector.shape_cast %231 : vector<1x32x128xf32> to vector<32x128xf32>
    %cst_142 = arith.constant dense<0.000000e+00> : vector<256x128xf32>
    %233 = tpu.matmul %19, %232, %cst_142 {dimension_numbers = #tpu.dot_dimension_numbers<[1], [0], [0], [1], [0, 0, 1, 1], [], []>} : vector<256x32xf32>, vector<32x128xf32>, vector<256x128xf32> -> vector<256x128xf32>
    %234 = arith.addf %230, %233 : vector<256x128xf32>
    %235 = math.tanh %234 : vector<256x128xf32>
    %c64_i32_143 = arith.constant 64 : i32
    %236 = tpu.dynamic_rotate %234 by %c64_i32_143 dim 1 : vector<256x128xf32>, i32 -> vector<256x128xf32>
    %237 = arith.negf %236 : vector<256x128xf32>
    %238 = math.exp %237 : vector<256x128xf32>
    %cst_144 = arith.constant 1.000000e+00 : f32
    %239 = vector.broadcast %cst_144 : f32 to vector<256x128xf32>
    %240 = arith.addf %239, %238 : vector<256x128xf32>
    %241 = arith.divf %239, %240 : vector<256x128xf32>
    %242 = arith.mulf %235, %241 : vector<256x128xf32>
    %c3_145 = arith.constant 3 : index
    %c0_146 = arith.constant 0 : index
    %c0_147 = arith.constant 0 : index
    %243 = vector.load %arg9[%c3_145, %c0_146, %c0_147] : memref<4x128x128xf32, #tpu.memory_space<vmem>>, vector<1x128x128xf32>
    %244 = vector.shape_cast %243 : vector<1x128x128xf32> to vector<128x128xf32>
    %cst_148 = arith.constant dense<0.000000e+00> : vector<256x128xf32>
    %245 = tpu.matmul %242, %244, %cst_148 {dimension_numbers = #tpu.dot_dimension_numbers<[1], [0], [0], [1], [0, 0, 1, 1], [], []>} : vector<256x128xf32>, vector<128x128xf32>, vector<256x128xf32> -> vector<256x128xf32>
    %c3_149 = arith.constant 3 : index
    %c0_150 = arith.constant 0 : index
    %c0_151 = arith.constant 0 : index
    %246 = vector.load %arg10[%c3_149, %c0_150, %c0_151] : memref<4x1x128xf32, #tpu.memory_space<vmem>>, vector<1x1x128xf32>
    %247 = vector.shape_cast %246 : vector<1x1x128xf32> to vector<1x128xf32>
    %248 = vector.broadcast %247 : vector<1x128xf32> to vector<256x128xf32>
    %249 = arith.addf %245, %248 : vector<256x128xf32>
    %250 = arith.addf %194, %249 : vector<256x128xf32>
    %251 = vector.broadcast %5 : vector<1x128xf32> to vector<256x128xf32>
    %252 = arith.mulf %250, %251 : vector<256x128xf32>
    %c64_i32_152 = arith.constant 64 : i32
    %253 = vector.broadcast %c64_i32_152 : i32 to vector<1x128xi32>
    %254 = arith.cmpi slt, %0, %253 : vector<1x128xi32>
    %cst_153 = arith.constant 1.000000e+00 : f32
    %cst_154 = arith.constant 5.000000e-01 : f32
    %255 = vector.broadcast %cst_153 : f32 to vector<1x128xf32>
    %256 = vector.broadcast %cst_154 : f32 to vector<1x128xf32>
    %257 = arith.select %254, %255, %256 : vector<1x128xi1>, vector<1x128xf32>
    %258 = vector.broadcast %257 : vector<1x128xf32> to vector<256x128xf32>
    %259 = arith.mulf %252, %258 : vector<256x128xf32>
    %c0_155 = arith.constant 0 : index
    %c0_156 = arith.constant 0 : index
    %260 = vector.load %arg16[%c0_155, %c0_156] : memref<256x128xf32, #tpu.memory_space<vmem>>, vector<256x128xf32>
    tpu.vector_store %arg16[%c0_155, %c0_156], %259 {strides = array<i32>} : memref<256x128xf32, #tpu.memory_space<vmem>>, vector<256x128xf32>,
    %c0_157 = arith.constant 0 : index
    %c0_158 = arith.constant 0 : index
    %261 = vector.load %arg11[%c0_157, %c0_158] : memref<128x64xf32, #tpu.memory_space<vmem>>, vector<128x64xf32>
    %cst_159 = arith.constant dense<0.000000e+00> : vector<256x64xf32>
    %262 = tpu.matmul %259, %261, %cst_159 {dimension_numbers = #tpu.dot_dimension_numbers<[1], [0], [0], [1], [0, 0, 1, 1], [], []>} : vector<256x128xf32>, vector<128x64xf32>, vector<256x64xf32> -> vector<256x64xf32>
    %c0_160 = arith.constant 0 : index
    %c0_161 = arith.constant 0 : index
    %263 = vector.load %arg12[%c0_160, %c0_161] : memref<1x64xf32, #tpu.memory_space<vmem>>, vector<1x64xf32>
    %264 = vector.broadcast %263 : vector<1x64xf32> to vector<256x64xf32>
    %265 = arith.addf %262, %264 : vector<256x64xf32>
    %cst_162 = arith.constant 0.000000e+00 : f32
    %266 = vector.broadcast %cst_162 : f32 to vector<256x64xf32>
    %267 = arith.maximumf %265, %266 : vector<256x64xf32>
    %c0_163 = arith.constant 0 : index
    %c0_164 = arith.constant 0 : index
    %268 = vector.load %arg13[%c0_163, %c0_164] : memref<1x64xf32, #tpu.memory_space<vmem>>, vector<1x64xf32>
    %269 = vector.broadcast %268 : vector<1x64xf32> to vector<256x64xf32>
    %270 = arith.mulf %267, %269 : vector<256x64xf32>
    %cst_165 = arith.constant dense<0.000000e+00> : vector<256xf32>
    %271 = vector.multi_reduction <add>, %270, %cst_165 [1] : vector<256x64xf32> to vector<256xf32>
    %272 = vector.shape_cast %271 : vector<256xf32> to vector<256x1xf32>
    %c0_166 = arith.constant 0 : index
    %c0_167 = arith.constant 0 : index
    %273 = vector.load %arg14[%c0_166, %c0_167] : memref<1x1xf32, #tpu.memory_space<vmem>>, vector<1x1xf32>
    %274 = vector.broadcast %273 : vector<1x1xf32> to vector<256x1xf32>
    %275 = arith.addf %272, %274 : vector<256x1xf32>
    %c0_168 = arith.constant 0 : index
    %c0_169 = arith.constant 0 : index
    %276 = vector.load %arg15[%c0_168, %c0_169] : memref<256x1xf32, #tpu.memory_space<vmem>>, vector<256x1xf32>
    tpu.vector_store %arg15[%c0_168, %c0_169], %275 {strides = array<i32>} : memref<256x1xf32, #tpu.memory_space<vmem>>, vector<256x1xf32>,
    return
  }
  func.func @transform_0(%arg0: i32) -> (i32, i32) {
    %c0_i32 = arith.constant 0 : i32
    %c0_i32_0 = arith.constant 0 : i32
    return %arg0, %c0_i32 : i32, i32
  }
  func.func @transform_1(%arg0: i32) -> (i32, i32) {
    %c0_i32 = arith.constant 0 : i32
    %c0_i32_0 = arith.constant 0 : i32
    return %arg0, %c0_i32 : i32, i32
  }
  func.func @transform_2(%arg0: i32) -> (i32, i32, i32) {
    %c0_i32 = arith.constant 0 : i32
    %c0_i32_0 = arith.constant 0 : i32
    %c0_i32_1 = arith.constant 0 : i32
    return %arg0, %c0_i32, %c0_i32_0 : i32, i32, i32
  }
  func.func @transform_3(%arg0: i32) -> (i32, i32) {
    %c0_i32 = arith.constant 0 : i32
    %c0_i32_0 = arith.constant 0 : i32
    %c0_i32_1 = arith.constant 0 : i32
    return %c0_i32, %c0_i32_0 : i32, i32
  }
  func.func @transform_4(%arg0: i32) -> (i32, i32) {
    %c0_i32 = arith.constant 0 : i32
    %c0_i32_0 = arith.constant 0 : i32
    %c0_i32_1 = arith.constant 0 : i32
    return %c0_i32, %c0_i32_0 : i32, i32
  }
  func.func @transform_5(%arg0: i32) -> (i32, i32, i32, i32) {
    %c0_i32 = arith.constant 0 : i32
    %c0_i32_0 = arith.constant 0 : i32
    %c0_i32_1 = arith.constant 0 : i32
    %c0_i32_2 = arith.constant 0 : i32
    %c0_i32_3 = arith.constant 0 : i32
    return %c0_i32, %c0_i32_0, %c0_i32_1, %c0_i32_2 : i32, i32, i32, i32
  }
  func.func @transform_6(%arg0: i32) -> (i32, i32, i32) {
    %c0_i32 = arith.constant 0 : i32
    %c0_i32_0 = arith.constant 0 : i32
    %c0_i32_1 = arith.constant 0 : i32
    %c0_i32_2 = arith.constant 0 : i32
    return %c0_i32, %c0_i32_0, %c0_i32_1 : i32, i32, i32
  }
  func.func @transform_7(%arg0: i32) -> (i32, i32, i32) {
    %c0_i32 = arith.constant 0 : i32
    %c0_i32_0 = arith.constant 0 : i32
    %c0_i32_1 = arith.constant 0 : i32
    %c0_i32_2 = arith.constant 0 : i32
    return %c0_i32, %c0_i32_0, %c0_i32_1 : i32, i32, i32
  }
  func.func @transform_8(%arg0: i32) -> (i32, i32, i32) {
    %c0_i32 = arith.constant 0 : i32
    %c0_i32_0 = arith.constant 0 : i32
    %c0_i32_1 = arith.constant 0 : i32
    %c0_i32_2 = arith.constant 0 : i32
    return %c0_i32, %c0_i32_0, %c0_i32_1 : i32, i32, i32
  }
  func.func @transform_9(%arg0: i32) -> (i32, i32, i32) {
    %c0_i32 = arith.constant 0 : i32
    %c0_i32_0 = arith.constant 0 : i32
    %c0_i32_1 = arith.constant 0 : i32
    %c0_i32_2 = arith.constant 0 : i32
    return %c0_i32, %c0_i32_0, %c0_i32_1 : i32, i32, i32
  }
  func.func @transform_10(%arg0: i32) -> (i32, i32) {
    %c0_i32 = arith.constant 0 : i32
    %c0_i32_0 = arith.constant 0 : i32
    %c0_i32_1 = arith.constant 0 : i32
    return %c0_i32, %c0_i32_0 : i32, i32
  }
  func.func @transform_11(%arg0: i32) -> (i32, i32) {
    %c0_i32 = arith.constant 0 : i32
    %c0_i32_0 = arith.constant 0 : i32
    %c0_i32_1 = arith.constant 0 : i32
    return %c0_i32, %c0_i32_0 : i32, i32
  }
  func.func @transform_12(%arg0: i32) -> (i32, i32) {
    %c0_i32 = arith.constant 0 : i32
    %c0_i32_0 = arith.constant 0 : i32
    %c0_i32_1 = arith.constant 0 : i32
    return %c0_i32, %c0_i32_0 : i32, i32
  }
  func.func @transform_13(%arg0: i32) -> (i32, i32) {
    %c0_i32 = arith.constant 0 : i32
    %c0_i32_0 = arith.constant 0 : i32
    %c0_i32_1 = arith.constant 0 : i32
    return %c0_i32, %c0_i32_0 : i32, i32
  }
  func.func @transform_14(%arg0: i32) -> (i32, i32) {
    %c0_i32 = arith.constant 0 : i32
    %c0_i32_0 = arith.constant 0 : i32
    return %arg0, %c0_i32 : i32, i32
  }
  func.func @transform_15(%arg0: i32) -> (i32, i32) {
    %c0_i32 = arith.constant 0 : i32
    %c0_i32_0 = arith.constant 0 : i32
    return %arg0, %c0_i32 : i32, i32
  }
}

</mosaic_0001>

<llo_original>
// kernel: diffwave_forward.1
$region0: #{diffwave_forward.1}
  #allocation0 [shape = 'u32[]', space=smem, size = 0x4, offset = 0x4, fixed_abs, tag = 'smem constant byte address 0x4 - core index']
  #allocation1 [shape = 'u32[72,128]{1,0:T(1,128)}', space=vmem, size = 0x9000, scoped, tag = 'internal scratch']
  #allocation2 [shape = 'f32[1,1]{1,0:T(1,128)S(1)}', space=vmem, size = 0x200, scoped, tag = 'scoped memory for diffwave_forward.1']
  %s0 = inlined_call_operand.vmem [shape: f32[256,1], index: 0, kind: input, shape index: {}]
  %s1 = inlined_call_operand.vmem [shape: f32[256,32], index: 1, kind: input, shape index: {}]
  %s2 = inlined_call_operand.vmem [shape: f32[2,4,128], index: 2, kind: input, shape index: {}]
  %s3 = inlined_call_operand.vmem [shape: f32[1,128], index: 3, kind: input, shape index: {}]
  %s4 = inlined_call_operand.vmem [shape: f32[1,128], index: 4, kind: input, shape index: {}]
  %s5 = inlined_call_operand.hbm [shape: f32[4,3,128,128], index: 5, kind: input, shape index: {}]
  %s6 = inlined_call_operand.vmem [shape: f32[4,1,128], index: 6, kind: input, shape index: {}]
  %s7 = inlined_call_operand.vmem [shape: f32[4,32,128], index: 7, kind: input, shape index: {}]
  %s8 = inlined_call_operand.vmem [shape: f32[4,128,128], index: 8, kind: input, shape index: {}]
  %s9 = inlined_call_operand.vmem [shape: f32[4,1,128], index: 9, kind: input, shape index: {}]
  %s10 = inlined_call_operand.vmem [shape: f32[128,64], index: 10, kind: input, shape index: {}]
  %s11 = inlined_call_operand.vmem [shape: f32[1,64], index: 11, kind: input, shape index: {}]
  %s12 = inlined_call_operand.vmem [shape: f32[1,64], index: 12, kind: input, shape index: {}]
  %s13 = inlined_call_operand.<no memory space> [shape: f32[1,1], index: 13, kind: input, shape index: {}]
  %s14 = inlined_call_operand.vmem [shape: f32[256,1], index: 14, kind: output, shape index: {0}]
  %s15 = inlined_call_operand.vmem [shape: f32[256,128], index: 15, kind: output, shape index: {1}]
  %16 = xla_tuple %s14, %s15
  %s17 = sld [smem:[#allocation0]]
  $region78: #{diffwave_forward.1} parent=0
    _
  %s19 = ssub.s32 1, %s17
  %s20 = scalar_select 0, %s19, %s17
  %v21 = vstv %s13
  %22 = vst [vmem:[#allocation2] sm:$0x1] %v21
  $region1: #{diffwave_forward.1} parent=0
    #allocation3 [shape = 'u8[786432]{0}', space=vmem, size = 0xc0000, scoped, tag = 'input window, operand 5, single buffered']
    #allocation4 [shape = 's32[1]{0}', space=sflag, size = 0x4, scoped, tag = 'scoped memory for diffwave_forward.1']
    %23 = vsyncpa [#allocation4], 0
    // Predicated region
    $region2: #{diffwave_forward.1} parent=1 // pred_check
      _
    $region3: #{diffwave_forward.1} parent=1 // pred_check_branch
      %25 = sbr.rel (0) target = $region5
    $region4: #{diffwave_forward.1} parent=1 // pred_region
      _
    $region5: #{diffwave_forward.1} parent=1 // pred_fallthru
      _
    // Predicated region
    $region6: #{diffwave_forward.1} parent=1 // pred_check
      _
    $region7: #{diffwave_forward.1} parent=1 // pred_check_branch
      %27 = sbr.rel (0) target = $region9
    $region8: #{diffwave_forward.1} parent=1 // pred_region
      _
    $region9: #{diffwave_forward.1} parent=1 // pred_fallthru
      _
    // Predicated region
    $region10: #{diffwave_forward.1} parent=1 // pred_check
      _
    $region11: #{diffwave_forward.1} parent=1 // pred_check_branch
      %29 = sbr.rel (0) target = $region13
    $region12: #{diffwave_forward.1} parent=1 // pred_region
      _
    $region13: #{diffwave_forward.1} parent=1 // pred_fallthru
      _
    // Predicated region
    $region14: #{diffwave_forward.1} parent=1 // pred_check
      _
    $region15: #{diffwave_forward.1} parent=1 // pred_check_branch
      %31 = sbr.rel (0) target = $region17
    $region16: #{diffwave_forward.1} parent=1 // pred_region
      _
    $region17: #{diffwave_forward.1} parent=1 // pred_fallthru
      _
    // Predicated region
    $region18: #{diffwave_forward.1} parent=1 // pred_check
      _
    $region19: #{diffwave_forward.1} parent=1 // pred_check_branch
      %33 = sbr.rel (0) target = $region21
    $region20: #{diffwave_forward.1} parent=1 // pred_region
      _
    $region21: #{diffwave_forward.1} parent=1 // pred_fallthru
      _
    // Predicated region
    $region22: #{diffwave_forward.1} parent=1 // pred_check
      _
    $region23: #{diffwave_forward.1} parent=1 // pred_check_branch
      %35 = sbr.rel (0) target = $region25
    $region24: #{diffwave_forward.1} parent=1 // pred_region
      %37 = vsyncadd [#allocation4], 0
      %s38 = sshll.u32 %s5, 4
      %s39 = int_to_ptr.hbm [resolvable:$true] %s38
      %s40 = sshll.u32 [#allocation3], 4
      %s41 = int_to_ptr.vmem [resolvable:$true] %s40
      %46 = dma.hbm_to_vmem [thread:$0]  %s39, 24576, %s41, [#allocation4], 128, 128, 8
    $region25: #{diffwave_forward.1} parent=1 // pred_fallthru
      _
    // Predicated region
    $region26: #{diffwave_forward.1} parent=1 // pred_check
      _
    $region27: #{diffwave_forward.1} parent=1 // pred_check_branch
      %48 = sbr.rel (0) target = $region29
    $region28: #{diffwave_forward.1} parent=1 // pred_region
      _
    $region29: #{diffwave_forward.1} parent=1 // pred_fallthru
      _
    // Predicated region
    $region30: #{diffwave_forward.1} parent=1 // pred_check
      _
    $region31: #{diffwave_forward.1} parent=1 // pred_check_branch
      %50 = sbr.rel (0) target = $region33
    $region32: #{diffwave_forward.1} parent=1 // pred_region
      _
    $region33: #{diffwave_forward.1} parent=1 // pred_fallthru
      _
    // Predicated region
    $region34: #{diffwave_forward.1} parent=1 // pred_check
      _
    $region35: #{diffwave_forward.1} parent=1 // pred_check_branch
      %52 = sbr.rel (0) target = $region37
    $region36: #{diffwave_forward.1} parent=1 // pred_region
      _
    $region37: #{diffwave_forward.1} parent=1 // pred_fallthru
      _
    // Predicated region
    $region38: #{diffwave_forward.1} parent=1 // pred_check
      _
    $region39: #{diffwave_forward.1} parent=1 // pred_check_branch
      %54 = sbr.rel (0) target = $region41
    $region40: #{diffwave_forward.1} parent=1 // pred_region
      _
    $region41: #{diffwave_forward.1} parent=1 // pred_fallthru
      _
    // Predicated region
    $region42: #{diffwave_forward.1} parent=1 // pred_check
      _
    $region43: #{diffwave_forward.1} parent=1 // pred_check_branch
      %56 = sbr.rel (0) target = $region45
    $region44: #{diffwave_forward.1} parent=1 // pred_region
      _
    $region45: #{diffwave_forward.1} parent=1 // pred_fallthru
      _
    // Predicated region
    $region46: #{diffwave_forward.1} parent=1 // pred_check
      _
    $region47: #{diffwave_forward.1} parent=1 // pred_check_branch
      %58 = sbr.rel (0) target = $region49
    $region48: #{diffwave_forward.1} parent=1 // pred_region
      _
    $region49: #{diffwave_forward.1} parent=1 // pred_fallthru
      _
    // Predicated region
    $region50: #{diffwave_forward.1} parent=1 // pred_check
      _
    $region51: #{diffwave_forward.1} parent=1 // pred_check_branch
      %60 = sbr.rel (0) target = $region53
    $region52: #{diffwave_forward.1} parent=1 // pred_region
      _
    $region53: #{diffwave_forward.1} parent=1 // pred_fallthru
      _
    // Predicated region
    $region54: #{diffwave_forward.1} parent=1 // pred_check
      _
    $region55: #{diffwave_forward.1} parent=1 // pred_check_branch
      %62 = sbr.rel (0) target = $region57
    $region56: #{diffwave_forward.1} parent=1 // pred_region
      _
    $region57: #{diffwave_forward.1} parent=1 // pred_fallthru
      _
    // Predicated region
    $region58: #{diffwave_forward.1} parent=1 // pred_check
      _
    $region59: #{diffwave_forward.1} parent=1 // pred_check_branch
      %64 = sbr.rel (0) target = $region61
    $region60: #{diffwave_forward.1} parent=1 // pred_region
      %66 = dma.done [#allocation4], 24576
    $region61: #{diffwave_forward.1} parent=1 // pred_fallthru
      _
    %v67 = vlaneseq
    %v68 = vand.u32 %v67, 127
    %vm69 = vcmp.lt.s32.totalorder %v68, 64
    %v70 = vsel %vm69, 0.70710677, 1.0
    %v71 = vld [vmem:[%s0] sm:$0xff]
    %v72 = vld [vmem:[%s0 + $0x8] sm:$0xff]
    %v73 = vld [vmem:[%s0 + $0x10] sm:$0xff]
    %v74 = vld [vmem:[%s0 + $0x18] sm:$0xff]
    %v75 = vld [vmem:[%s0 + $0x20] sm:$0xff]
    %v76 = vld [vmem:[%s0 + $0x28] sm:$0xff]
    %v77 = vld [vmem:[%s0 + $0x30] sm:$0xff]
    %v78 = vld [vmem:[%s0 + $0x38] sm:$0xff]
    %v79 = vld [vmem:[%s0 + $0x40] sm:$0xff]
    %v80 = vld [vmem:[%s0 + $0x48] sm:$0xff]
    %v81 = vld [vmem:[%s0 + $0x50] sm:$0xff]
    %v82 = vld [vmem:[%s0 + $0x58] sm:$0xff]
    %v83 = vld [vmem:[%s0 + $0x60] sm:$0xff]
    %v84 = vld [vmem:[%s0 + $0x68] sm:$0xff]
    %v85 = vld [vmem:[%s0 + $0x70] sm:$0xff]
    %v86 = vld [vmem:[%s0 + $0x78] sm:$0xff]
    %v87 = vld [vmem:[%s0 + $0x80] sm:$0xff]
    %v88 = vld [vmem:[%s0 + $0x88] sm:$0xff]
    %v89 = vld [vmem:[%s0 + $0x90] sm:$0xff]
    %v90 = vld [vmem:[%s0 + $0x98] sm:$0xff]
    %v91 = vld [vmem:[%s0 + $0xa0] sm:$0xff]
    %v92 = vld [vmem:[%s0 + $0xa8] sm:$0xff]
    %v93 = vld [vmem:[%s0 + $0xb0] sm:$0xff]
    %v94 = vld [vmem:[%s0 + $0xb8] sm:$0xff]
    %v95 = vld [vmem:[%s0 + $0xc0] sm:$0xff]
    %v96 = vld [vmem:[%s0 + $0xc8] sm:$0xff]
    %v97 = vld [vmem:[%s0 + $0xd0] sm:$0xff]
    %v98 = vld [vmem:[%s0 + $0xd8] sm:$0xff]
    %v99 = vld [vmem:[%s0 + $0xe0] sm:$0xff]
    %v100 = vld [vmem:[%s0 + $0xe8] sm:$0xff]
    %v101 = vld [vmem:[%s0 + $0xf0] sm:$0xff]
    %v102 = vld [vmem:[%s0 + $0xf8] sm:$0xff]
    %v103 = vld [vmem:[%s3] sm:$0x1]
    %105 = vset.pattern.permute.xlu0 0
    %106 = vperm.xlu0 %105, %v71
    %v107 = vpop.permute.xlu0 %106
    %110 = vset.pattern.permute.xlu0 0
    %111 = vperm.xlu0 %110, %v72
    %v112 = vpop.permute.xlu0 %111
    %115 = vset.pattern.permute.xlu0 0
    %116 = vperm.xlu0 %115, %v73
    %v117 = vpop.permute.xlu0 %116
    %120 = vset.pattern.permute.xlu0 0
    %121 = vperm.xlu0 %120, %v74
    %v122 = vpop.permute.xlu0 %121
    %125 = vset.pattern.permute.xlu0 0
    %126 = vperm.xlu0 %125, %v75
    %v127 = vpop.permute.xlu0 %126
    %130 = vset.pattern.permute.xlu0 0
    %131 = vperm.xlu0 %130, %v76
    %v132 = vpop.permute.xlu0 %131
    %135 = vset.pattern.permute.xlu0 0
    %136 = vperm.xlu0 %135, %v77
    %v137 = vpop.permute.xlu0 %136
    %140 = vset.pattern.permute.xlu0 0
    %141 = vperm.xlu0 %140, %v78
    %v142 = vpop.permute.xlu0 %141
    %145 = vset.pattern.permute.xlu0 0
    %146 = vperm.xlu0 %145, %v79
    %v147 = vpop.permute.xlu0 %146
    %150 = vset.pattern.permute.xlu0 0
    %151 = vperm.xlu0 %150, %v80
    %v152 = vpop.permute.xlu0 %151
    %155 = vset.pattern.permute.xlu0 0
    %156 = vperm.xlu0 %155, %v81
    %v157 = vpop.permute.xlu0 %156
    %160 = vset.pattern.permute.xlu0 0
    %161 = vperm.xlu0 %160, %v82
    %v162 = vpop.permute.xlu0 %161
    %165 = vset.pattern.permute.xlu0 0
    %166 = vperm.xlu0 %165, %v83
    %v167 = vpop.permute.xlu0 %166
    %170 = vset.pattern.permute.xlu0 0
    %171 = vperm.xlu0 %170, %v84
    %v172 = vpop.permute.xlu0 %171
    %175 = vset.pattern.permute.xlu0 0
    %176 = vperm.xlu0 %175, %v85
    %v177 = vpop.permute.xlu0 %176
    %180 = vset.pattern.permute.xlu0 0
    %181 = vperm.xlu0 %180, %v86
    %v182 = vpop.permute.xlu0 %181
    %185 = vset.pattern.permute.xlu0 0
    %186 = vperm.xlu0 %185, %v87
    %v187 = vpop.permute.xlu0 %186
    %190 = vset.pattern.permute.xlu0 0
    %191 = vperm.xlu0 %190, %v88
    %v192 = vpop.permute.xlu0 %191
    %195 = vset.pattern.permute.xlu0 0
    %196 = vperm.xlu0 %195, %v89
    %v197 = vpop.permute.xlu0 %196
    %200 = vset.pattern.permute.xlu0 0
    %201 = vperm.xlu0 %200, %v90
    %v202 = vpop.permute.xlu0 %201
    %205 = vset.pattern.permute.xlu0 0
    %206 = vperm.xlu0 %205, %v91
    %v207 = vpop.permute.xlu0 %206
    %210 = vset.pattern.permute.xlu0 0
    %211 = vperm.xlu0 %210, %v92
    %v212 = vpop.permute.xlu0 %211
    %215 = vset.pattern.permute.xlu0 0
    %216 = vperm.xlu0 %215, %v93
    %v217 = vpop.permute.xlu0 %216
    %220 = vset.pattern.permute.xlu0 0
    %221 = vperm.xlu0 %220, %v94
    %v222 = vpop.permute.xlu0 %221
    %225 = vset.pattern.permute.xlu0 0
    %226 = vperm.xlu0 %225, %v95
    %v227 = vpop.permute.xlu0 %226
    %230 = vset.pattern.permute.xlu0 0
    %231 = vperm.xlu0 %230, %v96
    %v232 = vpop.permute.xlu0 %231
    %235 = vset.pattern.permute.xlu0 0
    %236 = vperm.xlu0 %235, %v97
    %v237 = vpop.permute.xlu0 %236
    %240 = vset.pattern.permute.xlu0 0
    %241 = vperm.xlu0 %240, %v98
    %v242 = vpop.permute.xlu0 %241
    %245 = vset.pattern.permute.xlu0 0
    %246 = vperm.xlu0 %245, %v99
    %v247 = vpop.permute.xlu0 %246
    %250 = vset.pattern.permute.xlu0 0
    %251 = vperm.xlu0 %250, %v100
    %v252 = vpop.permute.xlu0 %251
    %255 = vset.pattern.permute.xlu0 0
    %256 = vperm.xlu0 %255, %v101
    %v257 = vpop.permute.xlu0 %256
    %260 = vset.pattern.permute.xlu0 0
    %261 = vperm.xlu0 %260, %v102
    %v262 = vpop.permute.xlu0 %261
    %v265 = vperm.slane %v103, 0
    %v267 = vmul.f32 %v107, %v265
    %v268 = vmul.f32 %v112, %v265
    %v269 = vmul.f32 %v117, %v265
    %v270 = vmul.f32 %v122, %v265
    %v271 = vmul.f32 %v127, %v265
    %v272 = vmul.f32 %v132, %v265
    %v273 = vmul.f32 %v137, %v265
    %v274 = vmul.f32 %v142, %v265
    %v275 = vmul.f32 %v147, %v265
    %v276 = vmul.f32 %v152, %v265
    %v277 = vmul.f32 %v157, %v265
    %v278 = vmul.f32 %v162, %v265
    %v279 = vmul.f32 %v167, %v265
    %v280 = vmul.f32 %v172, %v265
    %v281 = vmul.f32 %v177, %v265
    %v282 = vmul.f32 %v182, %v265
    %v283 = vmul.f32 %v187, %v265
    %v284 = vmul.f32 %v192, %v265
    %v285 = vmul.f32 %v197, %v265
    %v286 = vmul.f32 %v202, %v265
    %v287 = vmul.f32 %v207, %v265
    %v288 = vmul.f32 %v212, %v265
    %v289 = vmul.f32 %v217, %v265
    %v290 = vmul.f32 %v222, %v265
    %v291 = vmul.f32 %v227, %v265
    %v292 = vmul.f32 %v232, %v265
    %v293 = vmul.f32 %v237, %v265
    %v294 = vmul.f32 %v242, %v265
    %v295 = vmul.f32 %v247, %v265
    %v296 = vmul.f32 %v252, %v265
    %v297 = vmul.f32 %v257, %v265
    %v298 = vmul.f32 %v262, %v265
    %v299 = vld [vmem:[%s4] sm:$0x1]
    %v301 = vperm.slane %v299, 0
    %v303 = vadd.f32 %v267, %v301
    %v304 = vadd.f32 %v268, %v301
    %v305 = vadd.f32 %v269, %v301
    %v306 = vadd.f32 %v270, %v301
    %v307 = vadd.f32 %v271, %v301
    %v308 = vadd.f32 %v272, %v301
    %v309 = vadd.f32 %v273, %v301
    %v310 = vadd.f32 %v274, %v301
    %v311 = vadd.f32 %v275, %v301
    %v312 = vadd.f32 %v276, %v301
    %v313 = vadd.f32 %v277, %v301
    %v314 = vadd.f32 %v278, %v301
    %v315 = vadd.f32 %v279, %v301
    %v316 = vadd.f32 %v280, %v301
    %v317 = vadd.f32 %v281, %v301
    %v318 = vadd.f32 %v282, %v301
    %v319 = vadd.f32 %v283, %v301
    %v320 = vadd.f32 %v284, %v301
    %v321 = vadd.f32 %v285, %v301
    %v322 = vadd.f32 %v286, %v301
    %v323 = vadd.f32 %v287, %v301
    %v324 = vadd.f32 %v288, %v301
    %v325 = vadd.f32 %v289, %v301
    %v326 = vadd.f32 %v290, %v301
    %v327 = vadd.f32 %v291, %v301
    %v328 = vadd.f32 %v292, %v301
    %v329 = vadd.f32 %v293, %v301
    %v330 = vadd.f32 %v294, %v301
    %v331 = vadd.f32 %v295, %v301
    %v332 = vadd.f32 %v296, %v301
    %v333 = vadd.f32 %v297, %v301
    %v334 = vadd.f32 %v298, %v301
    %v335 = vmax.f32 %v303, 0.0
    %v336 = vmax.f32 %v304, 0.0
    %v337 = vmax.f32 %v305, 0.0
    %v338 = vmax.f32 %v306, 0.0
    %v339 = vmax.f32 %v307, 0.0
    %v340 = vmax.f32 %v308, 0.0
    %v341 = vmax.f32 %v309, 0.0
    %v342 = vmax.f32 %v310, 0.0
    %v343 = vmax.f32 %v311, 0.0
    %v344 = vmax.f32 %v312, 0.0
    %v345 = vmax.f32 %v313, 0.0
    %v346 = vmax.f32 %v314, 0.0
    %v347 = vmax.f32 %v315, 0.0
    %v348 = vmax.f32 %v316, 0.0
    %v349 = vmax.f32 %v317, 0.0
    %v350 = vmax.f32 %v318, 0.0
    %v351 = vmax.f32 %v319, 0.0
    %v352 = vmax.f32 %v320, 0.0
    %v353 = vmax.f32 %v321, 0.0
    %v354 = vmax.f32 %v322, 0.0
    %v355 = vmax.f32 %v323, 0.0
    %v356 = vmax.f32 %v324, 0.0
    %v357 = vmax.f32 %v325, 0.0
    %v358 = vmax.f32 %v326, 0.0
    %v359 = vmax.f32 %v327, 0.0
    %v360 = vmax.f32 %v328, 0.0
    %v361 = vmax.f32 %v329, 0.0
    %v362 = vmax.f32 %v330, 0.0
    %v363 = vmax.f32 %v331, 0.0
    %v364 = vmax.f32 %v332, 0.0
    %v365 = vmax.f32 %v333, 0.0
    %v366 = vmax.f32 %v334, 0.0
    %v367 = vlaneseq
    %v368 = vshrl.u32 %v367, 7
    %v369 = vadd.s32 %v368, 8
    %v370 = vadd.s32 %v368, 16
    %v371 = vadd.s32 %v368, 24
    %v372 = vadd.s32 %v368, 32
    %v373 = vadd.s32 %v368, 40
    %v374 = vadd.s32 %v368, 48
    %v375 = vadd.s32 %v368, 56
    %v376 = vadd.s32 %v368, 64
    %v377 = vadd.s32 %v368, 72
    %v378 = vadd.s32 %v368, 80
    %v379 = vadd.s32 %v368, 88
    %v380 = vadd.s32 %v368, 96
    %v381 = vadd.s32 %v368, 104
    %v382 = vadd.s32 %v368, 112
    %v383 = vadd.s32 %v368, 120
    %v384 = vadd.s32 %v368, 128
    %v385 = vadd.s32 %v368, 136
    %v386 = vadd.s32 %v368, 144
    %v387 = vadd.s32 %v368, 152
    %v388 = vadd.s32 %v368, 160
    %v389 = vadd.s32 %v368, 168
    %v390 = vadd.s32 %v368, 176
    %v391 = vadd.s32 %v368, 184
    %v392 = vadd.s32 %v368, 192
    %v393 = vadd.s32 %v368, 200
    %v394 = vadd.s32 %v368, 208
    %v395 = vadd.s32 %v368, 216
    %v396 = vadd.s32 %v368, 224
    %v397 = vadd.s32 %v368, 232
    %v398 = vadd.s32 %v368, 240
    %v399 = vadd.s32 %v368, 248
    %v400 = vand.u32 %v368, 127
    %v401 = vand.u32 %v369, 127
    %v402 = vand.u32 %v370, 127
    %v403 = vand.u32 %v371, 127
    %v404 = vand.u32 %v372, 127
    %v405 = vand.u32 %v373, 127
    %v406 = vand.u32 %v374, 127
    %v407 = vand.u32 %v375, 127
    %v408 = vand.u32 %v376, 127
    %v409 = vand.u32 %v377, 127
    %v410 = vand.u32 %v378, 127
    %v411 = vand.u32 %v379, 127
    %v412 = vand.u32 %v380, 127
    %v413 = vand.u32 %v381, 127
    %v414 = vand.u32 %v382, 127
    %v415 = vand.u32 %v383, 127
    %v416 = vand.u32 %v384, 127
    %v417 = vand.u32 %v385, 127
    %v418 = vand.u32 %v386, 127
    %v419 = vand.u32 %v387, 127
    %v420 = vand.u32 %v388, 127
    %v421 = vand.u32 %v389, 127
    %v422 = vand.u32 %v390, 127
    %v423 = vand.u32 %v391, 127
    %v424 = vand.u32 %v392, 127
    %v425 = vand.u32 %v393, 127
    %v426 = vand.u32 %v394, 127
    %v427 = vand.u32 %v395, 127
    %v428 = vand.u32 %v396, 127
    %v429 = vand.u32 %v397, 127
    %v430 = vand.u32 %v398, 127
    %v431 = vand.u32 %v399, 127
    %v432 = vld [vmem:[%s1] sm:$0xff]
    %v433 = vld [vmem:[%s1 + $0x8] sm:$0xff]
    %v434 = vld [vmem:[%s1 + $0x10] sm:$0xff]
    %v435 = vld [vmem:[%s1 + $0x18] sm:$0xff]
    %v436 = vld [vmem:[%s1 + $0x20] sm:$0xff]
    %v437 = vld [vmem:[%s1 + $0x28] sm:$0xff]
    %v438 = vld [vmem:[%s1 + $0x30] sm:$0xff]
    %v439 = vld [vmem:[%s1 + $0x38] sm:$0xff]
    %v440 = vld [vmem:[%s1 + $0x40] sm:$0xff]
    %v441 = vld [vmem:[%s1 + $0x48] sm:$0xff]
    %v442 = vld [vmem:[%s1 + $0x50] sm:$0xff]
    %v443 = vld [vmem:[%s1 + $0x58] sm:$0xff]
    %v444 = vld [vmem:[%s1 + $0x60] sm:$0xff]
    %v445 = vld [vmem:[%s1 + $0x68] sm:$0xff]
    %v446 = vld [vmem:[%s1 + $0x70] sm:$0xff]
    %v447 = vld [vmem:[%s1 + $0x78] sm:$0xff]
    %v448 = vld [vmem:[%s1 + $0x80] sm:$0xff]
    %v449 = vld [vmem:[%s1 + $0x88] sm:$0xff]
    %v450 = vld [vmem:[%s1 + $0x90] sm:$0xff]
    %v451 = vld [vmem:[%s1 + $0x98] sm:$0xff]
    %v452 = vld [vmem:[%s1 + $0xa0] sm:$0xff]
    %v453 = vld [vmem:[%s1 + $0xa8] sm:$0xff]
    %v454 = vld [vmem:[%s1 + $0xb0] sm:$0xff]
    %v455 = vld [vmem:[%s1 + $0xb8] sm:$0xff]
    %v456 = vld [vmem:[%s1 + $0xc0] sm:$0xff]
    %v457 = vld [vmem:[%s1 + $0xc8] sm:$0xff]
    %v458 = vld [vmem:[%s1 + $0xd0] sm:$0xff]
    %v459 = vld [vmem:[%s1 + $0xd8] sm:$0xff]
    %v460 = vld [vmem:[%s1 + $0xe0] sm:$0xff]
    %v461 = vld [vmem:[%s1 + $0xe8] sm:$0xff]
    %v462 = vld [vmem:[%s1 + $0xf0] sm:$0xff]
    %v463 = vld [vmem:[%s1 + $0xf8] sm:$0xff]
    %v464 = vld [vmem:[%s2] sm:$0xf]
    %v465 = vld [vmem:[%s2 + $0x4] sm:$0xf]
    %v466 = vperm.slane %v464, 0
    %v467 = vperm.slane %v465, 0
    %v468 = vadd.f32 %v335, %v466
    %v469 = vadd.f32 %v336, %v466
    %v470 = vadd.f32 %v337, %v466
    %v471 = vadd.f32 %v338, %v466
    %v472 = vadd.f32 %v339, %v466
    %v473 = vadd.f32 %v340, %v466
    %v474 = vadd.f32 %v341, %v466
    %v475 = vadd.f32 %v342, %v466
    %v476 = vadd.f32 %v343, %v466
    %v477 = vadd.f32 %v344, %v466
    %v478 = vadd.f32 %v345, %v466
    %v479 = vadd.f32 %v346, %v466
    %v480 = vadd.f32 %v347, %v466
    %v481 = vadd.f32 %v348, %v466
    %v482 = vadd.f32 %v349, %v466
    %v483 = vadd.f32 %v350, %v466
    %v484 = vadd.f32 %v351, %v467
    %v485 = vadd.f32 %v352, %v467
    %v486 = vadd.f32 %v353, %v467
    %v487 = vadd.f32 %v354, %v467
    %v488 = vadd.f32 %v355, %v467
    %v489 = vadd.f32 %v356, %v467
    %v490 = vadd.f32 %v357, %v467
    %v491 = vadd.f32 %v358, %v467
    %v492 = vadd.f32 %v359, %v467
    %v493 = vadd.f32 %v360, %v467
    %v494 = vadd.f32 %v361, %v467
    %v495 = vadd.f32 %v362, %v467
    %v496 = vadd.f32 %v363, %v467
    %v497 = vadd.f32 %v364, %v467
    %v498 = vadd.f32 %v365, %v467
    %v499 = vadd.f32 %v366, %v467
    %vm500 = vcmp.ge.s32.totalorder %v400, 1
    %vm501 = vcmp.ge.s32.totalorder %v401, 1
    %vm502 = vcmp.ge.s32.totalorder %v402, 1
    %vm503 = vcmp.ge.s32.totalorder %v403, 1
    %vm504 = vcmp.ge.s32.totalorder %v404, 1
    %vm505 = vcmp.ge.s32.totalorder %v405, 1
    %vm506 = vcmp.ge.s32.totalorder %v406, 1
    %vm507 = vcmp.ge.s32.totalorder %v407, 1
    %vm508 = vcmp.ge.s32.totalorder %v408, 1
    %vm509 = vcmp.ge.s32.totalorder %v409, 1
    %vm510 = vcmp.ge.s32.totalorder %v410, 1
    %vm511 = vcmp.ge.s32.totalorder %v411, 1
    %vm512 = vcmp.ge.s32.totalorder %v412, 1
    %vm513 = vcmp.ge.s32.totalorder %v413, 1
    %vm514 = vcmp.ge.s32.totalorder %v414, 1
    %vm515 = vcmp.ge.s32.totalorder %v415, 1
    %vm516 = vcmp.ge.s32.totalorder %v416, 1
    %vm517 = vcmp.ge.s32.totalorder %v417, 1
    %vm518 = vcmp.ge.s32.totalorder %v418, 1
    %vm519 = vcmp.ge.s32.totalorder %v419, 1
    %vm520 = vcmp.ge.s32.totalorder %v420, 1
    %vm521 = vcmp.ge.s32.totalorder %v421, 1
    %vm522 = vcmp.ge.s32.totalorder %v422, 1
    %vm523 = vcmp.ge.s32.totalorder %v423, 1
    %vm524 = vcmp.ge.s32.totalorder %v424, 1
    %vm525 = vcmp.ge.s32.totalorder %v425, 1
    %vm526 = vcmp.ge.s32.totalorder %v426, 1
    %vm527 = vcmp.ge.s32.totalorder %v427, 1
    %vm528 = vcmp.ge.s32.totalorder %v428, 1
    %vm529 = vcmp.ge.s32.totalorder %v429, 1
    %vm530 = vcmp.ge.s32.totalorder %v430, 1
    %vm531 = vcmp.ge.s32.totalorder %v431, 1
    %v532 = vrot.slane %v468, 7
    %v533 = vrot.slane %v469, 7
    %v534 = vrot.slane %v470, 7
    %v535 = vrot.slane %v471, 7
    %v536 = vrot.slane %v472, 7
    %v537 = vrot.slane %v473, 7
    %v538 = vrot.slane %v474, 7
    %v539 = vrot.slane %v475, 7
    %v540 = vrot.slane %v476, 7
    %v541 = vrot.slane %v477, 7
    %v542 = vrot.slane %v478, 7
    %v543 = vrot.slane %v479, 7
    %v544 = vrot.slane %v480, 7
    %v545 = vrot.slane %v481, 7
    %v546 = vrot.slane %v482, 7
    %v547 = vrot.slane %v483, 7
    %v548 = vrot.slane %v484, 7
    %v549 = vrot.slane %v485, 7
    %v550 = vrot.slane %v486, 7
    %v551 = vrot.slane %v487, 7
    %v552 = vrot.slane %v488, 7
    %v553 = vrot.slane %v489, 7
    %v554 = vrot.slane %v490, 7
    %v555 = vrot.slane %v491, 7
    %v556 = vrot.slane %v492, 7
    %v557 = vrot.slane %v493, 7
    %v558 = vrot.slane %v494, 7
    %v559 = vrot.slane %v495, 7
    %v560 = vrot.slane %v496, 7
    %v561 = vrot.slane %v497, 7
    %v562 = vrot.slane %v498, 7
    %v563 = vrot.slane %v499, 7
    %vm564 = vcmp.lt.s32.totalorder %v368, 1
    %v565 = vsel %vm564, %v562, %v563
    %v566 = vsel %vm564, %v561, %v562
    %v567 = vsel %vm564, %v560, %v561
    %v568 = vsel %vm564, %v559, %v560
    %v569 = vsel %vm564, %v558, %v559
    %v570 = vsel %vm564, %v557, %v558
    %v571 = vsel %vm564, %v556, %v557
    %v572 = vsel %vm564, %v555, %v556
    %v573 = vsel %vm564, %v554, %v555
    %v574 = vsel %vm564, %v553, %v554
    %v575 = vsel %vm564, %v552, %v553
    %v576 = vsel %vm564, %v551, %v552
    %v577 = vsel %vm564, %v550, %v551
    %v578 = vsel %vm564, %v549, %v550
    %v579 = vsel %vm564, %v548, %v549
    %v580 = vsel %vm564, %v547, %v548
    %v581 = vsel %vm564, %v546, %v547
    %v582 = vsel %vm564, %v545, %v546
    %v583 = vsel %vm564, %v544, %v545
    %v584 = vsel %vm564, %v543, %v544
    %v585 = vsel %vm564, %v542, %v543
    %v586 = vsel %vm564, %v541, %v542
    %v587 = vsel %vm564, %v540, %v541
    %v588 = vsel %vm564, %v539, %v540
    %v589 = vsel %vm564, %v538, %v539
    %v590 = vsel %vm564, %v537, %v538
    %v591 = vsel %vm564, %v536, %v537
    %v592 = vsel %vm564, %v535, %v536
    %v593 = vsel %vm564, %v534, %v535
    %v594 = vsel %vm564, %v533, %v534
    %v595 = vsel %vm564, %v532, %v533
    %v596 = vsel %vm564, %v563, %v532
    %v597 = vsel %vm500, 1, 0
    %v598 = vsel %vm501, 1, 0
    %v599 = vsel %vm502, 1, 0
    %v600 = vsel %vm503, 1, 0
    %v601 = vsel %vm504, 1, 0
    %v602 = vsel %vm505, 1, 0
    %v603 = vsel %vm506, 1, 0
    %v604 = vsel %vm507, 1, 0
    %v605 = vsel %vm508, 1, 0
    %v606 = vsel %vm509, 1, 0
    %v607 = vsel %vm510, 1, 0
    %v608 = vsel %vm511, 1, 0
    %v609 = vsel %vm512, 1, 0
    %v610 = vsel %vm513, 1, 0
    %v611 = vsel %vm514, 1, 0
    %v612 = vsel %vm515, 1, 0
    %v613 = vsel %vm516, 1, 0
    %v614 = vsel %vm517, 1, 0
    %v615 = vsel %vm518, 1, 0
    %v616 = vsel %vm519, 1, 0
    %v617 = vsel %vm520, 1, 0
    %v618 = vsel %vm521, 1, 0
    %v619 = vsel %vm522, 1, 0
    %v620 = vsel %vm523, 1, 0
    %v621 = vsel %vm524, 1, 0
    %v622 = vsel %vm525, 1, 0
    %v623 = vsel %vm526, 1, 0
    %v624 = vsel %vm527, 1, 0
    %v625 = vsel %vm528, 1, 0
    %v626 = vsel %vm529, 1, 0
    %v627 = vsel %vm530, 1, 0
    %v628 = vsel %vm531, 1, 0
    %vm629 = vcmp.eq.s32.totalorder %v597, 1
    %vm630 = vcmp.eq.s32.totalorder %v598, 1
    %vm631 = vcmp.eq.s32.totalorder %v599, 1
    %vm632 = vcmp.eq.s32.totalorder %v600, 1
    %vm633 = vcmp.eq.s32.totalorder %v601, 1
    %vm634 = vcmp.eq.s32.totalorder %v602, 1
    %vm635 = vcmp.eq.s32.totalorder %v603, 1
    %vm636 = vcmp.eq.s32.totalorder %v604, 1
    %vm637 = vcmp.eq.s32.totalorder %v605, 1
    %vm638 = vcmp.eq.s32.totalorder %v606, 1
    %vm639 = vcmp.eq.s32.totalorder %v607, 1
    %vm640 = vcmp.eq.s32.totalorder %v608, 1
    %vm641 = vcmp.eq.s32.totalorder %v609, 1
    %vm642 = vcmp.eq.s32.totalorder %v610, 1
    %vm643 = vcmp.eq.s32.totalorder %v611, 1
    %vm644 = vcmp.eq.s32.totalorder %v612, 1
    %vm645 = vcmp.eq.s32.totalorder %v613, 1
    %vm646 = vcmp.eq.s32.totalorder %v614, 1
    %vm647 = vcmp.eq.s32.totalorder %v615, 1
    %vm648 = vcmp.eq.s32.totalorder %v616, 1
    %vm649 = vcmp.eq.s32.totalorder %v617, 1
    %vm650 = vcmp.eq.s32.totalorder %v618, 1
    %vm651 = vcmp.eq.s32.totalorder %v619, 1
    %vm652 = vcmp.eq.s32.totalorder %v620, 1
    %vm653 = vcmp.eq.s32.totalorder %v621, 1
    %vm654 = vcmp.eq.s32.totalorder %v622, 1
    %vm655 = vcmp.eq.s32.totalorder %v623, 1
    %vm656 = vcmp.eq.s32.totalorder %v624, 1
    %vm657 = vcmp.eq.s32.totalorder %v625, 1
    %vm658 = vcmp.eq.s32.totalorder %v626, 1
    %vm659 = vcmp.eq.s32.totalorder %v627, 1
    %vm660 = vcmp.eq.s32.totalorder %v628, 1
    %v661 = vsel %vm629, %v596, 0.0
    %v662 = vsel %vm630, %v595, 0.0
    %v663 = vsel %vm631, %v594, 0.0
    %v664 = vsel %vm632, %v593, 0.0
    %v665 = vsel %vm633, %v592, 0.0
    %v666 = vsel %vm634, %v591, 0.0
    %v667 = vsel %vm635, %v590, 0.0
    %v668 = vsel %vm636, %v589, 0.0
    %v669 = vsel %vm637, %v588, 0.0
    %v670 = vsel %vm638, %v587, 0.0
    %v671 = vsel %vm639, %v586, 0.0
    %v672 = vsel %vm640, %v585, 0.0
    %v673 = vsel %vm641, %v584, 0.0
    %v674 = vsel %vm642, %v583, 0.0
    %v675 = vsel %vm643, %v582, 0.0
    %v676 = vsel %vm644, %v581, 0.0
    %v677 = vsel %vm645, %v580, 0.0
    %v678 = vsel %vm646, %v579, 0.0
    %v679 = vsel %vm647, %v578, 0.0
    %v680 = vsel %vm648, %v577, 0.0
    %v681 = vsel %vm649, %v576, 0.0
    %v682 = vsel %vm650, %v575, 0.0
    %v683 = vsel %vm651, %v574, 0.0
    %v684 = vsel %vm652, %v573, 0.0
    %v685 = vsel %vm653, %v572, 0.0
    %v686 = vsel %vm654, %v571, 0.0
    %v687 = vsel %vm655, %v570, 0.0
    %v688 = vsel %vm656, %v569, 0.0
    %v689 = vsel %vm657, %v568, 0.0
    %v690 = vsel %vm658, %v567, 0.0
    %v691 = vsel %vm659, %v566, 0.0
    %v692 = vsel %vm660, %v565, 0.0
    %vm693 = vcmp.lt.s32.totalorder %v400, 127
    %vm694 = vcmp.lt.s32.totalorder %v401, 127
    %vm695 = vcmp.lt.s32.totalorder %v402, 127
    %vm696 = vcmp.lt.s32.totalorder %v403, 127
    %vm697 = vcmp.lt.s32.totalorder %v404, 127
    %vm698 = vcmp.lt.s32.totalorder %v405, 127
    %vm699 = vcmp.lt.s32.totalorder %v406, 127
    %vm700 = vcmp.lt.s32.totalorder %v407, 127
    %vm701 = vcmp.lt.s32.totalorder %v408, 127
    %vm702 = vcmp.lt.s32.totalorder %v409, 127
    %vm703 = vcmp.lt.s32.totalorder %v410, 127
    %vm704 = vcmp.lt.s32.totalorder %v411, 127
    %vm705 = vcmp.lt.s32.totalorder %v412, 127
    %vm706 = vcmp.lt.s32.totalorder %v413, 127
    %vm707 = vcmp.lt.s32.totalorder %v414, 127
    %vm708 = vcmp.lt.s32.totalorder %v415, 127
    %vm709 = vcmp.lt.s32.totalorder %v416, 127
    %vm710 = vcmp.lt.s32.totalorder %v417, 127
    %vm711 = vcmp.lt.s32.totalorder %v418, 127
    %vm712 = vcmp.lt.s32.totalorder %v419, 127
    %vm713 = vcmp.lt.s32.totalorder %v420, 127
    %vm714 = vcmp.lt.s32.totalorder %v421, 127
    %vm715 = vcmp.lt.s32.totalorder %v422, 127
    %vm716 = vcmp.lt.s32.totalorder %v423, 127
    %vm717 = vcmp.lt.s32.totalorder %v424, 127
    %vm718 = vcmp.lt.s32.totalorder %v425, 127
    %vm719 = vcmp.lt.s32.totalorder %v426, 127
    %vm720 = vcmp.lt.s32.totalorder %v427, 127
    %vm721 = vcmp.lt.s32.totalorder %v428, 127
    %vm722 = vcmp.lt.s32.totalorder %v429, 127
    %vm723 = vcmp.lt.s32.totalorder %v430, 127
    %vm724 = vcmp.lt.s32.totalorder %v431, 127
    %v725 = vrot.slane %v468, 1
    %v726 = vrot.slane %v469, 1
    %v727 = vrot.slane %v470, 1
    %v728 = vrot.slane %v471, 1
    %v729 = vrot.slane %v472, 1
    %v730 = vrot.slane %v473, 1
    %v731 = vrot.slane %v474, 1
    %v732 = vrot.slane %v475, 1
    %v733 = vrot.slane %v476, 1
    %v734 = vrot.slane %v477, 1
    %v735 = vrot.slane %v478, 1
    %v736 = vrot.slane %v479, 1
    %v737 = vrot.slane %v480, 1
    %v738 = vrot.slane %v481, 1
    %v739 = vrot.slane %v482, 1
    %v740 = vrot.slane %v483, 1
    %v741 = vrot.slane %v484, 1
    %v742 = vrot.slane %v485, 1
    %v743 = vrot.slane %v486, 1
    %v744 = vrot.slane %v487, 1
    %v745 = vrot.slane %v488, 1
    %v746 = vrot.slane %v489, 1
    %v747 = vrot.slane %v490, 1
    %v748 = vrot.slane %v491, 1
    %v749 = vrot.slane %v492, 1
    %v750 = vrot.slane %v493, 1
    %v751 = vrot.slane %v494, 1
    %v752 = vrot.slane %v495, 1
    %v753 = vrot.slane %v496, 1
    %v754 = vrot.slane %v497, 1
    %v755 = vrot.slane %v498, 1
    %v756 = vrot.slane %v499, 1
    %vm757 = vcmp.lt.s32.totalorder %v368, 7
    %v758 = vsel %vm757, %v755, %v756
    %v759 = vsel %vm757, %v754, %v755
    %v760 = vsel %vm757, %v753, %v754
    %v761 = vsel %vm757, %v752, %v753
    %v762 = vsel %vm757, %v751, %v752
    %v763 = vsel %vm757, %v750, %v751
    %v764 = vsel %vm757, %v749, %v750
    %v765 = vsel %vm757, %v748, %v749
    %v766 = vsel %vm757, %v747, %v748
    %v767 = vsel %vm757, %v746, %v747
    %v768 = vsel %vm757, %v745, %v746
    %v769 = vsel %vm757, %v744, %v745
    %v770 = vsel %vm757, %v743, %v744
    %v771 = vsel %vm757, %v742, %v743
    %v772 = vsel %vm757, %v741, %v742
    %v773 = vsel %vm757, %v740, %v741
    %v774 = vsel %vm757, %v739, %v740
    %v775 = vsel %vm757, %v738, %v739
    %v776 = vsel %vm757, %v737, %v738
    %v777 = vsel %vm757, %v736, %v737
    %v778 = vsel %vm757, %v735, %v736
    %v779 = vsel %vm757, %v734, %v735
    %v780 = vsel %vm757, %v733, %v734
    %v781 = vsel %vm757, %v732, %v733
    %v782 = vsel %vm757, %v731, %v732
    %v783 = vsel %vm757, %v730, %v731
    %v784 = vsel %vm757, %v729, %v730
    %v785 = vsel %vm757, %v728, %v729
    %v786 = vsel %vm757, %v727, %v728
    %v787 = vsel %vm757, %v726, %v727
    %v788 = vsel %vm757, %v725, %v726
    %v789 = vsel %vm757, %v756, %v725
    %v790 = vsel %vm693, 1, 0
    %v791 = vsel %vm694, 1, 0
    %v792 = vsel %vm695, 1, 0
    %v793 = vsel %vm696, 1, 0
    %v794 = vsel %vm697, 1, 0
    %v795 = vsel %vm698, 1, 0
    %v796 = vsel %vm699, 1, 0
    %v797 = vsel %vm700, 1, 0
    %v798 = vsel %vm701, 1, 0
    %v799 = vsel %vm702, 1, 0
    %v800 = vsel %vm703, 1, 0
    %v801 = vsel %vm704, 1, 0
    %v802 = vsel %vm705, 1, 0
    %v803 = vsel %vm706, 1, 0
    %v804 = vsel %vm707, 1, 0
    %v805 = vsel %vm708, 1, 0
    %v806 = vsel %vm709, 1, 0
    %v807 = vsel %vm710, 1, 0
    %v808 = vsel %vm711, 1, 0
    %v809 = vsel %vm712, 1, 0
    %v810 = vsel %vm713, 1, 0
    %v811 = vsel %vm714, 1, 0
    %v812 = vsel %vm715, 1, 0
    %v813 = vsel %vm716, 1, 0
    %v814 = vsel %vm717, 1, 0
    %v815 = vsel %vm718, 1, 0
    %v816 = vsel %vm719, 1, 0
    %v817 = vsel %vm720, 1, 0
    %v818 = vsel %vm721, 1, 0
    %v819 = vsel %vm722, 1, 0
    %v820 = vsel %vm723, 1, 0
    %v821 = vsel %vm724, 1, 0
    %vm822 = vcmp.eq.s32.totalorder %v790, 1
    %vm823 = vcmp.eq.s32.totalorder %v791, 1
    %vm824 = vcmp.eq.s32.totalorder %v792, 1
    %vm825 = vcmp.eq.s32.totalorder %v793, 1
    %vm826 = vcmp.eq.s32.totalorder %v794, 1
    %vm827 = vcmp.eq.s32.totalorder %v795, 1
    %vm828 = vcmp.eq.s32.totalorder %v796, 1
    %vm829 = vcmp.eq.s32.totalorder %v797, 1
    %vm830 = vcmp.eq.s32.totalorder %v798, 1
    %vm831 = vcmp.eq.s32.totalorder %v799, 1
    %vm832 = vcmp.eq.s32.totalorder %v800, 1
    %vm833 = vcmp.eq.s32.totalorder %v801, 1
    %vm834 = vcmp.eq.s32.totalorder %v802, 1
    %vm835 = vcmp.eq.s32.totalorder %v803, 1
    %vm836 = vcmp.eq.s32.totalorder %v804, 1
    %vm837 = vcmp.eq.s32.totalorder %v805, 1
    %vm838 = vcmp.eq.s32.totalorder %v806, 1
    %vm839 = vcmp.eq.s32.totalorder %v807, 1
    %vm840 = vcmp.eq.s32.totalorder %v808, 1
    %vm841 = vcmp.eq.s32.totalorder %v809, 1
    %vm842 = vcmp.eq.s32.totalorder %v810, 1
    %vm843 = vcmp.eq.s32.totalorder %v811, 1
    %vm844 = vcmp.eq.s32.totalorder %v812, 1
    %vm845 = vcmp.eq.s32.totalorder %v813, 1
    %vm846 = vcmp.eq.s32.totalorder %v814, 1
    %vm847 = vcmp.eq.s32.totalorder %v815, 1
    %vm848 = vcmp.eq.s32.totalorder %v816, 1
    %vm849 = vcmp.eq.s32.totalorder %v817, 1
    %vm850 = vcmp.eq.s32.totalorder %v818, 1
    %vm851 = vcmp.eq.s32.totalorder %v819, 1
    %vm852 = vcmp.eq.s32.totalorder %v820, 1
    %vm853 = vcmp.eq.s32.totalorder %v821, 1
    %v854 = vsel %vm822, %v788, 0.0
    %v855 = vsel %vm823, %v787, 0.0
    %v856 = vsel %vm824, %v786, 0.0
    %v857 = vsel %vm825, %v785, 0.0
    %v858 = vsel %vm826, %v784, 0.0
    %v859 = vsel %vm827, %v783, 0.0
    %v860 = vsel %vm828, %v782, 0.0
    %v861 = vsel %vm829, %v781, 0.0
    %v862 = vsel %vm830, %v780, 0.0
    %v863 = vsel %vm831, %v779, 0.0
    %v864 = vsel %vm832, %v778, 0.0
    %v865 = vsel %vm833, %v777, 0.0
    %v866 = vsel %vm834, %v776, 0.0
    %v867 = vsel %vm835, %v775, 0.0
    %v868 = vsel %vm836, %v774, 0.0
    %v869 = vsel %vm837, %v773, 0.0
    %v870 = vsel %vm838, %v772, 0.0
    %v871 = vsel %vm839, %v771, 0.0
    %v872 = vsel %vm840, %v770, 0.0
    %v873 = vsel %vm841, %v769, 0.0
    %v874 = vsel %vm842, %v768, 0.0
    %v875 = vsel %vm843, %v767, 0.0
    %v876 = vsel %vm844, %v766, 0.0
    %v877 = vsel %vm845, %v765, 0.0
    %v878 = vsel %vm846, %v764, 0.0
    %v879 = vsel %vm847, %v763, 0.0
    %v880 = vsel %vm848, %v762, 0.0
    %v881 = vsel %vm849, %v761, 0.0
    %v882 = vsel %vm850, %v760, 0.0
    %v883 = vsel %vm851, %v759, 0.0
    %v884 = vsel %vm852, %v758, 0.0
    %v885 = vsel %vm853, %v789, 0.0
    %v886 = vld [vmem:[%s6] sm:$0x1]
    %v887 = vld [vmem:[#allocation3] sm:$0xff]
    %v888 = vld [vmem:[#allocation3 + $0x8] sm:$0xff]
    %v889 = vld [vmem:[#allocation3 + $0x10] sm:$0xff]
    %v890 = vld [vmem:[#allocation3 + $0x18] sm:$0xff]
    %v891 = vld [vmem:[#allocation3 + $0x20] sm:$0xff]
    %v892 = vld [vmem:[#allocation3 + $0x28] sm:$0xff]
    %v893 = vld [vmem:[#allocation3 + $0x30] sm:$0xff]
    %v894 = vld [vmem:[#allocation3 + $0x38] sm:$0xff]
    %v895 = vld [vmem:[#allocation3 + $0x40] sm:$0xff]
    %v896 = vld [vmem:[#allocation3 + $0x48] sm:$0xff]
    %v897 = vld [vmem:[#allocation3 + $0x50] sm:$0xff]
    %v898 = vld [vmem:[#allocation3 + $0x58] sm:$0xff]
    %v899 = vld [vmem:[#allocation3 + $0x60] sm:$0xff]
    %v900 = vld [vmem:[#allocation3 + $0x68] sm:$0xff]
    %v901 = vld [vmem:[#allocation3 + $0x70] sm:$0xff]
    %v902 = vld [vmem:[#allocation3 + $0x78] sm:$0xff]
    %903 = vmatpush.msra.mxu0 %v902
    %904 = vmatpush.msra.mxu0 %v901
    %905 = vmatpush.msra.mxu0 %v900
    %906 = vmatpush.msra.mxu0 %v899
    %907 = vmatpush.msra.mxu0 %v898
    %908 = vmatpush.msra.mxu0 %v897
    %909 = vmatpush.msra.mxu0 %v896
    %910 = vmatpush.msra.mxu0 %v895
    %911 = vmatpush.msra.mxu0 %v894
    %912 = vmatpush.msra.mxu0 %v893
    %913 = vmatpush.msra.mxu0 %v892
    %914 = vmatpush.msra.mxu0 %v891
    %915 = vmatpush.msra.mxu0 %v890
    %916 = vmatpush.msra.mxu0 %v889
    %917 = vmatpush.msra.mxu0 %v888
    %918 = vmatpush.msra.mxu0 %v887
    %919 = vmatmul.f32.gmra.mxu0 %v661
    %v920 = vpop.f32.mrf.mxu0
    %v921 = vadd.f32 0.0, %v920
    %922 = vmatmul.f32.gmra.mxu0 %v662
    %v923 = vpop.f32.mrf.mxu0
    %v924 = vadd.f32 0.0, %v923
    %925 = vmatmul.f32.gmra.mxu0 %v663
    %v926 = vpop.f32.mrf.mxu0
    %v927 = vadd.f32 0.0, %v926
    %928 = vmatmul.f32.gmra.mxu0 %v664
    %v929 = vpop.f32.mrf.mxu0
    %v930 = vadd.f32 0.0, %v929
    %931 = vmatmul.f32.gmra.mxu0 %v665
    %v932 = vpop.f32.mrf.mxu0
    %v933 = vadd.f32 0.0, %v932
    %934 = vmatmul.f32.gmra.mxu0 %v666
    %v935 = vpop.f32.mrf.mxu0
    %v936 = vadd.f32 0.0, %v935
    %937 = vmatmul.f32.gmra.mxu0 %v667
    %v938 = vpop.f32.mrf.mxu0
    %v939 = vadd.f32 0.0, %v938
    %940 = vmatmul.f32.gmra.mxu0 %v668
    %v941 = vpop.f32.mrf.mxu0
    %v942 = vadd.f32 0.0, %v941
    %943 = vmatmul.f32.gmra.mxu0 %v669
    %v944 = vpop.f32.mrf.mxu0
    %v945 = vadd.f32 0.0, %v944
    %946 = vmatmul.f32.gmra.mxu0 %v670
    %v947 = vpop.f32.mrf.mxu0
    %v948 = vadd.f32 0.0, %v947
    %949 = vmatmul.f32.gmra.mxu0 %v671
    %v950 = vpop.f32.mrf.mxu0
    %v951 = vadd.f32 0.0, %v950
    %952 = vmatmul.f32.gmra.mxu0 %v672
    %v953 = vpop.f32.mrf.mxu0
    %v954 = vadd.f32 0.0, %v953
    %955 = vmatmul.f32.gmra.mxu0 %v673
    %v956 = vpop.f32.mrf.mxu0
    %v957 = vadd.f32 0.0, %v956
    %958 = vmatmul.f32.gmra.mxu0 %v674
    %v959 = vpop.f32.mrf.mxu0
    %v960 = vadd.f32 0.0, %v959
    %961 = vmatmul.f32.gmra.mxu0 %v675
    %v962 = vpop.f32.mrf.mxu0
    %v963 = vadd.f32 0.0, %v962
    %964 = vmatmul.f32.gmra.mxu0 %v676
    %v965 = vpop.f32.mrf.mxu0
    %v966 = vadd.f32 0.0, %v965
    %967 = vmatmul.f32.gmra.mxu0 %v677
    %v968 = vpop.f32.mrf.mxu0
    %v969 = vadd.f32 0.0, %v968
    %970 = vmatmul.f32.gmra.mxu0 %v678
    %v971 = vpop.f32.mrf.mxu0
    %v972 = vadd.f32 0.0, %v971
    %973 = vmatmul.f32.gmra.mxu0 %v679
    %v974 = vpop.f32.mrf.mxu0
    %v975 = vadd.f32 0.0, %v974
    %976 = vmatmul.f32.gmra.mxu0 %v680
    %v977 = vpop.f32.mrf.mxu0
    %v978 = vadd.f32 0.0, %v977
    %979 = vmatmul.f32.gmra.mxu0 %v681
    %v980 = vpop.f32.mrf.mxu0
    %v981 = vadd.f32 0.0, %v980
    %982 = vmatmul.f32.gmra.mxu0 %v682
    %v983 = vpop.f32.mrf.mxu0
    %v984 = vadd.f32 0.0, %v983
    %985 = vmatmul.f32.gmra.mxu0 %v683
    %v986 = vpop.f32.mrf.mxu0
    %v987 = vadd.f32 0.0, %v986
    %988 = vmatmul.f32.gmra.mxu0 %v684
    %v989 = vpop.f32.mrf.mxu0
    %v990 = vadd.f32 0.0, %v989
    %991 = vmatmul.f32.gmra.mxu0 %v685
    %v992 = vpop.f32.mrf.mxu0
    %v993 = vadd.f32 0.0, %v992
    %994 = vmatmul.f32.gmra.mxu0 %v686
    %v995 = vpop.f32.mrf.mxu0
    %v996 = vadd.f32 0.0, %v995
    %997 = vmatmul.f32.gmra.mxu0 %v687
    %v998 = vpop.f32.mrf.mxu0
    %v999 = vadd.f32 0.0, %v998
    %1000 = vmatmul.f32.gmra.mxu0 %v688
    %v1001 = vpop.f32.mrf.mxu0
    %v1002 = vadd.f32 0.0, %v1001
    %1003 = vmatmul.f32.gmra.mxu0 %v689
    %v1004 = vpop.f32.mrf.mxu0
    %v1005 = vadd.f32 0.0, %v1004
    %1006 = vmatmul.f32.gmra.mxu0 %v690
    %v1007 = vpop.f32.mrf.mxu0
    %v1008 = vadd.f32 0.0, %v1007
    %1009 = vmatmul.f32.gmra.mxu0 %v691
    %v1010 = vpop.f32.mrf.mxu0
    %v1011 = vadd.f32 0.0, %v1010
    %1012 = vmatmul.f32.gmra.mxu0 %v692
    %v1013 = vpop.f32.mrf.mxu0
    %v1014 = vadd.f32 0.0, %v1013
    %1015 = vdwg.mxu0
    %v1017 = vperm.slane %v886, 0
    %v1019 = vadd.f32 %v1017, %v921
    %v1020 = vadd.f32 %v1017, %v924
    %v1021 = vadd.f32 %v1017, %v927
    %v1022 = vadd.f32 %v1017, %v930
    %v1023 = vadd.f32 %v1017, %v933
    %v1024 = vadd.f32 %v1017, %v936
    %v1025 = vadd.f32 %v1017, %v939
    %v1026 = vadd.f32 %v1017, %v942
    %v1027 = vadd.f32 %v1017, %v945
    %v1028 = vadd.f32 %v1017, %v948
    %v1029 = vadd.f32 %v1017, %v951
    %v1030 = vadd.f32 %v1017, %v954
    %v1031 = vadd.f32 %v1017, %v957
    %v1032 = vadd.f32 %v1017, %v960
    %v1033 = vadd.f32 %v1017, %v963
    %v1034 = vadd.f32 %v1017, %v966
    %v1035 = vadd.f32 %v1017, %v969
    %v1036 = vadd.f32 %v1017, %v972
    %v1037 = vadd.f32 %v1017, %v975
    %v1038 = vadd.f32 %v1017, %v978
    %v1039 = vadd.f32 %v1017, %v981
    %v1040 = vadd.f32 %v1017, %v984
    %v1041 = vadd.f32 %v1017, %v987
    %v1042 = vadd.f32 %v1017, %v990
    %v1043 = vadd.f32 %v1017, %v993
    %v1044 = vadd.f32 %v1017, %v996
    %v1045 = vadd.f32 %v1017, %v999
    %v1046 = vadd.f32 %v1017, %v1002
    %v1047 = vadd.f32 %v1017, %v1005
    %v1048 = vadd.f32 %v1017, %v1008
    %v1049 = vadd.f32 %v1017, %v1011
    %v1050 = vadd.f32 %v1017, %v1014
    %s1051 = scalar_lea.vmem [#allocation3], 128
    %v1052 = vld [vmem:[%s1051] sm:$0xff]
    %v1053 = vld [vmem:[%s1051 + $0x8] sm:$0xff]
    %v1054 = vld [vmem:[%s1051 + $0x10] sm:$0xff]
    %v1055 = vld [vmem:[%s1051 + $0x18] sm:$0xff]
    %v1056 = vld [vmem:[%s1051 + $0x20] sm:$0xff]
    %v1057 = vld [vmem:[%s1051 + $0x28] sm:$0xff]
    %v1058 = vld [vmem:[%s1051 + $0x30] sm:$0xff]
    %v1059 = vld [vmem:[%s1051 + $0x38] sm:$0xff]
    %v1060 = vld [vmem:[%s1051 + $0x40] sm:$0xff]
    %v1061 = vld [vmem:[%s1051 + $0x48] sm:$0xff]
    %v1062 = vld [vmem:[%s1051 + $0x50] sm:$0xff]
    %v1063 = vld [vmem:[%s1051 + $0x58] sm:$0xff]
    %v1064 = vld [vmem:[%s1051 + $0x60] sm:$0xff]
    %v1065 = vld [vmem:[%s1051 + $0x68] sm:$0xff]
    %v1066 = vld [vmem:[%s1051 + $0x70] sm:$0xff]
    %v1067 = vld [vmem:[%s1051 + $0x78] sm:$0xff]
    %1068 = vmatpush.msra.mxu0 %v1067
    %1069 = vmatpush.msra.mxu0 %v1066
    %1070 = vmatpush.msra.mxu0 %v1065
    %1071 = vmatpush.msra.mxu0 %v1064
    %1072 = vmatpush.msra.mxu0 %v1063
    %1073 = vmatpush.msra.mxu0 %v1062
    %1074 = vmatpush.msra.mxu0 %v1061
    %1075 = vmatpush.msra.mxu0 %v1060
    %1076 = vmatpush.msra.mxu0 %v1059
    %1077 = vmatpush.msra.mxu0 %v1058
    %1078 = vmatpush.msra.mxu0 %v1057
    %1079 = vmatpush.msra.mxu0 %v1056
    %1080 = vmatpush.msra.mxu0 %v1055
    %1081 = vmatpush.msra.mxu0 %v1054
    %1082 = vmatpush.msra.mxu0 %v1053
    %1083 = vmatpush.msra.mxu0 %v1052
    %1084 = vmatmul.f32.gmra.mxu0 %v468
    %v1085 = vpop.f32.mrf.mxu0
    %v1086 = vadd.f32 0.0, %v1085
    %1087 = vmatmul.f32.gmra.mxu0 %v469
    %v1088 = vpop.f32.mrf.mxu0
    %v1089 = vadd.f32 0.0, %v1088
    %1090 = vmatmul.f32.gmra.mxu0 %v470
    %v1091 = vpop.f32.mrf.mxu0
    %v1092 = vadd.f32 0.0, %v1091
    %1093 = vmatmul.f32.gmra.mxu0 %v471
    %v1094 = vpop.f32.mrf.mxu0
    %v1095 = vadd.f32 0.0, %v1094
    %1096 = vmatmul.f32.gmra.mxu0 %v472
    %v1097 = vpop.f32.mrf.mxu0
    %v1098 = vadd.f32 0.0, %v1097
    %1099 = vmatmul.f32.gmra.mxu0 %v473
    %v1100 = vpop.f32.mrf.mxu0
    %v1101 = vadd.f32 0.0, %v1100
    %1102 = vmatmul.f32.gmra.mxu0 %v474
    %v1103 = vpop.f32.mrf.mxu0
    %v1104 = vadd.f32 0.0, %v1103
    %1105 = vmatmul.f32.gmra.mxu0 %v475
    %v1106 = vpop.f32.mrf.mxu0
    %v1107 = vadd.f32 0.0, %v1106
    %1108 = vmatmul.f32.gmra.mxu0 %v476
    %v1109 = vpop.f32.mrf.mxu0
    %v1110 = vadd.f32 0.0, %v1109
    %1111 = vmatmul.f32.gmra.mxu0 %v477
    %v1112 = vpop.f32.mrf.mxu0
    %v1113 = vadd.f32 0.0, %v1112
    %1114 = vmatmul.f32.gmra.mxu0 %v478
    %v1115 = vpop.f32.mrf.mxu0
    %v1116 = vadd.f32 0.0, %v1115
    %1117 = vmatmul.f32.gmra.mxu0 %v479
    %v1118 = vpop.f32.mrf.mxu0
    %v1119 = vadd.f32 0.0, %v1118
    %1120 = vmatmul.f32.gmra.mxu0 %v480
    %v1121 = vpop.f32.mrf.mxu0
    %v1122 = vadd.f32 0.0, %v1121
    %1123 = vmatmul.f32.gmra.mxu0 %v481
    %v1124 = vpop.f32.mrf.mxu0
    %v1125 = vadd.f32 0.0, %v1124
    %1126 = vmatmul.f32.gmra.mxu0 %v482
    %v1127 = vpop.f32.mrf.mxu0
    %v1128 = vadd.f32 0.0, %v1127
    %1129 = vmatmul.f32.gmra.mxu0 %v483
    %v1130 = vpop.f32.mrf.mxu0
    %v1131 = vadd.f32 0.0, %v1130
    %1132 = vmatmul.f32.gmra.mxu0 %v484
    %v1133 = vpop.f32.mrf.mxu0
    %v1134 = vadd.f32 0.0, %v1133
    %1135 = vmatmul.f32.gmra.mxu0 %v485
    %v1136 = vpop.f32.mrf.mxu0
    %v1137 = vadd.f32 0.0, %v1136
    %1138 = vmatmul.f32.gmra.mxu0 %v486
    %v1139 = vpop.f32.mrf.mxu0
    %v1140 = vadd.f32 0.0, %v1139
    %1141 = vmatmul.f32.gmra.mxu0 %v487
    %v1142 = vpop.f32.mrf.mxu0
    %v1143 = vadd.f32 0.0, %v1142
    %1144 = vmatmul.f32.gmra.mxu0 %v488
    %v1145 = vpop.f32.mrf.mxu0
    %v1146 = vadd.f32 0.0, %v1145
    %1147 = vmatmul.f32.gmra.mxu0 %v489
    %v1148 = vpop.f32.mrf.mxu0
    %v1149 = vadd.f32 0.0, %v1148
    %1150 = vmatmul.f32.gmra.mxu0 %v490
    %v1151 = vpop.f32.mrf.mxu0
    %v1152 = vadd.f32 0.0, %v1151
    %1153 = vmatmul.f32.gmra.mxu0 %v491
    %v1154 = vpop.f32.mrf.mxu0
    %v1155 = vadd.f32 0.0, %v1154
    %1156 = vmatmul.f32.gmra.mxu0 %v492
    %v1157 = vpop.f32.mrf.mxu0
    %v1158 = vadd.f32 0.0, %v1157
    %1159 = vmatmul.f32.gmra.mxu0 %v493
    %v1160 = vpop.f32.mrf.mxu0
    %v1161 = vadd.f32 0.0, %v1160
    %1162 = vmatmul.f32.gmra.mxu0 %v494
    %v1163 = vpop.f32.mrf.mxu0
    %v1164 = vadd.f32 0.0, %v1163
    %1165 = vmatmul.f32.gmra.mxu0 %v495
    %v1166 = vpop.f32.mrf.mxu0
    %v1167 = vadd.f32 0.0, %v1166
    %1168 = vmatmul.f32.gmra.mxu0 %v496
    %v1169 = vpop.f32.mrf.mxu0
    %v1170 = vadd.f32 0.0, %v1169
    %1171 = vmatmul.f32.gmra.mxu0 %v497
    %v1172 = vpop.f32.mrf.mxu0
    %v1173 = vadd.f32 0.0, %v1172
    %1174 = vmatmul.f32.gmra.mxu0 %v498
    %v1175 = vpop.f32.mrf.mxu0
    %v1176 = vadd.f32 0.0, %v1175
    %1177 = vmatmul.f32.gmra.mxu0 %v499
    %v1178 = vpop.f32.mrf.mxu0
    %v1179 = vadd.f32 0.0, %v1178
    %1180 = vdwg.mxu0
    %v1181 = vadd.f32 %v1019, %v1086
    %v1182 = vadd.f32 %v1020, %v1089
    %v1183 = vadd.f32 %v1021, %v1092
    %v1184 = vadd.f32 %v1022, %v1095
    %v1185 = vadd.f32 %v1023, %v1098
    %v1186 = vadd.f32 %v1024, %v1101
    %v1187 = vadd.f32 %v1025, %v1104
    %v1188 = vadd.f32 %v1026, %v1107
    %v1189 = vadd.f32 %v1027, %v1110
    %v1190 = vadd.f32 %v1028, %v1113
    %v1191 = vadd.f32 %v1029, %v1116
    %v1192 = vadd.f32 %v1030, %v1119
    %v1193 = vadd.f32 %v1031, %v1122
    %v1194 = vadd.f32 %v1032, %v1125
    %v1195 = vadd.f32 %v1033, %v1128
    %v1196 = vadd.f32 %v1034, %v1131
    %v1197 = vadd.f32 %v1035, %v1134
    %v1198 = vadd.f32 %v1036, %v1137
    %v1199 = vadd.f32 %v1037, %v1140
    %v1200 = vadd.f32 %v1038, %v1143
    %v1201 = vadd.f32 %v1039, %v1146
    %v1202 = vadd.f32 %v1040, %v1149
    %v1203 = vadd.f32 %v1041, %v1152
    %v1204 = vadd.f32 %v1042, %v1155
    %v1205 = vadd.f32 %v1043, %v1158
    %v1206 = vadd.f32 %v1044, %v1161
    %v1207 = vadd.f32 %v1045, %v1164
    %v1208 = vadd.f32 %v1046, %v1167
    %v1209 = vadd.f32 %v1047, %v1170
    %v1210 = vadd.f32 %v1048, %v1173
    %v1211 = vadd.f32 %v1049, %v1176
    %v1212 = vadd.f32 %v1050, %v1179
    %s1213 = scalar_lea.vmem [#allocation3], 256
    %v1214 = vld [vmem:[%s1213] sm:$0xff]
    %v1215 = vld [vmem:[%s1213 + $0x8] sm:$0xff]
    %v1216 = vld [vmem:[%s1213 + $0x10] sm:$0xff]
    %v1217 = vld [vmem:[%s1213 + $0x18] sm:$0xff]
    %v1218 = vld [vmem:[%s1213 + $0x20] sm:$0xff]
    %v1219 = vld [vmem:[%s1213 + $0x28] sm:$0xff]
    %v1220 = vld [vmem:[%s1213 + $0x30] sm:$0xff]
    %v1221 = vld [vmem:[%s1213 + $0x38] sm:$0xff]
    %v1222 = vld [vmem:[%s1213 + $0x40] sm:$0xff]
    %v1223 = vld [vmem:[%s1213 + $0x48] sm:$0xff]
    %v1224 = vld [vmem:[%s1213 + $0x50] sm:$0xff]
    %v1225 = vld [vmem:[%s1213 + $0x58] sm:$0xff]
    %v1226 = vld [vmem:[%s1213 + $0x60] sm:$0xff]
    %v1227 = vld [vmem:[%s1213 + $0x68] sm:$0xff]
    %v1228 = vld [vmem:[%s1213 + $0x70] sm:$0xff]
    %v1229 = vld [vmem:[%s1213 + $0x78] sm:$0xff]
    %1230 = vmatpush.msra.mxu0 %v1229
    %1231 = vmatpush.msra.mxu0 %v1228
    %1232 = vmatpush.msra.mxu0 %v1227
    %1233 = vmatpush.msra.mxu0 %v1226
    %1234 = vmatpush.msra.mxu0 %v1225
    %1235 = vmatpush.msra.mxu0 %v1224
    %1236 = vmatpush.msra.mxu0 %v1223
    %1237 = vmatpush.msra.mxu0 %v1222
    %1238 = vmatpush.msra.mxu0 %v1221
    %1239 = vmatpush.msra.mxu0 %v1220
    %1240 = vmatpush.msra.mxu0 %v1219
    %1241 = vmatpush.msra.mxu0 %v1218
    %1242 = vmatpush.msra.mxu0 %v1217
    %1243 = vmatpush.msra.mxu0 %v1216
    %1244 = vmatpush.msra.mxu0 %v1215
    %1245 = vmatpush.msra.mxu0 %v1214
    %1246 = vmatmul.f32.gmra.mxu0 %v854
    %v1247 = vpop.f32.mrf.mxu0
    %v1248 = vadd.f32 0.0, %v1247
    %1249 = vmatmul.f32.gmra.mxu0 %v855
    %v1250 = vpop.f32.mrf.mxu0
    %v1251 = vadd.f32 0.0, %v1250
    %1252 = vmatmul.f32.gmra.mxu0 %v856
    %v1253 = vpop.f32.mrf.mxu0
    %v1254 = vadd.f32 0.0, %v1253
    %1255 = vmatmul.f32.gmra.mxu0 %v857
    %v1256 = vpop.f32.mrf.mxu0
    %v1257 = vadd.f32 0.0, %v1256
    %1258 = vmatmul.f32.gmra.mxu0 %v858
    %v1259 = vpop.f32.mrf.mxu0
    %v1260 = vadd.f32 0.0, %v1259
    %1261 = vmatmul.f32.gmra.mxu0 %v859
    %v1262 = vpop.f32.mrf.mxu0
    %v1263 = vadd.f32 0.0, %v1262
    %1264 = vmatmul.f32.gmra.mxu0 %v860
    %v1265 = vpop.f32.mrf.mxu0
    %v1266 = vadd.f32 0.0, %v1265
    %1267 = vmatmul.f32.gmra.mxu0 %v861
    %v1268 = vpop.f32.mrf.mxu0
    %v1269 = vadd.f32 0.0, %v1268
    %1270 = vmatmul.f32.gmra.mxu0 %v862
    %v1271 = vpop.f32.mrf.mxu0
    %v1272 = vadd.f32 0.0, %v1271
    %1273 = vmatmul.f32.gmra.mxu0 %v863
    %v1274 = vpop.f32.mrf.mxu0
    %v1275 = vadd.f32 0.0, %v1274
    %1276 = vmatmul.f32.gmra.mxu0 %v864
    %v1277 = vpop.f32.mrf.mxu0
    %v1278 = vadd.f32 0.0, %v1277
    %1279 = vmatmul.f32.gmra.mxu0 %v865
    %v1280 = vpop.f32.mrf.mxu0
    %v1281 = vadd.f32 0.0, %v1280
    %1282 = vmatmul.f32.gmra.mxu0 %v866
    %v1283 = vpop.f32.mrf.mxu0
    %v1284 = vadd.f32 0.0, %v1283
    %1285 = vmatmul.f32.gmra.mxu0 %v867
    %v1286 = vpop.f32.mrf.mxu0
    %v1287 = vadd.f32 0.0, %v1286
    %1288 = vmatmul.f32.gmra.mxu0 %v868
    %v1289 = vpop.f32.mrf.mxu0
    %v1290 = vadd.f32 0.0, %v1289
    %1291 = vmatmul.f32.gmra.mxu0 %v869
    %v1292 = vpop.f32.mrf.mxu0
    %v1293 = vadd.f32 0.0, %v1292
    %1294 = vmatmul.f32.gmra.mxu0 %v870
    %v1295 = vpop.f32.mrf.mxu0
    %v1296 = vadd.f32 0.0, %v1295
    %1297 = vmatmul.f32.gmra.mxu0 %v871
    %v1298 = vpop.f32.mrf.mxu0
    %v1299 = vadd.f32 0.0, %v1298
    %1300 = vmatmul.f32.gmra.mxu0 %v872
    %v1301 = vpop.f32.mrf.mxu0
    %v1302 = vadd.f32 0.0, %v1301
    %1303 = vmatmul.f32.gmra.mxu0 %v873
    %v1304 = vpop.f32.mrf.mxu0
    %v1305 = vadd.f32 0.0, %v1304
    %1306 = vmatmul.f32.gmra.mxu0 %v874
    %v1307 = vpop.f32.mrf.mxu0
    %v1308 = vadd.f32 0.0, %v1307
    %1309 = vmatmul.f32.gmra.mxu0 %v875
    %v1310 = vpop.f32.mrf.mxu0
    %v1311 = vadd.f32 0.0, %v1310
    %1312 = vmatmul.f32.gmra.mxu0 %v876
    %v1313 = vpop.f32.mrf.mxu0
    %v1314 = vadd.f32 0.0, %v1313
    %1315 = vmatmul.f32.gmra.mxu0 %v877
    %v1316 = vpop.f32.mrf.mxu0
    %v1317 = vadd.f32 0.0, %v1316
    %1318 = vmatmul.f32.gmra.mxu0 %v878
    %v1319 = vpop.f32.mrf.mxu0
    %v1320 = vadd.f32 0.0, %v1319
    %1321 = vmatmul.f32.gmra.mxu0 %v879
    %v1322 = vpop.f32.mrf.mxu0
    %v1323 = vadd.f32 0.0, %v1322
    %1324 = vmatmul.f32.gmra.mxu0 %v880
    %v1325 = vpop.f32.mrf.mxu0
    %v1326 = vadd.f32 0.0, %v1325
    %1327 = vmatmul.f32.gmra.mxu0 %v881
    %v1328 = vpop.f32.mrf.mxu0
    %v1329 = vadd.f32 0.0, %v1328
    %1330 = vmatmul.f32.gmra.mxu0 %v882
    %v1331 = vpop.f32.mrf.mxu0
    %v1332 = vadd.f32 0.0, %v1331
    %1333 = vmatmul.f32.gmra.mxu0 %v883
    %v1334 = vpop.f32.mrf.mxu0
    %v1335 = vadd.f32 0.0, %v1334
    %1336 = vmatmul.f32.gmra.mxu0 %v884
    %v1337 = vpop.f32.mrf.mxu0
    %v1338 = vadd.f32 0.0, %v1337
    %1339 = vmatmul.f32.gmra.mxu0 %v885
    %v1340 = vpop.f32.mrf.mxu0
    %v1341 = vadd.f32 0.0, %v1340
    %1342 = vdwg.mxu0
    %v1343 = vadd.f32 %v1181, %v1248
    %v1344 = vadd.f32 %v1182, %v1251
    %v1345 = vadd.f32 %v1183, %v1254
    %v1346 = vadd.f32 %v1184, %v1257
    %v1347 = vadd.f32 %v1185, %v1260
    %v1348 = vadd.f32 %v1186, %v1263
    %v1349 = vadd.f32 %v1187, %v1266
    %v1350 = vadd.f32 %v1188, %v1269
    %v1351 = vadd.f32 %v1189, %v1272
    %v1352 = vadd.f32 %v1190, %v1275
    %v1353 = vadd.f32 %v1191, %v1278
    %v1354 = vadd.f32 %v1192, %v1281
    %v1355 = vadd.f32 %v1193, %v1284
    %v1356 = vadd.f32 %v1194, %v1287
    %v1357 = vadd.f32 %v1195, %v1290
    %v1358 = vadd.f32 %v1196, %v1293
    %v1359 = vadd.f32 %v1197, %v1296
    %v1360 = vadd.f32 %v1198, %v1299
    %v1361 = vadd.f32 %v1199, %v1302
    %v1362 = vadd.f32 %v1200, %v1305
    %v1363 = vadd.f32 %v1201, %v1308
    %v1364 = vadd.f32 %v1202, %v1311
    %v1365 = vadd.f32 %v1203, %v1314
    %v1366 = vadd.f32 %v1204, %v1317
    %v1367 = vadd.f32 %v1205, %v1320
    %v1368 = vadd.f32 %v1206, %v1323
    %v1369 = vadd.f32 %v1207, %v1326
    %v1370 = vadd.f32 %v1208, %v1329
    %v1371 = vadd.f32 %v1209, %v1332
    %v1372 = vadd.f32 %v1210, %v1335
    %v1373 = vadd.f32 %v1211, %v1338
    %v1374 = vadd.f32 %v1212, %v1341
    %v1375 = vld [vmem:[%s7] sm:$0xff]
    %v1376 = vld [vmem:[%s7 + $0x8] sm:$0xff]
    %v1377 = vld [vmem:[%s7 + $0x10] sm:$0xff]
    %v1378 = vld [vmem:[%s7 + $0x18] sm:$0xff]
    %vm1379 = vcmask 261120
    %v1381 = vsel %vm1379, %v432, 0
    %v1384 = vsel %vm1379, %v433, 0
    %v1387 = vsel %vm1379, %v434, 0
    %v1390 = vsel %vm1379, %v435, 0
    %v1393 = vsel %vm1379, %v436, 0
    %v1396 = vsel %vm1379, %v437, 0
    %v1399 = vsel %vm1379, %v438, 0
    %v1402 = vsel %vm1379, %v439, 0
    %v1405 = vsel %vm1379, %v440, 0
    %v1408 = vsel %vm1379, %v441, 0
    %v1411 = vsel %vm1379, %v442, 0
    %v1414 = vsel %vm1379, %v443, 0
    %v1417 = vsel %vm1379, %v444, 0
    %v1420 = vsel %vm1379, %v445, 0
    %v1423 = vsel %vm1379, %v446, 0
    %v1426 = vsel %vm1379, %v447, 0
    %v1429 = vsel %vm1379, %v448, 0
    %v1432 = vsel %vm1379, %v449, 0
    %v1435 = vsel %vm1379, %v450, 0
    %v1438 = vsel %vm1379, %v451, 0
    %v1441 = vsel %vm1379, %v452, 0
    %v1444 = vsel %vm1379, %v453, 0
    %v1447 = vsel %vm1379, %v454, 0
    %v1450 = vsel %vm1379, %v455, 0
    %v1453 = vsel %vm1379, %v456, 0
    %v1456 = vsel %vm1379, %v457, 0
    %v1459 = vsel %vm1379, %v458, 0
    %v1462 = vsel %vm1379, %v459, 0
    %v1465 = vsel %vm1379, %v460, 0
    %v1468 = vsel %vm1379, %v461, 0
    %v1471 = vsel %vm1379, %v462, 0
    %v1474 = vsel %vm1379, %v463, 0
    %1476 = vmatpush.msra.mxu0 0.0
    %1477 = vmatpush.msra.mxu0 0.0
    %1478 = vmatpush.msra.mxu0 0.0
    %1479 = vmatpush.msra.mxu0 0.0
    %1480 = vmatpush.msra.mxu0 0.0
    %1481 = vmatpush.msra.mxu0 0.0
    %1482 = vmatpush.msra.mxu0 0.0
    %1483 = vmatpush.msra.mxu0 0.0
    %1484 = vmatpush.msra.mxu0 0.0
    %1485 = vmatpush.msra.mxu0 0.0
    %1486 = vmatpush.msra.mxu0 0.0
    %1487 = vmatpush.msra.mxu0 0.0
    %1488 = vmatpush.msra.mxu0 %v1378
    %1489 = vmatpush.msra.mxu0 %v1377
    %1490 = vmatpush.msra.mxu0 %v1376
    %1491 = vmatpush.msra.mxu0 %v1375
    %1492 = vmatmul.f32.gmra.mxu0 %v1381
    %v1493 = vpop.f32.mrf.mxu0
    %v1494 = vadd.f32 0.0, %v1493
    %1495 = vmatmul.f32.gmra.mxu0 %v1384
    %v1496 = vpop.f32.mrf.mxu0
    %v1497 = vadd.f32 0.0, %v1496
    %1498 = vmatmul.f32.gmra.mxu0 %v1387
    %v1499 = vpop.f32.mrf.mxu0
    %v1500 = vadd.f32 0.0, %v1499
    %1501 = vmatmul.f32.gmra.mxu0 %v1390
    %v1502 = vpop.f32.mrf.mxu0
    %v1503 = vadd.f32 0.0, %v1502
    %1504 = vmatmul.f32.gmra.mxu0 %v1393
    %v1505 = vpop.f32.mrf.mxu0
    %v1506 = vadd.f32 0.0, %v1505
    %1507 = vmatmul.f32.gmra.mxu0 %v1396
    %v1508 = vpop.f32.mrf.mxu0
    %v1509 = vadd.f32 0.0, %v1508
    %1510 = vmatmul.f32.gmra.mxu0 %v1399
    %v1511 = vpop.f32.mrf.mxu0
    %v1512 = vadd.f32 0.0, %v1511
    %1513 = vmatmul.f32.gmra.mxu0 %v1402
    %v1514 = vpop.f32.mrf.mxu0
    %v1515 = vadd.f32 0.0, %v1514
    %1516 = vmatmul.f32.gmra.mxu0 %v1405
    %v1517 = vpop.f32.mrf.mxu0
    %v1518 = vadd.f32 0.0, %v1517
    %1519 = vmatmul.f32.gmra.mxu0 %v1408
    %v1520 = vpop.f32.mrf.mxu0
    %v1521 = vadd.f32 0.0, %v1520
    %1522 = vmatmul.f32.gmra.mxu0 %v1411
    %v1523 = vpop.f32.mrf.mxu0
    %v1524 = vadd.f32 0.0, %v1523
    %1525 = vmatmul.f32.gmra.mxu0 %v1414
    %v1526 = vpop.f32.mrf.mxu0
    %v1527 = vadd.f32 0.0, %v1526
    %1528 = vmatmul.f32.gmra.mxu0 %v1417
    %v1529 = vpop.f32.mrf.mxu0
    %v1530 = vadd.f32 0.0, %v1529
    %1531 = vmatmul.f32.gmra.mxu0 %v1420
    %v1532 = vpop.f32.mrf.mxu0
    %v1533 = vadd.f32 0.0, %v1532
    %1534 = vmatmul.f32.gmra.mxu0 %v1423
    %v1535 = vpop.f32.mrf.mxu0
    %v1536 = vadd.f32 0.0, %v1535
    %1537 = vmatmul.f32.gmra.mxu0 %v1426
    %v1538 = vpop.f32.mrf.mxu0
    %v1539 = vadd.f32 0.0, %v1538
    %1540 = vmatmul.f32.gmra.mxu0 %v1429
    %v1541 = vpop.f32.mrf.mxu0
    %v1542 = vadd.f32 0.0, %v1541
    %1543 = vmatmul.f32.gmra.mxu0 %v1432
    %v1544 = vpop.f32.mrf.mxu0
    %v1545 = vadd.f32 0.0, %v1544
    %1546 = vmatmul.f32.gmra.mxu0 %v1435
    %v1547 = vpop.f32.mrf.mxu0
    %v1548 = vadd.f32 0.0, %v1547
    %1549 = vmatmul.f32.gmra.mxu0 %v1438
    %v1550 = vpop.f32.mrf.mxu0
    %v1551 = vadd.f32 0.0, %v1550
    %1552 = vmatmul.f32.gmra.mxu0 %v1441
    %v1553 = vpop.f32.mrf.mxu0
    %v1554 = vadd.f32 0.0, %v1553
    %1555 = vmatmul.f32.gmra.mxu0 %v1444
    %v1556 = vpop.f32.mrf.mxu0
    %v1557 = vadd.f32 0.0, %v1556
    %1558 = vmatmul.f32.gmra.mxu0 %v1447
    %v1559 = vpop.f32.mrf.mxu0
    %v1560 = vadd.f32 0.0, %v1559
    %1561 = vmatmul.f32.gmra.mxu0 %v1450
    %v1562 = vpop.f32.mrf.mxu0
    %v1563 = vadd.f32 0.0, %v1562
    %1564 = vmatmul.f32.gmra.mxu0 %v1453
    %v1565 = vpop.f32.mrf.mxu0
    %v1566 = vadd.f32 0.0, %v1565
    %1567 = vmatmul.f32.gmra.mxu0 %v1456
    %v1568 = vpop.f32.mrf.mxu0
    %v1569 = vadd.f32 0.0, %v1568
    %1570 = vmatmul.f32.gmra.mxu0 %v1459
    %v1571 = vpop.f32.mrf.mxu0
    %v1572 = vadd.f32 0.0, %v1571
    %1573 = vmatmul.f32.gmra.mxu0 %v1462
    %v1574 = vpop.f32.mrf.mxu0
    %v1575 = vadd.f32 0.0, %v1574
    %1576 = vmatmul.f32.gmra.mxu0 %v1465
    %v1577 = vpop.f32.mrf.mxu0
    %v1578 = vadd.f32 0.0, %v1577
    %1579 = vmatmul.f32.gmra.mxu0 %v1468
    %v1580 = vpop.f32.mrf.mxu0
    %v1581 = vadd.f32 0.0, %v1580
    %1582 = vmatmul.f32.gmra.mxu0 %v1471
    %v1583 = vpop.f32.mrf.mxu0
    %v1584 = vadd.f32 0.0, %v1583
    %1585 = vmatmul.f32.gmra.mxu0 %v1474
    %v1586 = vpop.f32.mrf.mxu0
    %v1587 = vadd.f32 0.0, %v1586
    %1588 = vdwg.mxu0
    %v1589 = vadd.f32 %v1343, %v1494
    %v1590 = vadd.f32 %v1344, %v1497
    %v1591 = vadd.f32 %v1345, %v1500
    %v1592 = vadd.f32 %v1346, %v1503
    %v1593 = vadd.f32 %v1347, %v1506
    %v1594 = vadd.f32 %v1348, %v1509
    %v1595 = vadd.f32 %v1349, %v1512
    %v1596 = vadd.f32 %v1350, %v1515
    %v1597 = vadd.f32 %v1351, %v1518
    %v1598 = vadd.f32 %v1352, %v1521
    %v1599 = vadd.f32 %v1353, %v1524
    %v1600 = vadd.f32 %v1354, %v1527
    %v1601 = vadd.f32 %v1355, %v1530
    %v1602 = vadd.f32 %v1356, %v1533
    %v1603 = vadd.f32 %v1357, %v1536
    %v1604 = vadd.f32 %v1358, %v1539
    %v1605 = vadd.f32 %v1359, %v1542
    %v1606 = vadd.f32 %v1360, %v1545
    %v1607 = vadd.f32 %v1361, %v1548
    %v1608 = vadd.f32 %v1362, %v1551
    %v1609 = vadd.f32 %v1363, %v1554
    %v1610 = vadd.f32 %v1364, %v1557
    %v1611 = vadd.f32 %v1365, %v1560
    %v1612 = vadd.f32 %v1366, %v1563
    %v1613 = vadd.f32 %v1367, %v1566
    %v1614 = vadd.f32 %v1368, %v1569
    %v1615 = vadd.f32 %v1369, %v1572
    %v1616 = vadd.f32 %v1370, %v1575
    %v1617 = vadd.f32 %v1371, %v1578
    %v1618 = vadd.f32 %v1372, %v1581
    %v1619 = vadd.f32 %v1373, %v1584
    %v1620 = vadd.f32 %v1374, %v1587
    %v1621 = vtanh.pop %v1589
    %v1622 = vtanh.pop %v1590
    %v1623 = vtanh.pop %v1591
    %v1624 = vtanh.pop %v1592
    %v1625 = vtanh.pop %v1593
    %v1626 = vtanh.pop %v1594
    %v1627 = vtanh.pop %v1595
    %v1628 = vtanh.pop %v1596
    %v1629 = vtanh.pop %v1597
    %v1630 = vtanh.pop %v1598
    %v1631 = vtanh.pop %v1599
    %v1632 = vtanh.pop %v1600
    %v1633 = vtanh.pop %v1601
    %v1634 = vtanh.pop %v1602
    %v1635 = vtanh.pop %v1603
    %v1636 = vtanh.pop %v1604
    %v1637 = vtanh.pop %v1605
    %v1638 = vtanh.pop %v1606
    %v1639 = vtanh.pop %v1607
    %v1640 = vtanh.pop %v1608
    %v1641 = vtanh.pop %v1609
    %v1642 = vtanh.pop %v1610
    %v1643 = vtanh.pop %v1611
    %v1644 = vtanh.pop %v1612
    %v1645 = vtanh.pop %v1613
    %v1646 = vtanh.pop %v1614
    %v1647 = vtanh.pop %v1615
    %v1648 = vtanh.pop %v1616
    %v1649 = vtanh.pop %v1617
    %v1650 = vtanh.pop %v1618
    %v1651 = vtanh.pop %v1619
    %v1652 = vtanh.pop %v1620
    %1653 = vrot.lane.b32.xlu0 %v1589, 64
    %v1654 = vpop.permute.xlu0 %1653
    %1655 = vrot.lane.b32.xlu0 %v1590, 64
    %v1656 = vpop.permute.xlu0 %1655
    %1657 = vrot.lane.b32.xlu0 %v1591, 64
    %v1658 = vpop.permute.xlu0 %1657
    %1659 = vrot.lane.b32.xlu0 %v1592, 64
    %v1660 = vpop.permute.xlu0 %1659
    %1661 = vrot.lane.b32.xlu0 %v1593, 64
    %v1662 = vpop.permute.xlu0 %1661
    %1663 = vrot.lane.b32.xlu0 %v1594, 64
    %v1664 = vpop.permute.xlu0 %1663
    %1665 = vrot.lane.b32.xlu0 %v1595, 64
    %v1666 = vpop.permute.xlu0 %1665
    %1667 = vrot.lane.b32.xlu0 %v1596, 64
    %v1668 = vpop.permute.xlu0 %1667
    %1669 = vrot.lane.b32.xlu0 %v1597, 64
    %v1670 = vpop.permute.xlu0 %1669
    %1671 = vrot.lane.b32.xlu0 %v1598, 64
    %v1672 = vpop.permute.xlu0 %1671
    %1673 = vrot.lane.b32.xlu0 %v1599, 64
    %v1674 = vpop.permute.xlu0 %1673
    %1675 = vrot.lane.b32.xlu0 %v1600, 64
    %v1676 = vpop.permute.xlu0 %1675
    %1677 = vrot.lane.b32.xlu0 %v1601, 64
    %v1678 = vpop.permute.xlu0 %1677
    %1679 = vrot.lane.b32.xlu0 %v1602, 64
    %v1680 = vpop.permute.xlu0 %1679
    %1681 = vrot.lane.b32.xlu0 %v1603, 64
    %v1682 = vpop.permute.xlu0 %1681
    %1683 = vrot.lane.b32.xlu0 %v1604, 64
    %v1684 = vpop.permute.xlu0 %1683
    %1685 = vrot.lane.b32.xlu0 %v1605, 64
    %v1686 = vpop.permute.xlu0 %1685
    %1687 = vrot.lane.b32.xlu0 %v1606, 64
    %v1688 = vpop.permute.xlu0 %1687
    %1689 = vrot.lane.b32.xlu0 %v1607, 64
    %v1690 = vpop.permute.xlu0 %1689
    %1691 = vrot.lane.b32.xlu0 %v1608, 64
    %v1692 = vpop.permute.xlu0 %1691
    %1693 = vrot.lane.b32.xlu0 %v1609, 64
    %v1694 = vpop.permute.xlu0 %1693
    %1695 = vrot.lane.b32.xlu0 %v1610, 64
    %v1696 = vpop.permute.xlu0 %1695
    %1697 = vrot.lane.b32.xlu0 %v1611, 64
    %v1698 = vpop.permute.xlu0 %1697
    %1699 = vrot.lane.b32.xlu0 %v1612, 64
    %v1700 = vpop.permute.xlu0 %1699
    %1701 = vrot.lane.b32.xlu0 %v1613, 64
    %v1702 = vpop.permute.xlu0 %1701
    %1703 = vrot.lane.b32.xlu0 %v1614, 64
    %v1704 = vpop.permute.xlu0 %1703
    %1705 = vrot.lane.b32.xlu0 %v1615, 64
    %v1706 = vpop.permute.xlu0 %1705
    %1707 = vrot.lane.b32.xlu0 %v1616, 64
    %v1708 = vpop.permute.xlu0 %1707
    %1709 = vrot.lane.b32.xlu0 %v1617, 64
    %v1710 = vpop.permute.xlu0 %1709
    %1711 = vrot.lane.b32.xlu0 %v1618, 64
    %v1712 = vpop.permute.xlu0 %1711
    %1713 = vrot.lane.b32.xlu0 %v1619, 64
    %v1714 = vpop.permute.xlu0 %1713
    %1715 = vrot.lane.b32.xlu0 %v1620, 64
    %v1716 = vpop.permute.xlu0 %1715
    %v1717 = vxor.u32 %v1654, 2147483648
    %v1718 = vxor.u32 %v1656, 2147483648
    %v1719 = vxor.u32 %v1658, 2147483648
    %v1720 = vxor.u32 %v1660, 2147483648
    %v1721 = vxor.u32 %v1662, 2147483648
    %v1722 = vxor.u32 %v1664, 2147483648
    %v1723 = vxor.u32 %v1666, 2147483648
    %v1724 = vxor.u32 %v1668, 2147483648
    %v1725 = vxor.u32 %v1670, 2147483648
    %v1726 = vxor.u32 %v1672, 2147483648
    %v1727 = vxor.u32 %v1674, 2147483648
    %v1728 = vxor.u32 %v1676, 2147483648
    %v1729 = vxor.u32 %v1678, 2147483648
    %v1730 = vxor.u32 %v1680, 2147483648
    %v1731 = vxor.u32 %v1682, 2147483648
    %v1732 = vxor.u32 %v1684, 2147483648
    %v1733 = vxor.u32 %v1686, 2147483648
    %v1734 = vxor.u32 %v1688, 2147483648
    %v1735 = vxor.u32 %v1690, 2147483648
    %v1736 = vxor.u32 %v1692, 2147483648
    %v1737 = vxor.u32 %v1694, 2147483648
    %v1738 = vxor.u32 %v1696, 2147483648
    %v1739 = vxor.u32 %v1698, 2147483648
    %v1740 = vxor.u32 %v1700, 2147483648
    %v1741 = vxor.u32 %v1702, 2147483648
    %v1742 = vxor.u32 %v1704, 2147483648
    %v1743 = vxor.u32 %v1706, 2147483648
    %v1744 = vxor.u32 %v1708, 2147483648
    %v1745 = vxor.u32 %v1710, 2147483648
    %v1746 = vxor.u32 %v1712, 2147483648
    %v1747 = vxor.u32 %v1714, 2147483648
    %v1748 = vxor.u32 %v1716, 2147483648
    %v1749 = vmul.f32 %v1717, 1.442695
    %v1750 = vpow.pop %v1749
    %v1751 = vmul.f32 %v1718, 1.442695
    %v1752 = vpow.pop %v1751
    %v1753 = vmul.f32 %v1719, 1.442695
    %v1754 = vpow.pop %v1753
    %v1755 = vmul.f32 %v1720, 1.442695
    %v1756 = vpow.pop %v1755
    %v1757 = vmul.f32 %v1721, 1.442695
    %v1758 = vpow.pop %v1757
    %v1759 = vmul.f32 %v1722, 1.442695
    %v1760 = vpow.pop %v1759
    %v1761 = vmul.f32 %v1723, 1.442695
    %v1762 = vpow.pop %v1761
    %v1763 = vmul.f32 %v1724, 1.442695
    %v1764 = vpow.pop %v1763
    %v1765 = vmul.f32 %v1725, 1.442695
    %v1766 = vpow.pop %v1765
    %v1767 = vmul.f32 %v1726, 1.442695
    %v1768 = vpow.pop %v1767
    %v1769 = vmul.f32 %v1727, 1.442695
    %v1770 = vpow.pop %v1769
    %v1771 = vmul.f32 %v1728, 1.442695
    %v1772 = vpow.pop %v1771
    %v1773 = vmul.f32 %v1729, 1.442695
    %v1774 = vpow.pop %v1773
    %v1775 = vmul.f32 %v1730, 1.442695
    %v1776 = vpow.pop %v1775
    %v1777 = vmul.f32 %v1731, 1.442695
    %v1778 = vpow.pop %v1777
    %v1779 = vmul.f32 %v1732, 1.442695
    %v1780 = vpow.pop %v1779
    %v1781 = vmul.f32 %v1733, 1.442695
    %v1782 = vpow.pop %v1781
    %v1783 = vmul.f32 %v1734, 1.442695
    %v1784 = vpow.pop %v1783
    %v1785 = vmul.f32 %v1735, 1.442695
    %v1786 = vpow.pop %v1785
    %v1787 = vmul.f32 %v1736, 1.442695
    %v1788 = vpow.pop %v1787
    %v1789 = vmul.f32 %v1737, 1.442695
    %v1790 = vpow.pop %v1789
    %v1791 = vmul.f32 %v1738, 1.442695
    %v1792 = vpow.pop %v1791
    %v1793 = vmul.f32 %v1739, 1.442695
    %v1794 = vpow.pop %v1793
    %v1795 = vmul.f32 %v1740, 1.442695
    %v1796 = vpow.pop %v1795
    %v1797 = vmul.f32 %v1741, 1.442695
    %v1798 = vpow.pop %v1797
    %v1799 = vmul.f32 %v1742, 1.442695
    %v1800 = vpow.pop %v1799
    %v1801 = vmul.f32 %v1743, 1.442695
    %v1802 = vpow.pop %v1801
    %v1803 = vmul.f32 %v1744, 1.442695
    %v1804 = vpow.pop %v1803
    %v1805 = vmul.f32 %v1745, 1.442695
    %v1806 = vpow.pop %v1805
    %v1807 = vmul.f32 %v1746, 1.442695
    %v1808 = vpow.pop %v1807
    %v1809 = vmul.f32 %v1747, 1.442695
    %v1810 = vpow.pop %v1809
    %v1811 = vmul.f32 %v1748, 1.442695
    %v1812 = vpow.pop %v1811
    %v1813 = vadd.f32 %v1750, 1.0
    %v1814 = vadd.f32 %v1752, 1.0
    %v1815 = vadd.f32 %v1754, 1.0
    %v1816 = vadd.f32 %v1756, 1.0
    %v1817 = vadd.f32 %v1758, 1.0
    %v1818 = vadd.f32 %v1760, 1.0
    %v1819 = vadd.f32 %v1762, 1.0
    %v1820 = vadd.f32 %v1764, 1.0
    %v1821 = vadd.f32 %v1766, 1.0
    %v1822 = vadd.f32 %v1768, 1.0
    %v1823 = vadd.f32 %v1770, 1.0
    %v1824 = vadd.f32 %v1772, 1.0
    %v1825 = vadd.f32 %v1774, 1.0
    %v1826 = vadd.f32 %v1776, 1.0
    %v1827 = vadd.f32 %v1778, 1.0
    %v1828 = vadd.f32 %v1780, 1.0
    %v1829 = vadd.f32 %v1782, 1.0
    %v1830 = vadd.f32 %v1784, 1.0
    %v1831 = vadd.f32 %v1786, 1.0
    %v1832 = vadd.f32 %v1788, 1.0
    %v1833 = vadd.f32 %v1790, 1.0
    %v1834 = vadd.f32 %v1792, 1.0
    %v1835 = vadd.f32 %v1794, 1.0
    %v1836 = vadd.f32 %v1796, 1.0
    %v1837 = vadd.f32 %v1798, 1.0
    %v1838 = vadd.f32 %v1800, 1.0
    %v1839 = vadd.f32 %v1802, 1.0
    %v1840 = vadd.f32 %v1804, 1.0
    %v1841 = vadd.f32 %v1806, 1.0
    %v1842 = vadd.f32 %v1808, 1.0
    %v1843 = vadd.f32 %v1810, 1.0
    %v1844 = vadd.f32 %v1812, 1.0
    %v1845 = vrcp.pop %v1813
    %v1846 = vmul.f32 %v1813, %v1845
    %v1847 = vsub.f32 1.0, %v1846
    %v1848 = vmul.f32 %v1845, %v1847
    %v1849 = vadd.f32 %v1845, %v1848
    %vm1850 = vweird.f32 %v1813
    %vm1851 = vweird.f32 %v1845
    %vm1852 = vmor %vm1850, %vm1851
    %v1853 = vsel %vm1852, %v1845, %v1849
    %v1854 = vand.u32 2147483647, %v1813
    %vm1855 = vcmp.eq.f32.partialorder %v1854, 8.507059e+37
    %v1856 = vand.u32 %v1813, 2147483648
    %v1857 = vor.u32 1.1754944e-38, %v1856
    %v1858 = vsel %vm1855, %v1857, %v1853
    %v1859 = vmul.f32 1.0, %v1858
    %v1860 = vrcp.pop %v1814
    %v1861 = vmul.f32 %v1814, %v1860
    %v1862 = vsub.f32 1.0, %v1861
    %v1863 = vmul.f32 %v1860, %v1862
    %v1864 = vadd.f32 %v1860, %v1863
    %vm1865 = vweird.f32 %v1814
    %vm1866 = vweird.f32 %v1860
    %vm1867 = vmor %vm1865, %vm1866
    %v1868 = vsel %vm1867, %v1860, %v1864
    %v1869 = vand.u32 2147483647, %v1814
    %vm1870 = vcmp.eq.f32.partialorder %v1869, 8.507059e+37
    %v1871 = vand.u32 %v1814, 2147483648
    %v1872 = vor.u32 1.1754944e-38, %v1871
    %v1873 = vsel %vm1870, %v1872, %v1868
    %v1874 = vmul.f32 1.0, %v1873
    %v1875 = vrcp.pop %v1815
    %v1876 = vmul.f32 %v1815, %v1875
    %v1877 = vsub.f32 1.0, %v1876
    %v1878 = vmul.f32 %v1875, %v1877
    %v1879 = vadd.f32 %v1875, %v1878
    %vm1880 = vweird.f32 %v1815
    %vm1881 = vweird.f32 %v1875
    %vm1882 = vmor %vm1880, %vm1881
    %v1883 = vsel %vm1882, %v1875, %v1879
    %v1884 = vand.u32 2147483647, %v1815
    %vm1885 = vcmp.eq.f32.partialorder %v1884, 8.507059e+37
    %v1886 = vand.u32 %v1815, 2147483648
    %v1887 = vor.u32 1.1754944e-38, %v1886
    %v1888 = vsel %vm1885, %v1887, %v1883
    %v1889 = vmul.f32 1.0, %v1888
    %v1890 = vrcp.pop %v1816
    %v1891 = vmul.f32 %v1816, %v1890
    %v1892 = vsub.f32 1.0, %v1891
    %v1893 = vmul.f32 %v1890, %v1892
    %v1894 = vadd.f32 %v1890, %v1893
    %vm1895 = vweird.f32 %v1816
    %vm1896 = vweird.f32 %v1890
    %vm1897 = vmor %vm1895, %vm1896
    %v1898 = vsel %vm1897, %v1890, %v1894
    %v1899 = vand.u32 2147483647, %v1816
    %vm1900 = vcmp.eq.f32.partialorder %v1899, 8.507059e+37
    %v1901 = vand.u32 %v1816, 2147483648
    %v1902 = vor.u32 1.1754944e-38, %v1901
    %v1903 = vsel %vm1900, %v1902, %v1898
    %v1904 = vmul.f32 1.0, %v1903
    %v1905 = vrcp.pop %v1817
    %v1906 = vmul.f32 %v1817, %v1905
    %v1907 = vsub.f32 1.0, %v1906
    %v1908 = vmul.f32 %v1905, %v1907
    %v1909 = vadd.f32 %v1905, %v1908
    %vm1910 = vweird.f32 %v1817
    %vm1911 = vweird.f32 %v1905
    %vm1912 = vmor %vm1910, %vm1911
    %v1913 = vsel %vm1912, %v1905, %v1909
    %v1914 = vand.u32 2147483647, %v1817
    %vm1915 = vcmp.eq.f32.partialorder %v1914, 8.507059e+37
    %v1916 = vand.u32 %v1817, 2147483648
    %v1917 = vor.u32 1.1754944e-38, %v1916
    %v1918 = vsel %vm1915, %v1917, %v1913
    %v1919 = vmul.f32 1.0, %v1918
    %v1920 = vrcp.pop %v1818
    %v1921 = vmul.f32 %v1818, %v1920
    %v1922 = vsub.f32 1.0, %v1921
    %v1923 = vmul.f32 %v1920, %v1922
    %v1924 = vadd.f32 %v1920, %v1923
    %vm1925 = vweird.f32 %v1818
    %vm1926 = vweird.f32 %v1920
    %vm1927 = vmor %vm1925, %vm1926
    %v1928 = vsel %vm1927, %v1920, %v1924
    %v1929 = vand.u32 2147483647, %v1818
    %vm1930 = vcmp.eq.f32.partialorder %v1929, 8.507059e+37
    %v1931 = vand.u32 %v1818, 2147483648
    %v1932 = vor.u32 1.1754944e-38, %v1931
    %v1933 = vsel %vm1930, %v1932, %v1928
    %v1934 = vmul.f32 1.0, %v1933
    %v1935 = vrcp.pop %v1819
    %v1936 = vmul.f32 %v1819, %v1935
    %v1937 = vsub.f32 1.0, %v1936
    %v1938 = vmul.f32 %v1935, %v1937
    %v1939 = vadd.f32 %v1935, %v1938
    %vm1940 = vweird.f32 %v1819
    %vm1941 = vweird.f32 %v1935
    %vm1942 = vmor %vm1940, %vm1941
    %v1943 = vsel %vm1942, %v1935, %v1939
    %v1944 = vand.u32 2147483647, %v1819
    %vm1945 = vcmp.eq.f32.partialorder %v1944, 8.507059e+37
    %v1946 = vand.u32 %v1819, 2147483648
    %v1947 = vor.u32 1.1754944e-38, %v1946
    %v1948 = vsel %vm1945, %v1947, %v1943
    %v1949 = vmul.f32 1.0, %v1948
    %v1950 = vrcp.pop %v1820
    %v1951 = vmul.f32 %v1820, %v1950
    %v1952 = vsub.f32 1.0, %v1951
    %v1953 = vmul.f32 %v1950, %v1952
    %v1954 = vadd.f32 %v1950, %v1953
    %vm1955 = vweird.f32 %v1820
    %vm1956 = vweird.f32 %v1950
    %vm1957 = vmor %vm1955, %vm1956
    %v1958 = vsel %vm1957, %v1950, %v1954
    %v1959 = vand.u32 2147483647, %v1820
    %vm1960 = vcmp.eq.f32.partialorder %v1959, 8.507059e+37
    %v1961 = vand.u32 %v1820, 2147483648
    %v1962 = vor.u32 1.1754944e-38, %v1961
    %v1963 = vsel %vm1960, %v1962, %v1958
    %v1964 = vmul.f32 1.0, %v1963
    %v1965 = vrcp.pop %v1821
    %v1966 = vmul.f32 %v1821, %v1965
    %v1967 = vsub.f32 1.0, %v1966
    %v1968 = vmul.f32 %v1965, %v1967
    %v1969 = vadd.f32 %v1965, %v1968
    %vm1970 = vweird.f32 %v1821
    %vm1971 = vweird.f32 %v1965
    %vm1972 = vmor %vm1970, %vm1971
    %v1973 = vsel %vm1972, %v1965, %v1969
    %v1974 = vand.u32 2147483647, %v1821
    %vm1975 = vcmp.eq.f32.partialorder %v1974, 8.507059e+37
    %v1976 = vand.u32 %v1821, 2147483648
    %v1977 = vor.u32 1.1754944e-38, %v1976
    %v1978 = vsel %vm1975, %v1977, %v1973
    %v1979 = vmul.f32 1.0, %v1978
    %v1980 = vrcp.pop %v1822
    %v1981 = vmul.f32 %v1822, %v1980
    %v1982 = vsub.f32 1.0, %v1981
    %v1983 = vmul.f32 %v1980, %v1982
    %v1984 = vadd.f32 %v1980, %v1983
    %vm1985 = vweird.f32 %v1822
    %vm1986 = vweird.f32 %v1980
    %vm1987 = vmor %vm1985, %vm1986
    %v1988 = vsel %vm1987, %v1980, %v1984
    %v1989 = vand.u32 2147483647, %v1822
    %vm1990 = vcmp.eq.f32.partialorder %v1989, 8.507059e+37
    %v1991 = vand.u32 %v1822, 2147483648
    %v1992 = vor.u32 1.1754944e-38, %v1991
    %v1993 = vsel %vm1990, %v1992, %v1988
    %v1994 = vmul.f32 1.0, %v1993
    %v1995 = vrcp.pop %v1823
    %v1996 = vmul.f32 %v1823, %v1995
    %v1997 = vsub.f32 1.0, %v1996
    %v1998 = vmul.f32 %v1995, %v1997
    %v1999 = vadd.f32 %v1995, %v1998
    %vm2000 = vweird.f32 %v1823
    %vm2001 = vweird.f32 %v1995
    %vm2002 = vmor %vm2000, %vm2001
    %v2003 = vsel %vm2002, %v1995, %v1999
    %v2004 = vand.u32 2147483647, %v1823
    %vm2005 = vcmp.eq.f32.partialorder %v2004, 8.507059e+37
    %v2006 = vand.u32 %v1823, 2147483648
    %v2007 = vor.u32 1.1754944e-38, %v2006
    %v2008 = vsel %vm2005, %v2007, %v2003
    %v2009 = vmul.f32 1.0, %v2008
    %v2010 = vrcp.pop %v1824
    %v2011 = vmul.f32 %v1824, %v2010
    %v2012 = vsub.f32 1.0, %v2011
    %v2013 = vmul.f32 %v2010, %v2012
    %v2014 = vadd.f32 %v2010, %v2013
    %vm2015 = vweird.f32 %v1824
    %vm2016 = vweird.f32 %v2010
    %vm2017 = vmor %vm2015, %vm2016
    %v2018 = vsel %vm2017, %v2010, %v2014
    %v2019 = vand.u32 2147483647, %v1824
    %vm2020 = vcmp.eq.f32.partialorder %v2019, 8.507059e+37
    %v2021 = vand.u32 %v1824, 2147483648
    %v2022 = vor.u32 1.1754944e-38, %v2021
    %v2023 = vsel %vm2020, %v2022, %v2018
    %v2024 = vmul.f32 1.0, %v2023
    %v2025 = vrcp.pop %v1825
    %v2026 = vmul.f32 %v1825, %v2025
    %v2027 = vsub.f32 1.0, %v2026
    %v2028 = vmul.f32 %v2025, %v2027
    %v2029 = vadd.f32 %v2025, %v2028
    %vm2030 = vweird.f32 %v1825
    %vm2031 = vweird.f32 %v2025
    %vm2032 = vmor %vm2030, %vm2031
    %v2033 = vsel %vm2032, %v2025, %v2029
    %v2034 = vand.u32 2147483647, %v1825
    %vm2035 = vcmp.eq.f32.partialorder %v2034, 8.507059e+37
    %v2036 = vand.u32 %v1825, 2147483648
    %v2037 = vor.u32 1.1754944e-38, %v2036
    %v2038 = vsel %vm2035, %v2037, %v2033
    %v2039 = vmul.f32 1.0, %v2038
    %v2040 = vrcp.pop %v1826
    %v2041 = vmul.f32 %v1826, %v2040
    %v2042 = vsub.f32 1.0, %v2041
    %v2043 = vmul.f32 %v2040, %v2042
    %v2044 = vadd.f32 %v2040, %v2043
    %vm2045 = vweird.f32 %v1826
    %vm2046 = vweird.f32 %v2040
    %vm2047 = vmor %vm2045, %vm2046
    %v2048 = vsel %vm2047, %v2040, %v2044
    %v2049 = vand.u32 2147483647, %v1826
    %vm2050 = vcmp.eq.f32.partialorder %v2049, 8.507059e+37
    %v2051 = vand.u32 %v1826, 2147483648
    %v2052 = vor.u32 1.1754944e-38, %v2051
    %v2053 = vsel %vm2050, %v2052, %v2048
    %v2054 = vmul.f32 1.0, %v2053
    %v2055 = vrcp.pop %v1827
    %v2056 = vmul.f32 %v1827, %v2055
    %v2057 = vsub.f32 1.0, %v2056
    %v2058 = vmul.f32 %v2055, %v2057
    %v2059 = vadd.f32 %v2055, %v2058
    %vm2060 = vweird.f32 %v1827
    %vm2061 = vweird.f32 %v2055
    %vm2062 = vmor %vm2060, %vm2061
    %v2063 = vsel %vm2062, %v2055, %v2059
    %v2064 = vand.u32 2147483647, %v1827
    %vm2065 = vcmp.eq.f32.partialorder %v2064, 8.507059e+37
    %v2066 = vand.u32 %v1827, 2147483648
    %v2067 = vor.u32 1.1754944e-38, %v2066
    %v2068 = vsel %vm2065, %v2067, %v2063
    %v2069 = vmul.f32 1.0, %v2068
    %v2070 = vrcp.pop %v1828
    %v2071 = vmul.f32 %v1828, %v2070
    %v2072 = vsub.f32 1.0, %v2071
    %v2073 = vmul.f32 %v2070, %v2072
    %v2074 = vadd.f32 %v2070, %v2073
    %vm2075 = vweird.f32 %v1828
    %vm2076 = vweird.f32 %v2070
    %vm2077 = vmor %vm2075, %vm2076
    %v2078 = vsel %vm2077, %v2070, %v2074
    %v2079 = vand.u32 2147483647, %v1828
    %vm2080 = vcmp.eq.f32.partialorder %v2079, 8.507059e+37
    %v2081 = vand.u32 %v1828, 2147483648
    %v2082 = vor.u32 1.1754944e-38, %v2081
    %v2083 = vsel %vm2080, %v2082, %v2078
    %v2084 = vmul.f32 1.0, %v2083
    %v2085 = vrcp.pop %v1829
    %v2086 = vmul.f32 %v1829, %v2085
    %v2087 = vsub.f32 1.0, %v2086
    %v2088 = vmul.f32 %v2085, %v2087
    %v2089 = vadd.f32 %v2085, %v2088
    %vm2090 = vweird.f32 %v1829
    %vm2091 = vweird.f32 %v2085
    %vm2092 = vmor %vm2090, %vm2091
    %v2093 = vsel %vm2092, %v2085, %v2089
    %v2094 = vand.u32 2147483647, %v1829
    %vm2095 = vcmp.eq.f32.partialorder %v2094, 8.507059e+37
    %v2096 = vand.u32 %v1829, 2147483648
    %v2097 = vor.u32 1.1754944e-38, %v2096
    %v2098 = vsel %vm2095, %v2097, %v2093
    %v2099 = vmul.f32 1.0, %v2098
    %v2100 = vrcp.pop %v1830
    %v2101 = vmul.f32 %v1830, %v2100
    %v2102 = vsub.f32 1.0, %v2101
    %v2103 = vmul.f32 %v2100, %v2102
    %v2104 = vadd.f32 %v2100, %v2103
    %vm2105 = vweird.f32 %v1830
    %vm2106 = vweird.f32 %v2100
    %vm2107 = vmor %vm2105, %vm2106
    %v2108 = vsel %vm2107, %v2100, %v2104
    %v2109 = vand.u32 2147483647, %v1830
    %vm2110 = vcmp.eq.f32.partialorder %v2109, 8.507059e+37
    %v2111 = vand.u32 %v1830, 2147483648
    %v2112 = vor.u32 1.1754944e-38, %v2111
    %v2113 = vsel %vm2110, %v2112, %v2108
    %v2114 = vmul.f32 1.0, %v2113
    %v2115 = vrcp.pop %v1831
    %v2116 = vmul.f32 %v1831, %v2115
    %v2117 = vsub.f32 1.0, %v2116
    %v2118 = vmul.f32 %v2115, %v2117
    %v2119 = vadd.f32 %v2115, %v2118
    %vm2120 = vweird.f32 %v1831
    %vm2121 = vweird.f32 %v2115
    %vm2122 = vmor %vm2120, %vm2121
    %v2123 = vsel %vm2122, %v2115, %v2119
    %v2124 = vand.u32 2147483647, %v1831
    %vm2125 = vcmp.eq.f32.partialorder %v2124, 8.507059e+37
    %v2126 = vand.u32 %v1831, 2147483648
    %v2127 = vor.u32 1.1754944e-38, %v2126
    %v2128 = vsel %vm2125, %v2127, %v2123
    %v2129 = vmul.f32 1.0, %v2128
    %v2130 = vrcp.pop %v1832
    %v2131 = vmul.f32 %v1832, %v2130
    %v2132 = vsub.f32 1.0, %v2131
    %v2133 = vmul.f32 %v2130, %v2132
    %v2134 = vadd.f32 %v2130, %v2133
    %vm2135 = vweird.f32 %v1832
    %vm2136 = vweird.f32 %v2130
    %vm2137 = vmor %vm2135, %vm2136
    %v2138 = vsel %vm2137, %v2130, %v2134
    %v2139 = vand.u32 2147483647, %v1832
    %vm2140 = vcmp.eq.f32.partialorder %v2139, 8.507059e+37
    %v2141 = vand.u32 %v1832, 2147483648
    %v2142 = vor.u32 1.1754944e-38, %v2141
    %v2143 = vsel %vm2140, %v2142, %v2138
    %v2144 = vmul.f32 1.0, %v2143
    %v2145 = vrcp.pop %v1833
    %v2146 = vmul.f32 %v1833, %v2145
    %v2147 = vsub.f32 1.0, %v2146
    %v2148 = vmul.f32 %v2145, %v2147
    %v2149 = vadd.f32 %v2145, %v2148
    %vm2150 = vweird.f32 %v1833
    %vm2151 = vweird.f32 %v2145
    %vm2152 = vmor %vm2150, %vm2151
    %v2153 = vsel %vm2152, %v2145, %v2149
    %v2154 = vand.u32 2147483647, %v1833
    %vm2155 = vcmp.eq.f32.partialorder %v2154, 8.507059e+37
    %v2156 = vand.u32 %v1833, 2147483648
    %v2157 = vor.u32 1.1754944e-38, %v2156
    %v2158 = vsel %vm2155, %v2157, %v2153
    %v2159 = vmul.f32 1.0, %v2158
    %v2160 = vrcp.pop %v1834
    %v2161 = vmul.f32 %v1834, %v2160
    %v2162 = vsub.f32 1.0, %v2161
    %v2163 = vmul.f32 %v2160, %v2162
    %v2164 = vadd.f32 %v2160, %v2163
    %vm2165 = vweird.f32 %v1834
    %vm2166 = vweird.f32 %v2160
    %vm2167 = vmor %vm2165, %vm2166
    %v2168 = vsel %vm2167, %v2160, %v2164
    %v2169 = vand.u32 2147483647, %v1834
    %vm2170 = vcmp.eq.f32.partialorder %v2169, 8.507059e+37
    %v2171 = vand.u32 %v1834, 2147483648
    %v2172 = vor.u32 1.1754944e-38, %v2171
    %v2173 = vsel %vm2170, %v2172, %v2168
    %v2174 = vmul.f32 1.0, %v2173
    %v2175 = vrcp.pop %v1835
    %v2176 = vmul.f32 %v1835, %v2175
    %v2177 = vsub.f32 1.0, %v2176
    %v2178 = vmul.f32 %v2175, %v2177
    %v2179 = vadd.f32 %v2175, %v2178
    %vm2180 = vweird.f32 %v1835
    %vm2181 = vweird.f32 %v2175
    %vm2182 = vmor %vm2180, %vm2181
    %v2183 = vsel %vm2182, %v2175, %v2179
    %v2184 = vand.u32 2147483647, %v1835
    %vm2185 = vcmp.eq.f32.partialorder %v2184, 8.507059e+37
    %v2186 = vand.u32 %v1835, 2147483648
    %v2187 = vor.u32 1.1754944e-38, %v2186
    %v2188 = vsel %vm2185, %v2187, %v2183
    %v2189 = vmul.f32 1.0, %v2188
    %v2190 = vrcp.pop %v1836
    %v2191 = vmul.f32 %v1836, %v2190
    %v2192 = vsub.f32 1.0, %v2191
    %v2193 = vmul.f32 %v2190, %v2192
    %v2194 = vadd.f32 %v2190, %v2193
    %vm2195 = vweird.f32 %v1836
    %vm2196 = vweird.f32 %v2190
    %vm2197 = vmor %vm2195, %vm2196
    %v2198 = vsel %vm2197, %v2190, %v2194
    %v2199 = vand.u32 2147483647, %v1836
    %vm2200 = vcmp.eq.f32.partialorder %v2199, 8.507059e+37
    %v2201 = vand.u32 %v1836, 2147483648
    %v2202 = vor.u32 1.1754944e-38, %v2201
    %v2203 = vsel %vm2200, %v2202, %v2198
    %v2204 = vmul.f32 1.0, %v2203
    %v2205 = vrcp.pop %v1837
    %v2206 = vmul.f32 %v1837, %v2205
    %v2207 = vsub.f32 1.0, %v2206
    %v2208 = vmul.f32 %v2205, %v2207
    %v2209 = vadd.f32 %v2205, %v2208
    %vm2210 = vweird.f32 %v1837
    %vm2211 = vweird.f32 %v2205
    %vm2212 = vmor %vm2210, %vm2211
    %v2213 = vsel %vm2212, %v2205, %v2209
    %v2214 = vand.u32 2147483647, %v1837
    %vm2215 = vcmp.eq.f32.partialorder %v2214, 8.507059e+37
    %v2216 = vand.u32 %v1837, 2147483648
    %v2217 = vor.u32 1.1754944e-38, %v2216
    %v2218 = vsel %vm2215, %v2217, %v2213
    %v2219 = vmul.f32 1.0, %v2218
    %v2220 = vrcp.pop %v1838
    %v2221 = vmul.f32 %v1838, %v2220
    %v2222 = vsub.f32 1.0, %v2221
    %v2223 = vmul.f32 %v2220, %v2222
    %v2224 = vadd.f32 %v2220, %v2223
    %vm2225 = vweird.f32 %v1838
    %vm2226 = vweird.f32 %v2220
    %vm2227 = vmor %vm2225, %vm2226
    %v2228 = vsel %vm2227, %v2220, %v2224
    %v2229 = vand.u32 2147483647, %v1838
    %vm2230 = vcmp.eq.f32.partialorder %v2229, 8.507059e+37
    %v2231 = vand.u32 %v1838, 2147483648
    %v2232 = vor.u32 1.1754944e-38, %v2231
    %v2233 = vsel %vm2230, %v2232, %v2228
    %v2234 = vmul.f32 1.0, %v2233
    %v2235 = vrcp.pop %v1839
    %v2236 = vmul.f32 %v1839, %v2235
    %v2237 = vsub.f32 1.0, %v2236
    %v2238 = vmul.f32 %v2235, %v2237
    %v2239 = vadd.f32 %v2235, %v2238
    %vm2240 = vweird.f32 %v1839
    %vm2241 = vweird.f32 %v2235
    %vm2242 = vmor %vm2240, %vm2241
    %v2243 = vsel %vm2242, %v2235, %v2239
    %v2244 = vand.u32 2147483647, %v1839
    %vm2245 = vcmp.eq.f32.partialorder %v2244, 8.507059e+37
    %v2246 = vand.u32 %v1839, 2147483648
    %v2247 = vor.u32 1.1754944e-38, %v2246
    %v2248 = vsel %vm2245, %v2247, %v2243
    %v2249 = vmul.f32 1.0, %v2248
    %v2250 = vrcp.pop %v1840
    %v2251 = vmul.f32 %v1840, %v2250
    %v2252 = vsub.f32 1.0, %v2251
    %v2253 = vmul.f32 %v2250, %v2252
    %v2254 = vadd.f32 %v2250, %v2253
    %vm2255 = vweird.f32 %v1840
    %vm2256 = vweird.f32 %v2250
    %vm2257 = vmor %vm2255, %vm2256
    %v2258 = vsel %vm2257, %v2250, %v2254
    %v2259 = vand.u32 2147483647, %v1840
    %vm2260 = vcmp.eq.f32.partialorder %v2259, 8.507059e+37
    %v2261 = vand.u32 %v1840, 2147483648
    %v2262 = vor.u32 1.1754944e-38, %v2261
    %v2263 = vsel %vm2260, %v2262, %v2258
    %v2264 = vmul.f32 1.0, %v2263
    %v2265 = vrcp.pop %v1841
    %v2266 = vmul.f32 %v1841, %v2265
    %v2267 = vsub.f32 1.0, %v2266
    %v2268 = vmul.f32 %v2265, %v2267
    %v2269 = vadd.f32 %v2265, %v2268
    %vm2270 = vweird.f32 %v1841
    %vm2271 = vweird.f32 %v2265
    %vm2272 = vmor %vm2270, %vm2271
    %v2273 = vsel %vm2272, %v2265, %v2269
    %v2274 = vand.u32 2147483647, %v1841
    %vm2275 = vcmp.eq.f32.partialorder %v2274, 8.507059e+37
    %v2276 = vand.u32 %v1841, 2147483648
    %v2277 = vor.u32 1.1754944e-38, %v2276
    %v2278 = vsel %vm2275, %v2277, %v2273
    %v2279 = vmul.f32 1.0, %v2278
    %v2280 = vrcp.pop %v1842
    %v2281 = vmul.f32 %v1842, %v2280
    %v2282 = vsub.f32 1.0, %v2281
    %v2283 = vmul.f32 %v2280, %v2282
    %v2284 = vadd.f32 %v2280, %v2283
    %vm2285 = vweird.f32 %v1842
    %vm2286 = vweird.f32 %v2280
    %vm2287 = vmor %vm2285, %vm2286
    %v2288 = vsel %vm2287, %v2280, %v2284
    %v2289 = vand.u32 2147483647, %v1842
    %vm2290 = vcmp.eq.f32.partialorder %v2289, 8.507059e+37
    %v2291 = vand.u32 %v1842, 2147483648
    %v2292 = vor.u32 1.1754944e-38, %v2291
    %v2293 = vsel %vm2290, %v2292, %v2288
    %v2294 = vmul.f32 1.0, %v2293
    %v2295 = vrcp.pop %v1843
    %v2296 = vmul.f32 %v1843, %v2295
    %v2297 = vsub.f32 1.0, %v2296
    %v2298 = vmul.f32 %v2295, %v2297
    %v2299 = vadd.f32 %v2295, %v2298
    %vm2300 = vweird.f32 %v1843
    %vm2301 = vweird.f32 %v2295
    %vm2302 = vmor %vm2300, %vm2301
    %v2303 = vsel %vm2302, %v2295, %v2299
    %v2304 = vand.u32 2147483647, %v1843
    %vm2305 = vcmp.eq.f32.partialorder %v2304, 8.507059e+37
    %v2306 = vand.u32 %v1843, 2147483648
    %v2307 = vor.u32 1.1754944e-38, %v2306
    %v2308 = vsel %vm2305, %v2307, %v2303
    %v2309 = vmul.f32 1.0, %v2308
    %v2310 = vrcp.pop %v1844
    %v2311 = vmul.f32 %v1844, %v2310
    %v2312 = vsub.f32 1.0, %v2311
    %v2313 = vmul.f32 %v2310, %v2312
    %v2314 = vadd.f32 %v2310, %v2313
    %vm2315 = vweird.f32 %v1844
    %vm2316 = vweird.f32 %v2310
    %vm2317 = vmor %vm2315, %vm2316
    %v2318 = vsel %vm2317, %v2310, %v2314
    %v2319 = vand.u32 2147483647, %v1844
    %vm2320 = vcmp.eq.f32.partialorder %v2319, 8.507059e+37
    %v2321 = vand.u32 %v1844, 2147483648
    %v2322 = vor.u32 1.1754944e-38, %v2321
    %v2323 = vsel %vm2320, %v2322, %v2318
    %v2324 = vmul.f32 1.0, %v2323
    %v2325 = vmul.f32 %v1621, %v1859
    %v2326 = vmul.f32 %v1622, %v1874
    %v2327 = vmul.f32 %v1623, %v1889
    %v2328 = vmul.f32 %v1624, %v1904
    %v2329 = vmul.f32 %v1625, %v1919
    %v2330 = vmul.f32 %v1626, %v1934
    %v2331 = vmul.f32 %v1627, %v1949
    %v2332 = vmul.f32 %v1628, %v1964
    %v2333 = vmul.f32 %v1629, %v1979
    %v2334 = vmul.f32 %v1630, %v1994
    %v2335 = vmul.f32 %v1631, %v2009
    %v2336 = vmul.f32 %v1632, %v2024
    %v2337 = vmul.f32 %v1633, %v2039
    %v2338 = vmul.f32 %v1634, %v2054
    %v2339 = vmul.f32 %v1635, %v2069
    %v2340 = vmul.f32 %v1636, %v2084
    %v2341 = vmul.f32 %v1637, %v2099
    %v2342 = vmul.f32 %v1638, %v2114
    %v2343 = vmul.f32 %v1639, %v2129
    %v2344 = vmul.f32 %v1640, %v2144
    %v2345 = vmul.f32 %v1641, %v2159
    %v2346 = vmul.f32 %v1642, %v2174
    %v2347 = vmul.f32 %v1643, %v2189
    %v2348 = vmul.f32 %v1644, %v2204
    %v2349 = vmul.f32 %v1645, %v2219
    %v2350 = vmul.f32 %v1646, %v2234
    %v2351 = vmul.f32 %v1647, %v2249
    %v2352 = vmul.f32 %v1648, %v2264
    %v2353 = vmul.f32 %v1649, %v2279
    %v2354 = vmul.f32 %v1650, %v2294
    %v2355 = vmul.f32 %v1651, %v2309
    %v2356 = vmul.f32 %v1652, %v2324
    %v2357 = vld [vmem:[%s8] sm:$0xff]
    %v2358 = vld [vmem:[%s8 + $0x8] sm:$0xff]
    %v2359 = vld [vmem:[%s8 + $0x10] sm:$0xff]
    %v2360 = vld [vmem:[%s8 + $0x18] sm:$0xff]
    %v2361 = vld [vmem:[%s8 + $0x20] sm:$0xff]
    %v2362 = vld [vmem:[%s8 + $0x28] sm:$0xff]
    %v2363 = vld [vmem:[%s8 + $0x30] sm:$0xff]
    %v2364 = vld [vmem:[%s8 + $0x38] sm:$0xff]
    %v2365 = vld [vmem:[%s8 + $0x40] sm:$0xff]
    %v2366 = vld [vmem:[%s8 + $0x48] sm:$0xff]
    %v2367 = vld [vmem:[%s8 + $0x50] sm:$0xff]
    %v2368 = vld [vmem:[%s8 + $0x58] sm:$0xff]
    %v2369 = vld [vmem:[%s8 + $0x60] sm:$0xff]
    %v2370 = vld [vmem:[%s8 + $0x68] sm:$0xff]
    %v2371 = vld [vmem:[%s8 + $0x70] sm:$0xff]
    %v2372 = vld [vmem:[%s8 + $0x78] sm:$0xff]
    %v2373 = vld [vmem:[%s9] sm:$0x1]
    %v2375 = vperm.slane %v2373, 0
    %2377 = vmatpush.msra.mxu0 %v2372
    %2378 = vmatpush.msra.mxu0 %v2371
    %2379 = vmatpush.msra.mxu0 %v2370
    %2380 = vmatpush.msra.mxu0 %v2369
    %2381 = vmatpush.msra.mxu0 %v2368
    %2382 = vmatpush.msra.mxu0 %v2367
    %2383 = vmatpush.msra.mxu0 %v2366
    %2384 = vmatpush.msra.mxu0 %v2365
    %2385 = vmatpush.msra.mxu0 %v2364
    %2386 = vmatpush.msra.mxu0 %v2363
    %2387 = vmatpush.msra.mxu0 %v2362
    %2388 = vmatpush.msra.mxu0 %v2361
    %2389 = vmatpush.msra.mxu0 %v2360
    %2390 = vmatpush.msra.mxu0 %v2359
    %2391 = vmatpush.msra.mxu0 %v2358
    %2392 = vmatpush.msra.mxu0 %v2357
    %2393 = vmatmul.f32.gmra.mxu0 %v2325
    %v2394 = vpop.f32.mrf.mxu0
    %v2395 = vadd.f32 %v2375, %v2394
    %2396 = vmatmul.f32.gmra.mxu0 %v2326
    %v2397 = vpop.f32.mrf.mxu0
    %v2398 = vadd.f32 %v2375, %v2397
    %2399 = vmatmul.f32.gmra.mxu0 %v2327
    %v2400 = vpop.f32.mrf.mxu0
    %v2401 = vadd.f32 %v2375, %v2400
    %2402 = vmatmul.f32.gmra.mxu0 %v2328
    %v2403 = vpop.f32.mrf.mxu0
    %v2404 = vadd.f32 %v2375, %v2403
    %2405 = vmatmul.f32.gmra.mxu0 %v2329
    %v2406 = vpop.f32.mrf.mxu0
    %v2407 = vadd.f32 %v2375, %v2406
    %2408 = vmatmul.f32.gmra.mxu0 %v2330
    %v2409 = vpop.f32.mrf.mxu0
    %v2410 = vadd.f32 %v2375, %v2409
    %2411 = vmatmul.f32.gmra.mxu0 %v2331
    %v2412 = vpop.f32.mrf.mxu0
    %v2413 = vadd.f32 %v2375, %v2412
    %2414 = vmatmul.f32.gmra.mxu0 %v2332
    %v2415 = vpop.f32.mrf.mxu0
    %v2416 = vadd.f32 %v2375, %v2415
    %2417 = vmatmul.f32.gmra.mxu0 %v2333
    %v2418 = vpop.f32.mrf.mxu0
    %v2419 = vadd.f32 %v2375, %v2418
    %2420 = vmatmul.f32.gmra.mxu0 %v2334
    %v2421 = vpop.f32.mrf.mxu0
    %v2422 = vadd.f32 %v2375, %v2421
    %2423 = vmatmul.f32.gmra.mxu0 %v2335
    %v2424 = vpop.f32.mrf.mxu0
    %v2425 = vadd.f32 %v2375, %v2424
    %2426 = vmatmul.f32.gmra.mxu0 %v2336
    %v2427 = vpop.f32.mrf.mxu0
    %v2428 = vadd.f32 %v2375, %v2427
    %2429 = vmatmul.f32.gmra.mxu0 %v2337
    %v2430 = vpop.f32.mrf.mxu0
    %v2431 = vadd.f32 %v2375, %v2430
    %2432 = vmatmul.f32.gmra.mxu0 %v2338
    %v2433 = vpop.f32.mrf.mxu0
    %v2434 = vadd.f32 %v2375, %v2433
    %2435 = vmatmul.f32.gmra.mxu0 %v2339
    %v2436 = vpop.f32.mrf.mxu0
    %v2437 = vadd.f32 %v2375, %v2436
    %2438 = vmatmul.f32.gmra.mxu0 %v2340
    %v2439 = vpop.f32.mrf.mxu0
    %v2440 = vadd.f32 %v2375, %v2439
    %2441 = vmatmul.f32.gmra.mxu0 %v2341
    %v2442 = vpop.f32.mrf.mxu0
    %v2443 = vadd.f32 %v2375, %v2442
    %2444 = vmatmul.f32.gmra.mxu0 %v2342
    %v2445 = vpop.f32.mrf.mxu0
    %v2446 = vadd.f32 %v2375, %v2445
    %2447 = vmatmul.f32.gmra.mxu0 %v2343
    %v2448 = vpop.f32.mrf.mxu0
    %v2449 = vadd.f32 %v2375, %v2448
    %2450 = vmatmul.f32.gmra.mxu0 %v2344
    %v2451 = vpop.f32.mrf.mxu0
    %v2452 = vadd.f32 %v2375, %v2451
    %2453 = vmatmul.f32.gmra.mxu0 %v2345
    %v2454 = vpop.f32.mrf.mxu0
    %v2455 = vadd.f32 %v2375, %v2454
    %2456 = vmatmul.f32.gmra.mxu0 %v2346
    %v2457 = vpop.f32.mrf.mxu0
    %v2458 = vadd.f32 %v2375, %v2457
    %2459 = vmatmul.f32.gmra.mxu0 %v2347
    %v2460 = vpop.f32.mrf.mxu0
    %v2461 = vadd.f32 %v2375, %v2460
    %2462 = vmatmul.f32.gmra.mxu0 %v2348
    %v2463 = vpop.f32.mrf.mxu0
    %v2464 = vadd.f32 %v2375, %v2463
    %2465 = vmatmul.f32.gmra.mxu0 %v2349
    %v2466 = vpop.f32.mrf.mxu0
    %v2467 = vadd.f32 %v2375, %v2466
    %2468 = vmatmul.f32.gmra.mxu0 %v2350
    %v2469 = vpop.f32.mrf.mxu0
    %v2470 = vadd.f32 %v2375, %v2469
    %2471 = vmatmul.f32.gmra.mxu0 %v2351
    %v2472 = vpop.f32.mrf.mxu0
    %v2473 = vadd.f32 %v2375, %v2472
    %2474 = vmatmul.f32.gmra.mxu0 %v2352
    %v2475 = vpop.f32.mrf.mxu0
    %v2476 = vadd.f32 %v2375, %v2475
    %2477 = vmatmul.f32.gmra.mxu0 %v2353
    %v2478 = vpop.f32.mrf.mxu0
    %v2479 = vadd.f32 %v2375, %v2478
    %2480 = vmatmul.f32.gmra.mxu0 %v2354
    %v2481 = vpop.f32.mrf.mxu0
    %v2482 = vadd.f32 %v2375, %v2481
    %2483 = vmatmul.f32.gmra.mxu0 %v2355
    %v2484 = vpop.f32.mrf.mxu0
    %v2485 = vadd.f32 %v2375, %v2484
    %2486 = vmatmul.f32.gmra.mxu0 %v2356
    %v2487 = vpop.f32.mrf.mxu0
    %v2488 = vadd.f32 %v2375, %v2487
    %2489 = vdwg.mxu0
    %v2490 = vadd.f32 %v335, %v2395
    %v2491 = vadd.f32 %v336, %v2398
    %v2492 = vadd.f32 %v337, %v2401
    %v2493 = vadd.f32 %v338, %v2404
    %v2494 = vadd.f32 %v339, %v2407
    %v2495 = vadd.f32 %v340, %v2410
    %v2496 = vadd.f32 %v341, %v2413
    %v2497 = vadd.f32 %v342, %v2416
    %v2498 = vadd.f32 %v343, %v2419
    %v2499 = vadd.f32 %v344, %v2422
    %v2500 = vadd.f32 %v345, %v2425
    %v2501 = vadd.f32 %v346, %v2428
    %v2502 = vadd.f32 %v347, %v2431
    %v2503 = vadd.f32 %v348, %v2434
    %v2504 = vadd.f32 %v349, %v2437
    %v2505 = vadd.f32 %v350, %v2440
    %v2506 = vadd.f32 %v351, %v2443
    %v2507 = vadd.f32 %v352, %v2446
    %v2508 = vadd.f32 %v353, %v2449
    %v2509 = vadd.f32 %v354, %v2452
    %v2510 = vadd.f32 %v355, %v2455
    %v2511 = vadd.f32 %v356, %v2458
    %v2512 = vadd.f32 %v357, %v2461
    %v2513 = vadd.f32 %v358, %v2464
    %v2514 = vadd.f32 %v359, %v2467
    %v2515 = vadd.f32 %v360, %v2470
    %v2516 = vadd.f32 %v361, %v2473
    %v2517 = vadd.f32 %v362, %v2476
    %v2518 = vadd.f32 %v363, %v2479
    %v2519 = vadd.f32 %v364, %v2482
    %v2520 = vadd.f32 %v365, %v2485
    %v2521 = vadd.f32 %v366, %v2488
    %v2522 = vmul.f32 %v2490, %v70
    %v2523 = vmul.f32 %v2491, %v70
    %v2524 = vmul.f32 %v2492, %v70
    %v2525 = vmul.f32 %v2493, %v70
    %v2526 = vmul.f32 %v2494, %v70
    %v2527 = vmul.f32 %v2495, %v70
    %v2528 = vmul.f32 %v2496, %v70
    %v2529 = vmul.f32 %v2497, %v70
    %v2530 = vmul.f32 %v2498, %v70
    %v2531 = vmul.f32 %v2499, %v70
    %v2532 = vmul.f32 %v2500, %v70
    %v2533 = vmul.f32 %v2501, %v70
    %v2534 = vmul.f32 %v2502, %v70
    %v2535 = vmul.f32 %v2503, %v70
    %v2536 = vmul.f32 %v2504, %v70
    %v2537 = vmul.f32 %v2505, %v70
    %v2538 = vmul.f32 %v2506, %v70
    %v2539 = vmul.f32 %v2507, %v70
    %v2540 = vmul.f32 %v2508, %v70
    %v2541 = vmul.f32 %v2509, %v70
    %v2542 = vmul.f32 %v2510, %v70
    %v2543 = vmul.f32 %v2511, %v70
    %v2544 = vmul.f32 %v2512, %v70
    %v2545 = vmul.f32 %v2513, %v70
    %v2546 = vmul.f32 %v2514, %v70
    %v2547 = vmul.f32 %v2515, %v70
    %v2548 = vmul.f32 %v2516, %v70
    %v2549 = vmul.f32 %v2517, %v70
    %v2550 = vmul.f32 %v2518, %v70
    %v2551 = vmul.f32 %v2519, %v70
    %v2552 = vmul.f32 %v2520, %v70
    %v2553 = vmul.f32 %v2521, %v70
    %v2554 = vperm.slane %v464, 1
    %v2555 = vperm.slane %v465, 1
    %v2556 = vadd.f32 %v2522, %v2554
    %v2557 = vadd.f32 %v2523, %v2554
    %v2558 = vadd.f32 %v2524, %v2554
    %v2559 = vadd.f32 %v2525, %v2554
    %v2560 = vadd.f32 %v2526, %v2554
    %v2561 = vadd.f32 %v2527, %v2554
    %v2562 = vadd.f32 %v2528, %v2554
    %v2563 = vadd.f32 %v2529, %v2554
    %v2564 = vadd.f32 %v2530, %v2554
    %v2565 = vadd.f32 %v2531, %v2554
    %v2566 = vadd.f32 %v2532, %v2554
    %v2567 = vadd.f32 %v2533, %v2554
    %v2568 = vadd.f32 %v2534, %v2554
    %v2569 = vadd.f32 %v2535, %v2554
    %v2570 = vadd.f32 %v2536, %v2554
    %v2571 = vadd.f32 %v2537, %v2554
    %v2572 = vadd.f32 %v2538, %v2555
    %v2573 = vadd.f32 %v2539, %v2555
    %v2574 = vadd.f32 %v2540, %v2555
    %v2575 = vadd.f32 %v2541, %v2555
    %v2576 = vadd.f32 %v2542, %v2555
    %v2577 = vadd.f32 %v2543, %v2555
    %v2578 = vadd.f32 %v2544, %v2555
    %v2579 = vadd.f32 %v2545, %v2555
    %v2580 = vadd.f32 %v2546, %v2555
    %v2581 = vadd.f32 %v2547, %v2555
    %v2582 = vadd.f32 %v2548, %v2555
    %v2583 = vadd.f32 %v2549, %v2555
    %v2584 = vadd.f32 %v2550, %v2555
    %v2585 = vadd.f32 %v2551, %v2555
    %v2586 = vadd.f32 %v2552, %v2555
    %v2587 = vadd.f32 %v2553, %v2555
    %vm2588 = vcmp.ge.s32.totalorder %v400, 2
    %vm2589 = vcmp.ge.s32.totalorder %v401, 2
    %vm2590 = vcmp.ge.s32.totalorder %v402, 2
    %vm2591 = vcmp.ge.s32.totalorder %v403, 2
    %vm2592 = vcmp.ge.s32.totalorder %v404, 2
    %vm2593 = vcmp.ge.s32.totalorder %v405, 2
    %vm2594 = vcmp.ge.s32.totalorder %v406, 2
    %vm2595 = vcmp.ge.s32.totalorder %v407, 2
    %vm2596 = vcmp.ge.s32.totalorder %v408, 2
    %vm2597 = vcmp.ge.s32.totalorder %v409, 2
    %vm2598 = vcmp.ge.s32.totalorder %v410, 2
    %vm2599 = vcmp.ge.s32.totalorder %v411, 2
    %vm2600 = vcmp.ge.s32.totalorder %v412, 2
    %vm2601 = vcmp.ge.s32.totalorder %v413, 2
    %vm2602 = vcmp.ge.s32.totalorder %v414, 2
    %vm2603 = vcmp.ge.s32.totalorder %v415, 2
    %vm2604 = vcmp.ge.s32.totalorder %v416, 2
    %vm2605 = vcmp.ge.s32.totalorder %v417, 2
    %vm2606 = vcmp.ge.s32.totalorder %v418, 2
    %vm2607 = vcmp.ge.s32.totalorder %v419, 2
    %vm2608 = vcmp.ge.s32.totalorder %v420, 2
    %vm2609 = vcmp.ge.s32.totalorder %v421, 2
    %vm2610 = vcmp.ge.s32.totalorder %v422, 2
    %vm2611 = vcmp.ge.s32.totalorder %v423, 2
    %vm2612 = vcmp.ge.s32.totalorder %v424, 2
    %vm2613 = vcmp.ge.s32.totalorder %v425, 2
    %vm2614 = vcmp.ge.s32.totalorder %v426, 2
    %vm2615 = vcmp.ge.s32.totalorder %v427, 2
    %vm2616 = vcmp.ge.s32.totalorder %v428, 2
    %vm2617 = vcmp.ge.s32.totalorder %v429, 2
    %vm2618 = vcmp.ge.s32.totalorder %v430, 2
    %vm2619 = vcmp.ge.s32.totalorder %v431, 2
    %v2620 = vrot.slane %v2556, 6
    %v2621 = vrot.slane %v2557, 6
    %v2622 = vrot.slane %v2558, 6
    %v2623 = vrot.slane %v2559, 6
    %v2624 = vrot.slane %v2560, 6
    %v2625 = vrot.slane %v2561, 6
    %v2626 = vrot.slane %v2562, 6
    %v2627 = vrot.slane %v2563, 6
    %v2628 = vrot.slane %v2564, 6
    %v2629 = vrot.slane %v2565, 6
    %v2630 = vrot.slane %v2566, 6
    %v2631 = vrot.slane %v2567, 6
    %v2632 = vrot.slane %v2568, 6
    %v2633 = vrot.slane %v2569, 6
    %v2634 = vrot.slane %v2570, 6
    %v2635 = vrot.slane %v2571, 6
    %v2636 = vrot.slane %v2572, 6
    %v2637 = vrot.slane %v2573, 6
    %v2638 = vrot.slane %v2574, 6
    %v2639 = vrot.slane %v2575, 6
    %v2640 = vrot.slane %v2576, 6
    %v2641 = vrot.slane %v2577, 6
    %v2642 = vrot.slane %v2578, 6
    %v2643 = vrot.slane %v2579, 6
    %v2644 = vrot.slane %v2580, 6
    %v2645 = vrot.slane %v2581, 6
    %v2646 = vrot.slane %v2582, 6
    %v2647 = vrot.slane %v2583, 6
    %v2648 = vrot.slane %v2584, 6
    %v2649 = vrot.slane %v2585, 6
    %v2650 = vrot.slane %v2586, 6
    %v2651 = vrot.slane %v2587, 6
    %vm2652 = vcmp.lt.s32.totalorder %v368, 2
    %v2653 = vsel %vm2652, %v2650, %v2651
    %v2654 = vsel %vm2652, %v2649, %v2650
    %v2655 = vsel %vm2652, %v2648, %v2649
    %v2656 = vsel %vm2652, %v2647, %v2648
    %v2657 = vsel %vm2652, %v2646, %v2647
    %v2658 = vsel %vm2652, %v2645, %v2646
    %v2659 = vsel %vm2652, %v2644, %v2645
    %v2660 = vsel %vm2652, %v2643, %v2644
    %v2661 = vsel %vm2652, %v2642, %v2643
    %v2662 = vsel %vm2652, %v2641, %v2642
    %v2663 = vsel %vm2652, %v2640, %v2641
    %v2664 = vsel %vm2652, %v2639, %v2640
    %v2665 = vsel %vm2652, %v2638, %v2639
    %v2666 = vsel %vm2652, %v2637, %v2638
    %v2667 = vsel %vm2652, %v2636, %v2637
    %v2668 = vsel %vm2652, %v2635, %v2636
    %v2669 = vsel %vm2652, %v2634, %v2635
    %v2670 = vsel %vm2652, %v2633, %v2634
    %v2671 = vsel %vm2652, %v2632, %v2633
    %v2672 = vsel %vm2652, %v2631, %v2632
    %v2673 = vsel %vm2652, %v2630, %v2631
    %v2674 = vsel %vm2652, %v2629, %v2630
    %v2675 = vsel %vm2652, %v2628, %v2629
    %v2676 = vsel %vm2652, %v2627, %v2628
    %v2677 = vsel %vm2652, %v2626, %v2627
    %v2678 = vsel %vm2652, %v2625, %v2626
    %v2679 = vsel %vm2652, %v2624, %v2625
    %v2680 = vsel %vm2652, %v2623, %v2624
    %v2681 = vsel %vm2652, %v2622, %v2623
    %v2682 = vsel %vm2652, %v2621, %v2622
    %v2683 = vsel %vm2652, %v2620, %v2621
    %v2684 = vsel %vm2652, %v2651, %v2620
    %v2685 = vsel %vm2588, 1, 0
    %v2686 = vsel %vm2589, 1, 0
    %v2687 = vsel %vm2590, 1, 0
    %v2688 = vsel %vm2591, 1, 0
    %v2689 = vsel %vm2592, 1, 0
    %v2690 = vsel %vm2593, 1, 0
    %v2691 = vsel %vm2594, 1, 0
    %v2692 = vsel %vm2595, 1, 0
    %v2693 = vsel %vm2596, 1, 0
    %v2694 = vsel %vm2597, 1, 0
    %v2695 = vsel %vm2598, 1, 0
    %v2696 = vsel %vm2599, 1, 0
    %v2697 = vsel %vm2600, 1, 0
    %v2698 = vsel %vm2601, 1, 0
    %v2699 = vsel %vm2602, 1, 0
    %v2700 = vsel %vm2603, 1, 0
    %v2701 = vsel %vm2604, 1, 0
    %v2702 = vsel %vm2605, 1, 0
    %v2703 = vsel %vm2606, 1, 0
    %v2704 = vsel %vm2607, 1, 0
    %v2705 = vsel %vm2608, 1, 0
    %v2706 = vsel %vm2609, 1, 0
    %v2707 = vsel %vm2610, 1, 0
    %v2708 = vsel %vm2611, 1, 0
    %v2709 = vsel %vm2612, 1, 0
    %v2710 = vsel %vm2613, 1, 0
    %v2711 = vsel %vm2614, 1, 0
    %v2712 = vsel %vm2615, 1, 0
    %v2713 = vsel %vm2616, 1, 0
    %v2714 = vsel %vm2617, 1, 0
    %v2715 = vsel %vm2618, 1, 0
    %v2716 = vsel %vm2619, 1, 0
    %vm2717 = vcmp.eq.s32.totalorder %v2685, 1
    %vm2718 = vcmp.eq.s32.totalorder %v2686, 1
    %vm2719 = vcmp.eq.s32.totalorder %v2687, 1
    %vm2720 = vcmp.eq.s32.totalorder %v2688, 1
    %vm2721 = vcmp.eq.s32.totalorder %v2689, 1
    %vm2722 = vcmp.eq.s32.totalorder %v2690, 1
    %vm2723 = vcmp.eq.s32.totalorder %v2691, 1
    %vm2724 = vcmp.eq.s32.totalorder %v2692, 1
    %vm2725 = vcmp.eq.s32.totalorder %v2693, 1
    %vm2726 = vcmp.eq.s32.totalorder %v2694, 1
    %vm2727 = vcmp.eq.s32.totalorder %v2695, 1
    %vm2728 = vcmp.eq.s32.totalorder %v2696, 1
    %vm2729 = vcmp.eq.s32.totalorder %v2697, 1
    %vm2730 = vcmp.eq.s32.totalorder %v2698, 1
    %vm2731 = vcmp.eq.s32.totalorder %v2699, 1
    %vm2732 = vcmp.eq.s32.totalorder %v2700, 1
    %vm2733 = vcmp.eq.s32.totalorder %v2701, 1
    %vm2734 = vcmp.eq.s32.totalorder %v2702, 1
    %vm2735 = vcmp.eq.s32.totalorder %v2703, 1
    %vm2736 = vcmp.eq.s32.totalorder %v2704, 1
    %vm2737 = vcmp.eq.s32.totalorder %v2705, 1
    %vm2738 = vcmp.eq.s32.totalorder %v2706, 1
    %vm2739 = vcmp.eq.s32.totalorder %v2707, 1
    %vm2740 = vcmp.eq.s32.totalorder %v2708, 1
    %vm2741 = vcmp.eq.s32.totalorder %v2709, 1
    %vm2742 = vcmp.eq.s32.totalorder %v2710, 1
    %vm2743 = vcmp.eq.s32.totalorder %v2711, 1
    %vm2744 = vcmp.eq.s32.totalorder %v2712, 1
    %vm2745 = vcmp.eq.s32.totalorder %v2713, 1
    %vm2746 = vcmp.eq.s32.totalorder %v2714, 1
    %vm2747 = vcmp.eq.s32.totalorder %v2715, 1
    %vm2748 = vcmp.eq.s32.totalorder %v2716, 1
    %v2749 = vsel %vm2717, %v2684, 0.0
    %v2750 = vsel %vm2718, %v2683, 0.0
    %v2751 = vsel %vm2719, %v2682, 0.0
    %v2752 = vsel %vm2720, %v2681, 0.0
    %v2753 = vsel %vm2721, %v2680, 0.0
    %v2754 = vsel %vm2722, %v2679, 0.0
    %v2755 = vsel %vm2723, %v2678, 0.0
    %v2756 = vsel %vm2724, %v2677, 0.0
    %v2757 = vsel %vm2725, %v2676, 0.0
    %v2758 = vsel %vm2726, %v2675, 0.0
    %v2759 = vsel %vm2727, %v2674, 0.0
    %v2760 = vsel %vm2728, %v2673, 0.0
    %v2761 = vsel %vm2729, %v2672, 0.0
    %v2762 = vsel %vm2730, %v2671, 0.0
    %v2763 = vsel %vm2731, %v2670, 0.0
    %v2764 = vsel %vm2732, %v2669, 0.0
    %v2765 = vsel %vm2733, %v2668, 0.0
    %v2766 = vsel %vm2734, %v2667, 0.0
    %v2767 = vsel %vm2735, %v2666, 0.0
    %v2768 = vsel %vm2736, %v2665, 0.0
    %v2769 = vsel %vm2737, %v2664, 0.0
    %v2770 = vsel %vm2738, %v2663, 0.0
    %v2771 = vsel %vm2739, %v2662, 0.0
    %v2772 = vsel %vm2740, %v2661, 0.0
    %v2773 = vsel %vm2741, %v2660, 0.0
    %v2774 = vsel %vm2742, %v2659, 0.0
    %v2775 = vsel %vm2743, %v2658, 0.0
    %v2776 = vsel %vm2744, %v2657, 0.0
    %v2777 = vsel %vm2745, %v2656, 0.0
    %v2778 = vsel %vm2746, %v2655, 0.0
    %v2779 = vsel %vm2747, %v2654, 0.0
    %v2780 = vsel %vm2748, %v2653, 0.0
    %vm2781 = vcmp.lt.s32.totalorder %v400, 126
    %vm2782 = vcmp.lt.s32.totalorder %v401, 126
    %vm2783 = vcmp.lt.s32.totalorder %v402, 126
    %vm2784 = vcmp.lt.s32.totalorder %v403, 126
    %vm2785 = vcmp.lt.s32.totalorder %v404, 126
    %vm2786 = vcmp.lt.s32.totalorder %v405, 126
    %vm2787 = vcmp.lt.s32.totalorder %v406, 126
    %vm2788 = vcmp.lt.s32.totalorder %v407, 126
    %vm2789 = vcmp.lt.s32.totalorder %v408, 126
    %vm2790 = vcmp.lt.s32.totalorder %v409, 126
    %vm2791 = vcmp.lt.s32.totalorder %v410, 126
    %vm2792 = vcmp.lt.s32.totalorder %v411, 126
    %vm2793 = vcmp.lt.s32.totalorder %v412, 126
    %vm2794 = vcmp.lt.s32.totalorder %v413, 126
    %vm2795 = vcmp.lt.s32.totalorder %v414, 126
    %vm2796 = vcmp.lt.s32.totalorder %v415, 126
    %vm2797 = vcmp.lt.s32.totalorder %v416, 126
    %vm2798 = vcmp.lt.s32.totalorder %v417, 126
    %vm2799 = vcmp.lt.s32.totalorder %v418, 126
    %vm2800 = vcmp.lt.s32.totalorder %v419, 126
    %vm2801 = vcmp.lt.s32.totalorder %v420, 126
    %vm2802 = vcmp.lt.s32.totalorder %v421, 126
    %vm2803 = vcmp.lt.s32.totalorder %v422, 126
    %vm2804 = vcmp.lt.s32.totalorder %v423, 126
    %vm2805 = vcmp.lt.s32.totalorder %v424, 126
    %vm2806 = vcmp.lt.s32.totalorder %v425, 126
    %vm2807 = vcmp.lt.s32.totalorder %v426, 126
    %vm2808 = vcmp.lt.s32.totalorder %v427, 126
    %vm2809 = vcmp.lt.s32.totalorder %v428, 126
    %vm2810 = vcmp.lt.s32.totalorder %v429, 126
    %vm2811 = vcmp.lt.s32.totalorder %v430, 126
    %vm2812 = vcmp.lt.s32.totalorder %v431, 126
    %v2813 = vrot.slane %v2556, 2
    %v2814 = vrot.slane %v2557, 2
    %v2815 = vrot.slane %v2558, 2
    %v2816 = vrot.slane %v2559, 2
    %v2817 = vrot.slane %v2560, 2
    %v2818 = vrot.slane %v2561, 2
    %v2819 = vrot.slane %v2562, 2
    %v2820 = vrot.slane %v2563, 2
    %v2821 = vrot.slane %v2564, 2
    %v2822 = vrot.slane %v2565, 2
    %v2823 = vrot.slane %v2566, 2
    %v2824 = vrot.slane %v2567, 2
    %v2825 = vrot.slane %v2568, 2
    %v2826 = vrot.slane %v2569, 2
    %v2827 = vrot.slane %v2570, 2
    %v2828 = vrot.slane %v2571, 2
    %v2829 = vrot.slane %v2572, 2
    %v2830 = vrot.slane %v2573, 2
    %v2831 = vrot.slane %v2574, 2
    %v2832 = vrot.slane %v2575, 2
    %v2833 = vrot.slane %v2576, 2
    %v2834 = vrot.slane %v2577, 2
    %v2835 = vrot.slane %v2578, 2
    %v2836 = vrot.slane %v2579, 2
    %v2837 = vrot.slane %v2580, 2
    %v2838 = vrot.slane %v2581, 2
    %v2839 = vrot.slane %v2582, 2
    %v2840 = vrot.slane %v2583, 2
    %v2841 = vrot.slane %v2584, 2
    %v2842 = vrot.slane %v2585, 2
    %v2843 = vrot.slane %v2586, 2
    %v2844 = vrot.slane %v2587, 2
    %vm2845 = vcmp.lt.s32.totalorder %v368, 6
    %v2846 = vsel %vm2845, %v2843, %v2844
    %v2847 = vsel %vm2845, %v2842, %v2843
    %v2848 = vsel %vm2845, %v2841, %v2842
    %v2849 = vsel %vm2845, %v2840, %v2841
    %v2850 = vsel %vm2845, %v2839, %v2840
    %v2851 = vsel %vm2845, %v2838, %v2839
    %v2852 = vsel %vm2845, %v2837, %v2838
    %v2853 = vsel %vm2845, %v2836, %v2837
    %v2854 = vsel %vm2845, %v2835, %v2836
    %v2855 = vsel %vm2845, %v2834, %v2835
    %v2856 = vsel %vm2845, %v2833, %v2834
    %v2857 = vsel %vm2845, %v2832, %v2833
    %v2858 = vsel %vm2845, %v2831, %v2832
    %v2859 = vsel %vm2845, %v2830, %v2831
    %v2860 = vsel %vm2845, %v2829, %v2830
    %v2861 = vsel %vm2845, %v2828, %v2829
    %v2862 = vsel %vm2845, %v2827, %v2828
    %v2863 = vsel %vm2845, %v2826, %v2827
    %v2864 = vsel %vm2845, %v2825, %v2826
    %v2865 = vsel %vm2845, %v2824, %v2825
    %v2866 = vsel %vm2845, %v2823, %v2824
    %v2867 = vsel %vm2845, %v2822, %v2823
    %v2868 = vsel %vm2845, %v2821, %v2822
    %v2869 = vsel %vm2845, %v2820, %v2821
    %v2870 = vsel %vm2845, %v2819, %v2820
    %v2871 = vsel %vm2845, %v2818, %v2819
    %v2872 = vsel %vm2845, %v2817, %v2818
    %v2873 = vsel %vm2845, %v2816, %v2817
    %v2874 = vsel %vm2845, %v2815, %v2816
    %v2875 = vsel %vm2845, %v2814, %v2815
    %v2876 = vsel %vm2845, %v2813, %v2814
    %v2877 = vsel %vm2845, %v2844, %v2813
    %v2878 = vsel %vm2781, 1, 0
    %v2879 = vsel %vm2782, 1, 0
    %v2880 = vsel %vm2783, 1, 0
    %v2881 = vsel %vm2784, 1, 0
    %v2882 = vsel %vm2785, 1, 0
    %v2883 = vsel %vm2786, 1, 0
    %v2884 = vsel %vm2787, 1, 0
    %v2885 = vsel %vm2788, 1, 0
    %v2886 = vsel %vm2789, 1, 0
    %v2887 = vsel %vm2790, 1, 0
    %v2888 = vsel %vm2791, 1, 0
    %v2889 = vsel %vm2792, 1, 0
    %v2890 = vsel %vm2793, 1, 0
    %v2891 = vsel %vm2794, 1, 0
    %v2892 = vsel %vm2795, 1, 0
    %v2893 = vsel %vm2796, 1, 0
    %v2894 = vsel %vm2797, 1, 0
    %v2895 = vsel %vm2798, 1, 0
    %v2896 = vsel %vm2799, 1, 0
    %v2897 = vsel %vm2800, 1, 0
    %v2898 = vsel %vm2801, 1, 0
    %v2899 = vsel %vm2802, 1, 0
    %v2900 = vsel %vm2803, 1, 0
    %v2901 = vsel %vm2804, 1, 0
    %v2902 = vsel %vm2805, 1, 0
    %v2903 = vsel %vm2806, 1, 0
    %v2904 = vsel %vm2807, 1, 0
    %v2905 = vsel %vm2808, 1, 0
    %v2906 = vsel %vm2809, 1, 0
    %v2907 = vsel %vm2810, 1, 0
    %v2908 = vsel %vm2811, 1, 0
    %v2909 = vsel %vm2812, 1, 0
    %vm2910 = vcmp.eq.s32.totalorder %v2878, 1
    %vm2911 = vcmp.eq.s32.totalorder %v2879, 1
    %vm2912 = vcmp.eq.s32.totalorder %v2880, 1
    %vm2913 = vcmp.eq.s32.totalorder %v2881, 1
    %vm2914 = vcmp.eq.s32.totalorder %v2882, 1
    %vm2915 = vcmp.eq.s32.totalorder %v2883, 1
    %vm2916 = vcmp.eq.s32.totalorder %v2884, 1
    %vm2917 = vcmp.eq.s32.totalorder %v2885, 1
    %vm2918 = vcmp.eq.s32.totalorder %v2886, 1
    %vm2919 = vcmp.eq.s32.totalorder %v2887, 1
    %vm2920 = vcmp.eq.s32.totalorder %v2888, 1
    %vm2921 = vcmp.eq.s32.totalorder %v2889, 1
    %vm2922 = vcmp.eq.s32.totalorder %v2890, 1
    %vm2923 = vcmp.eq.s32.totalorder %v2891, 1
    %vm2924 = vcmp.eq.s32.totalorder %v2892, 1
    %vm2925 = vcmp.eq.s32.totalorder %v2893, 1
    %vm2926 = vcmp.eq.s32.totalorder %v2894, 1
    %vm2927 = vcmp.eq.s32.totalorder %v2895, 1
    %vm2928 = vcmp.eq.s32.totalorder %v2896, 1
    %vm2929 = vcmp.eq.s32.totalorder %v2897, 1
    %vm2930 = vcmp.eq.s32.totalorder %v2898, 1
    %vm2931 = vcmp.eq.s32.totalorder %v2899, 1
    %vm2932 = vcmp.eq.s32.totalorder %v2900, 1
    %vm2933 = vcmp.eq.s32.totalorder %v2901, 1
    %vm2934 = vcmp.eq.s32.totalorder %v2902, 1
    %vm2935 = vcmp.eq.s32.totalorder %v2903, 1
    %vm2936 = vcmp.eq.s32.totalorder %v2904, 1
    %vm2937 = vcmp.eq.s32.totalorder %v2905, 1
    %vm2938 = vcmp.eq.s32.totalorder %v2906, 1
    %vm2939 = vcmp.eq.s32.totalorder %v2907, 1
    %vm2940 = vcmp.eq.s32.totalorder %v2908, 1
    %vm2941 = vcmp.eq.s32.totalorder %v2909, 1
    %v2942 = vsel %vm2910, %v2876, 0.0
    %v2943 = vsel %vm2911, %v2875, 0.0
    %v2944 = vsel %vm2912, %v2874, 0.0
    %v2945 = vsel %vm2913, %v2873, 0.0
    %v2946 = vsel %vm2914, %v2872, 0.0
    %v2947 = vsel %vm2915, %v2871, 0.0
    %v2948 = vsel %vm2916, %v2870, 0.0
    %v2949 = vsel %vm2917, %v2869, 0.0
    %v2950 = vsel %vm2918, %v2868, 0.0
    %v2951 = vsel %vm2919, %v2867, 0.0
    %v2952 = vsel %vm2920, %v2866, 0.0
    %v2953 = vsel %vm2921, %v2865, 0.0
    %v2954 = vsel %vm2922, %v2864, 0.0
    %v2955 = vsel %vm2923, %v2863, 0.0
    %v2956 = vsel %vm2924, %v2862, 0.0
    %v2957 = vsel %vm2925, %v2861, 0.0
    %v2958 = vsel %vm2926, %v2860, 0.0
    %v2959 = vsel %vm2927, %v2859, 0.0
    %v2960 = vsel %vm2928, %v2858, 0.0
    %v2961 = vsel %vm2929, %v2857, 0.0
    %v2962 = vsel %vm2930, %v2856, 0.0
    %v2963 = vsel %vm2931, %v2855, 0.0
    %v2964 = vsel %vm2932, %v2854, 0.0
    %v2965 = vsel %vm2933, %v2853, 0.0
    %v2966 = vsel %vm2934, %v2852, 0.0
    %v2967 = vsel %vm2935, %v2851, 0.0
    %v2968 = vsel %vm2936, %v2850, 0.0
    %v2969 = vsel %vm2937, %v2849, 0.0
    %v2970 = vsel %vm2938, %v2848, 0.0
    %v2971 = vsel %vm2939, %v2847, 0.0
    %v2972 = vsel %vm2940, %v2846, 0.0
    %v2973 = vsel %vm2941, %v2877, 0.0
    %s2974 = scalar_lea.vmem %s6, 1
    %v2975 = vld [vmem:[%s2974] sm:$0x1]
    %s2976 = scalar_lea.vmem [#allocation3], 384
    %v2977 = vld [vmem:[%s2976] sm:$0xff]
    %v2978 = vld [vmem:[%s2976 + $0x8] sm:$0xff]
    %v2979 = vld [vmem:[%s2976 + $0x10] sm:$0xff]
    %v2980 = vld [vmem:[%s2976 + $0x18] sm:$0xff]
    %v2981 = vld [vmem:[%s2976 + $0x20] sm:$0xff]
    %v2982 = vld [vmem:[%s2976 + $0x28] sm:$0xff]
    %v2983 = vld [vmem:[%s2976 + $0x30] sm:$0xff]
    %v2984 = vld [vmem:[%s2976 + $0x38] sm:$0xff]
    %v2985 = vld [vmem:[%s2976 + $0x40] sm:$0xff]
    %v2986 = vld [vmem:[%s2976 + $0x48] sm:$0xff]
    %v2987 = vld [vmem:[%s2976 + $0x50] sm:$0xff]
    %v2988 = vld [vmem:[%s2976 + $0x58] sm:$0xff]
    %v2989 = vld [vmem:[%s2976 + $0x60] sm:$0xff]
    %v2990 = vld [vmem:[%s2976 + $0x68] sm:$0xff]
    %v2991 = vld [vmem:[%s2976 + $0x70] sm:$0xff]
    %v2992 = vld [vmem:[%s2976 + $0x78] sm:$0xff]
    %2993 = vmatpush.msra.mxu0 %v2992
    %2994 = vmatpush.msra.mxu0 %v2991
    %2995 = vmatpush.msra.mxu0 %v2990
    %2996 = vmatpush.msra.mxu0 %v2989
    %2997 = vmatpush.msra.mxu0 %v2988
    %2998 = vmatpush.msra.mxu0 %v2987
    %2999 = vmatpush.msra.mxu0 %v2986
    %3000 = vmatpush.msra.mxu0 %v2985
    %3001 = vmatpush.msra.mxu0 %v2984
    %3002 = vmatpush.msra.mxu0 %v2983
    %3003 = vmatpush.msra.mxu0 %v2982
    %3004 = vmatpush.msra.mxu0 %v2981
    %3005 = vmatpush.msra.mxu0 %v2980
    %3006 = vmatpush.msra.mxu0 %v2979
    %3007 = vmatpush.msra.mxu0 %v2978
    %3008 = vmatpush.msra.mxu0 %v2977
    %3009 = vmatmul.f32.gmra.mxu0 %v2749
    %v3010 = vpop.f32.mrf.mxu0
    %v3011 = vadd.f32 0.0, %v3010
    %3012 = vmatmul.f32.gmra.mxu0 %v2750
    %v3013 = vpop.f32.mrf.mxu0
    %v3014 = vadd.f32 0.0, %v3013
    %3015 = vmatmul.f32.gmra.mxu0 %v2751
    %v3016 = vpop.f32.mrf.mxu0
    %v3017 = vadd.f32 0.0, %v3016
    %3018 = vmatmul.f32.gmra.mxu0 %v2752
    %v3019 = vpop.f32.mrf.mxu0
    %v3020 = vadd.f32 0.0, %v3019
    %3021 = vmatmul.f32.gmra.mxu0 %v2753
    %v3022 = vpop.f32.mrf.mxu0
    %v3023 = vadd.f32 0.0, %v3022
    %3024 = vmatmul.f32.gmra.mxu0 %v2754
    %v3025 = vpop.f32.mrf.mxu0
    %v3026 = vadd.f32 0.0, %v3025
    %3027 = vmatmul.f32.gmra.mxu0 %v2755
    %v3028 = vpop.f32.mrf.mxu0
    %v3029 = vadd.f32 0.0, %v3028
    %3030 = vmatmul.f32.gmra.mxu0 %v2756
    %v3031 = vpop.f32.mrf.mxu0
    %v3032 = vadd.f32 0.0, %v3031
    %3033 = vmatmul.f32.gmra.mxu0 %v2757
    %v3034 = vpop.f32.mrf.mxu0
    %v3035 = vadd.f32 0.0, %v3034
    %3036 = vmatmul.f32.gmra.mxu0 %v2758
    %v3037 = vpop.f32.mrf.mxu0
    %v3038 = vadd.f32 0.0, %v3037
    %3039 = vmatmul.f32.gmra.mxu0 %v2759
    %v3040 = vpop.f32.mrf.mxu0
    %v3041 = vadd.f32 0.0, %v3040
    %3042 = vmatmul.f32.gmra.mxu0 %v2760
    %v3043 = vpop.f32.mrf.mxu0
    %v3044 = vadd.f32 0.0, %v3043
    %3045 = vmatmul.f32.gmra.mxu0 %v2761
    %v3046 = vpop.f32.mrf.mxu0
    %v3047 = vadd.f32 0.0, %v3046
    %3048 = vmatmul.f32.gmra.mxu0 %v2762
    %v3049 = vpop.f32.mrf.mxu0
    %v3050 = vadd.f32 0.0, %v3049
    %3051 = vmatmul.f32.gmra.mxu0 %v2763
    %v3052 = vpop.f32.mrf.mxu0
    %v3053 = vadd.f32 0.0, %v3052
    %3054 = vmatmul.f32.gmra.mxu0 %v2764
    %v3055 = vpop.f32.mrf.mxu0
    %v3056 = vadd.f32 0.0, %v3055
    %3057 = vmatmul.f32.gmra.mxu0 %v2765
    %v3058 = vpop.f32.mrf.mxu0
    %v3059 = vadd.f32 0.0, %v3058
    %3060 = vmatmul.f32.gmra.mxu0 %v2766
    %v3061 = vpop.f32.mrf.mxu0
    %v3062 = vadd.f32 0.0, %v3061
    %3063 = vmatmul.f32.gmra.mxu0 %v2767
    %v3064 = vpop.f32.mrf.mxu0
    %v3065 = vadd.f32 0.0, %v3064
    %3066 = vmatmul.f32.gmra.mxu0 %v2768
    %v3067 = vpop.f32.mrf.mxu0
    %v3068 = vadd.f32 0.0, %v3067
    %3069 = vmatmul.f32.gmra.mxu0 %v2769
    %v3070 = vpop.f32.mrf.mxu0
    %v3071 = vadd.f32 0.0, %v3070
    %3072 = vmatmul.f32.gmra.mxu0 %v2770
    %v3073 = vpop.f32.mrf.mxu0
    %v3074 = vadd.f32 0.0, %v3073
    %3075 = vmatmul.f32.gmra.mxu0 %v2771
    %v3076 = vpop.f32.mrf.mxu0
    %v3077 = vadd.f32 0.0, %v3076
    %3078 = vmatmul.f32.gmra.mxu0 %v2772
    %v3079 = vpop.f32.mrf.mxu0
    %v3080 = vadd.f32 0.0, %v3079
    %3081 = vmatmul.f32.gmra.mxu0 %v2773
    %v3082 = vpop.f32.mrf.mxu0
    %v3083 = vadd.f32 0.0, %v3082
    %3084 = vmatmul.f32.gmra.mxu0 %v2774
    %v3085 = vpop.f32.mrf.mxu0
    %v3086 = vadd.f32 0.0, %v3085
    %3087 = vmatmul.f32.gmra.mxu0 %v2775
    %v3088 = vpop.f32.mrf.mxu0
    %v3089 = vadd.f32 0.0, %v3088
    %3090 = vmatmul.f32.gmra.mxu0 %v2776
    %v3091 = vpop.f32.mrf.mxu0
    %v3092 = vadd.f32 0.0, %v3091
    %3093 = vmatmul.f32.gmra.mxu0 %v2777
    %v3094 = vpop.f32.mrf.mxu0
    %v3095 = vadd.f32 0.0, %v3094
    %3096 = vmatmul.f32.gmra.mxu0 %v2778
    %v3097 = vpop.f32.mrf.mxu0
    %v3098 = vadd.f32 0.0, %v3097
    %3099 = vmatmul.f32.gmra.mxu0 %v2779
    %v3100 = vpop.f32.mrf.mxu0
    %v3101 = vadd.f32 0.0, %v3100
    %3102 = vmatmul.f32.gmra.mxu0 %v2780
    %v3103 = vpop.f32.mrf.mxu0
    %v3104 = vadd.f32 0.0, %v3103
    %3105 = vdwg.mxu0
    %v3107 = vperm.slane %v2975, 0
    %v3109 = vadd.f32 %v3107, %v3011
    %v3110 = vadd.f32 %v3107, %v3014
    %v3111 = vadd.f32 %v3107, %v3017
    %v3112 = vadd.f32 %v3107, %v3020
    %v3113 = vadd.f32 %v3107, %v3023
    %v3114 = vadd.f32 %v3107, %v3026
    %v3115 = vadd.f32 %v3107, %v3029
    %v3116 = vadd.f32 %v3107, %v3032
    %v3117 = vadd.f32 %v3107, %v3035
    %v3118 = vadd.f32 %v3107, %v3038
    %v3119 = vadd.f32 %v3107, %v3041
    %v3120 = vadd.f32 %v3107, %v3044
    %v3121 = vadd.f32 %v3107, %v3047
    %v3122 = vadd.f32 %v3107, %v3050
    %v3123 = vadd.f32 %v3107, %v3053
    %v3124 = vadd.f32 %v3107, %v3056
    %v3125 = vadd.f32 %v3107, %v3059
    %v3126 = vadd.f32 %v3107, %v3062
    %v3127 = vadd.f32 %v3107, %v3065
    %v3128 = vadd.f32 %v3107, %v3068
    %v3129 = vadd.f32 %v3107, %v3071
    %v3130 = vadd.f32 %v3107, %v3074
    %v3131 = vadd.f32 %v3107, %v3077
    %v3132 = vadd.f32 %v3107, %v3080
    %v3133 = vadd.f32 %v3107, %v3083
    %v3134 = vadd.f32 %v3107, %v3086
    %v3135 = vadd.f32 %v3107, %v3089
    %v3136 = vadd.f32 %v3107, %v3092
    %v3137 = vadd.f32 %v3107, %v3095
    %v3138 = vadd.f32 %v3107, %v3098
    %v3139 = vadd.f32 %v3107, %v3101
    %v3140 = vadd.f32 %v3107, %v3104
    %s3141 = scalar_lea.vmem [#allocation3], 512
    %v3142 = vld [vmem:[%s3141] sm:$0xff]
    %v3143 = vld [vmem:[%s3141 + $0x8] sm:$0xff]
    %v3144 = vld [vmem:[%s3141 + $0x10] sm:$0xff]
    %v3145 = vld [vmem:[%s3141 + $0x18] sm:$0xff]
    %v3146 = vld [vmem:[%s3141 + $0x20] sm:$0xff]
    %v3147 = vld [vmem:[%s3141 + $0x28] sm:$0xff]
    %v3148 = vld [vmem:[%s3141 + $0x30] sm:$0xff]
    %v3149 = vld [vmem:[%s3141 + $0x38] sm:$0xff]
    %v3150 = vld [vmem:[%s3141 + $0x40] sm:$0xff]
    %v3151 = vld [vmem:[%s3141 + $0x48] sm:$0xff]
    %v3152 = vld [vmem:[%s3141 + $0x50] sm:$0xff]
    %v3153 = vld [vmem:[%s3141 + $0x58] sm:$0xff]
    %v3154 = vld [vmem:[%s3141 + $0x60] sm:$0xff]
    %v3155 = vld [vmem:[%s3141 + $0x68] sm:$0xff]
    %v3156 = vld [vmem:[%s3141 + $0x70] sm:$0xff]
    %v3157 = vld [vmem:[%s3141 + $0x78] sm:$0xff]
    %3158 = vmatpush.msra.mxu0 %v3157
    %3159 = vmatpush.msra.mxu0 %v3156
    %3160 = vmatpush.msra.mxu0 %v3155
    %3161 = vmatpush.msra.mxu0 %v3154
    %3162 = vmatpush.msra.mxu0 %v3153
    %3163 = vmatpush.msra.mxu0 %v3152
    %3164 = vmatpush.msra.mxu0 %v3151
    %3165 = vmatpush.msra.mxu0 %v3150
    %3166 = vmatpush.msra.mxu0 %v3149
    %3167 = vmatpush.msra.mxu0 %v3148
    %3168 = vmatpush.msra.mxu0 %v3147
    %3169 = vmatpush.msra.mxu0 %v3146
    %3170 = vmatpush.msra.mxu0 %v3145
    %3171 = vmatpush.msra.mxu0 %v3144
    %3172 = vmatpush.msra.mxu0 %v3143
    %3173 = vmatpush.msra.mxu0 %v3142
    %3174 = vmatmul.f32.gmra.mxu0 %v2556
    %v3175 = vpop.f32.mrf.mxu0
    %v3176 = vadd.f32 0.0, %v3175
    %3177 = vmatmul.f32.gmra.mxu0 %v2557
    %v3178 = vpop.f32.mrf.mxu0
    %v3179 = vadd.f32 0.0, %v3178
    %3180 = vmatmul.f32.gmra.mxu0 %v2558
    %v3181 = vpop.f32.mrf.mxu0
    %v3182 = vadd.f32 0.0, %v3181
    %3183 = vmatmul.f32.gmra.mxu0 %v2559
    %v3184 = vpop.f32.mrf.mxu0
    %v3185 = vadd.f32 0.0, %v3184
    %3186 = vmatmul.f32.gmra.mxu0 %v2560
    %v3187 = vpop.f32.mrf.mxu0
    %v3188 = vadd.f32 0.0, %v3187
    %3189 = vmatmul.f32.gmra.mxu0 %v2561
    %v3190 = vpop.f32.mrf.mxu0
    %v3191 = vadd.f32 0.0, %v3190
    %3192 = vmatmul.f32.gmra.mxu0 %v2562
    %v3193 = vpop.f32.mrf.mxu0
    %v3194 = vadd.f32 0.0, %v3193
    %3195 = vmatmul.f32.gmra.mxu0 %v2563
    %v3196 = vpop.f32.mrf.mxu0
    %v3197 = vadd.f32 0.0, %v3196
    %3198 = vmatmul.f32.gmra.mxu0 %v2564
    %v3199 = vpop.f32.mrf.mxu0
    %v3200 = vadd.f32 0.0, %v3199
    %3201 = vmatmul.f32.gmra.mxu0 %v2565
    %v3202 = vpop.f32.mrf.mxu0
    %v3203 = vadd.f32 0.0, %v3202
    %3204 = vmatmul.f32.gmra.mxu0 %v2566
    %v3205 = vpop.f32.mrf.mxu0
    %v3206 = vadd.f32 0.0, %v3205
    %3207 = vmatmul.f32.gmra.mxu0 %v2567
    %v3208 = vpop.f32.mrf.mxu0
    %v3209 = vadd.f32 0.0, %v3208
    %3210 = vmatmul.f32.gmra.mxu0 %v2568
    %v3211 = vpop.f32.mrf.mxu0
    %v3212 = vadd.f32 0.0, %v3211
    %3213 = vmatmul.f32.gmra.mxu0 %v2569
    %v3214 = vpop.f32.mrf.mxu0
    %v3215 = vadd.f32 0.0, %v3214
    %3216 = vmatmul.f32.gmra.mxu0 %v2570
    %v3217 = vpop.f32.mrf.mxu0
    %v3218 = vadd.f32 0.0, %v3217
    %3219 = vmatmul.f32.gmra.mxu0 %v2571
    %v3220 = vpop.f32.mrf.mxu0
    %v3221 = vadd.f32 0.0, %v3220
    %3222 = vmatmul.f32.gmra.mxu0 %v2572
    %v3223 = vpop.f32.mrf.mxu0
    %v3224 = vadd.f32 0.0, %v3223
    %3225 = vmatmul.f32.gmra.mxu0 %v2573
    %v3226 = vpop.f32.mrf.mxu0
    %v3227 = vadd.f32 0.0, %v3226
    %3228 = vmatmul.f32.gmra.mxu0 %v2574
    %v3229 = vpop.f32.mrf.mxu0
    %v3230 = vadd.f32 0.0, %v3229
    %3231 = vmatmul.f32.gmra.mxu0 %v2575
    %v3232 = vpop.f32.mrf.mxu0
    %v3233 = vadd.f32 0.0, %v3232
    %3234 = vmatmul.f32.gmra.mxu0 %v2576
    %v3235 = vpop.f32.mrf.mxu0
    %v3236 = vadd.f32 0.0, %v3235
    %3237 = vmatmul.f32.gmra.mxu0 %v2577
    %v3238 = vpop.f32.mrf.mxu0
    %v3239 = vadd.f32 0.0, %v3238
    %3240 = vmatmul.f32.gmra.mxu0 %v2578
    %v3241 = vpop.f32.mrf.mxu0
    %v3242 = vadd.f32 0.0, %v3241
    %3243 = vmatmul.f32.gmra.mxu0 %v2579
    %v3244 = vpop.f32.mrf.mxu0
    %v3245 = vadd.f32 0.0, %v3244
    %3246 = vmatmul.f32.gmra.mxu0 %v2580
    %v3247 = vpop.f32.mrf.mxu0
    %v3248 = vadd.f32 0.0, %v3247
    %3249 = vmatmul.f32.gmra.mxu0 %v2581
    %v3250 = vpop.f32.mrf.mxu0
    %v3251 = vadd.f32 0.0, %v3250
    %3252 = vmatmul.f32.gmra.mxu0 %v2582
    %v3253 = vpop.f32.mrf.mxu0
    %v3254 = vadd.f32 0.0, %v3253
    %3255 = vmatmul.f32.gmra.mxu0 %v2583
    %v3256 = vpop.f32.mrf.mxu0
    %v3257 = vadd.f32 0.0, %v3256
    %3258 = vmatmul.f32.gmra.mxu0 %v2584
    %v3259 = vpop.f32.mrf.mxu0
    %v3260 = vadd.f32 0.0, %v3259
    %3261 = vmatmul.f32.gmra.mxu0 %v2585
    %v3262 = vpop.f32.mrf.mxu0
    %v3263 = vadd.f32 0.0, %v3262
    %3264 = vmatmul.f32.gmra.mxu0 %v2586
    %v3265 = vpop.f32.mrf.mxu0
    %v3266 = vadd.f32 0.0, %v3265
    %3267 = vmatmul.f32.gmra.mxu0 %v2587
    %v3268 = vpop.f32.mrf.mxu0
    %v3269 = vadd.f32 0.0, %v3268
    %3270 = vdwg.mxu0
    %v3271 = vadd.f32 %v3109, %v3176
    %v3272 = vadd.f32 %v3110, %v3179
    %v3273 = vadd.f32 %v3111, %v3182
    %v3274 = vadd.f32 %v3112, %v3185
    %v3275 = vadd.f32 %v3113, %v3188
    %v3276 = vadd.f32 %v3114, %v3191
    %v3277 = vadd.f32 %v3115, %v3194
    %v3278 = vadd.f32 %v3116, %v3197
    %v3279 = vadd.f32 %v3117, %v3200
    %v3280 = vadd.f32 %v3118, %v3203
    %v3281 = vadd.f32 %v3119, %v3206
    %v3282 = vadd.f32 %v3120, %v3209
    %v3283 = vadd.f32 %v3121, %v3212
    %v3284 = vadd.f32 %v3122, %v3215
    %v3285 = vadd.f32 %v3123, %v3218
    %v3286 = vadd.f32 %v3124, %v3221
    %v3287 = vadd.f32 %v3125, %v3224
    %v3288 = vadd.f32 %v3126, %v3227
    %v3289 = vadd.f32 %v3127, %v3230
    %v3290 = vadd.f32 %v3128, %v3233
    %v3291 = vadd.f32 %v3129, %v3236
    %v3292 = vadd.f32 %v3130, %v3239
    %v3293 = vadd.f32 %v3131, %v3242
    %v3294 = vadd.f32 %v3132, %v3245
    %v3295 = vadd.f32 %v3133, %v3248
    %v3296 = vadd.f32 %v3134, %v3251
    %v3297 = vadd.f32 %v3135, %v3254
    %v3298 = vadd.f32 %v3136, %v3257
    %v3299 = vadd.f32 %v3137, %v3260
    %v3300 = vadd.f32 %v3138, %v3263
    %v3301 = vadd.f32 %v3139, %v3266
    %v3302 = vadd.f32 %v3140, %v3269
    %s3303 = scalar_lea.vmem [#allocation3], 640
    %v3304 = vld [vmem:[%s3303] sm:$0xff]
    %v3305 = vld [vmem:[%s3303 + $0x8] sm:$0xff]
    %v3306 = vld [vmem:[%s3303 + $0x10] sm:$0xff]
    %v3307 = vld [vmem:[%s3303 + $0x18] sm:$0xff]
    %v3308 = vld [vmem:[%s3303 + $0x20] sm:$0xff]
    %v3309 = vld [vmem:[%s3303 + $0x28] sm:$0xff]
    %v3310 = vld [vmem:[%s3303 + $0x30] sm:$0xff]
    %v3311 = vld [vmem:[%s3303 + $0x38] sm:$0xff]
    %v3312 = vld [vmem:[%s3303 + $0x40] sm:$0xff]
    %v3313 = vld [vmem:[%s3303 + $0x48] sm:$0xff]
    %v3314 = vld [vmem:[%s3303 + $0x50] sm:$0xff]
    %v3315 = vld [vmem:[%s3303 + $0x58] sm:$0xff]
    %v3316 = vld [vmem:[%s3303 + $0x60] sm:$0xff]
    %v3317 = vld [vmem:[%s3303 + $0x68] sm:$0xff]
    %v3318 = vld [vmem:[%s3303 + $0x70] sm:$0xff]
    %v3319 = vld [vmem:[%s3303 + $0x78] sm:$0xff]
    %3320 = vmatpush.msra.mxu0 %v3319
    %3321 = vmatpush.msra.mxu0 %v3318
    %3322 = vmatpush.msra.mxu0 %v3317
    %3323 = vmatpush.msra.mxu0 %v3316
    %3324 = vmatpush.msra.mxu0 %v3315
    %3325 = vmatpush.msra.mxu0 %v3314
    %3326 = vmatpush.msra.mxu0 %v3313
    %3327 = vmatpush.msra.mxu0 %v3312
    %3328 = vmatpush.msra.mxu0 %v3311
    %3329 = vmatpush.msra.mxu0 %v3310
    %3330 = vmatpush.msra.mxu0 %v3309
    %3331 = vmatpush.msra.mxu0 %v3308
    %3332 = vmatpush.msra.mxu0 %v3307
    %3333 = vmatpush.msra.mxu0 %v3306
    %3334 = vmatpush.msra.mxu0 %v3305
    %3335 = vmatpush.msra.mxu0 %v3304
    %3336 = vmatmul.f32.gmra.mxu0 %v2942
    %v3337 = vpop.f32.mrf.mxu0
    %v3338 = vadd.f32 0.0, %v3337
    %3339 = vmatmul.f32.gmra.mxu0 %v2943
    %v3340 = vpop.f32.mrf.mxu0
    %v3341 = vadd.f32 0.0, %v3340
    %3342 = vmatmul.f32.gmra.mxu0 %v2944
    %v3343 = vpop.f32.mrf.mxu0
    %v3344 = vadd.f32 0.0, %v3343
    %3345 = vmatmul.f32.gmra.mxu0 %v2945
    %v3346 = vpop.f32.mrf.mxu0
    %v3347 = vadd.f32 0.0, %v3346
    %3348 = vmatmul.f32.gmra.mxu0 %v2946
    %v3349 = vpop.f32.mrf.mxu0
    %v3350 = vadd.f32 0.0, %v3349
    %3351 = vmatmul.f32.gmra.mxu0 %v2947
    %v3352 = vpop.f32.mrf.mxu0
    %v3353 = vadd.f32 0.0, %v3352
    %3354 = vmatmul.f32.gmra.mxu0 %v2948
    %v3355 = vpop.f32.mrf.mxu0
    %v3356 = vadd.f32 0.0, %v3355
    %3357 = vmatmul.f32.gmra.mxu0 %v2949
    %v3358 = vpop.f32.mrf.mxu0
    %v3359 = vadd.f32 0.0, %v3358
    %3360 = vmatmul.f32.gmra.mxu0 %v2950
    %v3361 = vpop.f32.mrf.mxu0
    %v3362 = vadd.f32 0.0, %v3361
    %3363 = vmatmul.f32.gmra.mxu0 %v2951
    %v3364 = vpop.f32.mrf.mxu0
    %v3365 = vadd.f32 0.0, %v3364
    %3366 = vmatmul.f32.gmra.mxu0 %v2952
    %v3367 = vpop.f32.mrf.mxu0
    %v3368 = vadd.f32 0.0, %v3367
    %3369 = vmatmul.f32.gmra.mxu0 %v2953
    %v3370 = vpop.f32.mrf.mxu0
    %v3371 = vadd.f32 0.0, %v3370
    %3372 = vmatmul.f32.gmra.mxu0 %v2954
    %v3373 = vpop.f32.mrf.mxu0
    %v3374 = vadd.f32 0.0, %v3373
    %3375 = vmatmul.f32.gmra.mxu0 %v2955
    %v3376 = vpop.f32.mrf.mxu0
    %v3377 = vadd.f32 0.0, %v3376
    %3378 = vmatmul.f32.gmra.mxu0 %v2956
    %v3379 = vpop.f32.mrf.mxu0
    %v3380 = vadd.f32 0.0, %v3379
    %3381 = vmatmul.f32.gmra.mxu0 %v2957
    %v3382 = vpop.f32.mrf.mxu0
    %v3383 = vadd.f32 0.0, %v3382
    %3384 = vmatmul.f32.gmra.mxu0 %v2958
    %v3385 = vpop.f32.mrf.mxu0
    %v3386 = vadd.f32 0.0, %v3385
    %3387 = vmatmul.f32.gmra.mxu0 %v2959
    %v3388 = vpop.f32.mrf.mxu0
    %v3389 = vadd.f32 0.0, %v3388
    %3390 = vmatmul.f32.gmra.mxu0 %v2960
    %v3391 = vpop.f32.mrf.mxu0
    %v3392 = vadd.f32 0.0, %v3391
    %3393 = vmatmul.f32.gmra.mxu0 %v2961
    %v3394 = vpop.f32.mrf.mxu0
    %v3395 = vadd.f32 0.0, %v3394
    %3396 = vmatmul.f32.gmra.mxu0 %v2962
    %v3397 = vpop.f32.mrf.mxu0
    %v3398 = vadd.f32 0.0, %v3397
    %3399 = vmatmul.f32.gmra.mxu0 %v2963
    %v3400 = vpop.f32.mrf.mxu0
    %v3401 = vadd.f32 0.0, %v3400
    %3402 = vmatmul.f32.gmra.mxu0 %v2964
    %v3403 = vpop.f32.mrf.mxu0
    %v3404 = vadd.f32 0.0, %v3403
    %3405 = vmatmul.f32.gmra.mxu0 %v2965
    %v3406 = vpop.f32.mrf.mxu0
    %v3407 = vadd.f32 0.0, %v3406
    %3408 = vmatmul.f32.gmra.mxu0 %v2966
    %v3409 = vpop.f32.mrf.mxu0
    %v3410 = vadd.f32 0.0, %v3409
    %3411 = vmatmul.f32.gmra.mxu0 %v2967
    %v3412 = vpop.f32.mrf.mxu0
    %v3413 = vadd.f32 0.0, %v3412
    %3414 = vmatmul.f32.gmra.mxu0 %v2968
    %v3415 = vpop.f32.mrf.mxu0
    %v3416 = vadd.f32 0.0, %v3415
    %3417 = vmatmul.f32.gmra.mxu0 %v2969
    %v3418 = vpop.f32.mrf.mxu0
    %v3419 = vadd.f32 0.0, %v3418
    %3420 = vmatmul.f32.gmra.mxu0 %v2970
    %v3421 = vpop.f32.mrf.mxu0
    %v3422 = vadd.f32 0.0, %v3421
    %3423 = vmatmul.f32.gmra.mxu0 %v2971
    %v3424 = vpop.f32.mrf.mxu0
    %v3425 = vadd.f32 0.0, %v3424
    %3426 = vmatmul.f32.gmra.mxu0 %v2972
    %v3427 = vpop.f32.mrf.mxu0
    %v3428 = vadd.f32 0.0, %v3427
    %3429 = vmatmul.f32.gmra.mxu0 %v2973
    %v3430 = vpop.f32.mrf.mxu0
    %v3431 = vadd.f32 0.0, %v3430
    %3432 = vdwg.mxu0
    %v3433 = vadd.f32 %v3271, %v3338
    %v3434 = vadd.f32 %v3272, %v3341
    %v3435 = vadd.f32 %v3273, %v3344
    %v3436 = vadd.f32 %v3274, %v3347
    %v3437 = vadd.f32 %v3275, %v3350
    %v3438 = vadd.f32 %v3276, %v3353
    %v3439 = vadd.f32 %v3277, %v3356
    %v3440 = vadd.f32 %v3278, %v3359
    %v3441 = vadd.f32 %v3279, %v3362
    %v3442 = vadd.f32 %v3280, %v3365
    %v3443 = vadd.f32 %v3281, %v3368
    %v3444 = vadd.f32 %v3282, %v3371
    %v3445 = vadd.f32 %v3283, %v3374
    %v3446 = vadd.f32 %v3284, %v3377
    %v3447 = vadd.f32 %v3285, %v3380
    %v3448 = vadd.f32 %v3286, %v3383
    %v3449 = vadd.f32 %v3287, %v3386
    %v3450 = vadd.f32 %v3288, %v3389
    %v3451 = vadd.f32 %v3289, %v3392
    %v3452 = vadd.f32 %v3290, %v3395
    %v3453 = vadd.f32 %v3291, %v3398
    %v3454 = vadd.f32 %v3292, %v3401
    %v3455 = vadd.f32 %v3293, %v3404
    %v3456 = vadd.f32 %v3294, %v3407
    %v3457 = vadd.f32 %v3295, %v3410
    %v3458 = vadd.f32 %v3296, %v3413
    %v3459 = vadd.f32 %v3297, %v3416
    %v3460 = vadd.f32 %v3298, %v3419
    %v3461 = vadd.f32 %v3299, %v3422
    %v3462 = vadd.f32 %v3300, %v3425
    %v3463 = vadd.f32 %v3301, %v3428
    %v3464 = vadd.f32 %v3302, %v3431
    %s3465 = scalar_lea.vmem %s7, 32
    %v3466 = vld [vmem:[%s3465] sm:$0xff]
    %v3467 = vld [vmem:[%s3465 + $0x8] sm:$0xff]
    %v3468 = vld [vmem:[%s3465 + $0x10] sm:$0xff]
    %v3469 = vld [vmem:[%s3465 + $0x18] sm:$0xff]
    %3470 = vmatpush.msra.mxu0 0.0
    %3471 = vmatpush.msra.mxu0 0.0
    %3472 = vmatpush.msra.mxu0 0.0
    %3473 = vmatpush.msra.mxu0 0.0
    %3474 = vmatpush.msra.mxu0 0.0
    %3475 = vmatpush.msra.mxu0 0.0
    %3476 = vmatpush.msra.mxu0 0.0
    %3477 = vmatpush.msra.mxu0 0.0
    %3478 = vmatpush.msra.mxu0 0.0
    %3479 = vmatpush.msra.mxu0 0.0
    %3480 = vmatpush.msra.mxu0 0.0
    %3481 = vmatpush.msra.mxu0 0.0
    %3482 = vmatpush.msra.mxu0 %v3469
    %3483 = vmatpush.msra.mxu0 %v3468
    %3484 = vmatpush.msra.mxu0 %v3467
    %3485 = vmatpush.msra.mxu0 %v3466
    %3486 = vmatmul.f32.gmra.mxu0 %v1381
    %v3487 = vpop.f32.mrf.mxu0
    %v3488 = vadd.f32 0.0, %v3487
    %3489 = vmatmul.f32.gmra.mxu0 %v1384
    %v3490 = vpop.f32.mrf.mxu0
    %v3491 = vadd.f32 0.0, %v3490
    %3492 = vmatmul.f32.gmra.mxu0 %v1387
    %v3493 = vpop.f32.mrf.mxu0
    %v3494 = vadd.f32 0.0, %v3493
    %3495 = vmatmul.f32.gmra.mxu0 %v1390
    %v3496 = vpop.f32.mrf.mxu0
    %v3497 = vadd.f32 0.0, %v3496
    %3498 = vmatmul.f32.gmra.mxu0 %v1393
    %v3499 = vpop.f32.mrf.mxu0
    %v3500 = vadd.f32 0.0, %v3499
    %3501 = vmatmul.f32.gmra.mxu0 %v1396
    %v3502 = vpop.f32.mrf.mxu0
    %v3503 = vadd.f32 0.0, %v3502
    %3504 = vmatmul.f32.gmra.mxu0 %v1399
    %v3505 = vpop.f32.mrf.mxu0
    %v3506 = vadd.f32 0.0, %v3505
    %3507 = vmatmul.f32.gmra.mxu0 %v1402
    %v3508 = vpop.f32.mrf.mxu0
    %v3509 = vadd.f32 0.0, %v3508
    %3510 = vmatmul.f32.gmra.mxu0 %v1405
    %v3511 = vpop.f32.mrf.mxu0
    %v3512 = vadd.f32 0.0, %v3511
    %3513 = vmatmul.f32.gmra.mxu0 %v1408
    %v3514 = vpop.f32.mrf.mxu0
    %v3515 = vadd.f32 0.0, %v3514
    %3516 = vmatmul.f32.gmra.mxu0 %v1411
    %v3517 = vpop.f32.mrf.mxu0
    %v3518 = vadd.f32 0.0, %v3517
    %3519 = vmatmul.f32.gmra.mxu0 %v1414
    %v3520 = vpop.f32.mrf.mxu0
    %v3521 = vadd.f32 0.0, %v3520
    %3522 = vmatmul.f32.gmra.mxu0 %v1417
    %v3523 = vpop.f32.mrf.mxu0
    %v3524 = vadd.f32 0.0, %v3523
    %3525 = vmatmul.f32.gmra.mxu0 %v1420
    %v3526 = vpop.f32.mrf.mxu0
    %v3527 = vadd.f32 0.0, %v3526
    %3528 = vmatmul.f32.gmra.mxu0 %v1423
    %v3529 = vpop.f32.mrf.mxu0
    %v3530 = vadd.f32 0.0, %v3529
    %3531 = vmatmul.f32.gmra.mxu0 %v1426
    %v3532 = vpop.f32.mrf.mxu0
    %v3533 = vadd.f32 0.0, %v3532
    %3534 = vmatmul.f32.gmra.mxu0 %v1429
    %v3535 = vpop.f32.mrf.mxu0
    %v3536 = vadd.f32 0.0, %v3535
    %3537 = vmatmul.f32.gmra.mxu0 %v1432
    %v3538 = vpop.f32.mrf.mxu0
    %v3539 = vadd.f32 0.0, %v3538
    %3540 = vmatmul.f32.gmra.mxu0 %v1435
    %v3541 = vpop.f32.mrf.mxu0
    %v3542 = vadd.f32 0.0, %v3541
    %3543 = vmatmul.f32.gmra.mxu0 %v1438
    %v3544 = vpop.f32.mrf.mxu0
    %v3545 = vadd.f32 0.0, %v3544
    %3546 = vmatmul.f32.gmra.mxu0 %v1441
    %v3547 = vpop.f32.mrf.mxu0
    %v3548 = vadd.f32 0.0, %v3547
    %3549 = vmatmul.f32.gmra.mxu0 %v1444
    %v3550 = vpop.f32.mrf.mxu0
    %v3551 = vadd.f32 0.0, %v3550
    %3552 = vmatmul.f32.gmra.mxu0 %v1447
    %v3553 = vpop.f32.mrf.mxu0
    %v3554 = vadd.f32 0.0, %v3553
    %3555 = vmatmul.f32.gmra.mxu0 %v1450
    %v3556 = vpop.f32.mrf.mxu0
    %v3557 = vadd.f32 0.0, %v3556
    %3558 = vmatmul.f32.gmra.mxu0 %v1453
    %v3559 = vpop.f32.mrf.mxu0
    %v3560 = vadd.f32 0.0, %v3559
    %3561 = vmatmul.f32.gmra.mxu0 %v1456
    %v3562 = vpop.f32.mrf.mxu0
    %v3563 = vadd.f32 0.0, %v3562
    %3564 = vmatmul.f32.gmra.mxu0 %v1459
    %v3565 = vpop.f32.mrf.mxu0
    %v3566 = vadd.f32 0.0, %v3565
    %3567 = vmatmul.f32.gmra.mxu0 %v1462
    %v3568 = vpop.f32.mrf.mxu0
    %v3569 = vadd.f32 0.0, %v3568
    %3570 = vmatmul.f32.gmra.mxu0 %v1465
    %v3571 = vpop.f32.mrf.mxu0
    %v3572 = vadd.f32 0.0, %v3571
    %3573 = vmatmul.f32.gmra.mxu0 %v1468
    %v3574 = vpop.f32.mrf.mxu0
    %v3575 = vadd.f32 0.0, %v3574
    %3576 = vmatmul.f32.gmra.mxu0 %v1471
    %v3577 = vpop.f32.mrf.mxu0
    %v3578 = vadd.f32 0.0, %v3577
    %3579 = vmatmul.f32.gmra.mxu0 %v1474
    %v3580 = vpop.f32.mrf.mxu0
    %v3581 = vadd.f32 0.0, %v3580
    %3582 = vdwg.mxu0
    %v3583 = vadd.f32 %v3433, %v3488
    %v3584 = vadd.f32 %v3434, %v3491
    %v3585 = vadd.f32 %v3435, %v3494
    %v3586 = vadd.f32 %v3436, %v3497
    %v3587 = vadd.f32 %v3437, %v3500
    %v3588 = vadd.f32 %v3438, %v3503
    %v3589 = vadd.f32 %v3439, %v3506
    %v3590 = vadd.f32 %v3440, %v3509
    %v3591 = vadd.f32 %v3441, %v3512
    %v3592 = vadd.f32 %v3442, %v3515
    %v3593 = vadd.f32 %v3443, %v3518
    %v3594 = vadd.f32 %v3444, %v3521
    %v3595 = vadd.f32 %v3445, %v3524
    %v3596 = vadd.f32 %v3446, %v3527
    %v3597 = vadd.f32 %v3447, %v3530
    %v3598 = vadd.f32 %v3448, %v3533
    %v3599 = vadd.f32 %v3449, %v3536
    %v3600 = vadd.f32 %v3450, %v3539
    %v3601 = vadd.f32 %v3451, %v3542
    %v3602 = vadd.f32 %v3452, %v3545
    %v3603 = vadd.f32 %v3453, %v3548
    %v3604 = vadd.f32 %v3454, %v3551
    %v3605 = vadd.f32 %v3455, %v3554
    %v3606 = vadd.f32 %v3456, %v3557
    %v3607 = vadd.f32 %v3457, %v3560
    %v3608 = vadd.f32 %v3458, %v3563
    %v3609 = vadd.f32 %v3459, %v3566
    %v3610 = vadd.f32 %v3460, %v3569
    %v3611 = vadd.f32 %v3461, %v3572
    %v3612 = vadd.f32 %v3462, %v3575
    %v3613 = vadd.f32 %v3463, %v3578
    %v3614 = vadd.f32 %v3464, %v3581
    %v3615 = vtanh.pop %v3583
    %v3616 = vtanh.pop %v3584
    %v3617 = vtanh.pop %v3585
    %v3618 = vtanh.pop %v3586
    %v3619 = vtanh.pop %v3587
    %v3620 = vtanh.pop %v3588
    %v3621 = vtanh.pop %v3589
    %v3622 = vtanh.pop %v3590
    %v3623 = vtanh.pop %v3591
    %v3624 = vtanh.pop %v3592
    %v3625 = vtanh.pop %v3593
    %v3626 = vtanh.pop %v3594
    %v3627 = vtanh.pop %v3595
    %v3628 = vtanh.pop %v3596
    %v3629 = vtanh.pop %v3597
    %v3630 = vtanh.pop %v3598
    %v3631 = vtanh.pop %v3599
    %v3632 = vtanh.pop %v3600
    %v3633 = vtanh.pop %v3601
    %v3634 = vtanh.pop %v3602
    %v3635 = vtanh.pop %v3603
    %v3636 = vtanh.pop %v3604
    %v3637 = vtanh.pop %v3605
    %v3638 = vtanh.pop %v3606
    %v3639 = vtanh.pop %v3607
    %v3640 = vtanh.pop %v3608
    %v3641 = vtanh.pop %v3609
    %v3642 = vtanh.pop %v3610
    %v3643 = vtanh.pop %v3611
    %v3644 = vtanh.pop %v3612
    %v3645 = vtanh.pop %v3613
    %v3646 = vtanh.pop %v3614
    %3647 = vrot.lane.b32.xlu0 %v3583, 64
    %v3648 = vpop.permute.xlu0 %3647
    %3649 = vrot.lane.b32.xlu0 %v3584, 64
    %v3650 = vpop.permute.xlu0 %3649
    %3651 = vrot.lane.b32.xlu0 %v3585, 64
    %v3652 = vpop.permute.xlu0 %3651
    %3653 = vrot.lane.b32.xlu0 %v3586, 64
    %v3654 = vpop.permute.xlu0 %3653
    %3655 = vrot.lane.b32.xlu0 %v3587, 64
    %v3656 = vpop.permute.xlu0 %3655
    %3657 = vrot.lane.b32.xlu0 %v3588, 64
    %v3658 = vpop.permute.xlu0 %3657
    %3659 = vrot.lane.b32.xlu0 %v3589, 64
    %v3660 = vpop.permute.xlu0 %3659
    %3661 = vrot.lane.b32.xlu0 %v3590, 64
    %v3662 = vpop.permute.xlu0 %3661
    %3663 = vrot.lane.b32.xlu0 %v3591, 64
    %v3664 = vpop.permute.xlu0 %3663
    %3665 = vrot.lane.b32.xlu0 %v3592, 64
    %v3666 = vpop.permute.xlu0 %3665
    %3667 = vrot.lane.b32.xlu0 %v3593, 64
    %v3668 = vpop.permute.xlu0 %3667
    %3669 = vrot.lane.b32.xlu0 %v3594, 64
    %v3670 = vpop.permute.xlu0 %3669
    %3671 = vrot.lane.b32.xlu0 %v3595, 64
    %v3672 = vpop.permute.xlu0 %3671
    %3673 = vrot.lane.b32.xlu0 %v3596, 64
    %v3674 = vpop.permute.xlu0 %3673
    %3675 = vrot.lane.b32.xlu0 %v3597, 64
    %v3676 = vpop.permute.xlu0 %3675
    %3677 = vrot.lane.b32.xlu0 %v3598, 64
    %v3678 = vpop.permute.xlu0 %3677
    %3679 = vrot.lane.b32.xlu0 %v3599, 64
    %v3680 = vpop.permute.xlu0 %3679
    %3681 = vrot.lane.b32.xlu0 %v3600, 64
    %v3682 = vpop.permute.xlu0 %3681
    %3683 = vrot.lane.b32.xlu0 %v3601, 64
    %v3684 = vpop.permute.xlu0 %3683
    %3685 = vrot.lane.b32.xlu0 %v3602, 64
    %v3686 = vpop.permute.xlu0 %3685
    %3687 = vrot.lane.b32.xlu0 %v3603, 64
    %v3688 = vpop.permute.xlu0 %3687
    %3689 = vrot.lane.b32.xlu0 %v3604, 64
    %v3690 = vpop.permute.xlu0 %3689
    %3691 = vrot.lane.b32.xlu0 %v3605, 64
    %v3692 = vpop.permute.xlu0 %3691
    %3693 = vrot.lane.b32.xlu0 %v3606, 64
    %v3694 = vpop.permute.xlu0 %3693
    %3695 = vrot.lane.b32.xlu0 %v3607, 64
    %v3696 = vpop.permute.xlu0 %3695
    %3697 = vrot.lane.b32.xlu0 %v3608, 64
    %v3698 = vpop.permute.xlu0 %3697
    %3699 = vrot.lane.b32.xlu0 %v3609, 64
    %v3700 = vpop.permute.xlu0 %3699
    %3701 = vrot.lane.b32.xlu0 %v3610, 64
    %v3702 = vpop.permute.xlu0 %3701
    %3703 = vrot.lane.b32.xlu0 %v3611, 64
    %v3704 = vpop.permute.xlu0 %3703
    %3705 = vrot.lane.b32.xlu0 %v3612, 64
    %v3706 = vpop.permute.xlu0 %3705
    %3707 = vrot.lane.b32.xlu0 %v3613, 64
    %v3708 = vpop.permute.xlu0 %3707
    %3709 = vrot.lane.b32.xlu0 %v3614, 64
    %v3710 = vpop.permute.xlu0 %3709
    %v3711 = vxor.u32 %v3648, 2147483648
    %v3712 = vxor.u32 %v3650, 2147483648
    %v3713 = vxor.u32 %v3652, 2147483648
    %v3714 = vxor.u32 %v3654, 2147483648
    %v3715 = vxor.u32 %v3656, 2147483648
    %v3716 = vxor.u32 %v3658, 2147483648
    %v3717 = vxor.u32 %v3660, 2147483648
    %v3718 = vxor.u32 %v3662, 2147483648
    %v3719 = vxor.u32 %v3664, 2147483648
    %v3720 = vxor.u32 %v3666, 2147483648
    %v3721 = vxor.u32 %v3668, 2147483648
    %v3722 = vxor.u32 %v3670, 2147483648
    %v3723 = vxor.u32 %v3672, 2147483648
    %v3724 = vxor.u32 %v3674, 2147483648
    %v3725 = vxor.u32 %v3676, 2147483648
    %v3726 = vxor.u32 %v3678, 2147483648
    %v3727 = vxor.u32 %v3680, 2147483648
    %v3728 = vxor.u32 %v3682, 2147483648
    %v3729 = vxor.u32 %v3684, 2147483648
    %v3730 = vxor.u32 %v3686, 2147483648
    %v3731 = vxor.u32 %v3688, 2147483648
    %v3732 = vxor.u32 %v3690, 2147483648
    %v3733 = vxor.u32 %v3692, 2147483648
    %v3734 = vxor.u32 %v3694, 2147483648
    %v3735 = vxor.u32 %v3696, 2147483648
    %v3736 = vxor.u32 %v3698, 2147483648
    %v3737 = vxor.u32 %v3700, 2147483648
    %v3738 = vxor.u32 %v3702, 2147483648
    %v3739 = vxor.u32 %v3704, 2147483648
    %v3740 = vxor.u32 %v3706, 2147483648
    %v3741 = vxor.u32 %v3708, 2147483648
    %v3742 = vxor.u32 %v3710, 2147483648
    %v3743 = vmul.f32 %v3711, 1.442695
    %v3744 = vpow.pop %v3743
    %v3745 = vmul.f32 %v3712, 1.442695
    %v3746 = vpow.pop %v3745
    %v3747 = vmul.f32 %v3713, 1.442695
    %v3748 = vpow.pop %v3747
    %v3749 = vmul.f32 %v3714, 1.442695
    %v3750 = vpow.pop %v3749
    %v3751 = vmul.f32 %v3715, 1.442695
    %v3752 = vpow.pop %v3751
    %v3753 = vmul.f32 %v3716, 1.442695
    %v3754 = vpow.pop %v3753
    %v3755 = vmul.f32 %v3717, 1.442695
    %v3756 = vpow.pop %v3755
    %v3757 = vmul.f32 %v3718, 1.442695
    %v3758 = vpow.pop %v3757
    %v3759 = vmul.f32 %v3719, 1.442695
    %v3760 = vpow.pop %v3759
    %v3761 = vmul.f32 %v3720, 1.442695
    %v3762 = vpow.pop %v3761
    %v3763 = vmul.f32 %v3721, 1.442695
    %v3764 = vpow.pop %v3763
    %v3765 = vmul.f32 %v3722, 1.442695
    %v3766 = vpow.pop %v3765
    %v3767 = vmul.f32 %v3723, 1.442695
    %v3768 = vpow.pop %v3767
    %v3769 = vmul.f32 %v3724, 1.442695
    %v3770 = vpow.pop %v3769
    %v3771 = vmul.f32 %v3725, 1.442695
    %v3772 = vpow.pop %v3771
    %v3773 = vmul.f32 %v3726, 1.442695
    %v3774 = vpow.pop %v3773
    %v3775 = vmul.f32 %v3727, 1.442695
    %v3776 = vpow.pop %v3775
    %v3777 = vmul.f32 %v3728, 1.442695
    %v3778 = vpow.pop %v3777
    %v3779 = vmul.f32 %v3729, 1.442695
    %v3780 = vpow.pop %v3779
    %v3781 = vmul.f32 %v3730, 1.442695
    %v3782 = vpow.pop %v3781
    %v3783 = vmul.f32 %v3731, 1.442695
    %v3784 = vpow.pop %v3783
    %v3785 = vmul.f32 %v3732, 1.442695
    %v3786 = vpow.pop %v3785
    %v3787 = vmul.f32 %v3733, 1.442695
    %v3788 = vpow.pop %v3787
    %v3789 = vmul.f32 %v3734, 1.442695
    %v3790 = vpow.pop %v3789
    %v3791 = vmul.f32 %v3735, 1.442695
    %v3792 = vpow.pop %v3791
    %v3793 = vmul.f32 %v3736, 1.442695
    %v3794 = vpow.pop %v3793
    %v3795 = vmul.f32 %v3737, 1.442695
    %v3796 = vpow.pop %v3795
    %v3797 = vmul.f32 %v3738, 1.442695
    %v3798 = vpow.pop %v3797
    %v3799 = vmul.f32 %v3739, 1.442695
    %v3800 = vpow.pop %v3799
    %v3801 = vmul.f32 %v3740, 1.442695
    %v3802 = vpow.pop %v3801
    %v3803 = vmul.f32 %v3741, 1.442695
    %v3804 = vpow.pop %v3803
    %v3805 = vmul.f32 %v3742, 1.442695
    %v3806 = vpow.pop %v3805
    %v3807 = vadd.f32 %v3744, 1.0
    %v3808 = vadd.f32 %v3746, 1.0
    %v3809 = vadd.f32 %v3748, 1.0
    %v3810 = vadd.f32 %v3750, 1.0
    %v3811 = vadd.f32 %v3752, 1.0
    %v3812 = vadd.f32 %v3754, 1.0
    %v3813 = vadd.f32 %v3756, 1.0
    %v3814 = vadd.f32 %v3758, 1.0
    %v3815 = vadd.f32 %v3760, 1.0
    %v3816 = vadd.f32 %v3762, 1.0
    %v3817 = vadd.f32 %v3764, 1.0
    %v3818 = vadd.f32 %v3766, 1.0
    %v3819 = vadd.f32 %v3768, 1.0
    %v3820 = vadd.f32 %v3770, 1.0
    %v3821 = vadd.f32 %v3772, 1.0
    %v3822 = vadd.f32 %v3774, 1.0
    %v3823 = vadd.f32 %v3776, 1.0
    %v3824 = vadd.f32 %v3778, 1.0
    %v3825 = vadd.f32 %v3780, 1.0
    %v3826 = vadd.f32 %v3782, 1.0
    %v3827 = vadd.f32 %v3784, 1.0
    %v3828 = vadd.f32 %v3786, 1.0
    %v3829 = vadd.f32 %v3788, 1.0
    %v3830 = vadd.f32 %v3790, 1.0
    %v3831 = vadd.f32 %v3792, 1.0
    %v3832 = vadd.f32 %v3794, 1.0
    %v3833 = vadd.f32 %v3796, 1.0
    %v3834 = vadd.f32 %v3798, 1.0
    %v3835 = vadd.f32 %v3800, 1.0
    %v3836 = vadd.f32 %v3802, 1.0
    %v3837 = vadd.f32 %v3804, 1.0
    %v3838 = vadd.f32 %v3806, 1.0
    %v3839 = vrcp.pop %v3807
    %v3840 = vmul.f32 %v3807, %v3839
    %v3841 = vsub.f32 1.0, %v3840
    %v3842 = vmul.f32 %v3839, %v3841
    %v3843 = vadd.f32 %v3839, %v3842
    %vm3844 = vweird.f32 %v3807
    %vm3845 = vweird.f32 %v3839
    %vm3846 = vmor %vm3844, %vm3845
    %v3847 = vsel %vm3846, %v3839, %v3843
    %v3848 = vand.u32 2147483647, %v3807
    %vm3849 = vcmp.eq.f32.partialorder %v3848, 8.507059e+37
    %v3850 = vand.u32 %v3807, 2147483648
    %v3851 = vor.u32 1.1754944e-38, %v3850
    %v3852 = vsel %vm3849, %v3851, %v3847
    %v3853 = vmul.f32 1.0, %v3852
    %v3854 = vrcp.pop %v3808
    %v3855 = vmul.f32 %v3808, %v3854
    %v3856 = vsub.f32 1.0, %v3855
    %v3857 = vmul.f32 %v3854, %v3856
    %v3858 = vadd.f32 %v3854, %v3857
    %vm3859 = vweird.f32 %v3808
    %vm3860 = vweird.f32 %v3854
    %vm3861 = vmor %vm3859, %vm3860
    %v3862 = vsel %vm3861, %v3854, %v3858
    %v3863 = vand.u32 2147483647, %v3808
    %vm3864 = vcmp.eq.f32.partialorder %v3863, 8.507059e+37
    %v3865 = vand.u32 %v3808, 2147483648
    %v3866 = vor.u32 1.1754944e-38, %v3865
    %v3867 = vsel %vm3864, %v3866, %v3862
    %v3868 = vmul.f32 1.0, %v3867
    %v3869 = vrcp.pop %v3809
    %v3870 = vmul.f32 %v3809, %v3869
    %v3871 = vsub.f32 1.0, %v3870
    %v3872 = vmul.f32 %v3869, %v3871
    %v3873 = vadd.f32 %v3869, %v3872
    %vm3874 = vweird.f32 %v3809
    %vm3875 = vweird.f32 %v3869
    %vm3876 = vmor %vm3874, %vm3875
    %v3877 = vsel %vm3876, %v3869, %v3873
    %v3878 = vand.u32 2147483647, %v3809
    %vm3879 = vcmp.eq.f32.partialorder %v3878, 8.507059e+37
    %v3880 = vand.u32 %v3809, 2147483648
    %v3881 = vor.u32 1.1754944e-38, %v3880
    %v3882 = vsel %vm3879, %v3881, %v3877
    %v3883 = vmul.f32 1.0, %v3882
    %v3884 = vrcp.pop %v3810
    %v3885 = vmul.f32 %v3810, %v3884
    %v3886 = vsub.f32 1.0, %v3885
    %v3887 = vmul.f32 %v3884, %v3886
    %v3888 = vadd.f32 %v3884, %v3887
    %vm3889 = vweird.f32 %v3810
    %vm3890 = vweird.f32 %v3884
    %vm3891 = vmor %vm3889, %vm3890
    %v3892 = vsel %vm3891, %v3884, %v3888
    %v3893 = vand.u32 2147483647, %v3810
    %vm3894 = vcmp.eq.f32.partialorder %v3893, 8.507059e+37
    %v3895 = vand.u32 %v3810, 2147483648
    %v3896 = vor.u32 1.1754944e-38, %v3895
    %v3897 = vsel %vm3894, %v3896, %v3892
    %v3898 = vmul.f32 1.0, %v3897
    %v3899 = vrcp.pop %v3811
    %v3900 = vmul.f32 %v3811, %v3899
    %v3901 = vsub.f32 1.0, %v3900
    %v3902 = vmul.f32 %v3899, %v3901
    %v3903 = vadd.f32 %v3899, %v3902
    %vm3904 = vweird.f32 %v3811
    %vm3905 = vweird.f32 %v3899
    %vm3906 = vmor %vm3904, %vm3905
    %v3907 = vsel %vm3906, %v3899, %v3903
    %v3908 = vand.u32 2147483647, %v3811
    %vm3909 = vcmp.eq.f32.partialorder %v3908, 8.507059e+37
    %v3910 = vand.u32 %v3811, 2147483648
    %v3911 = vor.u32 1.1754944e-38, %v3910
    %v3912 = vsel %vm3909, %v3911, %v3907
    %v3913 = vmul.f32 1.0, %v3912
    %v3914 = vrcp.pop %v3812
    %v3915 = vmul.f32 %v3812, %v3914
    %v3916 = vsub.f32 1.0, %v3915
    %v3917 = vmul.f32 %v3914, %v3916
    %v3918 = vadd.f32 %v3914, %v3917
    %vm3919 = vweird.f32 %v3812
    %vm3920 = vweird.f32 %v3914
    %vm3921 = vmor %vm3919, %vm3920
    %v3922 = vsel %vm3921, %v3914, %v3918
    %v3923 = vand.u32 2147483647, %v3812
    %vm3924 = vcmp.eq.f32.partialorder %v3923, 8.507059e+37
    %v3925 = vand.u32 %v3812, 2147483648
    %v3926 = vor.u32 1.1754944e-38, %v3925
    %v3927 = vsel %vm3924, %v3926, %v3922
    %v3928 = vmul.f32 1.0, %v3927
    %v3929 = vrcp.pop %v3813
    %v3930 = vmul.f32 %v3813, %v3929
    %v3931 = vsub.f32 1.0, %v3930
    %v3932 = vmul.f32 %v3929, %v3931
    %v3933 = vadd.f32 %v3929, %v3932
    %vm3934 = vweird.f32 %v3813
    %vm3935 = vweird.f32 %v3929
    %vm3936 = vmor %vm3934, %vm3935
    %v3937 = vsel %vm3936, %v3929, %v3933
    %v3938 = vand.u32 2147483647, %v3813
    %vm3939 = vcmp.eq.f32.partialorder %v3938, 8.507059e+37
    %v3940 = vand.u32 %v3813, 2147483648
    %v3941 = vor.u32 1.1754944e-38, %v3940
    %v3942 = vsel %vm3939, %v3941, %v3937
    %v3943 = vmul.f32 1.0, %v3942
    %v3944 = vrcp.pop %v3814
    %v3945 = vmul.f32 %v3814, %v3944
    %v3946 = vsub.f32 1.0, %v3945
    %v3947 = vmul.f32 %v3944, %v3946
    %v3948 = vadd.f32 %v3944, %v3947
    %vm3949 = vweird.f32 %v3814
    %vm3950 = vweird.f32 %v3944
    %vm3951 = vmor %vm3949, %vm3950
    %v3952 = vsel %vm3951, %v3944, %v3948
    %v3953 = vand.u32 2147483647, %v3814
    %vm3954 = vcmp.eq.f32.partialorder %v3953, 8.507059e+37
    %v3955 = vand.u32 %v3814, 2147483648
    %v3956 = vor.u32 1.1754944e-38, %v3955
    %v3957 = vsel %vm3954, %v3956, %v3952
    %v3958 = vmul.f32 1.0, %v3957
    %v3959 = vrcp.pop %v3815
    %v3960 = vmul.f32 %v3815, %v3959
    %v3961 = vsub.f32 1.0, %v3960
    %v3962 = vmul.f32 %v3959, %v3961
    %v3963 = vadd.f32 %v3959, %v3962
    %vm3964 = vweird.f32 %v3815
    %vm3965 = vweird.f32 %v3959
    %vm3966 = vmor %vm3964, %vm3965
    %v3967 = vsel %vm3966, %v3959, %v3963
    %v3968 = vand.u32 2147483647, %v3815
    %vm3969 = vcmp.eq.f32.partialorder %v3968, 8.507059e+37
    %v3970 = vand.u32 %v3815, 2147483648
    %v3971 = vor.u32 1.1754944e-38, %v3970
    %v3972 = vsel %vm3969, %v3971, %v3967
    %v3973 = vmul.f32 1.0, %v3972
    %v3974 = vrcp.pop %v3816
    %v3975 = vmul.f32 %v3816, %v3974
    %v3976 = vsub.f32 1.0, %v3975
    %v3977 = vmul.f32 %v3974, %v3976
    %v3978 = vadd.f32 %v3974, %v3977
    %vm3979 = vweird.f32 %v3816
    %vm3980 = vweird.f32 %v3974
    %vm3981 = vmor %vm3979, %vm3980
    %v3982 = vsel %vm3981, %v3974, %v3978
    %v3983 = vand.u32 2147483647, %v3816
    %vm3984 = vcmp.eq.f32.partialorder %v3983, 8.507059e+37
    %v3985 = vand.u32 %v3816, 2147483648
    %v3986 = vor.u32 1.1754944e-38, %v3985
    %v3987 = vsel %vm3984, %v3986, %v3982
    %v3988 = vmul.f32 1.0, %v3987
    %v3989 = vrcp.pop %v3817
    %v3990 = vmul.f32 %v3817, %v3989
    %v3991 = vsub.f32 1.0, %v3990
    %v3992 = vmul.f32 %v3989, %v3991
    %v3993 = vadd.f32 %v3989, %v3992
    %vm3994 = vweird.f32 %v3817
    %vm3995 = vweird.f32 %v3989
    %vm3996 = vmor %vm3994, %vm3995
    %v3997 = vsel %vm3996, %v3989, %v3993
    %v3998 = vand.u32 2147483647, %v3817
    %vm3999 = vcmp.eq.f32.partialorder %v3998, 8.507059e+37
    %v4000 = vand.u32 %v3817, 2147483648
    %v4001 = vor.u32 1.1754944e-38, %v4000
    %v4002 = vsel %vm3999, %v4001, %v3997
    %v4003 = vmul.f32 1.0, %v4002
    %v4004 = vrcp.pop %v3818
    %v4005 = vmul.f32 %v3818, %v4004
    %v4006 = vsub.f32 1.0, %v4005
    %v4007 = vmul.f32 %v4004, %v4006
    %v4008 = vadd.f32 %v4004, %v4007
    %vm4009 = vweird.f32 %v3818
    %vm4010 = vweird.f32 %v4004
    %vm4011 = vmor %vm4009, %vm4010
    %v4012 = vsel %vm4011, %v4004, %v4008
    %v4013 = vand.u32 2147483647, %v3818
    %vm4014 = vcmp.eq.f32.partialorder %v4013, 8.507059e+37
    %v4015 = vand.u32 %v3818, 2147483648
    %v4016 = vor.u32 1.1754944e-38, %v4015
    %v4017 = vsel %vm4014, %v4016, %v4012
    %v4018 = vmul.f32 1.0, %v4017
    %v4019 = vrcp.pop %v3819
    %v4020 = vmul.f32 %v3819, %v4019
    %v4021 = vsub.f32 1.0, %v4020
    %v4022 = vmul.f32 %v4019, %v4021
    %v4023 = vadd.f32 %v4019, %v4022
    %vm4024 = vweird.f32 %v3819
    %vm4025 = vweird.f32 %v4019
    %vm4026 = vmor %vm4024, %vm4025
    %v4027 = vsel %vm4026, %v4019, %v4023
    %v4028 = vand.u32 2147483647, %v3819
    %vm4029 = vcmp.eq.f32.partialorder %v4028, 8.507059e+37
    %v4030 = vand.u32 %v3819, 2147483648
    %v4031 = vor.u32 1.1754944e-38, %v4030
    %v4032 = vsel %vm4029, %v4031, %v4027
    %v4033 = vmul.f32 1.0, %v4032
    %v4034 = vrcp.pop %v3820
    %v4035 = vmul.f32 %v3820, %v4034
    %v4036 = vsub.f32 1.0, %v4035
    %v4037 = vmul.f32 %v4034, %v4036
    %v4038 = vadd.f32 %v4034, %v4037
    %vm4039 = vweird.f32 %v3820
    %vm4040 = vweird.f32 %v4034
    %vm4041 = vmor %vm4039, %vm4040
    %v4042 = vsel %vm4041, %v4034, %v4038
    %v4043 = vand.u32 2147483647, %v3820
    %vm4044 = vcmp.eq.f32.partialorder %v4043, 8.507059e+37
    %v4045 = vand.u32 %v3820, 2147483648
    %v4046 = vor.u32 1.1754944e-38, %v4045
    %v4047 = vsel %vm4044, %v4046, %v4042
    %v4048 = vmul.f32 1.0, %v4047
    %v4049 = vrcp.pop %v3821
    %v4050 = vmul.f32 %v3821, %v4049
    %v4051 = vsub.f32 1.0, %v4050
    %v4052 = vmul.f32 %v4049, %v4051
    %v4053 = vadd.f32 %v4049, %v4052
    %vm4054 = vweird.f32 %v3821
    %vm4055 = vweird.f32 %v4049
    %vm4056 = vmor %vm4054, %vm4055
    %v4057 = vsel %vm4056, %v4049, %v4053
    %v4058 = vand.u32 2147483647, %v3821
    %vm4059 = vcmp.eq.f32.partialorder %v4058, 8.507059e+37
    %v4060 = vand.u32 %v3821, 2147483648
    %v4061 = vor.u32 1.1754944e-38, %v4060
    %v4062 = vsel %vm4059, %v4061, %v4057
    %v4063 = vmul.f32 1.0, %v4062
    %v4064 = vrcp.pop %v3822
    %v4065 = vmul.f32 %v3822, %v4064
    %v4066 = vsub.f32 1.0, %v4065
    %v4067 = vmul.f32 %v4064, %v4066
    %v4068 = vadd.f32 %v4064, %v4067
    %vm4069 = vweird.f32 %v3822
    %vm4070 = vweird.f32 %v4064
    %vm4071 = vmor %vm4069, %vm4070
    %v4072 = vsel %vm4071, %v4064, %v4068
    %v4073 = vand.u32 2147483647, %v3822
    %vm4074 = vcmp.eq.f32.partialorder %v4073, 8.507059e+37
    %v4075 = vand.u32 %v3822, 2147483648
    %v4076 = vor.u32 1.1754944e-38, %v4075
    %v4077 = vsel %vm4074, %v4076, %v4072
    %v4078 = vmul.f32 1.0, %v4077
    %v4079 = vrcp.pop %v3823
    %v4080 = vmul.f32 %v3823, %v4079
    %v4081 = vsub.f32 1.0, %v4080
    %v4082 = vmul.f32 %v4079, %v4081
    %v4083 = vadd.f32 %v4079, %v4082
    %vm4084 = vweird.f32 %v3823
    %vm4085 = vweird.f32 %v4079
    %vm4086 = vmor %vm4084, %vm4085
    %v4087 = vsel %vm4086, %v4079, %v4083
    %v4088 = vand.u32 2147483647, %v3823
    %vm4089 = vcmp.eq.f32.partialorder %v4088, 8.507059e+37
    %v4090 = vand.u32 %v3823, 2147483648
    %v4091 = vor.u32 1.1754944e-38, %v4090
    %v4092 = vsel %vm4089, %v4091, %v4087
    %v4093 = vmul.f32 1.0, %v4092
    %v4094 = vrcp.pop %v3824
    %v4095 = vmul.f32 %v3824, %v4094
    %v4096 = vsub.f32 1.0, %v4095
    %v4097 = vmul.f32 %v4094, %v4096
    %v4098 = vadd.f32 %v4094, %v4097
    %vm4099 = vweird.f32 %v3824
    %vm4100 = vweird.f32 %v4094
    %vm4101 = vmor %vm4099, %vm4100
    %v4102 = vsel %vm4101, %v4094, %v4098
    %v4103 = vand.u32 2147483647, %v3824
    %vm4104 = vcmp.eq.f32.partialorder %v4103, 8.507059e+37
    %v4105 = vand.u32 %v3824, 2147483648
    %v4106 = vor.u32 1.1754944e-38, %v4105
    %v4107 = vsel %vm4104, %v4106, %v4102
    %v4108 = vmul.f32 1.0, %v4107
    %v4109 = vrcp.pop %v3825
    %v4110 = vmul.f32 %v3825, %v4109
    %v4111 = vsub.f32 1.0, %v4110
    %v4112 = vmul.f32 %v4109, %v4111
    %v4113 = vadd.f32 %v4109, %v4112
    %vm4114 = vweird.f32 %v3825
    %vm4115 = vweird.f32 %v4109
    %vm4116 = vmor %vm4114, %vm4115
    %v4117 = vsel %vm4116, %v4109, %v4113
    %v4118 = vand.u32 2147483647, %v3825
    %vm4119 = vcmp.eq.f32.partialorder %v4118, 8.507059e+37
    %v4120 = vand.u32 %v3825, 2147483648
    %v4121 = vor.u32 1.1754944e-38, %v4120
    %v4122 = vsel %vm4119, %v4121, %v4117
    %v4123 = vmul.f32 1.0, %v4122
    %v4124 = vrcp.pop %v3826
    %v4125 = vmul.f32 %v3826, %v4124
    %v4126 = vsub.f32 1.0, %v4125
    %v4127 = vmul.f32 %v4124, %v4126
    %v4128 = vadd.f32 %v4124, %v4127
    %vm4129 = vweird.f32 %v3826
    %vm4130 = vweird.f32 %v4124
    %vm4131 = vmor %vm4129, %vm4130
    %v4132 = vsel %vm4131, %v4124, %v4128
    %v4133 = vand.u32 2147483647, %v3826
    %vm4134 = vcmp.eq.f32.partialorder %v4133, 8.507059e+37
    %v4135 = vand.u32 %v3826, 2147483648
    %v4136 = vor.u32 1.1754944e-38, %v4135
    %v4137 = vsel %vm4134, %v4136, %v4132
    %v4138 = vmul.f32 1.0, %v4137
    %v4139 = vrcp.pop %v3827
    %v4140 = vmul.f32 %v3827, %v4139
    %v4141 = vsub.f32 1.0, %v4140
    %v4142 = vmul.f32 %v4139, %v4141
    %v4143 = vadd.f32 %v4139, %v4142
    %vm4144 = vweird.f32 %v3827
    %vm4145 = vweird.f32 %v4139
    %vm4146 = vmor %vm4144, %vm4145
    %v4147 = vsel %vm4146, %v4139, %v4143
    %v4148 = vand.u32 2147483647, %v3827
    %vm4149 = vcmp.eq.f32.partialorder %v4148, 8.507059e+37
    %v4150 = vand.u32 %v3827, 2147483648
    %v4151 = vor.u32 1.1754944e-38, %v4150
    %v4152 = vsel %vm4149, %v4151, %v4147
    %v4153 = vmul.f32 1.0, %v4152
    %v4154 = vrcp.pop %v3828
    %v4155 = vmul.f32 %v3828, %v4154
    %v4156 = vsub.f32 1.0, %v4155
    %v4157 = vmul.f32 %v4154, %v4156
    %v4158 = vadd.f32 %v4154, %v4157
    %vm4159 = vweird.f32 %v3828
    %vm4160 = vweird.f32 %v4154
    %vm4161 = vmor %vm4159, %vm4160
    %v4162 = vsel %vm4161, %v4154, %v4158
    %v4163 = vand.u32 2147483647, %v3828
    %vm4164 = vcmp.eq.f32.partialorder %v4163, 8.507059e+37
    %v4165 = vand.u32 %v3828, 2147483648
    %v4166 = vor.u32 1.1754944e-38, %v4165
    %v4167 = vsel %vm4164, %v4166, %v4162
    %v4168 = vmul.f32 1.0, %v4167
    %v4169 = vrcp.pop %v3829
    %v4170 = vmul.f32 %v3829, %v4169
    %v4171 = vsub.f32 1.0, %v4170
    %v4172 = vmul.f32 %v4169, %v4171
    %v4173 = vadd.f32 %v4169, %v4172
    %vm4174 = vweird.f32 %v3829
    %vm4175 = vweird.f32 %v4169
    %vm4176 = vmor %vm4174, %vm4175
    %v4177 = vsel %vm4176, %v4169, %v4173
    %v4178 = vand.u32 2147483647, %v3829
    %vm4179 = vcmp.eq.f32.partialorder %v4178, 8.507059e+37
    %v4180 = vand.u32 %v3829, 2147483648
    %v4181 = vor.u32 1.1754944e-38, %v4180
    %v4182 = vsel %vm4179, %v4181, %v4177
    %v4183 = vmul.f32 1.0, %v4182
    %v4184 = vrcp.pop %v3830
    %v4185 = vmul.f32 %v3830, %v4184
    %v4186 = vsub.f32 1.0, %v4185
    %v4187 = vmul.f32 %v4184, %v4186
    %v4188 = vadd.f32 %v4184, %v4187
    %vm4189 = vweird.f32 %v3830
    %vm4190 = vweird.f32 %v4184
    %vm4191 = vmor %vm4189, %vm4190
    %v4192 = vsel %vm4191, %v4184, %v4188
    %v4193 = vand.u32 2147483647, %v3830
    %vm4194 = vcmp.eq.f32.partialorder %v4193, 8.507059e+37
    %v4195 = vand.u32 %v3830, 2147483648
    %v4196 = vor.u32 1.1754944e-38, %v4195
    %v4197 = vsel %vm4194, %v4196, %v4192
    %v4198 = vmul.f32 1.0, %v4197
    %v4199 = vrcp.pop %v3831
    %v4200 = vmul.f32 %v3831, %v4199
    %v4201 = vsub.f32 1.0, %v4200
    %v4202 = vmul.f32 %v4199, %v4201
    %v4203 = vadd.f32 %v4199, %v4202
    %vm4204 = vweird.f32 %v3831
    %vm4205 = vweird.f32 %v4199
    %vm4206 = vmor %vm4204, %vm4205
    %v4207 = vsel %vm4206, %v4199, %v4203
    %v4208 = vand.u32 2147483647, %v3831
    %vm4209 = vcmp.eq.f32.partialorder %v4208, 8.507059e+37
    %v4210 = vand.u32 %v3831, 2147483648
    %v4211 = vor.u32 1.1754944e-38, %v4210
    %v4212 = vsel %vm4209, %v4211, %v4207
    %v4213 = vmul.f32 1.0, %v4212
    %v4214 = vrcp.pop %v3832
    %v4215 = vmul.f32 %v3832, %v4214
    %v4216 = vsub.f32 1.0, %v4215
    %v4217 = vmul.f32 %v4214, %v4216
    %v4218 = vadd.f32 %v4214, %v4217
    %vm4219 = vweird.f32 %v3832
    %vm4220 = vweird.f32 %v4214
    %vm4221 = vmor %vm4219, %vm4220
    %v4222 = vsel %vm4221, %v4214, %v4218
    %v4223 = vand.u32 2147483647, %v3832
    %vm4224 = vcmp.eq.f32.partialorder %v4223, 8.507059e+37
    %v4225 = vand.u32 %v3832, 2147483648
    %v4226 = vor.u32 1.1754944e-38, %v4225
    %v4227 = vsel %vm4224, %v4226, %v4222
    %v4228 = vmul.f32 1.0, %v4227
    %v4229 = vrcp.pop %v3833
    %v4230 = vmul.f32 %v3833, %v4229
    %v4231 = vsub.f32 1.0, %v4230
    %v4232 = vmul.f32 %v4229, %v4231
    %v4233 = vadd.f32 %v4229, %v4232
    %vm4234 = vweird.f32 %v3833
    %vm4235 = vweird.f32 %v4229
    %vm4236 = vmor %vm4234, %vm4235
    %v4237 = vsel %vm4236, %v4229, %v4233
    %v4238 = vand.u32 2147483647, %v3833
    %vm4239 = vcmp.eq.f32.partialorder %v4238, 8.507059e+37
    %v4240 = vand.u32 %v3833, 2147483648
    %v4241 = vor.u32 1.1754944e-38, %v4240
    %v4242 = vsel %vm4239, %v4241, %v4237
    %v4243 = vmul.f32 1.0, %v4242
    %v4244 = vrcp.pop %v3834
    %v4245 = vmul.f32 %v3834, %v4244
    %v4246 = vsub.f32 1.0, %v4245
    %v4247 = vmul.f32 %v4244, %v4246
    %v4248 = vadd.f32 %v4244, %v4247
    %vm4249 = vweird.f32 %v3834
    %vm4250 = vweird.f32 %v4244
    %vm4251 = vmor %vm4249, %vm4250
    %v4252 = vsel %vm4251, %v4244, %v4248
    %v4253 = vand.u32 2147483647, %v3834
    %vm4254 = vcmp.eq.f32.partialorder %v4253, 8.507059e+37
    %v4255 = vand.u32 %v3834, 2147483648
    %v4256 = vor.u32 1.1754944e-38, %v4255
    %v4257 = vsel %vm4254, %v4256, %v4252
    %v4258 = vmul.f32 1.0, %v4257
    %v4259 = vrcp.pop %v3835
    %v4260 = vmul.f32 %v3835, %v4259
    %v4261 = vsub.f32 1.0, %v4260
    %v4262 = vmul.f32 %v4259, %v4261
    %v4263 = vadd.f32 %v4259, %v4262
    %vm4264 = vweird.f32 %v3835
    %vm4265 = vweird.f32 %v4259
    %vm4266 = vmor %vm4264, %vm4265
    %v4267 = vsel %vm4266, %v4259, %v4263
    %v4268 = vand.u32 2147483647, %v3835
    %vm4269 = vcmp.eq.f32.partialorder %v4268, 8.507059e+37
    %v4270 = vand.u32 %v3835, 2147483648
    %v4271 = vor.u32 1.1754944e-38, %v4270
    %v4272 = vsel %vm4269, %v4271, %v4267
    %v4273 = vmul.f32 1.0, %v4272
    %v4274 = vrcp.pop %v3836
    %v4275 = vmul.f32 %v3836, %v4274
    %v4276 = vsub.f32 1.0, %v4275
    %v4277 = vmul.f32 %v4274, %v4276
    %v4278 = vadd.f32 %v4274, %v4277
    %vm4279 = vweird.f32 %v3836
    %vm4280 = vweird.f32 %v4274
    %vm4281 = vmor %vm4279, %vm4280
    %v4282 = vsel %vm4281, %v4274, %v4278
    %v4283 = vand.u32 2147483647, %v3836
    %vm4284 = vcmp.eq.f32.partialorder %v4283, 8.507059e+37
    %v4285 = vand.u32 %v3836, 2147483648
    %v4286 = vor.u32 1.1754944e-38, %v4285
    %v4287 = vsel %vm4284, %v4286, %v4282
    %v4288 = vmul.f32 1.0, %v4287
    %v4289 = vrcp.pop %v3837
    %v4290 = vmul.f32 %v3837, %v4289
    %v4291 = vsub.f32 1.0, %v4290
    %v4292 = vmul.f32 %v4289, %v4291
    %v4293 = vadd.f32 %v4289, %v4292
    %vm4294 = vweird.f32 %v3837
    %vm4295 = vweird.f32 %v4289
    %vm4296 = vmor %vm4294, %vm4295
    %v4297 = vsel %vm4296, %v4289, %v4293
    %v4298 = vand.u32 2147483647, %v3837
    %vm4299 = vcmp.eq.f32.partialorder %v4298, 8.507059e+37
    %v4300 = vand.u32 %v3837, 2147483648
    %v4301 = vor.u32 1.1754944e-38, %v4300
    %v4302 = vsel %vm4299, %v4301, %v4297
    %v4303 = vmul.f32 1.0, %v4302
    %v4304 = vrcp.pop %v3838
    %v4305 = vmul.f32 %v3838, %v4304
    %v4306 = vsub.f32 1.0, %v4305
    %v4307 = vmul.f32 %v4304, %v4306
    %v4308 = vadd.f32 %v4304, %v4307
    %vm4309 = vweird.f32 %v3838
    %vm4310 = vweird.f32 %v4304
    %vm4311 = vmor %vm4309, %vm4310
    %v4312 = vsel %vm4311, %v4304, %v4308
    %v4313 = vand.u32 2147483647, %v3838
    %vm4314 = vcmp.eq.f32.partialorder %v4313, 8.507059e+37
    %v4315 = vand.u32 %v3838, 2147483648
    %v4316 = vor.u32 1.1754944e-38, %v4315
    %v4317 = vsel %vm4314, %v4316, %v4312
    %v4318 = vmul.f32 1.0, %v4317
    %v4319 = vmul.f32 %v3615, %v3853
    %v4320 = vmul.f32 %v3616, %v3868
    %v4321 = vmul.f32 %v3617, %v3883
    %v4322 = vmul.f32 %v3618, %v3898
    %v4323 = vmul.f32 %v3619, %v3913
    %v4324 = vmul.f32 %v3620, %v3928
    %v4325 = vmul.f32 %v3621, %v3943
    %v4326 = vmul.f32 %v3622, %v3958
    %v4327 = vmul.f32 %v3623, %v3973
    %v4328 = vmul.f32 %v3624, %v3988
    %v4329 = vmul.f32 %v3625, %v4003
    %v4330 = vmul.f32 %v3626, %v4018
    %v4331 = vmul.f32 %v3627, %v4033
    %v4332 = vmul.f32 %v3628, %v4048
    %v4333 = vmul.f32 %v3629, %v4063
    %v4334 = vmul.f32 %v3630, %v4078
    %v4335 = vmul.f32 %v3631, %v4093
    %v4336 = vmul.f32 %v3632, %v4108
    %v4337 = vmul.f32 %v3633, %v4123
    %v4338 = vmul.f32 %v3634, %v4138
    %v4339 = vmul.f32 %v3635, %v4153
    %v4340 = vmul.f32 %v3636, %v4168
    %v4341 = vmul.f32 %v3637, %v4183
    %v4342 = vmul.f32 %v3638, %v4198
    %v4343 = vmul.f32 %v3639, %v4213
    %v4344 = vmul.f32 %v3640, %v4228
    %v4345 = vmul.f32 %v3641, %v4243
    %v4346 = vmul.f32 %v3642, %v4258
    %v4347 = vmul.f32 %v3643, %v4273
    %v4348 = vmul.f32 %v3644, %v4288
    %v4349 = vmul.f32 %v3645, %v4303
    %v4350 = vmul.f32 %v3646, %v4318
    %s4351 = scalar_lea.vmem %s8, 128
    %v4352 = vld [vmem:[%s4351] sm:$0xff]
    %v4353 = vld [vmem:[%s4351 + $0x8] sm:$0xff]
    %v4354 = vld [vmem:[%s4351 + $0x10] sm:$0xff]
    %v4355 = vld [vmem:[%s4351 + $0x18] sm:$0xff]
    %v4356 = vld [vmem:[%s4351 + $0x20] sm:$0xff]
    %v4357 = vld [vmem:[%s4351 + $0x28] sm:$0xff]
    %v4358 = vld [vmem:[%s4351 + $0x30] sm:$0xff]
    %v4359 = vld [vmem:[%s4351 + $0x38] sm:$0xff]
    %v4360 = vld [vmem:[%s4351 + $0x40] sm:$0xff]
    %v4361 = vld [vmem:[%s4351 + $0x48] sm:$0xff]
    %v4362 = vld [vmem:[%s4351 + $0x50] sm:$0xff]
    %v4363 = vld [vmem:[%s4351 + $0x58] sm:$0xff]
    %v4364 = vld [vmem:[%s4351 + $0x60] sm:$0xff]
    %v4365 = vld [vmem:[%s4351 + $0x68] sm:$0xff]
    %v4366 = vld [vmem:[%s4351 + $0x70] sm:$0xff]
    %v4367 = vld [vmem:[%s4351 + $0x78] sm:$0xff]
    %s4368 = scalar_lea.vmem %s9, 1
    %v4369 = vld [vmem:[%s4368] sm:$0x1]
    %v4371 = vperm.slane %v4369, 0
    %4373 = vmatpush.msra.mxu0 %v4367
    %4374 = vmatpush.msra.mxu0 %v4366
    %4375 = vmatpush.msra.mxu0 %v4365
    %4376 = vmatpush.msra.mxu0 %v4364
    %4377 = vmatpush.msra.mxu0 %v4363
    %4378 = vmatpush.msra.mxu0 %v4362
    %4379 = vmatpush.msra.mxu0 %v4361
    %4380 = vmatpush.msra.mxu0 %v4360
    %4381 = vmatpush.msra.mxu0 %v4359
    %4382 = vmatpush.msra.mxu0 %v4358
    %4383 = vmatpush.msra.mxu0 %v4357
    %4384 = vmatpush.msra.mxu0 %v4356
    %4385 = vmatpush.msra.mxu0 %v4355
    %4386 = vmatpush.msra.mxu0 %v4354
    %4387 = vmatpush.msra.mxu0 %v4353
    %4388 = vmatpush.msra.mxu0 %v4352
    %4389 = vmatmul.f32.gmra.mxu0 %v4319
    %v4390 = vpop.f32.mrf.mxu0
    %v4391 = vadd.f32 %v4371, %v4390
    %4392 = vmatmul.f32.gmra.mxu0 %v4320
    %v4393 = vpop.f32.mrf.mxu0
    %v4394 = vadd.f32 %v4371, %v4393
    %4395 = vmatmul.f32.gmra.mxu0 %v4321
    %v4396 = vpop.f32.mrf.mxu0
    %v4397 = vadd.f32 %v4371, %v4396
    %4398 = vmatmul.f32.gmra.mxu0 %v4322
    %v4399 = vpop.f32.mrf.mxu0
    %v4400 = vadd.f32 %v4371, %v4399
    %4401 = vmatmul.f32.gmra.mxu0 %v4323
    %v4402 = vpop.f32.mrf.mxu0
    %v4403 = vadd.f32 %v4371, %v4402
    %4404 = vmatmul.f32.gmra.mxu0 %v4324
    %v4405 = vpop.f32.mrf.mxu0
    %v4406 = vadd.f32 %v4371, %v4405
    %4407 = vmatmul.f32.gmra.mxu0 %v4325
    %v4408 = vpop.f32.mrf.mxu0
    %v4409 = vadd.f32 %v4371, %v4408
    %4410 = vmatmul.f32.gmra.mxu0 %v4326
    %v4411 = vpop.f32.mrf.mxu0
    %v4412 = vadd.f32 %v4371, %v4411
    %4413 = vmatmul.f32.gmra.mxu0 %v4327
    %v4414 = vpop.f32.mrf.mxu0
    %v4415 = vadd.f32 %v4371, %v4414
    %4416 = vmatmul.f32.gmra.mxu0 %v4328
    %v4417 = vpop.f32.mrf.mxu0
    %v4418 = vadd.f32 %v4371, %v4417
    %4419 = vmatmul.f32.gmra.mxu0 %v4329
    %v4420 = vpop.f32.mrf.mxu0
    %v4421 = vadd.f32 %v4371, %v4420
    %4422 = vmatmul.f32.gmra.mxu0 %v4330
    %v4423 = vpop.f32.mrf.mxu0
    %v4424 = vadd.f32 %v4371, %v4423
    %4425 = vmatmul.f32.gmra.mxu0 %v4331
    %v4426 = vpop.f32.mrf.mxu0
    %v4427 = vadd.f32 %v4371, %v4426
    %4428 = vmatmul.f32.gmra.mxu0 %v4332
    %v4429 = vpop.f32.mrf.mxu0
    %v4430 = vadd.f32 %v4371, %v4429
    %4431 = vmatmul.f32.gmra.mxu0 %v4333
    %v4432 = vpop.f32.mrf.mxu0
    %v4433 = vadd.f32 %v4371, %v4432
    %4434 = vmatmul.f32.gmra.mxu0 %v4334
    %v4435 = vpop.f32.mrf.mxu0
    %v4436 = vadd.f32 %v4371, %v4435
    %4437 = vmatmul.f32.gmra.mxu0 %v4335
    %v4438 = vpop.f32.mrf.mxu0
    %v4439 = vadd.f32 %v4371, %v4438
    %4440 = vmatmul.f32.gmra.mxu0 %v4336
    %v4441 = vpop.f32.mrf.mxu0
    %v4442 = vadd.f32 %v4371, %v4441
    %4443 = vmatmul.f32.gmra.mxu0 %v4337
    %v4444 = vpop.f32.mrf.mxu0
    %v4445 = vadd.f32 %v4371, %v4444
    %4446 = vmatmul.f32.gmra.mxu0 %v4338
    %v4447 = vpop.f32.mrf.mxu0
    %v4448 = vadd.f32 %v4371, %v4447
    %4449 = vmatmul.f32.gmra.mxu0 %v4339
    %v4450 = vpop.f32.mrf.mxu0
    %v4451 = vadd.f32 %v4371, %v4450
    %4452 = vmatmul.f32.gmra.mxu0 %v4340
    %v4453 = vpop.f32.mrf.mxu0
    %v4454 = vadd.f32 %v4371, %v4453
    %4455 = vmatmul.f32.gmra.mxu0 %v4341
    %v4456 = vpop.f32.mrf.mxu0
    %v4457 = vadd.f32 %v4371, %v4456
    %4458 = vmatmul.f32.gmra.mxu0 %v4342
    %v4459 = vpop.f32.mrf.mxu0
    %v4460 = vadd.f32 %v4371, %v4459
    %4461 = vmatmul.f32.gmra.mxu0 %v4343
    %v4462 = vpop.f32.mrf.mxu0
    %v4463 = vadd.f32 %v4371, %v4462
    %4464 = vmatmul.f32.gmra.mxu0 %v4344
    %v4465 = vpop.f32.mrf.mxu0
    %v4466 = vadd.f32 %v4371, %v4465
    %4467 = vmatmul.f32.gmra.mxu0 %v4345
    %v4468 = vpop.f32.mrf.mxu0
    %v4469 = vadd.f32 %v4371, %v4468
    %4470 = vmatmul.f32.gmra.mxu0 %v4346
    %v4471 = vpop.f32.mrf.mxu0
    %v4472 = vadd.f32 %v4371, %v4471
    %4473 = vmatmul.f32.gmra.mxu0 %v4347
    %v4474 = vpop.f32.mrf.mxu0
    %v4475 = vadd.f32 %v4371, %v4474
    %4476 = vmatmul.f32.gmra.mxu0 %v4348
    %v4477 = vpop.f32.mrf.mxu0
    %v4478 = vadd.f32 %v4371, %v4477
    %4479 = vmatmul.f32.gmra.mxu0 %v4349
    %v4480 = vpop.f32.mrf.mxu0
    %v4481 = vadd.f32 %v4371, %v4480
    %4482 = vmatmul.f32.gmra.mxu0 %v4350
    %v4483 = vpop.f32.mrf.mxu0
    %v4484 = vadd.f32 %v4371, %v4483
    %4485 = vdwg.mxu0
    %v4486 = vadd.f32 %v2522, %v4391
    %v4487 = vadd.f32 %v2523, %v4394
    %v4488 = vadd.f32 %v2524, %v4397
    %v4489 = vadd.f32 %v2525, %v4400
    %v4490 = vadd.f32 %v2526, %v4403
    %v4491 = vadd.f32 %v2527, %v4406
    %v4492 = vadd.f32 %v2528, %v4409
    %v4493 = vadd.f32 %v2529, %v4412
    %v4494 = vadd.f32 %v2530, %v4415
    %v4495 = vadd.f32 %v2531, %v4418
    %v4496 = vadd.f32 %v2532, %v4421
    %v4497 = vadd.f32 %v2533, %v4424
    %v4498 = vadd.f32 %v2534, %v4427
    %v4499 = vadd.f32 %v2535, %v4430
    %v4500 = vadd.f32 %v2536, %v4433
    %v4501 = vadd.f32 %v2537, %v4436
    %v4502 = vadd.f32 %v2538, %v4439
    %v4503 = vadd.f32 %v2539, %v4442
    %v4504 = vadd.f32 %v2540, %v4445
    %v4505 = vadd.f32 %v2541, %v4448
    %v4506 = vadd.f32 %v2542, %v4451
    %v4507 = vadd.f32 %v2543, %v4454
    %v4508 = vadd.f32 %v2544, %v4457
    %v4509 = vadd.f32 %v2545, %v4460
    %v4510 = vadd.f32 %v2546, %v4463
    %v4511 = vadd.f32 %v2547, %v4466
    %v4512 = vadd.f32 %v2548, %v4469
    %v4513 = vadd.f32 %v2549, %v4472
    %v4514 = vadd.f32 %v2550, %v4475
    %v4515 = vadd.f32 %v2551, %v4478
    %v4516 = vadd.f32 %v2552, %v4481
    %v4517 = vadd.f32 %v2553, %v4484
    %v4518 = vmul.f32 %v4486, %v70
    %v4519 = vmul.f32 %v4487, %v70
    %v4520 = vmul.f32 %v4488, %v70
    %v4521 = vmul.f32 %v4489, %v70
    %v4522 = vmul.f32 %v4490, %v70
    %v4523 = vmul.f32 %v4491, %v70
    %v4524 = vmul.f32 %v4492, %v70
    %v4525 = vmul.f32 %v4493, %v70
    %v4526 = vmul.f32 %v4494, %v70
    %v4527 = vmul.f32 %v4495, %v70
    %v4528 = vmul.f32 %v4496, %v70
    %v4529 = vmul.f32 %v4497, %v70
    %v4530 = vmul.f32 %v4498, %v70
    %v4531 = vmul.f32 %v4499, %v70
    %v4532 = vmul.f32 %v4500, %v70
    %v4533 = vmul.f32 %v4501, %v70
    %v4534 = vmul.f32 %v4502, %v70
    %v4535 = vmul.f32 %v4503, %v70
    %v4536 = vmul.f32 %v4504, %v70
    %v4537 = vmul.f32 %v4505, %v70
    %v4538 = vmul.f32 %v4506, %v70
    %v4539 = vmul.f32 %v4507, %v70
    %v4540 = vmul.f32 %v4508, %v70
    %v4541 = vmul.f32 %v4509, %v70
    %v4542 = vmul.f32 %v4510, %v70
    %v4543 = vmul.f32 %v4511, %v70
    %v4544 = vmul.f32 %v4512, %v70
    %v4545 = vmul.f32 %v4513, %v70
    %v4546 = vmul.f32 %v4514, %v70
    %v4547 = vmul.f32 %v4515, %v70
    %v4548 = vmul.f32 %v4516, %v70
    %v4549 = vmul.f32 %v4517, %v70
    %v4550 = vperm.slane %v464, 2
    %v4551 = vperm.slane %v465, 2
    %v4552 = vadd.f32 %v4518, %v4550
    %v4553 = vadd.f32 %v4519, %v4550
    %v4554 = vadd.f32 %v4520, %v4550
    %v4555 = vadd.f32 %v4521, %v4550
    %v4556 = vadd.f32 %v4522, %v4550
    %v4557 = vadd.f32 %v4523, %v4550
    %v4558 = vadd.f32 %v4524, %v4550
    %v4559 = vadd.f32 %v4525, %v4550
    %v4560 = vadd.f32 %v4526, %v4550
    %v4561 = vadd.f32 %v4527, %v4550
    %v4562 = vadd.f32 %v4528, %v4550
    %v4563 = vadd.f32 %v4529, %v4550
    %v4564 = vadd.f32 %v4530, %v4550
    %v4565 = vadd.f32 %v4531, %v4550
    %v4566 = vadd.f32 %v4532, %v4550
    %v4567 = vadd.f32 %v4533, %v4550
    %v4568 = vadd.f32 %v4534, %v4551
    %v4569 = vadd.f32 %v4535, %v4551
    %v4570 = vadd.f32 %v4536, %v4551
    %v4571 = vadd.f32 %v4537, %v4551
    %v4572 = vadd.f32 %v4538, %v4551
    %v4573 = vadd.f32 %v4539, %v4551
    %v4574 = vadd.f32 %v4540, %v4551
    %v4575 = vadd.f32 %v4541, %v4551
    %v4576 = vadd.f32 %v4542, %v4551
    %v4577 = vadd.f32 %v4543, %v4551
    %v4578 = vadd.f32 %v4544, %v4551
    %v4579 = vadd.f32 %v4545, %v4551
    %v4580 = vadd.f32 %v4546, %v4551
    %v4581 = vadd.f32 %v4547, %v4551
    %v4582 = vadd.f32 %v4548, %v4551
    %v4583 = vadd.f32 %v4549, %v4551
    %v4584 = vrot.slane %v4552, 7
    %v4585 = vrot.slane %v4553, 7
    %v4586 = vrot.slane %v4554, 7
    %v4587 = vrot.slane %v4555, 7
    %v4588 = vrot.slane %v4556, 7
    %v4589 = vrot.slane %v4557, 7
    %v4590 = vrot.slane %v4558, 7
    %v4591 = vrot.slane %v4559, 7
    %v4592 = vrot.slane %v4560, 7
    %v4593 = vrot.slane %v4561, 7
    %v4594 = vrot.slane %v4562, 7
    %v4595 = vrot.slane %v4563, 7
    %v4596 = vrot.slane %v4564, 7
    %v4597 = vrot.slane %v4565, 7
    %v4598 = vrot.slane %v4566, 7
    %v4599 = vrot.slane %v4567, 7
    %v4600 = vrot.slane %v4568, 7
    %v4601 = vrot.slane %v4569, 7
    %v4602 = vrot.slane %v4570, 7
    %v4603 = vrot.slane %v4571, 7
    %v4604 = vrot.slane %v4572, 7
    %v4605 = vrot.slane %v4573, 7
    %v4606 = vrot.slane %v4574, 7
    %v4607 = vrot.slane %v4575, 7
    %v4608 = vrot.slane %v4576, 7
    %v4609 = vrot.slane %v4577, 7
    %v4610 = vrot.slane %v4578, 7
    %v4611 = vrot.slane %v4579, 7
    %v4612 = vrot.slane %v4580, 7
    %v4613 = vrot.slane %v4581, 7
    %v4614 = vrot.slane %v4582, 7
    %v4615 = vrot.slane %v4583, 7
    %v4616 = vsel %vm564, %v4614, %v4615
    %v4617 = vsel %vm564, %v4613, %v4614
    %v4618 = vsel %vm564, %v4612, %v4613
    %v4619 = vsel %vm564, %v4611, %v4612
    %v4620 = vsel %vm564, %v4610, %v4611
    %v4621 = vsel %vm564, %v4609, %v4610
    %v4622 = vsel %vm564, %v4608, %v4609
    %v4623 = vsel %vm564, %v4607, %v4608
    %v4624 = vsel %vm564, %v4606, %v4607
    %v4625 = vsel %vm564, %v4605, %v4606
    %v4626 = vsel %vm564, %v4604, %v4605
    %v4627 = vsel %vm564, %v4603, %v4604
    %v4628 = vsel %vm564, %v4602, %v4603
    %v4629 = vsel %vm564, %v4601, %v4602
    %v4630 = vsel %vm564, %v4600, %v4601
    %v4631 = vsel %vm564, %v4599, %v4600
    %v4632 = vsel %vm564, %v4598, %v4599
    %v4633 = vsel %vm564, %v4597, %v4598
    %v4634 = vsel %vm564, %v4596, %v4597
    %v4635 = vsel %vm564, %v4595, %v4596
    %v4636 = vsel %vm564, %v4594, %v4595
    %v4637 = vsel %vm564, %v4593, %v4594
    %v4638 = vsel %vm564, %v4592, %v4593
    %v4639 = vsel %vm564, %v4591, %v4592
    %v4640 = vsel %vm564, %v4590, %v4591
    %v4641 = vsel %vm564, %v4589, %v4590
    %v4642 = vsel %vm564, %v4588, %v4589
    %v4643 = vsel %vm564, %v4587, %v4588
    %v4644 = vsel %vm564, %v4586, %v4587
    %v4645 = vsel %vm564, %v4585, %v4586
    %v4646 = vsel %vm564, %v4584, %v4585
    %v4647 = vsel %vm564, %v4615, %v4584
    %v4648 = vsel %vm629, %v4647, 0.0
    %v4649 = vsel %vm630, %v4646, 0.0
    %v4650 = vsel %vm631, %v4645, 0.0
    %v4651 = vsel %vm632, %v4644, 0.0
    %v4652 = vsel %vm633, %v4643, 0.0
    %v4653 = vsel %vm634, %v4642, 0.0
    %v4654 = vsel %vm635, %v4641, 0.0
    %v4655 = vsel %vm636, %v4640, 0.0
    %v4656 = vsel %vm637, %v4639, 0.0
    %v4657 = vsel %vm638, %v4638, 0.0
    %v4658 = vsel %vm639, %v4637, 0.0
    %v4659 = vsel %vm640, %v4636, 0.0
    %v4660 = vsel %vm641, %v4635, 0.0
    %v4661 = vsel %vm642, %v4634, 0.0
    %v4662 = vsel %vm643, %v4633, 0.0
    %v4663 = vsel %vm644, %v4632, 0.0
    %v4664 = vsel %vm645, %v4631, 0.0
    %v4665 = vsel %vm646, %v4630, 0.0
    %v4666 = vsel %vm647, %v4629, 0.0
    %v4667 = vsel %vm648, %v4628, 0.0
    %v4668 = vsel %vm649, %v4627, 0.0
    %v4669 = vsel %vm650, %v4626, 0.0
    %v4670 = vsel %vm651, %v4625, 0.0
    %v4671 = vsel %vm652, %v4624, 0.0
    %v4672 = vsel %vm653, %v4623, 0.0
    %v4673 = vsel %vm654, %v4622, 0.0
    %v4674 = vsel %vm655, %v4621, 0.0
    %v4675 = vsel %vm656, %v4620, 0.0
    %v4676 = vsel %vm657, %v4619, 0.0
    %v4677 = vsel %vm658, %v4618, 0.0
    %v4678 = vsel %vm659, %v4617, 0.0
    %v4679 = vsel %vm660, %v4616, 0.0
    %v4680 = vrot.slane %v4552, 1
    %v4681 = vrot.slane %v4553, 1
    %v4682 = vrot.slane %v4554, 1
    %v4683 = vrot.slane %v4555, 1
    %v4684 = vrot.slane %v4556, 1
    %v4685 = vrot.slane %v4557, 1
    %v4686 = vrot.slane %v4558, 1
    %v4687 = vrot.slane %v4559, 1
    %v4688 = vrot.slane %v4560, 1
    %v4689 = vrot.slane %v4561, 1
    %v4690 = vrot.slane %v4562, 1
    %v4691 = vrot.slane %v4563, 1
    %v4692 = vrot.slane %v4564, 1
    %v4693 = vrot.slane %v4565, 1
    %v4694 = vrot.slane %v4566, 1
    %v4695 = vrot.slane %v4567, 1
    %v4696 = vrot.slane %v4568, 1
    %v4697 = vrot.slane %v4569, 1
    %v4698 = vrot.slane %v4570, 1
    %v4699 = vrot.slane %v4571, 1
    %v4700 = vrot.slane %v4572, 1
    %v4701 = vrot.slane %v4573, 1
    %v4702 = vrot.slane %v4574, 1
    %v4703 = vrot.slane %v4575, 1
    %v4704 = vrot.slane %v4576, 1
    %v4705 = vrot.slane %v4577, 1
    %v4706 = vrot.slane %v4578, 1
    %v4707 = vrot.slane %v4579, 1
    %v4708 = vrot.slane %v4580, 1
    %v4709 = vrot.slane %v4581, 1
    %v4710 = vrot.slane %v4582, 1
    %v4711 = vrot.slane %v4583, 1
    %v4712 = vsel %vm757, %v4710, %v4711
    %v4713 = vsel %vm757, %v4709, %v4710
    %v4714 = vsel %vm757, %v4708, %v4709
    %v4715 = vsel %vm757, %v4707, %v4708
    %v4716 = vsel %vm757, %v4706, %v4707
    %v4717 = vsel %vm757, %v4705, %v4706
    %v4718 = vsel %vm757, %v4704, %v4705
    %v4719 = vsel %vm757, %v4703, %v4704
    %v4720 = vsel %vm757, %v4702, %v4703
    %v4721 = vsel %vm757, %v4701, %v4702
    %v4722 = vsel %vm757, %v4700, %v4701
    %v4723 = vsel %vm757, %v4699, %v4700
    %v4724 = vsel %vm757, %v4698, %v4699
    %v4725 = vsel %vm757, %v4697, %v4698
    %v4726 = vsel %vm757, %v4696, %v4697
    %v4727 = vsel %vm757, %v4695, %v4696
    %v4728 = vsel %vm757, %v4694, %v4695
    %v4729 = vsel %vm757, %v4693, %v4694
    %v4730 = vsel %vm757, %v4692, %v4693
    %v4731 = vsel %vm757, %v4691, %v4692
    %v4732 = vsel %vm757, %v4690, %v4691
    %v4733 = vsel %vm757, %v4689, %v4690
    %v4734 = vsel %vm757, %v4688, %v4689
    %v4735 = vsel %vm757, %v4687, %v4688
    %v4736 = vsel %vm757, %v4686, %v4687
    %v4737 = vsel %vm757, %v4685, %v4686
    %v4738 = vsel %vm757, %v4684, %v4685
    %v4739 = vsel %vm757, %v4683, %v4684
    %v4740 = vsel %vm757, %v4682, %v4683
    %v4741 = vsel %vm757, %v4681, %v4682
    %v4742 = vsel %vm757, %v4680, %v4681
    %v4743 = vsel %vm757, %v4711, %v4680
    %v4744 = vsel %vm822, %v4742, 0.0
    %v4745 = vsel %vm823, %v4741, 0.0
    %v4746 = vsel %vm824, %v4740, 0.0
    %v4747 = vsel %vm825, %v4739, 0.0
    %v4748 = vsel %vm826, %v4738, 0.0
    %v4749 = vsel %vm827, %v4737, 0.0
    %v4750 = vsel %vm828, %v4736, 0.0
    %v4751 = vsel %vm829, %v4735, 0.0
    %v4752 = vsel %vm830, %v4734, 0.0
    %v4753 = vsel %vm831, %v4733, 0.0
    %v4754 = vsel %vm832, %v4732, 0.0
    %v4755 = vsel %vm833, %v4731, 0.0
    %v4756 = vsel %vm834, %v4730, 0.0
    %v4757 = vsel %vm835, %v4729, 0.0
    %v4758 = vsel %vm836, %v4728, 0.0
    %v4759 = vsel %vm837, %v4727, 0.0
    %v4760 = vsel %vm838, %v4726, 0.0
    %v4761 = vsel %vm839, %v4725, 0.0
    %v4762 = vsel %vm840, %v4724, 0.0
    %v4763 = vsel %vm841, %v4723, 0.0
    %v4764 = vsel %vm842, %v4722, 0.0
    %v4765 = vsel %vm843, %v4721, 0.0
    %v4766 = vsel %vm844, %v4720, 0.0
    %v4767 = vsel %vm845, %v4719, 0.0
    %v4768 = vsel %vm846, %v4718, 0.0
    %v4769 = vsel %vm847, %v4717, 0.0
    %v4770 = vsel %vm848, %v4716, 0.0
    %v4771 = vsel %vm849, %v4715, 0.0
    %v4772 = vsel %vm850, %v4714, 0.0
    %v4773 = vsel %vm851, %v4713, 0.0
    %v4774 = vsel %vm852, %v4712, 0.0
    %v4775 = vsel %vm853, %v4743, 0.0
    %s4776 = scalar_lea.vmem %s6, 2
    %v4777 = vld [vmem:[%s4776] sm:$0x1]
    %s4778 = scalar_lea.vmem [#allocation3], 768
    %v4779 = vld [vmem:[%s4778] sm:$0xff]
    %v4780 = vld [vmem:[%s4778 + $0x8] sm:$0xff]
    %v4781 = vld [vmem:[%s4778 + $0x10] sm:$0xff]
    %v4782 = vld [vmem:[%s4778 + $0x18] sm:$0xff]
    %v4783 = vld [vmem:[%s4778 + $0x20] sm:$0xff]
    %v4784 = vld [vmem:[%s4778 + $0x28] sm:$0xff]
    %v4785 = vld [vmem:[%s4778 + $0x30] sm:$0xff]
    %v4786 = vld [vmem:[%s4778 + $0x38] sm:$0xff]
    %v4787 = vld [vmem:[%s4778 + $0x40] sm:$0xff]
    %v4788 = vld [vmem:[%s4778 + $0x48] sm:$0xff]
    %v4789 = vld [vmem:[%s4778 + $0x50] sm:$0xff]
    %v4790 = vld [vmem:[%s4778 + $0x58] sm:$0xff]
    %v4791 = vld [vmem:[%s4778 + $0x60] sm:$0xff]
    %v4792 = vld [vmem:[%s4778 + $0x68] sm:$0xff]
    %v4793 = vld [vmem:[%s4778 + $0x70] sm:$0xff]
    %v4794 = vld [vmem:[%s4778 + $0x78] sm:$0xff]
    %4795 = vmatpush.msra.mxu0 %v4794
    %4796 = vmatpush.msra.mxu0 %v4793
    %4797 = vmatpush.msra.mxu0 %v4792
    %4798 = vmatpush.msra.mxu0 %v4791
    %4799 = vmatpush.msra.mxu0 %v4790
    %4800 = vmatpush.msra.mxu0 %v4789
    %4801 = vmatpush.msra.mxu0 %v4788
    %4802 = vmatpush.msra.mxu0 %v4787
    %4803 = vmatpush.msra.mxu0 %v4786
    %4804 = vmatpush.msra.mxu0 %v4785
    %4805 = vmatpush.msra.mxu0 %v4784
    %4806 = vmatpush.msra.mxu0 %v4783
    %4807 = vmatpush.msra.mxu0 %v4782
    %4808 = vmatpush.msra.mxu0 %v4781
    %4809 = vmatpush.msra.mxu0 %v4780
    %4810 = vmatpush.msra.mxu0 %v4779
    %4811 = vmatmul.f32.gmra.mxu0 %v4648
    %v4812 = vpop.f32.mrf.mxu0
    %v4813 = vadd.f32 0.0, %v4812
    %4814 = vmatmul.f32.gmra.mxu0 %v4649
    %v4815 = vpop.f32.mrf.mxu0
    %v4816 = vadd.f32 0.0, %v4815
    %4817 = vmatmul.f32.gmra.mxu0 %v4650
    %v4818 = vpop.f32.mrf.mxu0
    %v4819 = vadd.f32 0.0, %v4818
    %4820 = vmatmul.f32.gmra.mxu0 %v4651
    %v4821 = vpop.f32.mrf.mxu0
    %v4822 = vadd.f32 0.0, %v4821
    %4823 = vmatmul.f32.gmra.mxu0 %v4652
    %v4824 = vpop.f32.mrf.mxu0
    %v4825 = vadd.f32 0.0, %v4824
    %4826 = vmatmul.f32.gmra.mxu0 %v4653
    %v4827 = vpop.f32.mrf.mxu0
    %v4828 = vadd.f32 0.0, %v4827
    %4829 = vmatmul.f32.gmra.mxu0 %v4654
    %v4830 = vpop.f32.mrf.mxu0
    %v4831 = vadd.f32 0.0, %v4830
    %4832 = vmatmul.f32.gmra.mxu0 %v4655
    %v4833 = vpop.f32.mrf.mxu0
    %v4834 = vadd.f32 0.0, %v4833
    %4835 = vmatmul.f32.gmra.mxu0 %v4656
    %v4836 = vpop.f32.mrf.mxu0
    %v4837 = vadd.f32 0.0, %v4836
    %4838 = vmatmul.f32.gmra.mxu0 %v4657
    %v4839 = vpop.f32.mrf.mxu0
    %v4840 = vadd.f32 0.0, %v4839
    %4841 = vmatmul.f32.gmra.mxu0 %v4658
    %v4842 = vpop.f32.mrf.mxu0
    %v4843 = vadd.f32 0.0, %v4842
    %4844 = vmatmul.f32.gmra.mxu0 %v4659
    %v4845 = vpop.f32.mrf.mxu0
    %v4846 = vadd.f32 0.0, %v4845
    %4847 = vmatmul.f32.gmra.mxu0 %v4660
    %v4848 = vpop.f32.mrf.mxu0
    %v4849 = vadd.f32 0.0, %v4848
    %4850 = vmatmul.f32.gmra.mxu0 %v4661
    %v4851 = vpop.f32.mrf.mxu0
    %v4852 = vadd.f32 0.0, %v4851
    %4853 = vmatmul.f32.gmra.mxu0 %v4662
    %v4854 = vpop.f32.mrf.mxu0
    %v4855 = vadd.f32 0.0, %v4854
    %4856 = vmatmul.f32.gmra.mxu0 %v4663
    %v4857 = vpop.f32.mrf.mxu0
    %v4858 = vadd.f32 0.0, %v4857
    %4859 = vmatmul.f32.gmra.mxu0 %v4664
    %v4860 = vpop.f32.mrf.mxu0
    %v4861 = vadd.f32 0.0, %v4860
    %4862 = vmatmul.f32.gmra.mxu0 %v4665
    %v4863 = vpop.f32.mrf.mxu0
    %v4864 = vadd.f32 0.0, %v4863
    %4865 = vmatmul.f32.gmra.mxu0 %v4666
    %v4866 = vpop.f32.mrf.mxu0
    %v4867 = vadd.f32 0.0, %v4866
    %4868 = vmatmul.f32.gmra.mxu0 %v4667
    %v4869 = vpop.f32.mrf.mxu0
    %v4870 = vadd.f32 0.0, %v4869
    %4871 = vmatmul.f32.gmra.mxu0 %v4668
    %v4872 = vpop.f32.mrf.mxu0
    %v4873 = vadd.f32 0.0, %v4872
    %4874 = vmatmul.f32.gmra.mxu0 %v4669
    %v4875 = vpop.f32.mrf.mxu0
    %v4876 = vadd.f32 0.0, %v4875
    %4877 = vmatmul.f32.gmra.mxu0 %v4670
    %v4878 = vpop.f32.mrf.mxu0
    %v4879 = vadd.f32 0.0, %v4878
    %4880 = vmatmul.f32.gmra.mxu0 %v4671
    %v4881 = vpop.f32.mrf.mxu0
    %v4882 = vadd.f32 0.0, %v4881
    %4883 = vmatmul.f32.gmra.mxu0 %v4672
    %v4884 = vpop.f32.mrf.mxu0
    %v4885 = vadd.f32 0.0, %v4884
    %4886 = vmatmul.f32.gmra.mxu0 %v4673
    %v4887 = vpop.f32.mrf.mxu0
    %v4888 = vadd.f32 0.0, %v4887
    %4889 = vmatmul.f32.gmra.mxu0 %v4674
    %v4890 = vpop.f32.mrf.mxu0
    %v4891 = vadd.f32 0.0, %v4890
    %4892 = vmatmul.f32.gmra.mxu0 %v4675
    %v4893 = vpop.f32.mrf.mxu0
    %v4894 = vadd.f32 0.0, %v4893
    %4895 = vmatmul.f32.gmra.mxu0 %v4676
    %v4896 = vpop.f32.mrf.mxu0
    %v4897 = vadd.f32 0.0, %v4896
    %4898 = vmatmul.f32.gmra.mxu0 %v4677
    %v4899 = vpop.f32.mrf.mxu0
    %v4900 = vadd.f32 0.0, %v4899
    %4901 = vmatmul.f32.gmra.mxu0 %v4678
    %v4902 = vpop.f32.mrf.mxu0
    %v4903 = vadd.f32 0.0, %v4902
    %4904 = vmatmul.f32.gmra.mxu0 %v4679
    %v4905 = vpop.f32.mrf.mxu0
    %v4906 = vadd.f32 0.0, %v4905
    %4907 = vdwg.mxu0
    %v4909 = vperm.slane %v4777, 0
    %v4911 = vadd.f32 %v4909, %v4813
    %v4912 = vadd.f32 %v4909, %v4816
    %v4913 = vadd.f32 %v4909, %v4819
    %v4914 = vadd.f32 %v4909, %v4822
    %v4915 = vadd.f32 %v4909, %v4825
    %v4916 = vadd.f32 %v4909, %v4828
    %v4917 = vadd.f32 %v4909, %v4831
    %v4918 = vadd.f32 %v4909, %v4834
    %v4919 = vadd.f32 %v4909, %v4837
    %v4920 = vadd.f32 %v4909, %v4840
    %v4921 = vadd.f32 %v4909, %v4843
    %v4922 = vadd.f32 %v4909, %v4846
    %v4923 = vadd.f32 %v4909, %v4849
    %v4924 = vadd.f32 %v4909, %v4852
    %v4925 = vadd.f32 %v4909, %v4855
    %v4926 = vadd.f32 %v4909, %v4858
    %v4927 = vadd.f32 %v4909, %v4861
    %v4928 = vadd.f32 %v4909, %v4864
    %v4929 = vadd.f32 %v4909, %v4867
    %v4930 = vadd.f32 %v4909, %v4870
    %v4931 = vadd.f32 %v4909, %v4873
    %v4932 = vadd.f32 %v4909, %v4876
    %v4933 = vadd.f32 %v4909, %v4879
    %v4934 = vadd.f32 %v4909, %v4882
    %v4935 = vadd.f32 %v4909, %v4885
    %v4936 = vadd.f32 %v4909, %v4888
    %v4937 = vadd.f32 %v4909, %v4891
    %v4938 = vadd.f32 %v4909, %v4894
    %v4939 = vadd.f32 %v4909, %v4897
    %v4940 = vadd.f32 %v4909, %v4900
    %v4941 = vadd.f32 %v4909, %v4903
    %v4942 = vadd.f32 %v4909, %v4906
    %s4943 = scalar_lea.vmem [#allocation3], 896
    %v4944 = vld [vmem:[%s4943] sm:$0xff]
    %v4945 = vld [vmem:[%s4943 + $0x8] sm:$0xff]
    %v4946 = vld [vmem:[%s4943 + $0x10] sm:$0xff]
    %v4947 = vld [vmem:[%s4943 + $0x18] sm:$0xff]
    %v4948 = vld [vmem:[%s4943 + $0x20] sm:$0xff]
    %v4949 = vld [vmem:[%s4943 + $0x28] sm:$0xff]
    %v4950 = vld [vmem:[%s4943 + $0x30] sm:$0xff]
    %v4951 = vld [vmem:[%s4943 + $0x38] sm:$0xff]
    %v4952 = vld [vmem:[%s4943 + $0x40] sm:$0xff]
    %v4953 = vld [vmem:[%s4943 + $0x48] sm:$0xff]
    %v4954 = vld [vmem:[%s4943 + $0x50] sm:$0xff]
    %v4955 = vld [vmem:[%s4943 + $0x58] sm:$0xff]
    %v4956 = vld [vmem:[%s4943 + $0x60] sm:$0xff]
    %v4957 = vld [vmem:[%s4943 + $0x68] sm:$0xff]
    %v4958 = vld [vmem:[%s4943 + $0x70] sm:$0xff]
    %v4959 = vld [vmem:[%s4943 + $0x78] sm:$0xff]
    %4960 = vmatpush.msra.mxu0 %v4959
    %4961 = vmatpush.msra.mxu0 %v4958
    %4962 = vmatpush.msra.mxu0 %v4957
    %4963 = vmatpush.msra.mxu0 %v4956
    %4964 = vmatpush.msra.mxu0 %v4955
    %4965 = vmatpush.msra.mxu0 %v4954
    %4966 = vmatpush.msra.mxu0 %v4953
    %4967 = vmatpush.msra.mxu0 %v4952
    %4968 = vmatpush.msra.mxu0 %v4951
    %4969 = vmatpush.msra.mxu0 %v4950
    %4970 = vmatpush.msra.mxu0 %v4949
    %4971 = vmatpush.msra.mxu0 %v4948
    %4972 = vmatpush.msra.mxu0 %v4947
    %4973 = vmatpush.msra.mxu0 %v4946
    %4974 = vmatpush.msra.mxu0 %v4945
    %4975 = vmatpush.msra.mxu0 %v4944
    %4976 = vmatmul.f32.gmra.mxu0 %v4552
    %v4977 = vpop.f32.mrf.mxu0
    %v4978 = vadd.f32 0.0, %v4977
    %4979 = vmatmul.f32.gmra.mxu0 %v4553
    %v4980 = vpop.f32.mrf.mxu0
    %v4981 = vadd.f32 0.0, %v4980
    %4982 = vmatmul.f32.gmra.mxu0 %v4554
    %v4983 = vpop.f32.mrf.mxu0
    %v4984 = vadd.f32 0.0, %v4983
    %4985 = vmatmul.f32.gmra.mxu0 %v4555
    %v4986 = vpop.f32.mrf.mxu0
    %v4987 = vadd.f32 0.0, %v4986
    %4988 = vmatmul.f32.gmra.mxu0 %v4556
    %v4989 = vpop.f32.mrf.mxu0
    %v4990 = vadd.f32 0.0, %v4989
    %4991 = vmatmul.f32.gmra.mxu0 %v4557
    %v4992 = vpop.f32.mrf.mxu0
    %v4993 = vadd.f32 0.0, %v4992
    %4994 = vmatmul.f32.gmra.mxu0 %v4558
    %v4995 = vpop.f32.mrf.mxu0
    %v4996 = vadd.f32 0.0, %v4995
    %4997 = vmatmul.f32.gmra.mxu0 %v4559
    %v4998 = vpop.f32.mrf.mxu0
    %v4999 = vadd.f32 0.0, %v4998
    %5000 = vmatmul.f32.gmra.mxu0 %v4560
    %v5001 = vpop.f32.mrf.mxu0
    %v5002 = vadd.f32 0.0, %v5001
    %5003 = vmatmul.f32.gmra.mxu0 %v4561
    %v5004 = vpop.f32.mrf.mxu0
    %v5005 = vadd.f32 0.0, %v5004
    %5006 = vmatmul.f32.gmra.mxu0 %v4562
    %v5007 = vpop.f32.mrf.mxu0
    %v5008 = vadd.f32 0.0, %v5007
    %5009 = vmatmul.f32.gmra.mxu0 %v4563
    %v5010 = vpop.f32.mrf.mxu0
    %v5011 = vadd.f32 0.0, %v5010
    %5012 = vmatmul.f32.gmra.mxu0 %v4564
    %v5013 = vpop.f32.mrf.mxu0
    %v5014 = vadd.f32 0.0, %v5013
    %5015 = vmatmul.f32.gmra.mxu0 %v4565
    %v5016 = vpop.f32.mrf.mxu0
    %v5017 = vadd.f32 0.0, %v5016
    %5018 = vmatmul.f32.gmra.mxu0 %v4566
    %v5019 = vpop.f32.mrf.mxu0
    %v5020 = vadd.f32 0.0, %v5019
    %5021 = vmatmul.f32.gmra.mxu0 %v4567
    %v5022 = vpop.f32.mrf.mxu0
    %v5023 = vadd.f32 0.0, %v5022
    %5024 = vmatmul.f32.gmra.mxu0 %v4568
    %v5025 = vpop.f32.mrf.mxu0
    %v5026 = vadd.f32 0.0, %v5025
    %5027 = vmatmul.f32.gmra.mxu0 %v4569
    %v5028 = vpop.f32.mrf.mxu0
    %v5029 = vadd.f32 0.0, %v5028
    %5030 = vmatmul.f32.gmra.mxu0 %v4570
    %v5031 = vpop.f32.mrf.mxu0
    %v5032 = vadd.f32 0.0, %v5031
    %5033 = vmatmul.f32.gmra.mxu0 %v4571
    %v5034 = vpop.f32.mrf.mxu0
    %v5035 = vadd.f32 0.0, %v5034
    %5036 = vmatmul.f32.gmra.mxu0 %v4572
    %v5037 = vpop.f32.mrf.mxu0
    %v5038 = vadd.f32 0.0, %v5037
    %5039 = vmatmul.f32.gmra.mxu0 %v4573
    %v5040 = vpop.f32.mrf.mxu0
    %v5041 = vadd.f32 0.0, %v5040
    %5042 = vmatmul.f32.gmra.mxu0 %v4574
    %v5043 = vpop.f32.mrf.mxu0
    %v5044 = vadd.f32 0.0, %v5043
    %5045 = vmatmul.f32.gmra.mxu0 %v4575
    %v5046 = vpop.f32.mrf.mxu0
    %v5047 = vadd.f32 0.0, %v5046
    %5048 = vmatmul.f32.gmra.mxu0 %v4576
    %v5049 = vpop.f32.mrf.mxu0
    %v5050 = vadd.f32 0.0, %v5049
    %5051 = vmatmul.f32.gmra.mxu0 %v4577
    %v5052 = vpop.f32.mrf.mxu0
    %v5053 = vadd.f32 0.0, %v5052
    %5054 = vmatmul.f32.gmra.mxu0 %v4578
    %v5055 = vpop.f32.mrf.mxu0
    %v5056 = vadd.f32 0.0, %v5055
    %5057 = vmatmul.f32.gmra.mxu0 %v4579
    %v5058 = vpop.f32.mrf.mxu0
    %v5059 = vadd.f32 0.0, %v5058
    %5060 = vmatmul.f32.gmra.mxu0 %v4580
    %v5061 = vpop.f32.mrf.mxu0
    %v5062 = vadd.f32 0.0, %v5061
    %5063 = vmatmul.f32.gmra.mxu0 %v4581
    %v5064 = vpop.f32.mrf.mxu0
    %v5065 = vadd.f32 0.0, %v5064
    %5066 = vmatmul.f32.gmra.mxu0 %v4582
    %v5067 = vpop.f32.mrf.mxu0
    %v5068 = vadd.f32 0.0, %v5067
    %5069 = vmatmul.f32.gmra.mxu0 %v4583
    %v5070 = vpop.f32.mrf.mxu0
    %v5071 = vadd.f32 0.0, %v5070
    %5072 = vdwg.mxu0
    %v5073 = vadd.f32 %v4911, %v4978
    %v5074 = vadd.f32 %v4912, %v4981
    %v5075 = vadd.f32 %v4913, %v4984
    %v5076 = vadd.f32 %v4914, %v4987
    %v5077 = vadd.f32 %v4915, %v4990
    %v5078 = vadd.f32 %v4916, %v4993
    %v5079 = vadd.f32 %v4917, %v4996
    %v5080 = vadd.f32 %v4918, %v4999
    %v5081 = vadd.f32 %v4919, %v5002
    %v5082 = vadd.f32 %v4920, %v5005
    %v5083 = vadd.f32 %v4921, %v5008
    %v5084 = vadd.f32 %v4922, %v5011
    %v5085 = vadd.f32 %v4923, %v5014
    %v5086 = vadd.f32 %v4924, %v5017
    %v5087 = vadd.f32 %v4925, %v5020
    %v5088 = vadd.f32 %v4926, %v5023
    %v5089 = vadd.f32 %v4927, %v5026
    %v5090 = vadd.f32 %v4928, %v5029
    %v5091 = vadd.f32 %v4929, %v5032
    %v5092 = vadd.f32 %v4930, %v5035
    %v5093 = vadd.f32 %v4931, %v5038
    %v5094 = vadd.f32 %v4932, %v5041
    %v5095 = vadd.f32 %v4933, %v5044
    %v5096 = vadd.f32 %v4934, %v5047
    %v5097 = vadd.f32 %v4935, %v5050
    %v5098 = vadd.f32 %v4936, %v5053
    %v5099 = vadd.f32 %v4937, %v5056
    %v5100 = vadd.f32 %v4938, %v5059
    %v5101 = vadd.f32 %v4939, %v5062
    %v5102 = vadd.f32 %v4940, %v5065
    %v5103 = vadd.f32 %v4941, %v5068
    %v5104 = vadd.f32 %v4942, %v5071
    %s5105 = scalar_lea.vmem [#allocation3], 1024
    %v5106 = vld [vmem:[%s5105] sm:$0xff]
    %v5107 = vld [vmem:[%s5105 + $0x8] sm:$0xff]
    %v5108 = vld [vmem:[%s5105 + $0x10] sm:$0xff]
    %v5109 = vld [vmem:[%s5105 + $0x18] sm:$0xff]
    %v5110 = vld [vmem:[%s5105 + $0x20] sm:$0xff]
    %v5111 = vld [vmem:[%s5105 + $0x28] sm:$0xff]
    %v5112 = vld [vmem:[%s5105 + $0x30] sm:$0xff]
    %v5113 = vld [vmem:[%s5105 + $0x38] sm:$0xff]
    %v5114 = vld [vmem:[%s5105 + $0x40] sm:$0xff]
    %v5115 = vld [vmem:[%s5105 + $0x48] sm:$0xff]
    %v5116 = vld [vmem:[%s5105 + $0x50] sm:$0xff]
    %v5117 = vld [vmem:[%s5105 + $0x58] sm:$0xff]
    %v5118 = vld [vmem:[%s5105 + $0x60] sm:$0xff]
    %v5119 = vld [vmem:[%s5105 + $0x68] sm:$0xff]
    %v5120 = vld [vmem:[%s5105 + $0x70] sm:$0xff]
    %v5121 = vld [vmem:[%s5105 + $0x78] sm:$0xff]
    %5122 = vmatpush.msra.mxu0 %v5121
    %5123 = vmatpush.msra.mxu0 %v5120
    %5124 = vmatpush.msra.mxu0 %v5119
    %5125 = vmatpush.msra.mxu0 %v5118
    %5126 = vmatpush.msra.mxu0 %v5117
    %5127 = vmatpush.msra.mxu0 %v5116
    %5128 = vmatpush.msra.mxu0 %v5115
    %5129 = vmatpush.msra.mxu0 %v5114
    %5130 = vmatpush.msra.mxu0 %v5113
    %5131 = vmatpush.msra.mxu0 %v5112
    %5132 = vmatpush.msra.mxu0 %v5111
    %5133 = vmatpush.msra.mxu0 %v5110
    %5134 = vmatpush.msra.mxu0 %v5109
    %5135 = vmatpush.msra.mxu0 %v5108
    %5136 = vmatpush.msra.mxu0 %v5107
    %5137 = vmatpush.msra.mxu0 %v5106
    %5138 = vmatmul.f32.gmra.mxu0 %v4744
    %v5139 = vpop.f32.mrf.mxu0
    %v5140 = vadd.f32 0.0, %v5139
    %5141 = vmatmul.f32.gmra.mxu0 %v4745
    %v5142 = vpop.f32.mrf.mxu0
    %v5143 = vadd.f32 0.0, %v5142
    %5144 = vmatmul.f32.gmra.mxu0 %v4746
    %v5145 = vpop.f32.mrf.mxu0
    %v5146 = vadd.f32 0.0, %v5145
    %5147 = vmatmul.f32.gmra.mxu0 %v4747
    %v5148 = vpop.f32.mrf.mxu0
    %v5149 = vadd.f32 0.0, %v5148
    %5150 = vmatmul.f32.gmra.mxu0 %v4748
    %v5151 = vpop.f32.mrf.mxu0
    %v5152 = vadd.f32 0.0, %v5151
    %5153 = vmatmul.f32.gmra.mxu0 %v4749
    %v5154 = vpop.f32.mrf.mxu0
    %v5155 = vadd.f32 0.0, %v5154
    %5156 = vmatmul.f32.gmra.mxu0 %v4750
    %v5157 = vpop.f32.mrf.mxu0
    %v5158 = vadd.f32 0.0, %v5157
    %5159 = vmatmul.f32.gmra.mxu0 %v4751
    %v5160 = vpop.f32.mrf.mxu0
    %v5161 = vadd.f32 0.0, %v5160
    %5162 = vmatmul.f32.gmra.mxu0 %v4752
    %v5163 = vpop.f32.mrf.mxu0
    %v5164 = vadd.f32 0.0, %v5163
    %5165 = vmatmul.f32.gmra.mxu0 %v4753
    %v5166 = vpop.f32.mrf.mxu0
    %v5167 = vadd.f32 0.0, %v5166
    %5168 = vmatmul.f32.gmra.mxu0 %v4754
    %v5169 = vpop.f32.mrf.mxu0
    %v5170 = vadd.f32 0.0, %v5169
    %5171 = vmatmul.f32.gmra.mxu0 %v4755
    %v5172 = vpop.f32.mrf.mxu0
    %v5173 = vadd.f32 0.0, %v5172
    %5174 = vmatmul.f32.gmra.mxu0 %v4756
    %v5175 = vpop.f32.mrf.mxu0
    %v5176 = vadd.f32 0.0, %v5175
    %5177 = vmatmul.f32.gmra.mxu0 %v4757
    %v5178 = vpop.f32.mrf.mxu0
    %v5179 = vadd.f32 0.0, %v5178
    %5180 = vmatmul.f32.gmra.mxu0 %v4758
    %v5181 = vpop.f32.mrf.mxu0
    %v5182 = vadd.f32 0.0, %v5181
    %5183 = vmatmul.f32.gmra.mxu0 %v4759
    %v5184 = vpop.f32.mrf.mxu0
    %v5185 = vadd.f32 0.0, %v5184
    %5186 = vmatmul.f32.gmra.mxu0 %v4760
    %v5187 = vpop.f32.mrf.mxu0
    %v5188 = vadd.f32 0.0, %v5187
    %5189 = vmatmul.f32.gmra.mxu0 %v4761
    %v5190 = vpop.f32.mrf.mxu0
    %v5191 = vadd.f32 0.0, %v5190
    %5192 = vmatmul.f32.gmra.mxu0 %v4762
    %v5193 = vpop.f32.mrf.mxu0
    %v5194 = vadd.f32 0.0, %v5193
    %5195 = vmatmul.f32.gmra.mxu0 %v4763
    %v5196 = vpop.f32.mrf.mxu0
    %v5197 = vadd.f32 0.0, %v5196
    %5198 = vmatmul.f32.gmra.mxu0 %v4764
    %v5199 = vpop.f32.mrf.mxu0
    %v5200 = vadd.f32 0.0, %v5199
    %5201 = vmatmul.f32.gmra.mxu0 %v4765
    %v5202 = vpop.f32.mrf.mxu0
    %v5203 = vadd.f32 0.0, %v5202
    %5204 = vmatmul.f32.gmra.mxu0 %v4766
    %v5205 = vpop.f32.mrf.mxu0
    %v5206 = vadd.f32 0.0, %v5205
    %5207 = vmatmul.f32.gmra.mxu0 %v4767
    %v5208 = vpop.f32.mrf.mxu0
    %v5209 = vadd.f32 0.0, %v5208
    %5210 = vmatmul.f32.gmra.mxu0 %v4768
    %v5211 = vpop.f32.mrf.mxu0
    %v5212 = vadd.f32 0.0, %v5211
    %5213 = vmatmul.f32.gmra.mxu0 %v4769
    %v5214 = vpop.f32.mrf.mxu0
    %v5215 = vadd.f32 0.0, %v5214
    %5216 = vmatmul.f32.gmra.mxu0 %v4770
    %v5217 = vpop.f32.mrf.mxu0
    %v5218 = vadd.f32 0.0, %v5217
    %5219 = vmatmul.f32.gmra.mxu0 %v4771
    %v5220 = vpop.f32.mrf.mxu0
    %v5221 = vadd.f32 0.0, %v5220
    %5222 = vmatmul.f32.gmra.mxu0 %v4772
    %v5223 = vpop.f32.mrf.mxu0
    %v5224 = vadd.f32 0.0, %v5223
    %5225 = vmatmul.f32.gmra.mxu0 %v4773
    %v5226 = vpop.f32.mrf.mxu0
    %v5227 = vadd.f32 0.0, %v5226
    %5228 = vmatmul.f32.gmra.mxu0 %v4774
    %v5229 = vpop.f32.mrf.mxu0
    %v5230 = vadd.f32 0.0, %v5229
    %5231 = vmatmul.f32.gmra.mxu0 %v4775
    %v5232 = vpop.f32.mrf.mxu0
    %v5233 = vadd.f32 0.0, %v5232
    %5234 = vdwg.mxu0
    %v5235 = vadd.f32 %v5073, %v5140
    %v5236 = vadd.f32 %v5074, %v5143
    %v5237 = vadd.f32 %v5075, %v5146
    %v5238 = vadd.f32 %v5076, %v5149
    %v5239 = vadd.f32 %v5077, %v5152
    %v5240 = vadd.f32 %v5078, %v5155
    %v5241 = vadd.f32 %v5079, %v5158
    %v5242 = vadd.f32 %v5080, %v5161
    %v5243 = vadd.f32 %v5081, %v5164
    %v5244 = vadd.f32 %v5082, %v5167
    %v5245 = vadd.f32 %v5083, %v5170
    %v5246 = vadd.f32 %v5084, %v5173
    %v5247 = vadd.f32 %v5085, %v5176
    %v5248 = vadd.f32 %v5086, %v5179
    %v5249 = vadd.f32 %v5087, %v5182
    %v5250 = vadd.f32 %v5088, %v5185
    %v5251 = vadd.f32 %v5089, %v5188
    %v5252 = vadd.f32 %v5090, %v5191
    %v5253 = vadd.f32 %v5091, %v5194
    %v5254 = vadd.f32 %v5092, %v5197
    %v5255 = vadd.f32 %v5093, %v5200
    %v5256 = vadd.f32 %v5094, %v5203
    %v5257 = vadd.f32 %v5095, %v5206
    %v5258 = vadd.f32 %v5096, %v5209
    %v5259 = vadd.f32 %v5097, %v5212
    %v5260 = vadd.f32 %v5098, %v5215
    %v5261 = vadd.f32 %v5099, %v5218
    %v5262 = vadd.f32 %v5100, %v5221
    %v5263 = vadd.f32 %v5101, %v5224
    %v5264 = vadd.f32 %v5102, %v5227
    %v5265 = vadd.f32 %v5103, %v5230
    %v5266 = vadd.f32 %v5104, %v5233
    %s5267 = scalar_lea.vmem %s7, 64
    %v5268 = vld [vmem:[%s5267] sm:$0xff]
    %v5269 = vld [vmem:[%s5267 + $0x8] sm:$0xff]
    %v5270 = vld [vmem:[%s5267 + $0x10] sm:$0xff]
    %v5271 = vld [vmem:[%s5267 + $0x18] sm:$0xff]
    %5272 = vmatpush.msra.mxu0 0.0
    %5273 = vmatpush.msra.mxu0 0.0
    %5274 = vmatpush.msra.mxu0 0.0
    %5275 = vmatpush.msra.mxu0 0.0
    %5276 = vmatpush.msra.mxu0 0.0
    %5277 = vmatpush.msra.mxu0 0.0
    %5278 = vmatpush.msra.mxu0 0.0
    %5279 = vmatpush.msra.mxu0 0.0
    %5280 = vmatpush.msra.mxu0 0.0
    %5281 = vmatpush.msra.mxu0 0.0
    %5282 = vmatpush.msra.mxu0 0.0
    %5283 = vmatpush.msra.mxu0 0.0
    %5284 = vmatpush.msra.mxu0 %v5271
    %5285 = vmatpush.msra.mxu0 %v5270
    %5286 = vmatpush.msra.mxu0 %v5269
    %5287 = vmatpush.msra.mxu0 %v5268
    %5288 = vmatmul.f32.gmra.mxu0 %v1381
    %v5289 = vpop.f32.mrf.mxu0
    %v5290 = vadd.f32 0.0, %v5289
    %5291 = vmatmul.f32.gmra.mxu0 %v1384
    %v5292 = vpop.f32.mrf.mxu0
    %v5293 = vadd.f32 0.0, %v5292
    %5294 = vmatmul.f32.gmra.mxu0 %v1387
    %v5295 = vpop.f32.mrf.mxu0
    %v5296 = vadd.f32 0.0, %v5295
    %5297 = vmatmul.f32.gmra.mxu0 %v1390
    %v5298 = vpop.f32.mrf.mxu0
    %v5299 = vadd.f32 0.0, %v5298
    %5300 = vmatmul.f32.gmra.mxu0 %v1393
    %v5301 = vpop.f32.mrf.mxu0
    %v5302 = vadd.f32 0.0, %v5301
    %5303 = vmatmul.f32.gmra.mxu0 %v1396
    %v5304 = vpop.f32.mrf.mxu0
    %v5305 = vadd.f32 0.0, %v5304
    %5306 = vmatmul.f32.gmra.mxu0 %v1399
    %v5307 = vpop.f32.mrf.mxu0
    %v5308 = vadd.f32 0.0, %v5307
    %5309 = vmatmul.f32.gmra.mxu0 %v1402
    %v5310 = vpop.f32.mrf.mxu0
    %v5311 = vadd.f32 0.0, %v5310
    %5312 = vmatmul.f32.gmra.mxu0 %v1405
    %v5313 = vpop.f32.mrf.mxu0
    %v5314 = vadd.f32 0.0, %v5313
    %5315 = vmatmul.f32.gmra.mxu0 %v1408
    %v5316 = vpop.f32.mrf.mxu0
    %v5317 = vadd.f32 0.0, %v5316
    %5318 = vmatmul.f32.gmra.mxu0 %v1411
    %v5319 = vpop.f32.mrf.mxu0
    %v5320 = vadd.f32 0.0, %v5319
    %5321 = vmatmul.f32.gmra.mxu0 %v1414
    %v5322 = vpop.f32.mrf.mxu0
    %v5323 = vadd.f32 0.0, %v5322
    %5324 = vmatmul.f32.gmra.mxu0 %v1417
    %v5325 = vpop.f32.mrf.mxu0
    %v5326 = vadd.f32 0.0, %v5325
    %5327 = vmatmul.f32.gmra.mxu0 %v1420
    %v5328 = vpop.f32.mrf.mxu0
    %v5329 = vadd.f32 0.0, %v5328
    %5330 = vmatmul.f32.gmra.mxu0 %v1423
    %v5331 = vpop.f32.mrf.mxu0
    %v5332 = vadd.f32 0.0, %v5331
    %5333 = vmatmul.f32.gmra.mxu0 %v1426
    %v5334 = vpop.f32.mrf.mxu0
    %v5335 = vadd.f32 0.0, %v5334
    %5336 = vmatmul.f32.gmra.mxu0 %v1429
    %v5337 = vpop.f32.mrf.mxu0
    %v5338 = vadd.f32 0.0, %v5337
    %5339 = vmatmul.f32.gmra.mxu0 %v1432
    %v5340 = vpop.f32.mrf.mxu0
    %v5341 = vadd.f32 0.0, %v5340
    %5342 = vmatmul.f32.gmra.mxu0 %v1435
    %v5343 = vpop.f32.mrf.mxu0
    %v5344 = vadd.f32 0.0, %v5343
    %5345 = vmatmul.f32.gmra.mxu0 %v1438
    %v5346 = vpop.f32.mrf.mxu0
    %v5347 = vadd.f32 0.0, %v5346
    %5348 = vmatmul.f32.gmra.mxu0 %v1441
    %v5349 = vpop.f32.mrf.mxu0
    %v5350 = vadd.f32 0.0, %v5349
    %5351 = vmatmul.f32.gmra.mxu0 %v1444
    %v5352 = vpop.f32.mrf.mxu0
    %v5353 = vadd.f32 0.0, %v5352
    %5354 = vmatmul.f32.gmra.mxu0 %v1447
    %v5355 = vpop.f32.mrf.mxu0
    %v5356 = vadd.f32 0.0, %v5355
    %5357 = vmatmul.f32.gmra.mxu0 %v1450
    %v5358 = vpop.f32.mrf.mxu0
    %v5359 = vadd.f32 0.0, %v5358
    %5360 = vmatmul.f32.gmra.mxu0 %v1453
    %v5361 = vpop.f32.mrf.mxu0
    %v5362 = vadd.f32 0.0, %v5361
    %5363 = vmatmul.f32.gmra.mxu0 %v1456
    %v5364 = vpop.f32.mrf.mxu0
    %v5365 = vadd.f32 0.0, %v5364
    %5366 = vmatmul.f32.gmra.mxu0 %v1459
    %v5367 = vpop.f32.mrf.mxu0
    %v5368 = vadd.f32 0.0, %v5367
    %5369 = vmatmul.f32.gmra.mxu0 %v1462
    %v5370 = vpop.f32.mrf.mxu0
    %v5371 = vadd.f32 0.0, %v5370
    %5372 = vmatmul.f32.gmra.mxu0 %v1465
    %v5373 = vpop.f32.mrf.mxu0
    %v5374 = vadd.f32 0.0, %v5373
    %5375 = vmatmul.f32.gmra.mxu0 %v1468
    %v5376 = vpop.f32.mrf.mxu0
    %v5377 = vadd.f32 0.0, %v5376
    %5378 = vmatmul.f32.gmra.mxu0 %v1471
    %v5379 = vpop.f32.mrf.mxu0
    %v5380 = vadd.f32 0.0, %v5379
    %5381 = vmatmul.f32.gmra.mxu0 %v1474
    %v5382 = vpop.f32.mrf.mxu0
    %v5383 = vadd.f32 0.0, %v5382
    %5384 = vdwg.mxu0
    %v5385 = vadd.f32 %v5235, %v5290
    %v5386 = vadd.f32 %v5236, %v5293
    %v5387 = vadd.f32 %v5237, %v5296
    %v5388 = vadd.f32 %v5238, %v5299
    %v5389 = vadd.f32 %v5239, %v5302
    %v5390 = vadd.f32 %v5240, %v5305
    %v5391 = vadd.f32 %v5241, %v5308
    %v5392 = vadd.f32 %v5242, %v5311
    %v5393 = vadd.f32 %v5243, %v5314
    %v5394 = vadd.f32 %v5244, %v5317
    %v5395 = vadd.f32 %v5245, %v5320
    %v5396 = vadd.f32 %v5246, %v5323
    %v5397 = vadd.f32 %v5247, %v5326
    %v5398 = vadd.f32 %v5248, %v5329
    %v5399 = vadd.f32 %v5249, %v5332
    %v5400 = vadd.f32 %v5250, %v5335
    %v5401 = vadd.f32 %v5251, %v5338
    %v5402 = vadd.f32 %v5252, %v5341
    %v5403 = vadd.f32 %v5253, %v5344
    %v5404 = vadd.f32 %v5254, %v5347
    %v5405 = vadd.f32 %v5255, %v5350
    %v5406 = vadd.f32 %v5256, %v5353
    %v5407 = vadd.f32 %v5257, %v5356
    %v5408 = vadd.f32 %v5258, %v5359
    %v5409 = vadd.f32 %v5259, %v5362
    %v5410 = vadd.f32 %v5260, %v5365
    %v5411 = vadd.f32 %v5261, %v5368
    %v5412 = vadd.f32 %v5262, %v5371
    %v5413 = vadd.f32 %v5263, %v5374
    %v5414 = vadd.f32 %v5264, %v5377
    %v5415 = vadd.f32 %v5265, %v5380
    %v5416 = vadd.f32 %v5266, %v5383
    %v5417 = vtanh.pop %v5385
    %v5418 = vtanh.pop %v5386
    %v5419 = vtanh.pop %v5387
    %v5420 = vtanh.pop %v5388
    %v5421 = vtanh.pop %v5389
    %v5422 = vtanh.pop %v5390
    %v5423 = vtanh.pop %v5391
    %v5424 = vtanh.pop %v5392
    %v5425 = vtanh.pop %v5393
    %v5426 = vtanh.pop %v5394
    %v5427 = vtanh.pop %v5395
    %v5428 = vtanh.pop %v5396
    %v5429 = vtanh.pop %v5397
    %v5430 = vtanh.pop %v5398
    %v5431 = vtanh.pop %v5399
    %v5432 = vtanh.pop %v5400
    %v5433 = vtanh.pop %v5401
    %v5434 = vtanh.pop %v5402
    %v5435 = vtanh.pop %v5403
    %v5436 = vtanh.pop %v5404
    %v5437 = vtanh.pop %v5405
    %v5438 = vtanh.pop %v5406
    %v5439 = vtanh.pop %v5407
    %v5440 = vtanh.pop %v5408
    %v5441 = vtanh.pop %v5409
    %v5442 = vtanh.pop %v5410
    %v5443 = vtanh.pop %v5411
    %v5444 = vtanh.pop %v5412
    %v5445 = vtanh.pop %v5413
    %v5446 = vtanh.pop %v5414
    %v5447 = vtanh.pop %v5415
    %v5448 = vtanh.pop %v5416
    %5449 = vrot.lane.b32.xlu0 %v5385, 64
    %v5450 = vpop.permute.xlu0 %5449
    %5451 = vrot.lane.b32.xlu0 %v5386, 64
    %v5452 = vpop.permute.xlu0 %5451
    %5453 = vrot.lane.b32.xlu0 %v5387, 64
    %v5454 = vpop.permute.xlu0 %5453
    %5455 = vrot.lane.b32.xlu0 %v5388, 64
    %v5456 = vpop.permute.xlu0 %5455
    %5457 = vrot.lane.b32.xlu0 %v5389, 64
    %v5458 = vpop.permute.xlu0 %5457
    %5459 = vrot.lane.b32.xlu0 %v5390, 64
    %v5460 = vpop.permute.xlu0 %5459
    %5461 = vrot.lane.b32.xlu0 %v5391, 64
    %v5462 = vpop.permute.xlu0 %5461
    %5463 = vrot.lane.b32.xlu0 %v5392, 64
    %v5464 = vpop.permute.xlu0 %5463
    %5465 = vrot.lane.b32.xlu0 %v5393, 64
    %v5466 = vpop.permute.xlu0 %5465
    %5467 = vrot.lane.b32.xlu0 %v5394, 64
    %v5468 = vpop.permute.xlu0 %5467
    %5469 = vrot.lane.b32.xlu0 %v5395, 64
    %v5470 = vpop.permute.xlu0 %5469
    %5471 = vrot.lane.b32.xlu0 %v5396, 64
    %v5472 = vpop.permute.xlu0 %5471
    %5473 = vrot.lane.b32.xlu0 %v5397, 64
    %v5474 = vpop.permute.xlu0 %5473
    %5475 = vrot.lane.b32.xlu0 %v5398, 64
    %v5476 = vpop.permute.xlu0 %5475
    %5477 = vrot.lane.b32.xlu0 %v5399, 64
    %v5478 = vpop.permute.xlu0 %5477
    %5479 = vrot.lane.b32.xlu0 %v5400, 64
    %v5480 = vpop.permute.xlu0 %5479
    %5481 = vrot.lane.b32.xlu0 %v5401, 64
    %v5482 = vpop.permute.xlu0 %5481
    %5483 = vrot.lane.b32.xlu0 %v5402, 64
    %v5484 = vpop.permute.xlu0 %5483
    %5485 = vrot.lane.b32.xlu0 %v5403, 64
    %v5486 = vpop.permute.xlu0 %5485
    %5487 = vrot.lane.b32.xlu0 %v5404, 64
    %v5488 = vpop.permute.xlu0 %5487
    %5489 = vrot.lane.b32.xlu0 %v5405, 64
    %v5490 = vpop.permute.xlu0 %5489
    %5491 = vrot.lane.b32.xlu0 %v5406, 64
    %v5492 = vpop.permute.xlu0 %5491
    %5493 = vrot.lane.b32.xlu0 %v5407, 64
    %v5494 = vpop.permute.xlu0 %5493
    %5495 = vrot.lane.b32.xlu0 %v5408, 64
    %v5496 = vpop.permute.xlu0 %5495
    %5497 = vrot.lane.b32.xlu0 %v5409, 64
    %v5498 = vpop.permute.xlu0 %5497
    %5499 = vrot.lane.b32.xlu0 %v5410, 64
    %v5500 = vpop.permute.xlu0 %5499
    %5501 = vrot.lane.b32.xlu0 %v5411, 64
    %v5502 = vpop.permute.xlu0 %5501
    %5503 = vrot.lane.b32.xlu0 %v5412, 64
    %v5504 = vpop.permute.xlu0 %5503
    %5505 = vrot.lane.b32.xlu0 %v5413, 64
    %v5506 = vpop.permute.xlu0 %5505
    %5507 = vrot.lane.b32.xlu0 %v5414, 64
    %v5508 = vpop.permute.xlu0 %5507
    %5509 = vrot.lane.b32.xlu0 %v5415, 64
    %v5510 = vpop.permute.xlu0 %5509
    %5511 = vrot.lane.b32.xlu0 %v5416, 64
    %v5512 = vpop.permute.xlu0 %5511
    %v5513 = vxor.u32 %v5450, 2147483648
    %v5514 = vxor.u32 %v5452, 2147483648
    %v5515 = vxor.u32 %v5454, 2147483648
    %v5516 = vxor.u32 %v5456, 2147483648
    %v5517 = vxor.u32 %v5458, 2147483648
    %v5518 = vxor.u32 %v5460, 2147483648
    %v5519 = vxor.u32 %v5462, 2147483648
    %v5520 = vxor.u32 %v5464, 2147483648
    %v5521 = vxor.u32 %v5466, 2147483648
    %v5522 = vxor.u32 %v5468, 2147483648
    %v5523 = vxor.u32 %v5470, 2147483648
    %v5524 = vxor.u32 %v5472, 2147483648
    %v5525 = vxor.u32 %v5474, 2147483648
    %v5526 = vxor.u32 %v5476, 2147483648
    %v5527 = vxor.u32 %v5478, 2147483648
    %v5528 = vxor.u32 %v5480, 2147483648
    %v5529 = vxor.u32 %v5482, 2147483648
    %v5530 = vxor.u32 %v5484, 2147483648
    %v5531 = vxor.u32 %v5486, 2147483648
    %v5532 = vxor.u32 %v5488, 2147483648
    %v5533 = vxor.u32 %v5490, 2147483648
    %v5534 = vxor.u32 %v5492, 2147483648
    %v5535 = vxor.u32 %v5494, 2147483648
    %v5536 = vxor.u32 %v5496, 2147483648
    %v5537 = vxor.u32 %v5498, 2147483648
    %v5538 = vxor.u32 %v5500, 2147483648
    %v5539 = vxor.u32 %v5502, 2147483648
    %v5540 = vxor.u32 %v5504, 2147483648
    %v5541 = vxor.u32 %v5506, 2147483648
    %v5542 = vxor.u32 %v5508, 2147483648
    %v5543 = vxor.u32 %v5510, 2147483648
    %v5544 = vxor.u32 %v5512, 2147483648
    %v5545 = vmul.f32 %v5513, 1.442695
    %v5546 = vpow.pop %v5545
    %v5547 = vmul.f32 %v5514, 1.442695
    %v5548 = vpow.pop %v5547
    %v5549 = vmul.f32 %v5515, 1.442695
    %v5550 = vpow.pop %v5549
    %v5551 = vmul.f32 %v5516, 1.442695
    %v5552 = vpow.pop %v5551
    %v5553 = vmul.f32 %v5517, 1.442695
    %v5554 = vpow.pop %v5553
    %v5555 = vmul.f32 %v5518, 1.442695
    %v5556 = vpow.pop %v5555
    %v5557 = vmul.f32 %v5519, 1.442695
    %v5558 = vpow.pop %v5557
    %v5559 = vmul.f32 %v5520, 1.442695
    %v5560 = vpow.pop %v5559
    %v5561 = vmul.f32 %v5521, 1.442695
    %v5562 = vpow.pop %v5561
    %v5563 = vmul.f32 %v5522, 1.442695
    %v5564 = vpow.pop %v5563
    %v5565 = vmul.f32 %v5523, 1.442695
    %v5566 = vpow.pop %v5565
    %v5567 = vmul.f32 %v5524, 1.442695
    %v5568 = vpow.pop %v5567
    %v5569 = vmul.f32 %v5525, 1.442695
    %v5570 = vpow.pop %v5569
    %v5571 = vmul.f32 %v5526, 1.442695
    %v5572 = vpow.pop %v5571
    %v5573 = vmul.f32 %v5527, 1.442695
    %v5574 = vpow.pop %v5573
    %v5575 = vmul.f32 %v5528, 1.442695
    %v5576 = vpow.pop %v5575
    %v5577 = vmul.f32 %v5529, 1.442695
    %v5578 = vpow.pop %v5577
    %v5579 = vmul.f32 %v5530, 1.442695
    %v5580 = vpow.pop %v5579
    %v5581 = vmul.f32 %v5531, 1.442695
    %v5582 = vpow.pop %v5581
    %v5583 = vmul.f32 %v5532, 1.442695
    %v5584 = vpow.pop %v5583
    %v5585 = vmul.f32 %v5533, 1.442695
    %v5586 = vpow.pop %v5585
    %v5587 = vmul.f32 %v5534, 1.442695
    %v5588 = vpow.pop %v5587
    %v5589 = vmul.f32 %v5535, 1.442695
    %v5590 = vpow.pop %v5589
    %v5591 = vmul.f32 %v5536, 1.442695
    %v5592 = vpow.pop %v5591
    %v5593 = vmul.f32 %v5537, 1.442695
    %v5594 = vpow.pop %v5593
    %v5595 = vmul.f32 %v5538, 1.442695
    %v5596 = vpow.pop %v5595
    %v5597 = vmul.f32 %v5539, 1.442695
    %v5598 = vpow.pop %v5597
    %v5599 = vmul.f32 %v5540, 1.442695
    %v5600 = vpow.pop %v5599
    %v5601 = vmul.f32 %v5541, 1.442695
    %v5602 = vpow.pop %v5601
    %v5603 = vmul.f32 %v5542, 1.442695
    %v5604 = vpow.pop %v5603
    %v5605 = vmul.f32 %v5543, 1.442695
    %v5606 = vpow.pop %v5605
    %v5607 = vmul.f32 %v5544, 1.442695
    %v5608 = vpow.pop %v5607
    %v5609 = vadd.f32 %v5546, 1.0
    %v5610 = vadd.f32 %v5548, 1.0
    %v5611 = vadd.f32 %v5550, 1.0
    %v5612 = vadd.f32 %v5552, 1.0
    %v5613 = vadd.f32 %v5554, 1.0
    %v5614 = vadd.f32 %v5556, 1.0
    %v5615 = vadd.f32 %v5558, 1.0
    %v5616 = vadd.f32 %v5560, 1.0
    %v5617 = vadd.f32 %v5562, 1.0
    %v5618 = vadd.f32 %v5564, 1.0
    %v5619 = vadd.f32 %v5566, 1.0
    %v5620 = vadd.f32 %v5568, 1.0
    %v5621 = vadd.f32 %v5570, 1.0
    %v5622 = vadd.f32 %v5572, 1.0
    %v5623 = vadd.f32 %v5574, 1.0
    %v5624 = vadd.f32 %v5576, 1.0
    %v5625 = vadd.f32 %v5578, 1.0
    %v5626 = vadd.f32 %v5580, 1.0
    %v5627 = vadd.f32 %v5582, 1.0
    %v5628 = vadd.f32 %v5584, 1.0
    %v5629 = vadd.f32 %v5586, 1.0
    %v5630 = vadd.f32 %v5588, 1.0
    %v5631 = vadd.f32 %v5590, 1.0
    %v5632 = vadd.f32 %v5592, 1.0
    %v5633 = vadd.f32 %v5594, 1.0
    %v5634 = vadd.f32 %v5596, 1.0
    %v5635 = vadd.f32 %v5598, 1.0
    %v5636 = vadd.f32 %v5600, 1.0
    %v5637 = vadd.f32 %v5602, 1.0
    %v5638 = vadd.f32 %v5604, 1.0
    %v5639 = vadd.f32 %v5606, 1.0
    %v5640 = vadd.f32 %v5608, 1.0
    %v5641 = vrcp.pop %v5609
    %v5642 = vmul.f32 %v5609, %v5641
    %v5643 = vsub.f32 1.0, %v5642
    %v5644 = vmul.f32 %v5641, %v5643
    %v5645 = vadd.f32 %v5641, %v5644
    %vm5646 = vweird.f32 %v5609
    %vm5647 = vweird.f32 %v5641
    %vm5648 = vmor %vm5646, %vm5647
    %v5649 = vsel %vm5648, %v5641, %v5645
    %v5650 = vand.u32 2147483647, %v5609
    %vm5651 = vcmp.eq.f32.partialorder %v5650, 8.507059e+37
    %v5652 = vand.u32 %v5609, 2147483648
    %v5653 = vor.u32 1.1754944e-38, %v5652
    %v5654 = vsel %vm5651, %v5653, %v5649
    %v5655 = vmul.f32 1.0, %v5654
    %v5656 = vrcp.pop %v5610
    %v5657 = vmul.f32 %v5610, %v5656
    %v5658 = vsub.f32 1.0, %v5657
    %v5659 = vmul.f32 %v5656, %v5658
    %v5660 = vadd.f32 %v5656, %v5659
    %vm5661 = vweird.f32 %v5610
    %vm5662 = vweird.f32 %v5656
    %vm5663 = vmor %vm5661, %vm5662
    %v5664 = vsel %vm5663, %v5656, %v5660
    %v5665 = vand.u32 2147483647, %v5610
    %vm5666 = vcmp.eq.f32.partialorder %v5665, 8.507059e+37
    %v5667 = vand.u32 %v5610, 2147483648
    %v5668 = vor.u32 1.1754944e-38, %v5667
    %v5669 = vsel %vm5666, %v5668, %v5664
    %v5670 = vmul.f32 1.0, %v5669
    %v5671 = vrcp.pop %v5611
    %v5672 = vmul.f32 %v5611, %v5671
    %v5673 = vsub.f32 1.0, %v5672
    %v5674 = vmul.f32 %v5671, %v5673
    %v5675 = vadd.f32 %v5671, %v5674
    %vm5676 = vweird.f32 %v5611
    %vm5677 = vweird.f32 %v5671
    %vm5678 = vmor %vm5676, %vm5677
    %v5679 = vsel %vm5678, %v5671, %v5675
    %v5680 = vand.u32 2147483647, %v5611
    %vm5681 = vcmp.eq.f32.partialorder %v5680, 8.507059e+37
    %v5682 = vand.u32 %v5611, 2147483648
    %v5683 = vor.u32 1.1754944e-38, %v5682
    %v5684 = vsel %vm5681, %v5683, %v5679
    %v5685 = vmul.f32 1.0, %v5684
    %v5686 = vrcp.pop %v5612
    %v5687 = vmul.f32 %v5612, %v5686
    %v5688 = vsub.f32 1.0, %v5687
    %v5689 = vmul.f32 %v5686, %v5688
    %v5690 = vadd.f32 %v5686, %v5689
    %vm5691 = vweird.f32 %v5612
    %vm5692 = vweird.f32 %v5686
    %vm5693 = vmor %vm5691, %vm5692
    %v5694 = vsel %vm5693, %v5686, %v5690
    %v5695 = vand.u32 2147483647, %v5612
    %vm5696 = vcmp.eq.f32.partialorder %v5695, 8.507059e+37
    %v5697 = vand.u32 %v5612, 2147483648
    %v5698 = vor.u32 1.1754944e-38, %v5697
    %v5699 = vsel %vm5696, %v5698, %v5694
    %v5700 = vmul.f32 1.0, %v5699
    %v5701 = vrcp.pop %v5613
    %v5702 = vmul.f32 %v5613, %v5701
    %v5703 = vsub.f32 1.0, %v5702
    %v5704 = vmul.f32 %v5701, %v5703
    %v5705 = vadd.f32 %v5701, %v5704
    %vm5706 = vweird.f32 %v5613
    %vm5707 = vweird.f32 %v5701
    %vm5708 = vmor %vm5706, %vm5707
    %v5709 = vsel %vm5708, %v5701, %v5705
    %v5710 = vand.u32 2147483647, %v5613
    %vm5711 = vcmp.eq.f32.partialorder %v5710, 8.507059e+37
    %v5712 = vand.u32 %v5613, 2147483648
    %v5713 = vor.u32 1.1754944e-38, %v5712
    %v5714 = vsel %vm5711, %v5713, %v5709
    %v5715 = vmul.f32 1.0, %v5714
    %v5716 = vrcp.pop %v5614
    %v5717 = vmul.f32 %v5614, %v5716
    %v5718 = vsub.f32 1.0, %v5717
    %v5719 = vmul.f32 %v5716, %v5718
    %v5720 = vadd.f32 %v5716, %v5719
    %vm5721 = vweird.f32 %v5614
    %vm5722 = vweird.f32 %v5716
    %vm5723 = vmor %vm5721, %vm5722
    %v5724 = vsel %vm5723, %v5716, %v5720
    %v5725 = vand.u32 2147483647, %v5614
    %vm5726 = vcmp.eq.f32.partialorder %v5725, 8.507059e+37
    %v5727 = vand.u32 %v5614, 2147483648
    %v5728 = vor.u32 1.1754944e-38, %v5727
    %v5729 = vsel %vm5726, %v5728, %v5724
    %v5730 = vmul.f32 1.0, %v5729
    %v5731 = vrcp.pop %v5615
    %v5732 = vmul.f32 %v5615, %v5731
    %v5733 = vsub.f32 1.0, %v5732
    %v5734 = vmul.f32 %v5731, %v5733
    %v5735 = vadd.f32 %v5731, %v5734
    %vm5736 = vweird.f32 %v5615
    %vm5737 = vweird.f32 %v5731
    %vm5738 = vmor %vm5736, %vm5737
    %v5739 = vsel %vm5738, %v5731, %v5735
    %v5740 = vand.u32 2147483647, %v5615
    %vm5741 = vcmp.eq.f32.partialorder %v5740, 8.507059e+37
    %v5742 = vand.u32 %v5615, 2147483648
    %v5743 = vor.u32 1.1754944e-38, %v5742
    %v5744 = vsel %vm5741, %v5743, %v5739
    %v5745 = vmul.f32 1.0, %v5744
    %v5746 = vrcp.pop %v5616
    %v5747 = vmul.f32 %v5616, %v5746
    %v5748 = vsub.f32 1.0, %v5747
    %v5749 = vmul.f32 %v5746, %v5748
    %v5750 = vadd.f32 %v5746, %v5749
    %vm5751 = vweird.f32 %v5616
    %vm5752 = vweird.f32 %v5746
    %vm5753 = vmor %vm5751, %vm5752
    %v5754 = vsel %vm5753, %v5746, %v5750
    %v5755 = vand.u32 2147483647, %v5616
    %vm5756 = vcmp.eq.f32.partialorder %v5755, 8.507059e+37
    %v5757 = vand.u32 %v5616, 2147483648
    %v5758 = vor.u32 1.1754944e-38, %v5757
    %v5759 = vsel %vm5756, %v5758, %v5754
    %v5760 = vmul.f32 1.0, %v5759
    %v5761 = vrcp.pop %v5617
    %v5762 = vmul.f32 %v5617, %v5761
    %v5763 = vsub.f32 1.0, %v5762
    %v5764 = vmul.f32 %v5761, %v5763
    %v5765 = vadd.f32 %v5761, %v5764
    %vm5766 = vweird.f32 %v5617
    %vm5767 = vweird.f32 %v5761
    %vm5768 = vmor %vm5766, %vm5767
    %v5769 = vsel %vm5768, %v5761, %v5765
    %v5770 = vand.u32 2147483647, %v5617
    %vm5771 = vcmp.eq.f32.partialorder %v5770, 8.507059e+37
    %v5772 = vand.u32 %v5617, 2147483648
    %v5773 = vor.u32 1.1754944e-38, %v5772
    %v5774 = vsel %vm5771, %v5773, %v5769
    %v5775 = vmul.f32 1.0, %v5774
    %v5776 = vrcp.pop %v5618
    %v5777 = vmul.f32 %v5618, %v5776
    %v5778 = vsub.f32 1.0, %v5777
    %v5779 = vmul.f32 %v5776, %v5778
    %v5780 = vadd.f32 %v5776, %v5779
    %vm5781 = vweird.f32 %v5618
    %vm5782 = vweird.f32 %v5776
    %vm5783 = vmor %vm5781, %vm5782
    %v5784 = vsel %vm5783, %v5776, %v5780
    %v5785 = vand.u32 2147483647, %v5618
    %vm5786 = vcmp.eq.f32.partialorder %v5785, 8.507059e+37
    %v5787 = vand.u32 %v5618, 2147483648
    %v5788 = vor.u32 1.1754944e-38, %v5787
    %v5789 = vsel %vm5786, %v5788, %v5784
    %v5790 = vmul.f32 1.0, %v5789
    %v5791 = vrcp.pop %v5619
    %v5792 = vmul.f32 %v5619, %v5791
    %v5793 = vsub.f32 1.0, %v5792
    %v5794 = vmul.f32 %v5791, %v5793
    %v5795 = vadd.f32 %v5791, %v5794
    %vm5796 = vweird.f32 %v5619
    %vm5797 = vweird.f32 %v5791
    %vm5798 = vmor %vm5796, %vm5797
    %v5799 = vsel %vm5798, %v5791, %v5795
    %v5800 = vand.u32 2147483647, %v5619
    %vm5801 = vcmp.eq.f32.partialorder %v5800, 8.507059e+37
    %v5802 = vand.u32 %v5619, 2147483648
    %v5803 = vor.u32 1.1754944e-38, %v5802
    %v5804 = vsel %vm5801, %v5803, %v5799
    %v5805 = vmul.f32 1.0, %v5804
    %v5806 = vrcp.pop %v5620
    %v5807 = vmul.f32 %v5620, %v5806
    %v5808 = vsub.f32 1.0, %v5807
    %v5809 = vmul.f32 %v5806, %v5808
    %v5810 = vadd.f32 %v5806, %v5809
    %vm5811 = vweird.f32 %v5620
    %vm5812 = vweird.f32 %v5806
    %vm5813 = vmor %vm5811, %vm5812
    %v5814 = vsel %vm5813, %v5806, %v5810
    %v5815 = vand.u32 2147483647, %v5620
    %vm5816 = vcmp.eq.f32.partialorder %v5815, 8.507059e+37
    %v5817 = vand.u32 %v5620, 2147483648
    %v5818 = vor.u32 1.1754944e-38, %v5817
    %v5819 = vsel %vm5816, %v5818, %v5814
    %v5820 = vmul.f32 1.0, %v5819
    %v5821 = vrcp.pop %v5621
    %v5822 = vmul.f32 %v5621, %v5821
    %v5823 = vsub.f32 1.0, %v5822
    %v5824 = vmul.f32 %v5821, %v5823
    %v5825 = vadd.f32 %v5821, %v5824
    %vm5826 = vweird.f32 %v5621
    %vm5827 = vweird.f32 %v5821
    %vm5828 = vmor %vm5826, %vm5827
    %v5829 = vsel %vm5828, %v5821, %v5825
    %v5830 = vand.u32 2147483647, %v5621
    %vm5831 = vcmp.eq.f32.partialorder %v5830, 8.507059e+37
    %v5832 = vand.u32 %v5621, 2147483648
    %v5833 = vor.u32 1.1754944e-38, %v5832
    %v5834 = vsel %vm5831, %v5833, %v5829
    %v5835 = vmul.f32 1.0, %v5834
    %v5836 = vrcp.pop %v5622
    %v5837 = vmul.f32 %v5622, %v5836
    %v5838 = vsub.f32 1.0, %v5837
    %v5839 = vmul.f32 %v5836, %v5838
    %v5840 = vadd.f32 %v5836, %v5839
    %vm5841 = vweird.f32 %v5622
    %vm5842 = vweird.f32 %v5836
    %vm5843 = vmor %vm5841, %vm5842
    %v5844 = vsel %vm5843, %v5836, %v5840
    %v5845 = vand.u32 2147483647, %v5622
    %vm5846 = vcmp.eq.f32.partialorder %v5845, 8.507059e+37
    %v5847 = vand.u32 %v5622, 2147483648
    %v5848 = vor.u32 1.1754944e-38, %v5847
    %v5849 = vsel %vm5846, %v5848, %v5844
    %v5850 = vmul.f32 1.0, %v5849
    %v5851 = vrcp.pop %v5623
    %v5852 = vmul.f32 %v5623, %v5851
    %v5853 = vsub.f32 1.0, %v5852
    %v5854 = vmul.f32 %v5851, %v5853
    %v5855 = vadd.f32 %v5851, %v5854
    %vm5856 = vweird.f32 %v5623
    %vm5857 = vweird.f32 %v5851
    %vm5858 = vmor %vm5856, %vm5857
    %v5859 = vsel %vm5858, %v5851, %v5855
    %v5860 = vand.u32 2147483647, %v5623
    %vm5861 = vcmp.eq.f32.partialorder %v5860, 8.507059e+37
    %v5862 = vand.u32 %v5623, 2147483648
    %v5863 = vor.u32 1.1754944e-38, %v5862
    %v5864 = vsel %vm5861, %v5863, %v5859
    %v5865 = vmul.f32 1.0, %v5864
    %v5866 = vrcp.pop %v5624
    %v5867 = vmul.f32 %v5624, %v5866
    %v5868 = vsub.f32 1.0, %v5867
    %v5869 = vmul.f32 %v5866, %v5868
    %v5870 = vadd.f32 %v5866, %v5869
    %vm5871 = vweird.f32 %v5624
    %vm5872 = vweird.f32 %v5866
    %vm5873 = vmor %vm5871, %vm5872
    %v5874 = vsel %vm5873, %v5866, %v5870
    %v5875 = vand.u32 2147483647, %v5624
    %vm5876 = vcmp.eq.f32.partialorder %v5875, 8.507059e+37
    %v5877 = vand.u32 %v5624, 2147483648
    %v5878 = vor.u32 1.1754944e-38, %v5877
    %v5879 = vsel %vm5876, %v5878, %v5874
    %v5880 = vmul.f32 1.0, %v5879
    %v5881 = vrcp.pop %v5625
    %v5882 = vmul.f32 %v5625, %v5881
    %v5883 = vsub.f32 1.0, %v5882
    %v5884 = vmul.f32 %v5881, %v5883
    %v5885 = vadd.f32 %v5881, %v5884
    %vm5886 = vweird.f32 %v5625
    %vm5887 = vweird.f32 %v5881
    %vm5888 = vmor %vm5886, %vm5887
    %v5889 = vsel %vm5888, %v5881, %v5885
    %v5890 = vand.u32 2147483647, %v5625
    %vm5891 = vcmp.eq.f32.partialorder %v5890, 8.507059e+37
    %v5892 = vand.u32 %v5625, 2147483648
    %v5893 = vor.u32 1.1754944e-38, %v5892
    %v5894 = vsel %vm5891, %v5893, %v5889
    %v5895 = vmul.f32 1.0, %v5894
    %v5896 = vrcp.pop %v5626
    %v5897 = vmul.f32 %v5626, %v5896
    %v5898 = vsub.f32 1.0, %v5897
    %v5899 = vmul.f32 %v5896, %v5898
    %v5900 = vadd.f32 %v5896, %v5899
    %vm5901 = vweird.f32 %v5626
    %vm5902 = vweird.f32 %v5896
    %vm5903 = vmor %vm5901, %vm5902
    %v5904 = vsel %vm5903, %v5896, %v5900
    %v5905 = vand.u32 2147483647, %v5626
    %vm5906 = vcmp.eq.f32.partialorder %v5905, 8.507059e+37
    %v5907 = vand.u32 %v5626, 2147483648
    %v5908 = vor.u32 1.1754944e-38, %v5907
    %v5909 = vsel %vm5906, %v5908, %v5904
    %v5910 = vmul.f32 1.0, %v5909
    %v5911 = vrcp.pop %v5627
    %v5912 = vmul.f32 %v5627, %v5911
    %v5913 = vsub.f32 1.0, %v5912
    %v5914 = vmul.f32 %v5911, %v5913
    %v5915 = vadd.f32 %v5911, %v5914
    %vm5916 = vweird.f32 %v5627
    %vm5917 = vweird.f32 %v5911
    %vm5918 = vmor %vm5916, %vm5917
    %v5919 = vsel %vm5918, %v5911, %v5915
    %v5920 = vand.u32 2147483647, %v5627
    %vm5921 = vcmp.eq.f32.partialorder %v5920, 8.507059e+37
    %v5922 = vand.u32 %v5627, 2147483648
    %v5923 = vor.u32 1.1754944e-38, %v5922
    %v5924 = vsel %vm5921, %v5923, %v5919
    %v5925 = vmul.f32 1.0, %v5924
    %v5926 = vrcp.pop %v5628
    %v5927 = vmul.f32 %v5628, %v5926
    %v5928 = vsub.f32 1.0, %v5927
    %v5929 = vmul.f32 %v5926, %v5928
    %v5930 = vadd.f32 %v5926, %v5929
    %vm5931 = vweird.f32 %v5628
    %vm5932 = vweird.f32 %v5926
    %vm5933 = vmor %vm5931, %vm5932
    %v5934 = vsel %vm5933, %v5926, %v5930
    %v5935 = vand.u32 2147483647, %v5628
    %vm5936 = vcmp.eq.f32.partialorder %v5935, 8.507059e+37
    %v5937 = vand.u32 %v5628, 2147483648
    %v5938 = vor.u32 1.1754944e-38, %v5937
    %v5939 = vsel %vm5936, %v5938, %v5934
    %v5940 = vmul.f32 1.0, %v5939
    %v5941 = vrcp.pop %v5629
    %v5942 = vmul.f32 %v5629, %v5941
    %v5943 = vsub.f32 1.0, %v5942
    %v5944 = vmul.f32 %v5941, %v5943
    %v5945 = vadd.f32 %v5941, %v5944
    %vm5946 = vweird.f32 %v5629
    %vm5947 = vweird.f32 %v5941
    %vm5948 = vmor %vm5946, %vm5947
    %v5949 = vsel %vm5948, %v5941, %v5945
    %v5950 = vand.u32 2147483647, %v5629
    %vm5951 = vcmp.eq.f32.partialorder %v5950, 8.507059e+37
    %v5952 = vand.u32 %v5629, 2147483648
    %v5953 = vor.u32 1.1754944e-38, %v5952
    %v5954 = vsel %vm5951, %v5953, %v5949
    %v5955 = vmul.f32 1.0, %v5954
    %v5956 = vrcp.pop %v5630
    %v5957 = vmul.f32 %v5630, %v5956
    %v5958 = vsub.f32 1.0, %v5957
    %v5959 = vmul.f32 %v5956, %v5958
    %v5960 = vadd.f32 %v5956, %v5959
    %vm5961 = vweird.f32 %v5630
    %vm5962 = vweird.f32 %v5956
    %vm5963 = vmor %vm5961, %vm5962
    %v5964 = vsel %vm5963, %v5956, %v5960
    %v5965 = vand.u32 2147483647, %v5630
    %vm5966 = vcmp.eq.f32.partialorder %v5965, 8.507059e+37
    %v5967 = vand.u32 %v5630, 2147483648
    %v5968 = vor.u32 1.1754944e-38, %v5967
    %v5969 = vsel %vm5966, %v5968, %v5964
    %v5970 = vmul.f32 1.0, %v5969
    %v5971 = vrcp.pop %v5631
    %v5972 = vmul.f32 %v5631, %v5971
    %v5973 = vsub.f32 1.0, %v5972
    %v5974 = vmul.f32 %v5971, %v5973
    %v5975 = vadd.f32 %v5971, %v5974
    %vm5976 = vweird.f32 %v5631
    %vm5977 = vweird.f32 %v5971
    %vm5978 = vmor %vm5976, %vm5977
    %v5979 = vsel %vm5978, %v5971, %v5975
    %v5980 = vand.u32 2147483647, %v5631
    %vm5981 = vcmp.eq.f32.partialorder %v5980, 8.507059e+37
    %v5982 = vand.u32 %v5631, 2147483648
    %v5983 = vor.u32 1.1754944e-38, %v5982
    %v5984 = vsel %vm5981, %v5983, %v5979
    %v5985 = vmul.f32 1.0, %v5984
    %v5986 = vrcp.pop %v5632
    %v5987 = vmul.f32 %v5632, %v5986
    %v5988 = vsub.f32 1.0, %v5987
    %v5989 = vmul.f32 %v5986, %v5988
    %v5990 = vadd.f32 %v5986, %v5989
    %vm5991 = vweird.f32 %v5632
    %vm5992 = vweird.f32 %v5986
    %vm5993 = vmor %vm5991, %vm5992
    %v5994 = vsel %vm5993, %v5986, %v5990
    %v5995 = vand.u32 2147483647, %v5632
    %vm5996 = vcmp.eq.f32.partialorder %v5995, 8.507059e+37
    %v5997 = vand.u32 %v5632, 2147483648
    %v5998 = vor.u32 1.1754944e-38, %v5997
    %v5999 = vsel %vm5996, %v5998, %v5994
    %v6000 = vmul.f32 1.0, %v5999
    %v6001 = vrcp.pop %v5633
    %v6002 = vmul.f32 %v5633, %v6001
    %v6003 = vsub.f32 1.0, %v6002
    %v6004 = vmul.f32 %v6001, %v6003
    %v6005 = vadd.f32 %v6001, %v6004
    %vm6006 = vweird.f32 %v5633
    %vm6007 = vweird.f32 %v6001
    %vm6008 = vmor %vm6006, %vm6007
    %v6009 = vsel %vm6008, %v6001, %v6005
    %v6010 = vand.u32 2147483647, %v5633
    %vm6011 = vcmp.eq.f32.partialorder %v6010, 8.507059e+37
    %v6012 = vand.u32 %v5633, 2147483648
    %v6013 = vor.u32 1.1754944e-38, %v6012
    %v6014 = vsel %vm6011, %v6013, %v6009
    %v6015 = vmul.f32 1.0, %v6014
    %v6016 = vrcp.pop %v5634
    %v6017 = vmul.f32 %v5634, %v6016
    %v6018 = vsub.f32 1.0, %v6017
    %v6019 = vmul.f32 %v6016, %v6018
    %v6020 = vadd.f32 %v6016, %v6019
    %vm6021 = vweird.f32 %v5634
    %vm6022 = vweird.f32 %v6016
    %vm6023 = vmor %vm6021, %vm6022
    %v6024 = vsel %vm6023, %v6016, %v6020
    %v6025 = vand.u32 2147483647, %v5634
    %vm6026 = vcmp.eq.f32.partialorder %v6025, 8.507059e+37
    %v6027 = vand.u32 %v5634, 2147483648
    %v6028 = vor.u32 1.1754944e-38, %v6027
    %v6029 = vsel %vm6026, %v6028, %v6024
    %v6030 = vmul.f32 1.0, %v6029
    %v6031 = vrcp.pop %v5635
    %v6032 = vmul.f32 %v5635, %v6031
    %v6033 = vsub.f32 1.0, %v6032
    %v6034 = vmul.f32 %v6031, %v6033
    %v6035 = vadd.f32 %v6031, %v6034
    %vm6036 = vweird.f32 %v5635
    %vm6037 = vweird.f32 %v6031
    %vm6038 = vmor %vm6036, %vm6037
    %v6039 = vsel %vm6038, %v6031, %v6035
    %v6040 = vand.u32 2147483647, %v5635
    %vm6041 = vcmp.eq.f32.partialorder %v6040, 8.507059e+37
    %v6042 = vand.u32 %v5635, 2147483648
    %v6043 = vor.u32 1.1754944e-38, %v6042
    %v6044 = vsel %vm6041, %v6043, %v6039
    %v6045 = vmul.f32 1.0, %v6044
    %v6046 = vrcp.pop %v5636
    %v6047 = vmul.f32 %v5636, %v6046
    %v6048 = vsub.f32 1.0, %v6047
    %v6049 = vmul.f32 %v6046, %v6048
    %v6050 = vadd.f32 %v6046, %v6049
    %vm6051 = vweird.f32 %v5636
    %vm6052 = vweird.f32 %v6046
    %vm6053 = vmor %vm6051, %vm6052
    %v6054 = vsel %vm6053, %v6046, %v6050
    %v6055 = vand.u32 2147483647, %v5636
    %vm6056 = vcmp.eq.f32.partialorder %v6055, 8.507059e+37
    %v6057 = vand.u32 %v5636, 2147483648
    %v6058 = vor.u32 1.1754944e-38, %v6057
    %v6059 = vsel %vm6056, %v6058, %v6054
    %v6060 = vmul.f32 1.0, %v6059
    %v6061 = vrcp.pop %v5637
    %v6062 = vmul.f32 %v5637, %v6061
    %v6063 = vsub.f32 1.0, %v6062
    %v6064 = vmul.f32 %v6061, %v6063
    %v6065 = vadd.f32 %v6061, %v6064
    %vm6066 = vweird.f32 %v5637
    %vm6067 = vweird.f32 %v6061
    %vm6068 = vmor %vm6066, %vm6067
    %v6069 = vsel %vm6068, %v6061, %v6065
    %v6070 = vand.u32 2147483647, %v5637
    %vm6071 = vcmp.eq.f32.partialorder %v6070, 8.507059e+37
    %v6072 = vand.u32 %v5637, 2147483648
    %v6073 = vor.u32 1.1754944e-38, %v6072
    %v6074 = vsel %vm6071, %v6073, %v6069
    %v6075 = vmul.f32 1.0, %v6074
    %v6076 = vrcp.pop %v5638
    %v6077 = vmul.f32 %v5638, %v6076
    %v6078 = vsub.f32 1.0, %v6077
    %v6079 = vmul.f32 %v6076, %v6078
    %v6080 = vadd.f32 %v6076, %v6079
    %vm6081 = vweird.f32 %v5638
    %vm6082 = vweird.f32 %v6076
    %vm6083 = vmor %vm6081, %vm6082
    %v6084 = vsel %vm6083, %v6076, %v6080
    %v6085 = vand.u32 2147483647, %v5638
    %vm6086 = vcmp.eq.f32.partialorder %v6085, 8.507059e+37
    %v6087 = vand.u32 %v5638, 2147483648
    %v6088 = vor.u32 1.1754944e-38, %v6087
    %v6089 = vsel %vm6086, %v6088, %v6084
    %v6090 = vmul.f32 1.0, %v6089
    %v6091 = vrcp.pop %v5639
    %v6092 = vmul.f32 %v5639, %v6091
    %v6093 = vsub.f32 1.0, %v6092
    %v6094 = vmul.f32 %v6091, %v6093
    %v6095 = vadd.f32 %v6091, %v6094
    %vm6096 = vweird.f32 %v5639
    %vm6097 = vweird.f32 %v6091
    %vm6098 = vmor %vm6096, %vm6097
    %v6099 = vsel %vm6098, %v6091, %v6095
    %v6100 = vand.u32 2147483647, %v5639
    %vm6101 = vcmp.eq.f32.partialorder %v6100, 8.507059e+37
    %v6102 = vand.u32 %v5639, 2147483648
    %v6103 = vor.u32 1.1754944e-38, %v6102
    %v6104 = vsel %vm6101, %v6103, %v6099
    %v6105 = vmul.f32 1.0, %v6104
    %v6106 = vrcp.pop %v5640
    %v6107 = vmul.f32 %v5640, %v6106
    %v6108 = vsub.f32 1.0, %v6107
    %v6109 = vmul.f32 %v6106, %v6108
    %v6110 = vadd.f32 %v6106, %v6109
    %vm6111 = vweird.f32 %v5640
    %vm6112 = vweird.f32 %v6106
    %vm6113 = vmor %vm6111, %vm6112
    %v6114 = vsel %vm6113, %v6106, %v6110
    %v6115 = vand.u32 2147483647, %v5640
    %vm6116 = vcmp.eq.f32.partialorder %v6115, 8.507059e+37
    %v6117 = vand.u32 %v5640, 2147483648
    %v6118 = vor.u32 1.1754944e-38, %v6117
    %v6119 = vsel %vm6116, %v6118, %v6114
    %v6120 = vmul.f32 1.0, %v6119
    %v6121 = vmul.f32 %v5417, %v5655
    %v6122 = vmul.f32 %v5418, %v5670
    %v6123 = vmul.f32 %v5419, %v5685
    %v6124 = vmul.f32 %v5420, %v5700
    %v6125 = vmul.f32 %v5421, %v5715
    %v6126 = vmul.f32 %v5422, %v5730
    %v6127 = vmul.f32 %v5423, %v5745
    %v6128 = vmul.f32 %v5424, %v5760
    %v6129 = vmul.f32 %v5425, %v5775
    %v6130 = vmul.f32 %v5426, %v5790
    %v6131 = vmul.f32 %v5427, %v5805
    %v6132 = vmul.f32 %v5428, %v5820
    %v6133 = vmul.f32 %v5429, %v5835
    %v6134 = vmul.f32 %v5430, %v5850
    %v6135 = vmul.f32 %v5431, %v5865
    %v6136 = vmul.f32 %v5432, %v5880
    %v6137 = vmul.f32 %v5433, %v5895
    %v6138 = vmul.f32 %v5434, %v5910
    %v6139 = vmul.f32 %v5435, %v5925
    %v6140 = vmul.f32 %v5436, %v5940
    %v6141 = vmul.f32 %v5437, %v5955
    %v6142 = vmul.f32 %v5438, %v5970
    %v6143 = vmul.f32 %v5439, %v5985
    %v6144 = vmul.f32 %v5440, %v6000
    %v6145 = vmul.f32 %v5441, %v6015
    %v6146 = vmul.f32 %v5442, %v6030
    %v6147 = vmul.f32 %v5443, %v6045
    %v6148 = vmul.f32 %v5444, %v6060
    %v6149 = vmul.f32 %v5445, %v6075
    %v6150 = vmul.f32 %v5446, %v6090
    %v6151 = vmul.f32 %v5447, %v6105
    %v6152 = vmul.f32 %v5448, %v6120
    %s6153 = scalar_lea.vmem %s8, 256
    %v6154 = vld [vmem:[%s6153] sm:$0xff]
    %v6155 = vld [vmem:[%s6153 + $0x8] sm:$0xff]
    %v6156 = vld [vmem:[%s6153 + $0x10] sm:$0xff]
    %v6157 = vld [vmem:[%s6153 + $0x18] sm:$0xff]
    %v6158 = vld [vmem:[%s6153 + $0x20] sm:$0xff]
    %v6159 = vld [vmem:[%s6153 + $0x28] sm:$0xff]
    %v6160 = vld [vmem:[%s6153 + $0x30] sm:$0xff]
    %v6161 = vld [vmem:[%s6153 + $0x38] sm:$0xff]
    %v6162 = vld [vmem:[%s6153 + $0x40] sm:$0xff]
    %v6163 = vld [vmem:[%s6153 + $0x48] sm:$0xff]
    %v6164 = vld [vmem:[%s6153 + $0x50] sm:$0xff]
    %v6165 = vld [vmem:[%s6153 + $0x58] sm:$0xff]
    %v6166 = vld [vmem:[%s6153 + $0x60] sm:$0xff]
    %v6167 = vld [vmem:[%s6153 + $0x68] sm:$0xff]
    %v6168 = vld [vmem:[%s6153 + $0x70] sm:$0xff]
    %v6169 = vld [vmem:[%s6153 + $0x78] sm:$0xff]
    %s6170 = scalar_lea.vmem %s9, 2
    %v6171 = vld [vmem:[%s6170] sm:$0x1]
    %v6173 = vperm.slane %v6171, 0
    %6175 = vmatpush.msra.mxu0 %v6169
    %6176 = vmatpush.msra.mxu0 %v6168
    %6177 = vmatpush.msra.mxu0 %v6167
    %6178 = vmatpush.msra.mxu0 %v6166
    %6179 = vmatpush.msra.mxu0 %v6165
    %6180 = vmatpush.msra.mxu0 %v6164
    %6181 = vmatpush.msra.mxu0 %v6163
    %6182 = vmatpush.msra.mxu0 %v6162
    %6183 = vmatpush.msra.mxu0 %v6161
    %6184 = vmatpush.msra.mxu0 %v6160
    %6185 = vmatpush.msra.mxu0 %v6159
    %6186 = vmatpush.msra.mxu0 %v6158
    %6187 = vmatpush.msra.mxu0 %v6157
    %6188 = vmatpush.msra.mxu0 %v6156
    %6189 = vmatpush.msra.mxu0 %v6155
    %6190 = vmatpush.msra.mxu0 %v6154
    %6191 = vmatmul.f32.gmra.mxu0 %v6121
    %v6192 = vpop.f32.mrf.mxu0
    %v6193 = vadd.f32 %v6173, %v6192
    %6194 = vmatmul.f32.gmra.mxu0 %v6122
    %v6195 = vpop.f32.mrf.mxu0
    %v6196 = vadd.f32 %v6173, %v6195
    %6197 = vmatmul.f32.gmra.mxu0 %v6123
    %v6198 = vpop.f32.mrf.mxu0
    %v6199 = vadd.f32 %v6173, %v6198
    %6200 = vmatmul.f32.gmra.mxu0 %v6124
    %v6201 = vpop.f32.mrf.mxu0
    %v6202 = vadd.f32 %v6173, %v6201
    %6203 = vmatmul.f32.gmra.mxu0 %v6125
    %v6204 = vpop.f32.mrf.mxu0
    %v6205 = vadd.f32 %v6173, %v6204
    %6206 = vmatmul.f32.gmra.mxu0 %v6126
    %v6207 = vpop.f32.mrf.mxu0
    %v6208 = vadd.f32 %v6173, %v6207
    %6209 = vmatmul.f32.gmra.mxu0 %v6127
    %v6210 = vpop.f32.mrf.mxu0
    %v6211 = vadd.f32 %v6173, %v6210
    %6212 = vmatmul.f32.gmra.mxu0 %v6128
    %v6213 = vpop.f32.mrf.mxu0
    %v6214 = vadd.f32 %v6173, %v6213
    %6215 = vmatmul.f32.gmra.mxu0 %v6129
    %v6216 = vpop.f32.mrf.mxu0
    %v6217 = vadd.f32 %v6173, %v6216
    %6218 = vmatmul.f32.gmra.mxu0 %v6130
    %v6219 = vpop.f32.mrf.mxu0
    %v6220 = vadd.f32 %v6173, %v6219
    %6221 = vmatmul.f32.gmra.mxu0 %v6131
    %v6222 = vpop.f32.mrf.mxu0
    %v6223 = vadd.f32 %v6173, %v6222
    %6224 = vmatmul.f32.gmra.mxu0 %v6132
    %v6225 = vpop.f32.mrf.mxu0
    %v6226 = vadd.f32 %v6173, %v6225
    %6227 = vmatmul.f32.gmra.mxu0 %v6133
    %v6228 = vpop.f32.mrf.mxu0
    %v6229 = vadd.f32 %v6173, %v6228
    %6230 = vmatmul.f32.gmra.mxu0 %v6134
    %v6231 = vpop.f32.mrf.mxu0
    %v6232 = vadd.f32 %v6173, %v6231
    %6233 = vmatmul.f32.gmra.mxu0 %v6135
    %v6234 = vpop.f32.mrf.mxu0
    %v6235 = vadd.f32 %v6173, %v6234
    %6236 = vmatmul.f32.gmra.mxu0 %v6136
    %v6237 = vpop.f32.mrf.mxu0
    %v6238 = vadd.f32 %v6173, %v6237
    %6239 = vmatmul.f32.gmra.mxu0 %v6137
    %v6240 = vpop.f32.mrf.mxu0
    %v6241 = vadd.f32 %v6173, %v6240
    %6242 = vmatmul.f32.gmra.mxu0 %v6138
    %v6243 = vpop.f32.mrf.mxu0
    %v6244 = vadd.f32 %v6173, %v6243
    %6245 = vmatmul.f32.gmra.mxu0 %v6139
    %v6246 = vpop.f32.mrf.mxu0
    %v6247 = vadd.f32 %v6173, %v6246
    %6248 = vmatmul.f32.gmra.mxu0 %v6140
    %v6249 = vpop.f32.mrf.mxu0
    %v6250 = vadd.f32 %v6173, %v6249
    %6251 = vmatmul.f32.gmra.mxu0 %v6141
    %v6252 = vpop.f32.mrf.mxu0
    %v6253 = vadd.f32 %v6173, %v6252
    %6254 = vmatmul.f32.gmra.mxu0 %v6142
    %v6255 = vpop.f32.mrf.mxu0
    %v6256 = vadd.f32 %v6173, %v6255
    %6257 = vmatmul.f32.gmra.mxu0 %v6143
    %v6258 = vpop.f32.mrf.mxu0
    %v6259 = vadd.f32 %v6173, %v6258
    %6260 = vmatmul.f32.gmra.mxu0 %v6144
    %v6261 = vpop.f32.mrf.mxu0
    %v6262 = vadd.f32 %v6173, %v6261
    %6263 = vmatmul.f32.gmra.mxu0 %v6145
    %v6264 = vpop.f32.mrf.mxu0
    %v6265 = vadd.f32 %v6173, %v6264
    %6266 = vmatmul.f32.gmra.mxu0 %v6146
    %v6267 = vpop.f32.mrf.mxu0
    %v6268 = vadd.f32 %v6173, %v6267
    %6269 = vmatmul.f32.gmra.mxu0 %v6147
    %v6270 = vpop.f32.mrf.mxu0
    %v6271 = vadd.f32 %v6173, %v6270
    %6272 = vmatmul.f32.gmra.mxu0 %v6148
    %v6273 = vpop.f32.mrf.mxu0
    %v6274 = vadd.f32 %v6173, %v6273
    %6275 = vmatmul.f32.gmra.mxu0 %v6149
    %v6276 = vpop.f32.mrf.mxu0
    %v6277 = vadd.f32 %v6173, %v6276
    %6278 = vmatmul.f32.gmra.mxu0 %v6150
    %v6279 = vpop.f32.mrf.mxu0
    %v6280 = vadd.f32 %v6173, %v6279
    %6281 = vmatmul.f32.gmra.mxu0 %v6151
    %v6282 = vpop.f32.mrf.mxu0
    %v6283 = vadd.f32 %v6173, %v6282
    %6284 = vmatmul.f32.gmra.mxu0 %v6152
    %v6285 = vpop.f32.mrf.mxu0
    %v6286 = vadd.f32 %v6173, %v6285
    %6287 = vdwg.mxu0
    %v6288 = vadd.f32 %v4518, %v6193
    %v6289 = vadd.f32 %v4519, %v6196
    %v6290 = vadd.f32 %v4520, %v6199
    %v6291 = vadd.f32 %v4521, %v6202
    %v6292 = vadd.f32 %v4522, %v6205
    %v6293 = vadd.f32 %v4523, %v6208
    %v6294 = vadd.f32 %v4524, %v6211
    %v6295 = vadd.f32 %v4525, %v6214
    %v6296 = vadd.f32 %v4526, %v6217
    %v6297 = vadd.f32 %v4527, %v6220
    %v6298 = vadd.f32 %v4528, %v6223
    %v6299 = vadd.f32 %v4529, %v6226
    %v6300 = vadd.f32 %v4530, %v6229
    %v6301 = vadd.f32 %v4531, %v6232
    %v6302 = vadd.f32 %v4532, %v6235
    %v6303 = vadd.f32 %v4533, %v6238
    %v6304 = vadd.f32 %v4534, %v6241
    %v6305 = vadd.f32 %v4535, %v6244
    %v6306 = vadd.f32 %v4536, %v6247
    %v6307 = vadd.f32 %v4537, %v6250
    %v6308 = vadd.f32 %v4538, %v6253
    %v6309 = vadd.f32 %v4539, %v6256
    %v6310 = vadd.f32 %v4540, %v6259
    %v6311 = vadd.f32 %v4541, %v6262
    %v6312 = vadd.f32 %v4542, %v6265
    %v6313 = vadd.f32 %v4543, %v6268
    %v6314 = vadd.f32 %v4544, %v6271
    %v6315 = vadd.f32 %v4545, %v6274
    %v6316 = vadd.f32 %v4546, %v6277
    %v6317 = vadd.f32 %v4547, %v6280
    %v6318 = vadd.f32 %v4548, %v6283
    %v6319 = vadd.f32 %v4549, %v6286
    %v6320 = vmul.f32 %v6288, %v70
    %v6321 = vmul.f32 %v6289, %v70
    %v6322 = vmul.f32 %v6290, %v70
    %v6323 = vmul.f32 %v6291, %v70
    %v6324 = vmul.f32 %v6292, %v70
    %v6325 = vmul.f32 %v6293, %v70
    %v6326 = vmul.f32 %v6294, %v70
    %v6327 = vmul.f32 %v6295, %v70
    %v6328 = vmul.f32 %v6296, %v70
    %v6329 = vmul.f32 %v6297, %v70
    %v6330 = vmul.f32 %v6298, %v70
    %v6331 = vmul.f32 %v6299, %v70
    %v6332 = vmul.f32 %v6300, %v70
    %v6333 = vmul.f32 %v6301, %v70
    %v6334 = vmul.f32 %v6302, %v70
    %v6335 = vmul.f32 %v6303, %v70
    %v6336 = vmul.f32 %v6304, %v70
    %v6337 = vmul.f32 %v6305, %v70
    %v6338 = vmul.f32 %v6306, %v70
    %v6339 = vmul.f32 %v6307, %v70
    %v6340 = vmul.f32 %v6308, %v70
    %v6341 = vmul.f32 %v6309, %v70
    %v6342 = vmul.f32 %v6310, %v70
    %v6343 = vmul.f32 %v6311, %v70
    %v6344 = vmul.f32 %v6312, %v70
    %v6345 = vmul.f32 %v6313, %v70
    %v6346 = vmul.f32 %v6314, %v70
    %v6347 = vmul.f32 %v6315, %v70
    %v6348 = vmul.f32 %v6316, %v70
    %v6349 = vmul.f32 %v6317, %v70
    %v6350 = vmul.f32 %v6318, %v70
    %v6351 = vmul.f32 %v6319, %v70
    %v6352 = vperm.slane %v464, 3
    %v6353 = vperm.slane %v465, 3
    %v6354 = vadd.f32 %v6320, %v6352
    %v6355 = vadd.f32 %v6321, %v6352
    %v6356 = vadd.f32 %v6322, %v6352
    %v6357 = vadd.f32 %v6323, %v6352
    %v6358 = vadd.f32 %v6324, %v6352
    %v6359 = vadd.f32 %v6325, %v6352
    %v6360 = vadd.f32 %v6326, %v6352
    %v6361 = vadd.f32 %v6327, %v6352
    %v6362 = vadd.f32 %v6328, %v6352
    %v6363 = vadd.f32 %v6329, %v6352
    %v6364 = vadd.f32 %v6330, %v6352
    %v6365 = vadd.f32 %v6331, %v6352
    %v6366 = vadd.f32 %v6332, %v6352
    %v6367 = vadd.f32 %v6333, %v6352
    %v6368 = vadd.f32 %v6334, %v6352
    %v6369 = vadd.f32 %v6335, %v6352
    %v6370 = vadd.f32 %v6336, %v6353
    %v6371 = vadd.f32 %v6337, %v6353
    %v6372 = vadd.f32 %v6338, %v6353
    %v6373 = vadd.f32 %v6339, %v6353
    %v6374 = vadd.f32 %v6340, %v6353
    %v6375 = vadd.f32 %v6341, %v6353
    %v6376 = vadd.f32 %v6342, %v6353
    %v6377 = vadd.f32 %v6343, %v6353
    %v6378 = vadd.f32 %v6344, %v6353
    %v6379 = vadd.f32 %v6345, %v6353
    %v6380 = vadd.f32 %v6346, %v6353
    %v6381 = vadd.f32 %v6347, %v6353
    %v6382 = vadd.f32 %v6348, %v6353
    %v6383 = vadd.f32 %v6349, %v6353
    %v6384 = vadd.f32 %v6350, %v6353
    %v6385 = vadd.f32 %v6351, %v6353
    %v6386 = vrot.slane %v6354, 6
    %v6387 = vrot.slane %v6355, 6
    %v6388 = vrot.slane %v6356, 6
    %v6389 = vrot.slane %v6357, 6
    %v6390 = vrot.slane %v6358, 6
    %v6391 = vrot.slane %v6359, 6
    %v6392 = vrot.slane %v6360, 6
    %v6393 = vrot.slane %v6361, 6
    %v6394 = vrot.slane %v6362, 6
    %v6395 = vrot.slane %v6363, 6
    %v6396 = vrot.slane %v6364, 6
    %v6397 = vrot.slane %v6365, 6
    %v6398 = vrot.slane %v6366, 6
    %v6399 = vrot.slane %v6367, 6
    %v6400 = vrot.slane %v6368, 6
    %v6401 = vrot.slane %v6369, 6
    %v6402 = vrot.slane %v6370, 6
    %v6403 = vrot.slane %v6371, 6
    %v6404 = vrot.slane %v6372, 6
    %v6405 = vrot.slane %v6373, 6
    %v6406 = vrot.slane %v6374, 6
    %v6407 = vrot.slane %v6375, 6
    %v6408 = vrot.slane %v6376, 6
    %v6409 = vrot.slane %v6377, 6
    %v6410 = vrot.slane %v6378, 6
    %v6411 = vrot.slane %v6379, 6
    %v6412 = vrot.slane %v6380, 6
    %v6413 = vrot.slane %v6381, 6
    %v6414 = vrot.slane %v6382, 6
    %v6415 = vrot.slane %v6383, 6
    %v6416 = vrot.slane %v6384, 6
    %v6417 = vrot.slane %v6385, 6
    %v6418 = vsel %vm2652, %v6416, %v6417
    %v6419 = vsel %vm2652, %v6415, %v6416
    %v6420 = vsel %vm2652, %v6414, %v6415
    %v6421 = vsel %vm2652, %v6413, %v6414
    %v6422 = vsel %vm2652, %v6412, %v6413
    %v6423 = vsel %vm2652, %v6411, %v6412
    %v6424 = vsel %vm2652, %v6410, %v6411
    %v6425 = vsel %vm2652, %v6409, %v6410
    %v6426 = vsel %vm2652, %v6408, %v6409
    %v6427 = vsel %vm2652, %v6407, %v6408
    %v6428 = vsel %vm2652, %v6406, %v6407
    %v6429 = vsel %vm2652, %v6405, %v6406
    %v6430 = vsel %vm2652, %v6404, %v6405
    %v6431 = vsel %vm2652, %v6403, %v6404
    %v6432 = vsel %vm2652, %v6402, %v6403
    %v6433 = vsel %vm2652, %v6401, %v6402
    %v6434 = vsel %vm2652, %v6400, %v6401
    %v6435 = vsel %vm2652, %v6399, %v6400
    %v6436 = vsel %vm2652, %v6398, %v6399
    %v6437 = vsel %vm2652, %v6397, %v6398
    %v6438 = vsel %vm2652, %v6396, %v6397
    %v6439 = vsel %vm2652, %v6395, %v6396
    %v6440 = vsel %vm2652, %v6394, %v6395
    %v6441 = vsel %vm2652, %v6393, %v6394
    %v6442 = vsel %vm2652, %v6392, %v6393
    %v6443 = vsel %vm2652, %v6391, %v6392
    %v6444 = vsel %vm2652, %v6390, %v6391
    %v6445 = vsel %vm2652, %v6389, %v6390
    %v6446 = vsel %vm2652, %v6388, %v6389
    %v6447 = vsel %vm2652, %v6387, %v6388
    %v6448 = vsel %vm2652, %v6386, %v6387
    %v6449 = vsel %vm2652, %v6417, %v6386
    %v6450 = vsel %vm2717, %v6449, 0.0
    %v6451 = vsel %vm2718, %v6448, 0.0
    %v6452 = vsel %vm2719, %v6447, 0.0
    %v6453 = vsel %vm2720, %v6446, 0.0
    %v6454 = vsel %vm2721, %v6445, 0.0
    %v6455 = vsel %vm2722, %v6444, 0.0
    %v6456 = vsel %vm2723, %v6443, 0.0
    %v6457 = vsel %vm2724, %v6442, 0.0
    %v6458 = vsel %vm2725, %v6441, 0.0
    %v6459 = vsel %vm2726, %v6440, 0.0
    %v6460 = vsel %vm2727, %v6439, 0.0
    %v6461 = vsel %vm2728, %v6438, 0.0
    %v6462 = vsel %vm2729, %v6437, 0.0
    %v6463 = vsel %vm2730, %v6436, 0.0
    %v6464 = vsel %vm2731, %v6435, 0.0
    %v6465 = vsel %vm2732, %v6434, 0.0
    %v6466 = vsel %vm2733, %v6433, 0.0
    %v6467 = vsel %vm2734, %v6432, 0.0
    %v6468 = vsel %vm2735, %v6431, 0.0
    %v6469 = vsel %vm2736, %v6430, 0.0
    %v6470 = vsel %vm2737, %v6429, 0.0
    %v6471 = vsel %vm2738, %v6428, 0.0
    %v6472 = vsel %vm2739, %v6427, 0.0
    %v6473 = vsel %vm2740, %v6426, 0.0
    %v6474 = vsel %vm2741, %v6425, 0.0
    %v6475 = vsel %vm2742, %v6424, 0.0
    %v6476 = vsel %vm2743, %v6423, 0.0
    %v6477 = vsel %vm2744, %v6422, 0.0
    %v6478 = vsel %vm2745, %v6421, 0.0
    %v6479 = vsel %vm2746, %v6420, 0.0
    %v6480 = vsel %vm2747, %v6419, 0.0
    %v6481 = vsel %vm2748, %v6418, 0.0
    %v6482 = vrot.slane %v6354, 2
    %v6483 = vrot.slane %v6355, 2
    %v6484 = vrot.slane %v6356, 2
    %v6485 = vrot.slane %v6357, 2
    %v6486 = vrot.slane %v6358, 2
    %v6487 = vrot.slane %v6359, 2
    %v6488 = vrot.slane %v6360, 2
    %v6489 = vrot.slane %v6361, 2
    %v6490 = vrot.slane %v6362, 2
    %v6491 = vrot.slane %v6363, 2
    %v6492 = vrot.slane %v6364, 2
    %v6493 = vrot.slane %v6365, 2
    %v6494 = vrot.slane %v6366, 2
    %v6495 = vrot.slane %v6367, 2
    %v6496 = vrot.slane %v6368, 2
    %v6497 = vrot.slane %v6369, 2
    %v6498 = vrot.slane %v6370, 2
    %v6499 = vrot.slane %v6371, 2
    %v6500 = vrot.slane %v6372, 2
    %v6501 = vrot.slane %v6373, 2
    %v6502 = vrot.slane %v6374, 2
    %v6503 = vrot.slane %v6375, 2
    %v6504 = vrot.slane %v6376, 2
    %v6505 = vrot.slane %v6377, 2
    %v6506 = vrot.slane %v6378, 2
    %v6507 = vrot.slane %v6379, 2
    %v6508 = vrot.slane %v6380, 2
    %v6509 = vrot.slane %v6381, 2
    %v6510 = vrot.slane %v6382, 2
    %v6511 = vrot.slane %v6383, 2
    %v6512 = vrot.slane %v6384, 2
    %v6513 = vrot.slane %v6385, 2
    %v6514 = vsel %vm2845, %v6512, %v6513
    %v6515 = vsel %vm2845, %v6511, %v6512
    %v6516 = vsel %vm2845, %v6510, %v6511
    %v6517 = vsel %vm2845, %v6509, %v6510
    %v6518 = vsel %vm2845, %v6508, %v6509
    %v6519 = vsel %vm2845, %v6507, %v6508
    %v6520 = vsel %vm2845, %v6506, %v6507
    %v6521 = vsel %vm2845, %v6505, %v6506
    %v6522 = vsel %vm2845, %v6504, %v6505
    %v6523 = vsel %vm2845, %v6503, %v6504
    %v6524 = vsel %vm2845, %v6502, %v6503
    %v6525 = vsel %vm2845, %v6501, %v6502
    %v6526 = vsel %vm2845, %v6500, %v6501
    %v6527 = vsel %vm2845, %v6499, %v6500
    %v6528 = vsel %vm2845, %v6498, %v6499
    %v6529 = vsel %vm2845, %v6497, %v6498
    %v6530 = vsel %vm2845, %v6496, %v6497
    %v6531 = vsel %vm2845, %v6495, %v6496
    %v6532 = vsel %vm2845, %v6494, %v6495
    %v6533 = vsel %vm2845, %v6493, %v6494
    %v6534 = vsel %vm2845, %v6492, %v6493
    %v6535 = vsel %vm2845, %v6491, %v6492
    %v6536 = vsel %vm2845, %v6490, %v6491
    %v6537 = vsel %vm2845, %v6489, %v6490
    %v6538 = vsel %vm2845, %v6488, %v6489
    %v6539 = vsel %vm2845, %v6487, %v6488
    %v6540 = vsel %vm2845, %v6486, %v6487
    %v6541 = vsel %vm2845, %v6485, %v6486
    %v6542 = vsel %vm2845, %v6484, %v6485
    %v6543 = vsel %vm2845, %v6483, %v6484
    %v6544 = vsel %vm2845, %v6482, %v6483
    %v6545 = vsel %vm2845, %v6513, %v6482
    %v6546 = vsel %vm2910, %v6544, 0.0
    %v6547 = vsel %vm2911, %v6543, 0.0
    %v6548 = vsel %vm2912, %v6542, 0.0
    %v6549 = vsel %vm2913, %v6541, 0.0
    %v6550 = vsel %vm2914, %v6540, 0.0
    %v6551 = vsel %vm2915, %v6539, 0.0
    %v6552 = vsel %vm2916, %v6538, 0.0
    %v6553 = vsel %vm2917, %v6537, 0.0
    %v6554 = vsel %vm2918, %v6536, 0.0
    %v6555 = vsel %vm2919, %v6535, 0.0
    %v6556 = vsel %vm2920, %v6534, 0.0
    %v6557 = vsel %vm2921, %v6533, 0.0
    %v6558 = vsel %vm2922, %v6532, 0.0
    %v6559 = vsel %vm2923, %v6531, 0.0
    %v6560 = vsel %vm2924, %v6530, 0.0
    %v6561 = vsel %vm2925, %v6529, 0.0
    %v6562 = vsel %vm2926, %v6528, 0.0
    %v6563 = vsel %vm2927, %v6527, 0.0
    %v6564 = vsel %vm2928, %v6526, 0.0
    %v6565 = vsel %vm2929, %v6525, 0.0
    %v6566 = vsel %vm2930, %v6524, 0.0
    %v6567 = vsel %vm2931, %v6523, 0.0
    %v6568 = vsel %vm2932, %v6522, 0.0
    %v6569 = vsel %vm2933, %v6521, 0.0
    %v6570 = vsel %vm2934, %v6520, 0.0
    %v6571 = vsel %vm2935, %v6519, 0.0
    %v6572 = vsel %vm2936, %v6518, 0.0
    %v6573 = vsel %vm2937, %v6517, 0.0
    %v6574 = vsel %vm2938, %v6516, 0.0
    %v6575 = vsel %vm2939, %v6515, 0.0
    %v6576 = vsel %vm2940, %v6514, 0.0
    %v6577 = vsel %vm2941, %v6545, 0.0
    %s6578 = scalar_lea.vmem %s6, 3
    %v6579 = vld [vmem:[%s6578] sm:$0x1]
    %s6580 = scalar_lea.vmem [#allocation3], 1152
    %v6581 = vld [vmem:[%s6580] sm:$0xff]
    %v6582 = vld [vmem:[%s6580 + $0x8] sm:$0xff]
    %v6583 = vld [vmem:[%s6580 + $0x10] sm:$0xff]
    %v6584 = vld [vmem:[%s6580 + $0x18] sm:$0xff]
    %v6585 = vld [vmem:[%s6580 + $0x20] sm:$0xff]
    %v6586 = vld [vmem:[%s6580 + $0x28] sm:$0xff]
    %v6587 = vld [vmem:[%s6580 + $0x30] sm:$0xff]
    %v6588 = vld [vmem:[%s6580 + $0x38] sm:$0xff]
    %v6589 = vld [vmem:[%s6580 + $0x40] sm:$0xff]
    %v6590 = vld [vmem:[%s6580 + $0x48] sm:$0xff]
    %v6591 = vld [vmem:[%s6580 + $0x50] sm:$0xff]
    %v6592 = vld [vmem:[%s6580 + $0x58] sm:$0xff]
    %v6593 = vld [vmem:[%s6580 + $0x60] sm:$0xff]
    %v6594 = vld [vmem:[%s6580 + $0x68] sm:$0xff]
    %v6595 = vld [vmem:[%s6580 + $0x70] sm:$0xff]
    %v6596 = vld [vmem:[%s6580 + $0x78] sm:$0xff]
    %6597 = vmatpush.msra.mxu0 %v6596
    %6598 = vmatpush.msra.mxu0 %v6595
    %6599 = vmatpush.msra.mxu0 %v6594
    %6600 = vmatpush.msra.mxu0 %v6593
    %6601 = vmatpush.msra.mxu0 %v6592
    %6602 = vmatpush.msra.mxu0 %v6591
    %6603 = vmatpush.msra.mxu0 %v6590
    %6604 = vmatpush.msra.mxu0 %v6589
    %6605 = vmatpush.msra.mxu0 %v6588
    %6606 = vmatpush.msra.mxu0 %v6587
    %6607 = vmatpush.msra.mxu0 %v6586
    %6608 = vmatpush.msra.mxu0 %v6585
    %6609 = vmatpush.msra.mxu0 %v6584
    %6610 = vmatpush.msra.mxu0 %v6583
    %6611 = vmatpush.msra.mxu0 %v6582
    %6612 = vmatpush.msra.mxu0 %v6581
    %6613 = vmatmul.f32.gmra.mxu0 %v6450
    %v6614 = vpop.f32.mrf.mxu0
    %v6615 = vadd.f32 0.0, %v6614
    %6616 = vmatmul.f32.gmra.mxu0 %v6451
    %v6617 = vpop.f32.mrf.mxu0
    %v6618 = vadd.f32 0.0, %v6617
    %6619 = vmatmul.f32.gmra.mxu0 %v6452
    %v6620 = vpop.f32.mrf.mxu0
    %v6621 = vadd.f32 0.0, %v6620
    %6622 = vmatmul.f32.gmra.mxu0 %v6453
    %v6623 = vpop.f32.mrf.mxu0
    %v6624 = vadd.f32 0.0, %v6623
    %6625 = vmatmul.f32.gmra.mxu0 %v6454
    %v6626 = vpop.f32.mrf.mxu0
    %v6627 = vadd.f32 0.0, %v6626
    %6628 = vmatmul.f32.gmra.mxu0 %v6455
    %v6629 = vpop.f32.mrf.mxu0
    %v6630 = vadd.f32 0.0, %v6629
    %6631 = vmatmul.f32.gmra.mxu0 %v6456
    %v6632 = vpop.f32.mrf.mxu0
    %v6633 = vadd.f32 0.0, %v6632
    %6634 = vmatmul.f32.gmra.mxu0 %v6457
    %v6635 = vpop.f32.mrf.mxu0
    %v6636 = vadd.f32 0.0, %v6635
    %6637 = vmatmul.f32.gmra.mxu0 %v6458
    %v6638 = vpop.f32.mrf.mxu0
    %v6639 = vadd.f32 0.0, %v6638
    %6640 = vmatmul.f32.gmra.mxu0 %v6459
    %v6641 = vpop.f32.mrf.mxu0
    %v6642 = vadd.f32 0.0, %v6641
    %6643 = vmatmul.f32.gmra.mxu0 %v6460
    %v6644 = vpop.f32.mrf.mxu0
    %v6645 = vadd.f32 0.0, %v6644
    %6646 = vmatmul.f32.gmra.mxu0 %v6461
    %v6647 = vpop.f32.mrf.mxu0
    %v6648 = vadd.f32 0.0, %v6647
    %6649 = vmatmul.f32.gmra.mxu0 %v6462
    %v6650 = vpop.f32.mrf.mxu0
    %v6651 = vadd.f32 0.0, %v6650
    %6652 = vmatmul.f32.gmra.mxu0 %v6463
    %v6653 = vpop.f32.mrf.mxu0
    %v6654 = vadd.f32 0.0, %v6653
    %6655 = vmatmul.f32.gmra.mxu0 %v6464
    %v6656 = vpop.f32.mrf.mxu0
    %v6657 = vadd.f32 0.0, %v6656
    %6658 = vmatmul.f32.gmra.mxu0 %v6465
    %v6659 = vpop.f32.mrf.mxu0
    %v6660 = vadd.f32 0.0, %v6659
    %6661 = vmatmul.f32.gmra.mxu0 %v6466
    %v6662 = vpop.f32.mrf.mxu0
    %v6663 = vadd.f32 0.0, %v6662
    %6664 = vmatmul.f32.gmra.mxu0 %v6467
    %v6665 = vpop.f32.mrf.mxu0
    %v6666 = vadd.f32 0.0, %v6665
    %6667 = vmatmul.f32.gmra.mxu0 %v6468
    %v6668 = vpop.f32.mrf.mxu0
    %v6669 = vadd.f32 0.0, %v6668
    %6670 = vmatmul.f32.gmra.mxu0 %v6469
    %v6671 = vpop.f32.mrf.mxu0
    %v6672 = vadd.f32 0.0, %v6671
    %6673 = vmatmul.f32.gmra.mxu0 %v6470
    %v6674 = vpop.f32.mrf.mxu0
    %v6675 = vadd.f32 0.0, %v6674
    %6676 = vmatmul.f32.gmra.mxu0 %v6471
    %v6677 = vpop.f32.mrf.mxu0
    %v6678 = vadd.f32 0.0, %v6677
    %6679 = vmatmul.f32.gmra.mxu0 %v6472
    %v6680 = vpop.f32.mrf.mxu0
    %v6681 = vadd.f32 0.0, %v6680
    %6682 = vmatmul.f32.gmra.mxu0 %v6473
    %v6683 = vpop.f32.mrf.mxu0
    %v6684 = vadd.f32 0.0, %v6683
    %6685 = vmatmul.f32.gmra.mxu0 %v6474
    %v6686 = vpop.f32.mrf.mxu0
    %v6687 = vadd.f32 0.0, %v6686
    %6688 = vmatmul.f32.gmra.mxu0 %v6475
    %v6689 = vpop.f32.mrf.mxu0
    %v6690 = vadd.f32 0.0, %v6689
    %6691 = vmatmul.f32.gmra.mxu0 %v6476
    %v6692 = vpop.f32.mrf.mxu0
    %v6693 = vadd.f32 0.0, %v6692
    %6694 = vmatmul.f32.gmra.mxu0 %v6477
    %v6695 = vpop.f32.mrf.mxu0
    %v6696 = vadd.f32 0.0, %v6695
    %6697 = vmatmul.f32.gmra.mxu0 %v6478
    %v6698 = vpop.f32.mrf.mxu0
    %v6699 = vadd.f32 0.0, %v6698
    %6700 = vmatmul.f32.gmra.mxu0 %v6479
    %v6701 = vpop.f32.mrf.mxu0
    %v6702 = vadd.f32 0.0, %v6701
    %6703 = vmatmul.f32.gmra.mxu0 %v6480
    %v6704 = vpop.f32.mrf.mxu0
    %v6705 = vadd.f32 0.0, %v6704
    %6706 = vmatmul.f32.gmra.mxu0 %v6481
    %v6707 = vpop.f32.mrf.mxu0
    %v6708 = vadd.f32 0.0, %v6707
    %6709 = vdwg.mxu0
    %v6711 = vperm.slane %v6579, 0
    %v6713 = vadd.f32 %v6711, %v6615
    %v6714 = vadd.f32 %v6711, %v6618
    %v6715 = vadd.f32 %v6711, %v6621
    %v6716 = vadd.f32 %v6711, %v6624
    %v6717 = vadd.f32 %v6711, %v6627
    %v6718 = vadd.f32 %v6711, %v6630
    %v6719 = vadd.f32 %v6711, %v6633
    %v6720 = vadd.f32 %v6711, %v6636
    %v6721 = vadd.f32 %v6711, %v6639
    %v6722 = vadd.f32 %v6711, %v6642
    %v6723 = vadd.f32 %v6711, %v6645
    %v6724 = vadd.f32 %v6711, %v6648
    %v6725 = vadd.f32 %v6711, %v6651
    %v6726 = vadd.f32 %v6711, %v6654
    %v6727 = vadd.f32 %v6711, %v6657
    %v6728 = vadd.f32 %v6711, %v6660
    %v6729 = vadd.f32 %v6711, %v6663
    %v6730 = vadd.f32 %v6711, %v6666
    %v6731 = vadd.f32 %v6711, %v6669
    %v6732 = vadd.f32 %v6711, %v6672
    %v6733 = vadd.f32 %v6711, %v6675
    %v6734 = vadd.f32 %v6711, %v6678
    %v6735 = vadd.f32 %v6711, %v6681
    %v6736 = vadd.f32 %v6711, %v6684
    %v6737 = vadd.f32 %v6711, %v6687
    %v6738 = vadd.f32 %v6711, %v6690
    %v6739 = vadd.f32 %v6711, %v6693
    %v6740 = vadd.f32 %v6711, %v6696
    %v6741 = vadd.f32 %v6711, %v6699
    %v6742 = vadd.f32 %v6711, %v6702
    %v6743 = vadd.f32 %v6711, %v6705
    %v6744 = vadd.f32 %v6711, %v6708
    %s6745 = scalar_lea.vmem [#allocation3], 1280
    %v6746 = vld [vmem:[%s6745] sm:$0xff]
    %v6747 = vld [vmem:[%s6745 + $0x8] sm:$0xff]
    %v6748 = vld [vmem:[%s6745 + $0x10] sm:$0xff]
    %v6749 = vld [vmem:[%s6745 + $0x18] sm:$0xff]
    %v6750 = vld [vmem:[%s6745 + $0x20] sm:$0xff]
    %v6751 = vld [vmem:[%s6745 + $0x28] sm:$0xff]
    %v6752 = vld [vmem:[%s6745 + $0x30] sm:$0xff]
    %v6753 = vld [vmem:[%s6745 + $0x38] sm:$0xff]
    %v6754 = vld [vmem:[%s6745 + $0x40] sm:$0xff]
    %v6755 = vld [vmem:[%s6745 + $0x48] sm:$0xff]
    %v6756 = vld [vmem:[%s6745 + $0x50] sm:$0xff]
    %v6757 = vld [vmem:[%s6745 + $0x58] sm:$0xff]
    %v6758 = vld [vmem:[%s6745 + $0x60] sm:$0xff]
    %v6759 = vld [vmem:[%s6745 + $0x68] sm:$0xff]
    %v6760 = vld [vmem:[%s6745 + $0x70] sm:$0xff]
    %v6761 = vld [vmem:[%s6745 + $0x78] sm:$0xff]
    %6762 = vmatpush.msra.mxu0 %v6761
    %6763 = vmatpush.msra.mxu0 %v6760
    %6764 = vmatpush.msra.mxu0 %v6759
    %6765 = vmatpush.msra.mxu0 %v6758
    %6766 = vmatpush.msra.mxu0 %v6757
    %6767 = vmatpush.msra.mxu0 %v6756
    %6768 = vmatpush.msra.mxu0 %v6755
    %6769 = vmatpush.msra.mxu0 %v6754
    %6770 = vmatpush.msra.mxu0 %v6753
    %6771 = vmatpush.msra.mxu0 %v6752
    %6772 = vmatpush.msra.mxu0 %v6751
    %6773 = vmatpush.msra.mxu0 %v6750
    %6774 = vmatpush.msra.mxu0 %v6749
    %6775 = vmatpush.msra.mxu0 %v6748
    %6776 = vmatpush.msra.mxu0 %v6747
    %6777 = vmatpush.msra.mxu0 %v6746
    %6778 = vmatmul.f32.gmra.mxu0 %v6354
    %v6779 = vpop.f32.mrf.mxu0
    %v6780 = vadd.f32 0.0, %v6779
    %6781 = vmatmul.f32.gmra.mxu0 %v6355
    %v6782 = vpop.f32.mrf.mxu0
    %v6783 = vadd.f32 0.0, %v6782
    %6784 = vmatmul.f32.gmra.mxu0 %v6356
    %v6785 = vpop.f32.mrf.mxu0
    %v6786 = vadd.f32 0.0, %v6785
    %6787 = vmatmul.f32.gmra.mxu0 %v6357
    %v6788 = vpop.f32.mrf.mxu0
    %v6789 = vadd.f32 0.0, %v6788
    %6790 = vmatmul.f32.gmra.mxu0 %v6358
    %v6791 = vpop.f32.mrf.mxu0
    %v6792 = vadd.f32 0.0, %v6791
    %6793 = vmatmul.f32.gmra.mxu0 %v6359
    %v6794 = vpop.f32.mrf.mxu0
    %v6795 = vadd.f32 0.0, %v6794
    %6796 = vmatmul.f32.gmra.mxu0 %v6360
    %v6797 = vpop.f32.mrf.mxu0
    %v6798 = vadd.f32 0.0, %v6797
    %6799 = vmatmul.f32.gmra.mxu0 %v6361
    %v6800 = vpop.f32.mrf.mxu0
    %v6801 = vadd.f32 0.0, %v6800
    %6802 = vmatmul.f32.gmra.mxu0 %v6362
    %v6803 = vpop.f32.mrf.mxu0
    %v6804 = vadd.f32 0.0, %v6803
    %6805 = vmatmul.f32.gmra.mxu0 %v6363
    %v6806 = vpop.f32.mrf.mxu0
    %v6807 = vadd.f32 0.0, %v6806
    %6808 = vmatmul.f32.gmra.mxu0 %v6364
    %v6809 = vpop.f32.mrf.mxu0
    %v6810 = vadd.f32 0.0, %v6809
    %6811 = vmatmul.f32.gmra.mxu0 %v6365
    %v6812 = vpop.f32.mrf.mxu0
    %v6813 = vadd.f32 0.0, %v6812
    %6814 = vmatmul.f32.gmra.mxu0 %v6366
    %v6815 = vpop.f32.mrf.mxu0
    %v6816 = vadd.f32 0.0, %v6815
    %6817 = vmatmul.f32.gmra.mxu0 %v6367
    %v6818 = vpop.f32.mrf.mxu0
    %v6819 = vadd.f32 0.0, %v6818
    %6820 = vmatmul.f32.gmra.mxu0 %v6368
    %v6821 = vpop.f32.mrf.mxu0
    %v6822 = vadd.f32 0.0, %v6821
    %6823 = vmatmul.f32.gmra.mxu0 %v6369
    %v6824 = vpop.f32.mrf.mxu0
    %v6825 = vadd.f32 0.0, %v6824
    %6826 = vmatmul.f32.gmra.mxu0 %v6370
    %v6827 = vpop.f32.mrf.mxu0
    %v6828 = vadd.f32 0.0, %v6827
    %6829 = vmatmul.f32.gmra.mxu0 %v6371
    %v6830 = vpop.f32.mrf.mxu0
    %v6831 = vadd.f32 0.0, %v6830
    %6832 = vmatmul.f32.gmra.mxu0 %v6372
    %v6833 = vpop.f32.mrf.mxu0
    %v6834 = vadd.f32 0.0, %v6833
    %6835 = vmatmul.f32.gmra.mxu0 %v6373
    %v6836 = vpop.f32.mrf.mxu0
    %v6837 = vadd.f32 0.0, %v6836
    %6838 = vmatmul.f32.gmra.mxu0 %v6374
    %v6839 = vpop.f32.mrf.mxu0
    %v6840 = vadd.f32 0.0, %v6839
    %6841 = vmatmul.f32.gmra.mxu0 %v6375
    %v6842 = vpop.f32.mrf.mxu0
    %v6843 = vadd.f32 0.0, %v6842
    %6844 = vmatmul.f32.gmra.mxu0 %v6376
    %v6845 = vpop.f32.mrf.mxu0
    %v6846 = vadd.f32 0.0, %v6845
    %6847 = vmatmul.f32.gmra.mxu0 %v6377
    %v6848 = vpop.f32.mrf.mxu0
    %v6849 = vadd.f32 0.0, %v6848
    %6850 = vmatmul.f32.gmra.mxu0 %v6378
    %v6851 = vpop.f32.mrf.mxu0
    %v6852 = vadd.f32 0.0, %v6851
    %6853 = vmatmul.f32.gmra.mxu0 %v6379
    %v6854 = vpop.f32.mrf.mxu0
    %v6855 = vadd.f32 0.0, %v6854
    %6856 = vmatmul.f32.gmra.mxu0 %v6380
    %v6857 = vpop.f32.mrf.mxu0
    %v6858 = vadd.f32 0.0, %v6857
    %6859 = vmatmul.f32.gmra.mxu0 %v6381
    %v6860 = vpop.f32.mrf.mxu0
    %v6861 = vadd.f32 0.0, %v6860
    %6862 = vmatmul.f32.gmra.mxu0 %v6382
    %v6863 = vpop.f32.mrf.mxu0
    %v6864 = vadd.f32 0.0, %v6863
    %6865 = vmatmul.f32.gmra.mxu0 %v6383
    %v6866 = vpop.f32.mrf.mxu0
    %v6867 = vadd.f32 0.0, %v6866
    %6868 = vmatmul.f32.gmra.mxu0 %v6384
    %v6869 = vpop.f32.mrf.mxu0
    %v6870 = vadd.f32 0.0, %v6869
    %6871 = vmatmul.f32.gmra.mxu0 %v6385
    %v6872 = vpop.f32.mrf.mxu0
    %v6873 = vadd.f32 0.0, %v6872
    %6874 = vdwg.mxu0
    %v6875 = vadd.f32 %v6713, %v6780
    %v6876 = vadd.f32 %v6714, %v6783
    %v6877 = vadd.f32 %v6715, %v6786
    %v6878 = vadd.f32 %v6716, %v6789
    %v6879 = vadd.f32 %v6717, %v6792
    %v6880 = vadd.f32 %v6718, %v6795
    %v6881 = vadd.f32 %v6719, %v6798
    %v6882 = vadd.f32 %v6720, %v6801
    %v6883 = vadd.f32 %v6721, %v6804
    %v6884 = vadd.f32 %v6722, %v6807
    %v6885 = vadd.f32 %v6723, %v6810
    %v6886 = vadd.f32 %v6724, %v6813
    %v6887 = vadd.f32 %v6725, %v6816
    %v6888 = vadd.f32 %v6726, %v6819
    %v6889 = vadd.f32 %v6727, %v6822
    %v6890 = vadd.f32 %v6728, %v6825
    %v6891 = vadd.f32 %v6729, %v6828
    %v6892 = vadd.f32 %v6730, %v6831
    %v6893 = vadd.f32 %v6731, %v6834
    %v6894 = vadd.f32 %v6732, %v6837
    %v6895 = vadd.f32 %v6733, %v6840
    %v6896 = vadd.f32 %v6734, %v6843
    %v6897 = vadd.f32 %v6735, %v6846
    %v6898 = vadd.f32 %v6736, %v6849
    %v6899 = vadd.f32 %v6737, %v6852
    %v6900 = vadd.f32 %v6738, %v6855
    %v6901 = vadd.f32 %v6739, %v6858
    %v6902 = vadd.f32 %v6740, %v6861
    %v6903 = vadd.f32 %v6741, %v6864
    %v6904 = vadd.f32 %v6742, %v6867
    %v6905 = vadd.f32 %v6743, %v6870
    %v6906 = vadd.f32 %v6744, %v6873
    %s6907 = scalar_lea.vmem [#allocation3], 1408
    %v6908 = vld [vmem:[%s6907] sm:$0xff]
    %v6909 = vld [vmem:[%s6907 + $0x8] sm:$0xff]
    %v6910 = vld [vmem:[%s6907 + $0x10] sm:$0xff]
    %v6911 = vld [vmem:[%s6907 + $0x18] sm:$0xff]
    %v6912 = vld [vmem:[%s6907 + $0x20] sm:$0xff]
    %v6913 = vld [vmem:[%s6907 + $0x28] sm:$0xff]
    %v6914 = vld [vmem:[%s6907 + $0x30] sm:$0xff]
    %v6915 = vld [vmem:[%s6907 + $0x38] sm:$0xff]
    %v6916 = vld [vmem:[%s6907 + $0x40] sm:$0xff]
    %v6917 = vld [vmem:[%s6907 + $0x48] sm:$0xff]
    %v6918 = vld [vmem:[%s6907 + $0x50] sm:$0xff]
    %v6919 = vld [vmem:[%s6907 + $0x58] sm:$0xff]
    %v6920 = vld [vmem:[%s6907 + $0x60] sm:$0xff]
    %v6921 = vld [vmem:[%s6907 + $0x68] sm:$0xff]
    %v6922 = vld [vmem:[%s6907 + $0x70] sm:$0xff]
    %v6923 = vld [vmem:[%s6907 + $0x78] sm:$0xff]
    %6924 = vmatpush.msra.mxu0 %v6923
    %6925 = vmatpush.msra.mxu0 %v6922
    %6926 = vmatpush.msra.mxu0 %v6921
    %6927 = vmatpush.msra.mxu0 %v6920
    %6928 = vmatpush.msra.mxu0 %v6919
    %6929 = vmatpush.msra.mxu0 %v6918
    %6930 = vmatpush.msra.mxu0 %v6917
    %6931 = vmatpush.msra.mxu0 %v6916
    %6932 = vmatpush.msra.mxu0 %v6915
    %6933 = vmatpush.msra.mxu0 %v6914
    %6934 = vmatpush.msra.mxu0 %v6913
    %6935 = vmatpush.msra.mxu0 %v6912
    %6936 = vmatpush.msra.mxu0 %v6911
    %6937 = vmatpush.msra.mxu0 %v6910
    %6938 = vmatpush.msra.mxu0 %v6909
    %6939 = vmatpush.msra.mxu0 %v6908
    %6940 = vmatmul.f32.gmra.mxu0 %v6546
    %v6941 = vpop.f32.mrf.mxu0
    %v6942 = vadd.f32 0.0, %v6941
    %6943 = vmatmul.f32.gmra.mxu0 %v6547
    %v6944 = vpop.f32.mrf.mxu0
    %v6945 = vadd.f32 0.0, %v6944
    %6946 = vmatmul.f32.gmra.mxu0 %v6548
    %v6947 = vpop.f32.mrf.mxu0
    %v6948 = vadd.f32 0.0, %v6947
    %6949 = vmatmul.f32.gmra.mxu0 %v6549
    %v6950 = vpop.f32.mrf.mxu0
    %v6951 = vadd.f32 0.0, %v6950
    %6952 = vmatmul.f32.gmra.mxu0 %v6550
    %v6953 = vpop.f32.mrf.mxu0
    %v6954 = vadd.f32 0.0, %v6953
    %6955 = vmatmul.f32.gmra.mxu0 %v6551
    %v6956 = vpop.f32.mrf.mxu0
    %v6957 = vadd.f32 0.0, %v6956
    %6958 = vmatmul.f32.gmra.mxu0 %v6552
    %v6959 = vpop.f32.mrf.mxu0
    %v6960 = vadd.f32 0.0, %v6959
    %6961 = vmatmul.f32.gmra.mxu0 %v6553
    %v6962 = vpop.f32.mrf.mxu0
    %v6963 = vadd.f32 0.0, %v6962
    %6964 = vmatmul.f32.gmra.mxu0 %v6554
    %v6965 = vpop.f32.mrf.mxu0
    %v6966 = vadd.f32 0.0, %v6965
    %6967 = vmatmul.f32.gmra.mxu0 %v6555
    %v6968 = vpop.f32.mrf.mxu0
    %v6969 = vadd.f32 0.0, %v6968
    %6970 = vmatmul.f32.gmra.mxu0 %v6556
    %v6971 = vpop.f32.mrf.mxu0
    %v6972 = vadd.f32 0.0, %v6971
    %6973 = vmatmul.f32.gmra.mxu0 %v6557
    %v6974 = vpop.f32.mrf.mxu0
    %v6975 = vadd.f32 0.0, %v6974
    %6976 = vmatmul.f32.gmra.mxu0 %v6558
    %v6977 = vpop.f32.mrf.mxu0
    %v6978 = vadd.f32 0.0, %v6977
    %6979 = vmatmul.f32.gmra.mxu0 %v6559
    %v6980 = vpop.f32.mrf.mxu0
    %v6981 = vadd.f32 0.0, %v6980
    %6982 = vmatmul.f32.gmra.mxu0 %v6560
    %v6983 = vpop.f32.mrf.mxu0
    %v6984 = vadd.f32 0.0, %v6983
    %6985 = vmatmul.f32.gmra.mxu0 %v6561
    %v6986 = vpop.f32.mrf.mxu0
    %v6987 = vadd.f32 0.0, %v6986
    %6988 = vmatmul.f32.gmra.mxu0 %v6562
    %v6989 = vpop.f32.mrf.mxu0
    %v6990 = vadd.f32 0.0, %v6989
    %6991 = vmatmul.f32.gmra.mxu0 %v6563
    %v6992 = vpop.f32.mrf.mxu0
    %v6993 = vadd.f32 0.0, %v6992
    %6994 = vmatmul.f32.gmra.mxu0 %v6564
    %v6995 = vpop.f32.mrf.mxu0
    %v6996 = vadd.f32 0.0, %v6995
    %6997 = vmatmul.f32.gmra.mxu0 %v6565
    %v6998 = vpop.f32.mrf.mxu0
    %v6999 = vadd.f32 0.0, %v6998
    %7000 = vmatmul.f32.gmra.mxu0 %v6566
    %v7001 = vpop.f32.mrf.mxu0
    %v7002 = vadd.f32 0.0, %v7001
    %7003 = vmatmul.f32.gmra.mxu0 %v6567
    %v7004 = vpop.f32.mrf.mxu0
    %v7005 = vadd.f32 0.0, %v7004
    %7006 = vmatmul.f32.gmra.mxu0 %v6568
    %v7007 = vpop.f32.mrf.mxu0
    %v7008 = vadd.f32 0.0, %v7007
    %7009 = vmatmul.f32.gmra.mxu0 %v6569
    %v7010 = vpop.f32.mrf.mxu0
    %v7011 = vadd.f32 0.0, %v7010
    %7012 = vmatmul.f32.gmra.mxu0 %v6570
    %v7013 = vpop.f32.mrf.mxu0
    %v7014 = vadd.f32 0.0, %v7013
    %7015 = vmatmul.f32.gmra.mxu0 %v6571
    %v7016 = vpop.f32.mrf.mxu0
    %v7017 = vadd.f32 0.0, %v7016
    %7018 = vmatmul.f32.gmra.mxu0 %v6572
    %v7019 = vpop.f32.mrf.mxu0
    %v7020 = vadd.f32 0.0, %v7019
    %7021 = vmatmul.f32.gmra.mxu0 %v6573
    %v7022 = vpop.f32.mrf.mxu0
    %v7023 = vadd.f32 0.0, %v7022
    %7024 = vmatmul.f32.gmra.mxu0 %v6574
    %v7025 = vpop.f32.mrf.mxu0
    %v7026 = vadd.f32 0.0, %v7025
    %7027 = vmatmul.f32.gmra.mxu0 %v6575
    %v7028 = vpop.f32.mrf.mxu0
    %v7029 = vadd.f32 0.0, %v7028
    %7030 = vmatmul.f32.gmra.mxu0 %v6576
    %v7031 = vpop.f32.mrf.mxu0
    %v7032 = vadd.f32 0.0, %v7031
    %7033 = vmatmul.f32.gmra.mxu0 %v6577
    %v7034 = vpop.f32.mrf.mxu0
    %v7035 = vadd.f32 0.0, %v7034
    %7036 = vdwg.mxu0
    %v7037 = vadd.f32 %v6875, %v6942
    %v7038 = vadd.f32 %v6876, %v6945
    %v7039 = vadd.f32 %v6877, %v6948
    %v7040 = vadd.f32 %v6878, %v6951
    %v7041 = vadd.f32 %v6879, %v6954
    %v7042 = vadd.f32 %v6880, %v6957
    %v7043 = vadd.f32 %v6881, %v6960
    %v7044 = vadd.f32 %v6882, %v6963
    %v7045 = vadd.f32 %v6883, %v6966
    %v7046 = vadd.f32 %v6884, %v6969
    %v7047 = vadd.f32 %v6885, %v6972
    %v7048 = vadd.f32 %v6886, %v6975
    %v7049 = vadd.f32 %v6887, %v6978
    %v7050 = vadd.f32 %v6888, %v6981
    %v7051 = vadd.f32 %v6889, %v6984
    %v7052 = vadd.f32 %v6890, %v6987
    %v7053 = vadd.f32 %v6891, %v6990
    %v7054 = vadd.f32 %v6892, %v6993
    %v7055 = vadd.f32 %v6893, %v6996
    %v7056 = vadd.f32 %v6894, %v6999
    %v7057 = vadd.f32 %v6895, %v7002
    %v7058 = vadd.f32 %v6896, %v7005
    %v7059 = vadd.f32 %v6897, %v7008
    %v7060 = vadd.f32 %v6898, %v7011
    %v7061 = vadd.f32 %v6899, %v7014
    %v7062 = vadd.f32 %v6900, %v7017
    %v7063 = vadd.f32 %v6901, %v7020
    %v7064 = vadd.f32 %v6902, %v7023
    %v7065 = vadd.f32 %v6903, %v7026
    %v7066 = vadd.f32 %v6904, %v7029
    %v7067 = vadd.f32 %v6905, %v7032
    %v7068 = vadd.f32 %v6906, %v7035
    %s7069 = scalar_lea.vmem %s7, 96
    %v7070 = vld [vmem:[%s7069] sm:$0xff]
    %v7071 = vld [vmem:[%s7069 + $0x8] sm:$0xff]
    %v7072 = vld [vmem:[%s7069 + $0x10] sm:$0xff]
    %v7073 = vld [vmem:[%s7069 + $0x18] sm:$0xff]
    %7074 = vmatpush.msra.mxu0 0.0
    %7075 = vmatpush.msra.mxu0 0.0
    %7076 = vmatpush.msra.mxu0 0.0
    %7077 = vmatpush.msra.mxu0 0.0
    %7078 = vmatpush.msra.mxu0 0.0
    %7079 = vmatpush.msra.mxu0 0.0
    %7080 = vmatpush.msra.mxu0 0.0
    %7081 = vmatpush.msra.mxu0 0.0
    %7082 = vmatpush.msra.mxu0 0.0
    %7083 = vmatpush.msra.mxu0 0.0
    %7084 = vmatpush.msra.mxu0 0.0
    %7085 = vmatpush.msra.mxu0 0.0
    %7086 = vmatpush.msra.mxu0 %v7073
    %7087 = vmatpush.msra.mxu0 %v7072
    %7088 = vmatpush.msra.mxu0 %v7071
    %7089 = vmatpush.msra.mxu0 %v7070
    %7090 = vmatmul.f32.gmra.mxu0 %v1381
    %v7091 = vpop.f32.mrf.mxu0
    %v7092 = vadd.f32 0.0, %v7091
    %7093 = vmatmul.f32.gmra.mxu0 %v1384
    %v7094 = vpop.f32.mrf.mxu0
    %v7095 = vadd.f32 0.0, %v7094
    %7096 = vmatmul.f32.gmra.mxu0 %v1387
    %v7097 = vpop.f32.mrf.mxu0
    %v7098 = vadd.f32 0.0, %v7097
    %7099 = vmatmul.f32.gmra.mxu0 %v1390
    %v7100 = vpop.f32.mrf.mxu0
    %v7101 = vadd.f32 0.0, %v7100
    %7102 = vmatmul.f32.gmra.mxu0 %v1393
    %v7103 = vpop.f32.mrf.mxu0
    %v7104 = vadd.f32 0.0, %v7103
    %7105 = vmatmul.f32.gmra.mxu0 %v1396
    %v7106 = vpop.f32.mrf.mxu0
    %v7107 = vadd.f32 0.0, %v7106
    %7108 = vmatmul.f32.gmra.mxu0 %v1399
    %v7109 = vpop.f32.mrf.mxu0
    %v7110 = vadd.f32 0.0, %v7109
    %7111 = vmatmul.f32.gmra.mxu0 %v1402
    %v7112 = vpop.f32.mrf.mxu0
    %v7113 = vadd.f32 0.0, %v7112
    %7114 = vmatmul.f32.gmra.mxu0 %v1405
    %v7115 = vpop.f32.mrf.mxu0
    %v7116 = vadd.f32 0.0, %v7115
    %7117 = vmatmul.f32.gmra.mxu0 %v1408
    %v7118 = vpop.f32.mrf.mxu0
    %v7119 = vadd.f32 0.0, %v7118
    %7120 = vmatmul.f32.gmra.mxu0 %v1411
    %v7121 = vpop.f32.mrf.mxu0
    %v7122 = vadd.f32 0.0, %v7121
    %7123 = vmatmul.f32.gmra.mxu0 %v1414
    %v7124 = vpop.f32.mrf.mxu0
    %v7125 = vadd.f32 0.0, %v7124
    %7126 = vmatmul.f32.gmra.mxu0 %v1417
    %v7127 = vpop.f32.mrf.mxu0
    %v7128 = vadd.f32 0.0, %v7127
    %7129 = vmatmul.f32.gmra.mxu0 %v1420
    %v7130 = vpop.f32.mrf.mxu0
    %v7131 = vadd.f32 0.0, %v7130
    %7132 = vmatmul.f32.gmra.mxu0 %v1423
    %v7133 = vpop.f32.mrf.mxu0
    %v7134 = vadd.f32 0.0, %v7133
    %7135 = vmatmul.f32.gmra.mxu0 %v1426
    %v7136 = vpop.f32.mrf.mxu0
    %v7137 = vadd.f32 0.0, %v7136
    %7138 = vmatmul.f32.gmra.mxu0 %v1429
    %v7139 = vpop.f32.mrf.mxu0
    %v7140 = vadd.f32 0.0, %v7139
    %7141 = vmatmul.f32.gmra.mxu0 %v1432
    %v7142 = vpop.f32.mrf.mxu0
    %v7143 = vadd.f32 0.0, %v7142
    %7144 = vmatmul.f32.gmra.mxu0 %v1435
    %v7145 = vpop.f32.mrf.mxu0
    %v7146 = vadd.f32 0.0, %v7145
    %7147 = vmatmul.f32.gmra.mxu0 %v1438
    %v7148 = vpop.f32.mrf.mxu0
    %v7149 = vadd.f32 0.0, %v7148
    %7150 = vmatmul.f32.gmra.mxu0 %v1441
    %v7151 = vpop.f32.mrf.mxu0
    %v7152 = vadd.f32 0.0, %v7151
    %7153 = vmatmul.f32.gmra.mxu0 %v1444
    %v7154 = vpop.f32.mrf.mxu0
    %v7155 = vadd.f32 0.0, %v7154
    %7156 = vmatmul.f32.gmra.mxu0 %v1447
    %v7157 = vpop.f32.mrf.mxu0
    %v7158 = vadd.f32 0.0, %v7157
    %7159 = vmatmul.f32.gmra.mxu0 %v1450
    %v7160 = vpop.f32.mrf.mxu0
    %v7161 = vadd.f32 0.0, %v7160
    %7162 = vmatmul.f32.gmra.mxu0 %v1453
    %v7163 = vpop.f32.mrf.mxu0
    %v7164 = vadd.f32 0.0, %v7163
    %7165 = vmatmul.f32.gmra.mxu0 %v1456
    %v7166 = vpop.f32.mrf.mxu0
    %v7167 = vadd.f32 0.0, %v7166
    %7168 = vmatmul.f32.gmra.mxu0 %v1459
    %v7169 = vpop.f32.mrf.mxu0
    %v7170 = vadd.f32 0.0, %v7169
    %7171 = vmatmul.f32.gmra.mxu0 %v1462
    %v7172 = vpop.f32.mrf.mxu0
    %v7173 = vadd.f32 0.0, %v7172
    %7174 = vmatmul.f32.gmra.mxu0 %v1465
    %v7175 = vpop.f32.mrf.mxu0
    %v7176 = vadd.f32 0.0, %v7175
    %7177 = vmatmul.f32.gmra.mxu0 %v1468
    %v7178 = vpop.f32.mrf.mxu0
    %v7179 = vadd.f32 0.0, %v7178
    %7180 = vmatmul.f32.gmra.mxu0 %v1471
    %v7181 = vpop.f32.mrf.mxu0
    %v7182 = vadd.f32 0.0, %v7181
    %7183 = vmatmul.f32.gmra.mxu0 %v1474
    %v7184 = vpop.f32.mrf.mxu0
    %v7185 = vadd.f32 0.0, %v7184
    %7186 = vdwg.mxu0
    %v7187 = vadd.f32 %v7037, %v7092
    %v7188 = vadd.f32 %v7038, %v7095
    %v7189 = vadd.f32 %v7039, %v7098
    %v7190 = vadd.f32 %v7040, %v7101
    %v7191 = vadd.f32 %v7041, %v7104
    %v7192 = vadd.f32 %v7042, %v7107
    %v7193 = vadd.f32 %v7043, %v7110
    %v7194 = vadd.f32 %v7044, %v7113
    %v7195 = vadd.f32 %v7045, %v7116
    %v7196 = vadd.f32 %v7046, %v7119
    %v7197 = vadd.f32 %v7047, %v7122
    %v7198 = vadd.f32 %v7048, %v7125
    %v7199 = vadd.f32 %v7049, %v7128
    %v7200 = vadd.f32 %v7050, %v7131
    %v7201 = vadd.f32 %v7051, %v7134
    %v7202 = vadd.f32 %v7052, %v7137
    %v7203 = vadd.f32 %v7053, %v7140
    %v7204 = vadd.f32 %v7054, %v7143
    %v7205 = vadd.f32 %v7055, %v7146
    %v7206 = vadd.f32 %v7056, %v7149
    %v7207 = vadd.f32 %v7057, %v7152
    %v7208 = vadd.f32 %v7058, %v7155
    %v7209 = vadd.f32 %v7059, %v7158
    %v7210 = vadd.f32 %v7060, %v7161
    %v7211 = vadd.f32 %v7061, %v7164
    %v7212 = vadd.f32 %v7062, %v7167
    %v7213 = vadd.f32 %v7063, %v7170
    %v7214 = vadd.f32 %v7064, %v7173
    %v7215 = vadd.f32 %v7065, %v7176
    %v7216 = vadd.f32 %v7066, %v7179
    %v7217 = vadd.f32 %v7067, %v7182
    %v7218 = vadd.f32 %v7068, %v7185
    %v7219 = vtanh.pop %v7187
    %v7220 = vtanh.pop %v7188
    %v7221 = vtanh.pop %v7189
    %v7222 = vtanh.pop %v7190
    %v7223 = vtanh.pop %v7191
    %v7224 = vtanh.pop %v7192
    %v7225 = vtanh.pop %v7193
    %v7226 = vtanh.pop %v7194
    %v7227 = vtanh.pop %v7195
    %v7228 = vtanh.pop %v7196
    %v7229 = vtanh.pop %v7197
    %v7230 = vtanh.pop %v7198
    %v7231 = vtanh.pop %v7199
    %v7232 = vtanh.pop %v7200
    %v7233 = vtanh.pop %v7201
    %v7234 = vtanh.pop %v7202
    %v7235 = vtanh.pop %v7203
    %v7236 = vtanh.pop %v7204
    %v7237 = vtanh.pop %v7205
    %v7238 = vtanh.pop %v7206
    %v7239 = vtanh.pop %v7207
    %v7240 = vtanh.pop %v7208
    %v7241 = vtanh.pop %v7209
    %v7242 = vtanh.pop %v7210
    %v7243 = vtanh.pop %v7211
    %v7244 = vtanh.pop %v7212
    %v7245 = vtanh.pop %v7213
    %v7246 = vtanh.pop %v7214
    %v7247 = vtanh.pop %v7215
    %v7248 = vtanh.pop %v7216
    %v7249 = vtanh.pop %v7217
    %v7250 = vtanh.pop %v7218
    %7251 = vrot.lane.b32.xlu0 %v7187, 64
    %v7252 = vpop.permute.xlu0 %7251
    %7253 = vrot.lane.b32.xlu0 %v7188, 64
    %v7254 = vpop.permute.xlu0 %7253
    %7255 = vrot.lane.b32.xlu0 %v7189, 64
    %v7256 = vpop.permute.xlu0 %7255
    %7257 = vrot.lane.b32.xlu0 %v7190, 64
    %v7258 = vpop.permute.xlu0 %7257
    %7259 = vrot.lane.b32.xlu0 %v7191, 64
    %v7260 = vpop.permute.xlu0 %7259
    %7261 = vrot.lane.b32.xlu0 %v7192, 64
    %v7262 = vpop.permute.xlu0 %7261
    %7263 = vrot.lane.b32.xlu0 %v7193, 64
    %v7264 = vpop.permute.xlu0 %7263
    %7265 = vrot.lane.b32.xlu0 %v7194, 64
    %v7266 = vpop.permute.xlu0 %7265
    %7267 = vrot.lane.b32.xlu0 %v7195, 64
    %v7268 = vpop.permute.xlu0 %7267
    %7269 = vrot.lane.b32.xlu0 %v7196, 64
    %v7270 = vpop.permute.xlu0 %7269
    %7271 = vrot.lane.b32.xlu0 %v7197, 64
    %v7272 = vpop.permute.xlu0 %7271
    %7273 = vrot.lane.b32.xlu0 %v7198, 64
    %v7274 = vpop.permute.xlu0 %7273
    %7275 = vrot.lane.b32.xlu0 %v7199, 64
    %v7276 = vpop.permute.xlu0 %7275
    %7277 = vrot.lane.b32.xlu0 %v7200, 64
    %v7278 = vpop.permute.xlu0 %7277
    %7279 = vrot.lane.b32.xlu0 %v7201, 64
    %v7280 = vpop.permute.xlu0 %7279
    %7281 = vrot.lane.b32.xlu0 %v7202, 64
    %v7282 = vpop.permute.xlu0 %7281
    %7283 = vrot.lane.b32.xlu0 %v7203, 64
    %v7284 = vpop.permute.xlu0 %7283
    %7285 = vrot.lane.b32.xlu0 %v7204, 64
    %v7286 = vpop.permute.xlu0 %7285
    %7287 = vrot.lane.b32.xlu0 %v7205, 64
    %v7288 = vpop.permute.xlu0 %7287
    %7289 = vrot.lane.b32.xlu0 %v7206, 64
    %v7290 = vpop.permute.xlu0 %7289
    %7291 = vrot.lane.b32.xlu0 %v7207, 64
    %v7292 = vpop.permute.xlu0 %7291
    %7293 = vrot.lane.b32.xlu0 %v7208, 64
    %v7294 = vpop.permute.xlu0 %7293
    %7295 = vrot.lane.b32.xlu0 %v7209, 64
    %v7296 = vpop.permute.xlu0 %7295
    %7297 = vrot.lane.b32.xlu0 %v7210, 64
    %v7298 = vpop.permute.xlu0 %7297
    %7299 = vrot.lane.b32.xlu0 %v7211, 64
    %v7300 = vpop.permute.xlu0 %7299
    %7301 = vrot.lane.b32.xlu0 %v7212, 64
    %v7302 = vpop.permute.xlu0 %7301
    %7303 = vrot.lane.b32.xlu0 %v7213, 64
    %v7304 = vpop.permute.xlu0 %7303
    %7305 = vrot.lane.b32.xlu0 %v7214, 64
    %v7306 = vpop.permute.xlu0 %7305
    %7307 = vrot.lane.b32.xlu0 %v7215, 64
    %v7308 = vpop.permute.xlu0 %7307
    %7309 = vrot.lane.b32.xlu0 %v7216, 64
    %v7310 = vpop.permute.xlu0 %7309
    %7311 = vrot.lane.b32.xlu0 %v7217, 64
    %v7312 = vpop.permute.xlu0 %7311
    %7313 = vrot.lane.b32.xlu0 %v7218, 64
    %v7314 = vpop.permute.xlu0 %7313
    %v7315 = vxor.u32 %v7252, 2147483648
    %v7316 = vxor.u32 %v7254, 2147483648
    %v7317 = vxor.u32 %v7256, 2147483648
    %v7318 = vxor.u32 %v7258, 2147483648
    %v7319 = vxor.u32 %v7260, 2147483648
    %v7320 = vxor.u32 %v7262, 2147483648
    %v7321 = vxor.u32 %v7264, 2147483648
    %v7322 = vxor.u32 %v7266, 2147483648
    %v7323 = vxor.u32 %v7268, 2147483648
    %v7324 = vxor.u32 %v7270, 2147483648
    %v7325 = vxor.u32 %v7272, 2147483648
    %v7326 = vxor.u32 %v7274, 2147483648
    %v7327 = vxor.u32 %v7276, 2147483648
    %v7328 = vxor.u32 %v7278, 2147483648
    %v7329 = vxor.u32 %v7280, 2147483648
    %v7330 = vxor.u32 %v7282, 2147483648
    %v7331 = vxor.u32 %v7284, 2147483648
    %v7332 = vxor.u32 %v7286, 2147483648
    %v7333 = vxor.u32 %v7288, 2147483648
    %v7334 = vxor.u32 %v7290, 2147483648
    %v7335 = vxor.u32 %v7292, 2147483648
    %v7336 = vxor.u32 %v7294, 2147483648
    %v7337 = vxor.u32 %v7296, 2147483648
    %v7338 = vxor.u32 %v7298, 2147483648
    %v7339 = vxor.u32 %v7300, 2147483648
    %v7340 = vxor.u32 %v7302, 2147483648
    %v7341 = vxor.u32 %v7304, 2147483648
    %v7342 = vxor.u32 %v7306, 2147483648
    %v7343 = vxor.u32 %v7308, 2147483648
    %v7344 = vxor.u32 %v7310, 2147483648
    %v7345 = vxor.u32 %v7312, 2147483648
    %v7346 = vxor.u32 %v7314, 2147483648
    %v7347 = vmul.f32 %v7315, 1.442695
    %v7348 = vpow.pop %v7347
    %v7349 = vmul.f32 %v7316, 1.442695
    %v7350 = vpow.pop %v7349
    %v7351 = vmul.f32 %v7317, 1.442695
    %v7352 = vpow.pop %v7351
    %v7353 = vmul.f32 %v7318, 1.442695
    %v7354 = vpow.pop %v7353
    %v7355 = vmul.f32 %v7319, 1.442695
    %v7356 = vpow.pop %v7355
    %v7357 = vmul.f32 %v7320, 1.442695
    %v7358 = vpow.pop %v7357
    %v7359 = vmul.f32 %v7321, 1.442695
    %v7360 = vpow.pop %v7359
    %v7361 = vmul.f32 %v7322, 1.442695
    %v7362 = vpow.pop %v7361
    %v7363 = vmul.f32 %v7323, 1.442695
    %v7364 = vpow.pop %v7363
    %v7365 = vmul.f32 %v7324, 1.442695
    %v7366 = vpow.pop %v7365
    %v7367 = vmul.f32 %v7325, 1.442695
    %v7368 = vpow.pop %v7367
    %v7369 = vmul.f32 %v7326, 1.442695
    %v7370 = vpow.pop %v7369
    %v7371 = vmul.f32 %v7327, 1.442695
    %v7372 = vpow.pop %v7371
    %v7373 = vmul.f32 %v7328, 1.442695
    %v7374 = vpow.pop %v7373
    %v7375 = vmul.f32 %v7329, 1.442695
    %v7376 = vpow.pop %v7375
    %v7377 = vmul.f32 %v7330, 1.442695
    %v7378 = vpow.pop %v7377
    %v7379 = vmul.f32 %v7331, 1.442695
    %v7380 = vpow.pop %v7379
    %v7381 = vmul.f32 %v7332, 1.442695
    %v7382 = vpow.pop %v7381
    %v7383 = vmul.f32 %v7333, 1.442695
    %v7384 = vpow.pop %v7383
    %v7385 = vmul.f32 %v7334, 1.442695
    %v7386 = vpow.pop %v7385
    %v7387 = vmul.f32 %v7335, 1.442695
    %v7388 = vpow.pop %v7387
    %v7389 = vmul.f32 %v7336, 1.442695
    %v7390 = vpow.pop %v7389
    %v7391 = vmul.f32 %v7337, 1.442695
    %v7392 = vpow.pop %v7391
    %v7393 = vmul.f32 %v7338, 1.442695
    %v7394 = vpow.pop %v7393
    %v7395 = vmul.f32 %v7339, 1.442695
    %v7396 = vpow.pop %v7395
    %v7397 = vmul.f32 %v7340, 1.442695
    %v7398 = vpow.pop %v7397
    %v7399 = vmul.f32 %v7341, 1.442695
    %v7400 = vpow.pop %v7399
    %v7401 = vmul.f32 %v7342, 1.442695
    %v7402 = vpow.pop %v7401
    %v7403 = vmul.f32 %v7343, 1.442695
    %v7404 = vpow.pop %v7403
    %v7405 = vmul.f32 %v7344, 1.442695
    %v7406 = vpow.pop %v7405
    %v7407 = vmul.f32 %v7345, 1.442695
    %v7408 = vpow.pop %v7407
    %v7409 = vmul.f32 %v7346, 1.442695
    %v7410 = vpow.pop %v7409
    %v7411 = vadd.f32 %v7348, 1.0
    %v7412 = vadd.f32 %v7350, 1.0
    %v7413 = vadd.f32 %v7352, 1.0
    %v7414 = vadd.f32 %v7354, 1.0
    %v7415 = vadd.f32 %v7356, 1.0
    %v7416 = vadd.f32 %v7358, 1.0
    %v7417 = vadd.f32 %v7360, 1.0
    %v7418 = vadd.f32 %v7362, 1.0
    %v7419 = vadd.f32 %v7364, 1.0
    %v7420 = vadd.f32 %v7366, 1.0
    %v7421 = vadd.f32 %v7368, 1.0
    %v7422 = vadd.f32 %v7370, 1.0
    %v7423 = vadd.f32 %v7372, 1.0
    %v7424 = vadd.f32 %v7374, 1.0
    %v7425 = vadd.f32 %v7376, 1.0
    %v7426 = vadd.f32 %v7378, 1.0
    %v7427 = vadd.f32 %v7380, 1.0
    %v7428 = vadd.f32 %v7382, 1.0
    %v7429 = vadd.f32 %v7384, 1.0
    %v7430 = vadd.f32 %v7386, 1.0
    %v7431 = vadd.f32 %v7388, 1.0
    %v7432 = vadd.f32 %v7390, 1.0
    %v7433 = vadd.f32 %v7392, 1.0
    %v7434 = vadd.f32 %v7394, 1.0
    %v7435 = vadd.f32 %v7396, 1.0
    %v7436 = vadd.f32 %v7398, 1.0
    %v7437 = vadd.f32 %v7400, 1.0
    %v7438 = vadd.f32 %v7402, 1.0
    %v7439 = vadd.f32 %v7404, 1.0
    %v7440 = vadd.f32 %v7406, 1.0
    %v7441 = vadd.f32 %v7408, 1.0
    %v7442 = vadd.f32 %v7410, 1.0
    %v7443 = vrcp.pop %v7411
    %v7444 = vmul.f32 %v7411, %v7443
    %v7445 = vsub.f32 1.0, %v7444
    %v7446 = vmul.f32 %v7443, %v7445
    %v7447 = vadd.f32 %v7443, %v7446
    %vm7448 = vweird.f32 %v7411
    %vm7449 = vweird.f32 %v7443
    %vm7450 = vmor %vm7448, %vm7449
    %v7451 = vsel %vm7450, %v7443, %v7447
    %v7452 = vand.u32 2147483647, %v7411
    %vm7453 = vcmp.eq.f32.partialorder %v7452, 8.507059e+37
    %v7454 = vand.u32 %v7411, 2147483648
    %v7455 = vor.u32 1.1754944e-38, %v7454
    %v7456 = vsel %vm7453, %v7455, %v7451
    %v7457 = vmul.f32 1.0, %v7456
    %v7458 = vrcp.pop %v7412
    %v7459 = vmul.f32 %v7412, %v7458
    %v7460 = vsub.f32 1.0, %v7459
    %v7461 = vmul.f32 %v7458, %v7460
    %v7462 = vadd.f32 %v7458, %v7461
    %vm7463 = vweird.f32 %v7412
    %vm7464 = vweird.f32 %v7458
    %vm7465 = vmor %vm7463, %vm7464
    %v7466 = vsel %vm7465, %v7458, %v7462
    %v7467 = vand.u32 2147483647, %v7412
    %vm7468 = vcmp.eq.f32.partialorder %v7467, 8.507059e+37
    %v7469 = vand.u32 %v7412, 2147483648
    %v7470 = vor.u32 1.1754944e-38, %v7469
    %v7471 = vsel %vm7468, %v7470, %v7466
    %v7472 = vmul.f32 1.0, %v7471
    %v7473 = vrcp.pop %v7413
    %v7474 = vmul.f32 %v7413, %v7473
    %v7475 = vsub.f32 1.0, %v7474
    %v7476 = vmul.f32 %v7473, %v7475
    %v7477 = vadd.f32 %v7473, %v7476
    %vm7478 = vweird.f32 %v7413
    %vm7479 = vweird.f32 %v7473
    %vm7480 = vmor %vm7478, %vm7479
    %v7481 = vsel %vm7480, %v7473, %v7477
    %v7482 = vand.u32 2147483647, %v7413
    %vm7483 = vcmp.eq.f32.partialorder %v7482, 8.507059e+37
    %v7484 = vand.u32 %v7413, 2147483648
    %v7485 = vor.u32 1.1754944e-38, %v7484
    %v7486 = vsel %vm7483, %v7485, %v7481
    %v7487 = vmul.f32 1.0, %v7486
    %v7488 = vrcp.pop %v7414
    %v7489 = vmul.f32 %v7414, %v7488
    %v7490 = vsub.f32 1.0, %v7489
    %v7491 = vmul.f32 %v7488, %v7490
    %v7492 = vadd.f32 %v7488, %v7491
    %vm7493 = vweird.f32 %v7414
    %vm7494 = vweird.f32 %v7488
    %vm7495 = vmor %vm7493, %vm7494
    %v7496 = vsel %vm7495, %v7488, %v7492
    %v7497 = vand.u32 2147483647, %v7414
    %vm7498 = vcmp.eq.f32.partialorder %v7497, 8.507059e+37
    %v7499 = vand.u32 %v7414, 2147483648
    %v7500 = vor.u32 1.1754944e-38, %v7499
    %v7501 = vsel %vm7498, %v7500, %v7496
    %v7502 = vmul.f32 1.0, %v7501
    %v7503 = vrcp.pop %v7415
    %v7504 = vmul.f32 %v7415, %v7503
    %v7505 = vsub.f32 1.0, %v7504
    %v7506 = vmul.f32 %v7503, %v7505
    %v7507 = vadd.f32 %v7503, %v7506
    %vm7508 = vweird.f32 %v7415
    %vm7509 = vweird.f32 %v7503
    %vm7510 = vmor %vm7508, %vm7509
    %v7511 = vsel %vm7510, %v7503, %v7507
    %v7512 = vand.u32 2147483647, %v7415
    %vm7513 = vcmp.eq.f32.partialorder %v7512, 8.507059e+37
    %v7514 = vand.u32 %v7415, 2147483648
    %v7515 = vor.u32 1.1754944e-38, %v7514
    %v7516 = vsel %vm7513, %v7515, %v7511
    %v7517 = vmul.f32 1.0, %v7516
    %v7518 = vrcp.pop %v7416
    %v7519 = vmul.f32 %v7416, %v7518
    %v7520 = vsub.f32 1.0, %v7519
    %v7521 = vmul.f32 %v7518, %v7520
    %v7522 = vadd.f32 %v7518, %v7521
    %vm7523 = vweird.f32 %v7416
    %vm7524 = vweird.f32 %v7518
    %vm7525 = vmor %vm7523, %vm7524
    %v7526 = vsel %vm7525, %v7518, %v7522
    %v7527 = vand.u32 2147483647, %v7416
    %vm7528 = vcmp.eq.f32.partialorder %v7527, 8.507059e+37
    %v7529 = vand.u32 %v7416, 2147483648
    %v7530 = vor.u32 1.1754944e-38, %v7529
    %v7531 = vsel %vm7528, %v7530, %v7526
    %v7532 = vmul.f32 1.0, %v7531
    %v7533 = vrcp.pop %v7417
    %v7534 = vmul.f32 %v7417, %v7533
    %v7535 = vsub.f32 1.0, %v7534
    %v7536 = vmul.f32 %v7533, %v7535
    %v7537 = vadd.f32 %v7533, %v7536
    %vm7538 = vweird.f32 %v7417
    %vm7539 = vweird.f32 %v7533
    %vm7540 = vmor %vm7538, %vm7539
    %v7541 = vsel %vm7540, %v7533, %v7537
    %v7542 = vand.u32 2147483647, %v7417
    %vm7543 = vcmp.eq.f32.partialorder %v7542, 8.507059e+37
    %v7544 = vand.u32 %v7417, 2147483648
    %v7545 = vor.u32 1.1754944e-38, %v7544
    %v7546 = vsel %vm7543, %v7545, %v7541
    %v7547 = vmul.f32 1.0, %v7546
    %v7548 = vrcp.pop %v7418
    %v7549 = vmul.f32 %v7418, %v7548
    %v7550 = vsub.f32 1.0, %v7549
    %v7551 = vmul.f32 %v7548, %v7550
    %v7552 = vadd.f32 %v7548, %v7551
    %vm7553 = vweird.f32 %v7418
    %vm7554 = vweird.f32 %v7548
    %vm7555 = vmor %vm7553, %vm7554
    %v7556 = vsel %vm7555, %v7548, %v7552
    %v7557 = vand.u32 2147483647, %v7418
    %vm7558 = vcmp.eq.f32.partialorder %v7557, 8.507059e+37
    %v7559 = vand.u32 %v7418, 2147483648
    %v7560 = vor.u32 1.1754944e-38, %v7559
    %v7561 = vsel %vm7558, %v7560, %v7556
    %v7562 = vmul.f32 1.0, %v7561
    %v7563 = vrcp.pop %v7419
    %v7564 = vmul.f32 %v7419, %v7563
    %v7565 = vsub.f32 1.0, %v7564
    %v7566 = vmul.f32 %v7563, %v7565
    %v7567 = vadd.f32 %v7563, %v7566
    %vm7568 = vweird.f32 %v7419
    %vm7569 = vweird.f32 %v7563
    %vm7570 = vmor %vm7568, %vm7569
    %v7571 = vsel %vm7570, %v7563, %v7567
    %v7572 = vand.u32 2147483647, %v7419
    %vm7573 = vcmp.eq.f32.partialorder %v7572, 8.507059e+37
    %v7574 = vand.u32 %v7419, 2147483648
    %v7575 = vor.u32 1.1754944e-38, %v7574
    %v7576 = vsel %vm7573, %v7575, %v7571
    %v7577 = vmul.f32 1.0, %v7576
    %v7578 = vrcp.pop %v7420
    %v7579 = vmul.f32 %v7420, %v7578
    %v7580 = vsub.f32 1.0, %v7579
    %v7581 = vmul.f32 %v7578, %v7580
    %v7582 = vadd.f32 %v7578, %v7581
    %vm7583 = vweird.f32 %v7420
    %vm7584 = vweird.f32 %v7578
    %vm7585 = vmor %vm7583, %vm7584
    %v7586 = vsel %vm7585, %v7578, %v7582
    %v7587 = vand.u32 2147483647, %v7420
    %vm7588 = vcmp.eq.f32.partialorder %v7587, 8.507059e+37
    %v7589 = vand.u32 %v7420, 2147483648
    %v7590 = vor.u32 1.1754944e-38, %v7589
    %v7591 = vsel %vm7588, %v7590, %v7586
    %v7592 = vmul.f32 1.0, %v7591
    %v7593 = vrcp.pop %v7421
    %v7594 = vmul.f32 %v7421, %v7593
    %v7595 = vsub.f32 1.0, %v7594
    %v7596 = vmul.f32 %v7593, %v7595
    %v7597 = vadd.f32 %v7593, %v7596
    %vm7598 = vweird.f32 %v7421
    %vm7599 = vweird.f32 %v7593
    %vm7600 = vmor %vm7598, %vm7599
    %v7601 = vsel %vm7600, %v7593, %v7597
    %v7602 = vand.u32 2147483647, %v7421
    %vm7603 = vcmp.eq.f32.partialorder %v7602, 8.507059e+37
    %v7604 = vand.u32 %v7421, 2147483648
    %v7605 = vor.u32 1.1754944e-38, %v7604
    %v7606 = vsel %vm7603, %v7605, %v7601
    %v7607 = vmul.f32 1.0, %v7606
    %v7608 = vrcp.pop %v7422
    %v7609 = vmul.f32 %v7422, %v7608
    %v7610 = vsub.f32 1.0, %v7609
    %v7611 = vmul.f32 %v7608, %v7610
    %v7612 = vadd.f32 %v7608, %v7611
    %vm7613 = vweird.f32 %v7422
    %vm7614 = vweird.f32 %v7608
    %vm7615 = vmor %vm7613, %vm7614
    %v7616 = vsel %vm7615, %v7608, %v7612
    %v7617 = vand.u32 2147483647, %v7422
    %vm7618 = vcmp.eq.f32.partialorder %v7617, 8.507059e+37
    %v7619 = vand.u32 %v7422, 2147483648
    %v7620 = vor.u32 1.1754944e-38, %v7619
    %v7621 = vsel %vm7618, %v7620, %v7616
    %v7622 = vmul.f32 1.0, %v7621
    %v7623 = vrcp.pop %v7423
    %v7624 = vmul.f32 %v7423, %v7623
    %v7625 = vsub.f32 1.0, %v7624
    %v7626 = vmul.f32 %v7623, %v7625
    %v7627 = vadd.f32 %v7623, %v7626
    %vm7628 = vweird.f32 %v7423
    %vm7629 = vweird.f32 %v7623
    %vm7630 = vmor %vm7628, %vm7629
    %v7631 = vsel %vm7630, %v7623, %v7627
    %v7632 = vand.u32 2147483647, %v7423
    %vm7633 = vcmp.eq.f32.partialorder %v7632, 8.507059e+37
    %v7634 = vand.u32 %v7423, 2147483648
    %v7635 = vor.u32 1.1754944e-38, %v7634
    %v7636 = vsel %vm7633, %v7635, %v7631
    %v7637 = vmul.f32 1.0, %v7636
    %v7638 = vrcp.pop %v7424
    %v7639 = vmul.f32 %v7424, %v7638
    %v7640 = vsub.f32 1.0, %v7639
    %v7641 = vmul.f32 %v7638, %v7640
    %v7642 = vadd.f32 %v7638, %v7641
    %vm7643 = vweird.f32 %v7424
    %vm7644 = vweird.f32 %v7638
    %vm7645 = vmor %vm7643, %vm7644
    %v7646 = vsel %vm7645, %v7638, %v7642
    %v7647 = vand.u32 2147483647, %v7424
    %vm7648 = vcmp.eq.f32.partialorder %v7647, 8.507059e+37
    %v7649 = vand.u32 %v7424, 2147483648
    %v7650 = vor.u32 1.1754944e-38, %v7649
    %v7651 = vsel %vm7648, %v7650, %v7646
    %v7652 = vmul.f32 1.0, %v7651
    %v7653 = vrcp.pop %v7425
    %v7654 = vmul.f32 %v7425, %v7653
    %v7655 = vsub.f32 1.0, %v7654
    %v7656 = vmul.f32 %v7653, %v7655
    %v7657 = vadd.f32 %v7653, %v7656
    %vm7658 = vweird.f32 %v7425
    %vm7659 = vweird.f32 %v7653
    %vm7660 = vmor %vm7658, %vm7659
    %v7661 = vsel %vm7660, %v7653, %v7657
    %v7662 = vand.u32 2147483647, %v7425
    %vm7663 = vcmp.eq.f32.partialorder %v7662, 8.507059e+37
    %v7664 = vand.u32 %v7425, 2147483648
    %v7665 = vor.u32 1.1754944e-38, %v7664
    %v7666 = vsel %vm7663, %v7665, %v7661
    %v7667 = vmul.f32 1.0, %v7666
    %v7668 = vrcp.pop %v7426
    %v7669 = vmul.f32 %v7426, %v7668
    %v7670 = vsub.f32 1.0, %v7669
    %v7671 = vmul.f32 %v7668, %v7670
    %v7672 = vadd.f32 %v7668, %v7671
    %vm7673 = vweird.f32 %v7426
    %vm7674 = vweird.f32 %v7668
    %vm7675 = vmor %vm7673, %vm7674
    %v7676 = vsel %vm7675, %v7668, %v7672
    %v7677 = vand.u32 2147483647, %v7426
    %vm7678 = vcmp.eq.f32.partialorder %v7677, 8.507059e+37
    %v7679 = vand.u32 %v7426, 2147483648
    %v7680 = vor.u32 1.1754944e-38, %v7679
    %v7681 = vsel %vm7678, %v7680, %v7676
    %v7682 = vmul.f32 1.0, %v7681
    %v7683 = vrcp.pop %v7427
    %v7684 = vmul.f32 %v7427, %v7683
    %v7685 = vsub.f32 1.0, %v7684
    %v7686 = vmul.f32 %v7683, %v7685
    %v7687 = vadd.f32 %v7683, %v7686
    %vm7688 = vweird.f32 %v7427
    %vm7689 = vweird.f32 %v7683
    %vm7690 = vmor %vm7688, %vm7689
    %v7691 = vsel %vm7690, %v7683, %v7687
    %v7692 = vand.u32 2147483647, %v7427
    %vm7693 = vcmp.eq.f32.partialorder %v7692, 8.507059e+37
    %v7694 = vand.u32 %v7427, 2147483648
    %v7695 = vor.u32 1.1754944e-38, %v7694
    %v7696 = vsel %vm7693, %v7695, %v7691
    %v7697 = vmul.f32 1.0, %v7696
    %v7698 = vrcp.pop %v7428
    %v7699 = vmul.f32 %v7428, %v7698
    %v7700 = vsub.f32 1.0, %v7699
    %v7701 = vmul.f32 %v7698, %v7700
    %v7702 = vadd.f32 %v7698, %v7701
    %vm7703 = vweird.f32 %v7428
    %vm7704 = vweird.f32 %v7698
    %vm7705 = vmor %vm7703, %vm7704
    %v7706 = vsel %vm7705, %v7698, %v7702
    %v7707 = vand.u32 2147483647, %v7428
    %vm7708 = vcmp.eq.f32.partialorder %v7707, 8.507059e+37
    %v7709 = vand.u32 %v7428, 2147483648
    %v7710 = vor.u32 1.1754944e-38, %v7709
    %v7711 = vsel %vm7708, %v7710, %v7706
    %v7712 = vmul.f32 1.0, %v7711
    %v7713 = vrcp.pop %v7429
    %v7714 = vmul.f32 %v7429, %v7713
    %v7715 = vsub.f32 1.0, %v7714
    %v7716 = vmul.f32 %v7713, %v7715
    %v7717 = vadd.f32 %v7713, %v7716
    %vm7718 = vweird.f32 %v7429
    %vm7719 = vweird.f32 %v7713
    %vm7720 = vmor %vm7718, %vm7719
    %v7721 = vsel %vm7720, %v7713, %v7717
    %v7722 = vand.u32 2147483647, %v7429
    %vm7723 = vcmp.eq.f32.partialorder %v7722, 8.507059e+37
    %v7724 = vand.u32 %v7429, 2147483648
    %v7725 = vor.u32 1.1754944e-38, %v7724
    %v7726 = vsel %vm7723, %v7725, %v7721
    %v7727 = vmul.f32 1.0, %v7726
    %v7728 = vrcp.pop %v7430
    %v7729 = vmul.f32 %v7430, %v7728
    %v7730 = vsub.f32 1.0, %v7729
    %v7731 = vmul.f32 %v7728, %v7730
    %v7732 = vadd.f32 %v7728, %v7731
    %vm7733 = vweird.f32 %v7430
    %vm7734 = vweird.f32 %v7728
    %vm7735 = vmor %vm7733, %vm7734
    %v7736 = vsel %vm7735, %v7728, %v7732
    %v7737 = vand.u32 2147483647, %v7430
    %vm7738 = vcmp.eq.f32.partialorder %v7737, 8.507059e+37
    %v7739 = vand.u32 %v7430, 2147483648
    %v7740 = vor.u32 1.1754944e-38, %v7739
    %v7741 = vsel %vm7738, %v7740, %v7736
    %v7742 = vmul.f32 1.0, %v7741
    %v7743 = vrcp.pop %v7431
    %v7744 = vmul.f32 %v7431, %v7743
    %v7745 = vsub.f32 1.0, %v7744
    %v7746 = vmul.f32 %v7743, %v7745
    %v7747 = vadd.f32 %v7743, %v7746
    %vm7748 = vweird.f32 %v7431
    %vm7749 = vweird.f32 %v7743
    %vm7750 = vmor %vm7748, %vm7749
    %v7751 = vsel %vm7750, %v7743, %v7747
    %v7752 = vand.u32 2147483647, %v7431
    %vm7753 = vcmp.eq.f32.partialorder %v7752, 8.507059e+37
    %v7754 = vand.u32 %v7431, 2147483648
    %v7755 = vor.u32 1.1754944e-38, %v7754
    %v7756 = vsel %vm7753, %v7755, %v7751
    %v7757 = vmul.f32 1.0, %v7756
    %v7758 = vrcp.pop %v7432
    %v7759 = vmul.f32 %v7432, %v7758
    %v7760 = vsub.f32 1.0, %v7759
    %v7761 = vmul.f32 %v7758, %v7760
    %v7762 = vadd.f32 %v7758, %v7761
    %vm7763 = vweird.f32 %v7432
    %vm7764 = vweird.f32 %v7758
    %vm7765 = vmor %vm7763, %vm7764
    %v7766 = vsel %vm7765, %v7758, %v7762
    %v7767 = vand.u32 2147483647, %v7432
    %vm7768 = vcmp.eq.f32.partialorder %v7767, 8.507059e+37
    %v7769 = vand.u32 %v7432, 2147483648
    %v7770 = vor.u32 1.1754944e-38, %v7769
    %v7771 = vsel %vm7768, %v7770, %v7766
    %v7772 = vmul.f32 1.0, %v7771
    %v7773 = vrcp.pop %v7433
    %v7774 = vmul.f32 %v7433, %v7773
    %v7775 = vsub.f32 1.0, %v7774
    %v7776 = vmul.f32 %v7773, %v7775
    %v7777 = vadd.f32 %v7773, %v7776
    %vm7778 = vweird.f32 %v7433
    %vm7779 = vweird.f32 %v7773
    %vm7780 = vmor %vm7778, %vm7779
    %v7781 = vsel %vm7780, %v7773, %v7777
    %v7782 = vand.u32 2147483647, %v7433
    %vm7783 = vcmp.eq.f32.partialorder %v7782, 8.507059e+37
    %v7784 = vand.u32 %v7433, 2147483648
    %v7785 = vor.u32 1.1754944e-38, %v7784
    %v7786 = vsel %vm7783, %v7785, %v7781
    %v7787 = vmul.f32 1.0, %v7786
    %v7788 = vrcp.pop %v7434
    %v7789 = vmul.f32 %v7434, %v7788
    %v7790 = vsub.f32 1.0, %v7789
    %v7791 = vmul.f32 %v7788, %v7790
    %v7792 = vadd.f32 %v7788, %v7791
    %vm7793 = vweird.f32 %v7434
    %vm7794 = vweird.f32 %v7788
    %vm7795 = vmor %vm7793, %vm7794
    %v7796 = vsel %vm7795, %v7788, %v7792
    %v7797 = vand.u32 2147483647, %v7434
    %vm7798 = vcmp.eq.f32.partialorder %v7797, 8.507059e+37
    %v7799 = vand.u32 %v7434, 2147483648
    %v7800 = vor.u32 1.1754944e-38, %v7799
    %v7801 = vsel %vm7798, %v7800, %v7796
    %v7802 = vmul.f32 1.0, %v7801
    %v7803 = vrcp.pop %v7435
    %v7804 = vmul.f32 %v7435, %v7803
    %v7805 = vsub.f32 1.0, %v7804
    %v7806 = vmul.f32 %v7803, %v7805
    %v7807 = vadd.f32 %v7803, %v7806
    %vm7808 = vweird.f32 %v7435
    %vm7809 = vweird.f32 %v7803
    %vm7810 = vmor %vm7808, %vm7809
    %v7811 = vsel %vm7810, %v7803, %v7807
    %v7812 = vand.u32 2147483647, %v7435
    %vm7813 = vcmp.eq.f32.partialorder %v7812, 8.507059e+37
    %v7814 = vand.u32 %v7435, 2147483648
    %v7815 = vor.u32 1.1754944e-38, %v7814
    %v7816 = vsel %vm7813, %v7815, %v7811
    %v7817 = vmul.f32 1.0, %v7816
    %v7818 = vrcp.pop %v7436
    %v7819 = vmul.f32 %v7436, %v7818
    %v7820 = vsub.f32 1.0, %v7819
    %v7821 = vmul.f32 %v7818, %v7820
    %v7822 = vadd.f32 %v7818, %v7821
    %vm7823 = vweird.f32 %v7436
    %vm7824 = vweird.f32 %v7818
    %vm7825 = vmor %vm7823, %vm7824
    %v7826 = vsel %vm7825, %v7818, %v7822
    %v7827 = vand.u32 2147483647, %v7436
    %vm7828 = vcmp.eq.f32.partialorder %v7827, 8.507059e+37
    %v7829 = vand.u32 %v7436, 2147483648
    %v7830 = vor.u32 1.1754944e-38, %v7829
    %v7831 = vsel %vm7828, %v7830, %v7826
    %v7832 = vmul.f32 1.0, %v7831
    %v7833 = vrcp.pop %v7437
    %v7834 = vmul.f32 %v7437, %v7833
    %v7835 = vsub.f32 1.0, %v7834
    %v7836 = vmul.f32 %v7833, %v7835
    %v7837 = vadd.f32 %v7833, %v7836
    %vm7838 = vweird.f32 %v7437
    %vm7839 = vweird.f32 %v7833
    %vm7840 = vmor %vm7838, %vm7839
    %v7841 = vsel %vm7840, %v7833, %v7837
    %v7842 = vand.u32 2147483647, %v7437
    %vm7843 = vcmp.eq.f32.partialorder %v7842, 8.507059e+37
    %v7844 = vand.u32 %v7437, 2147483648
    %v7845 = vor.u32 1.1754944e-38, %v7844
    %v7846 = vsel %vm7843, %v7845, %v7841
    %v7847 = vmul.f32 1.0, %v7846
    %v7848 = vrcp.pop %v7438
    %v7849 = vmul.f32 %v7438, %v7848
    %v7850 = vsub.f32 1.0, %v7849
    %v7851 = vmul.f32 %v7848, %v7850
    %v7852 = vadd.f32 %v7848, %v7851
    %vm7853 = vweird.f32 %v7438
    %vm7854 = vweird.f32 %v7848
    %vm7855 = vmor %vm7853, %vm7854
    %v7856 = vsel %vm7855, %v7848, %v7852
    %v7857 = vand.u32 2147483647, %v7438
    %vm7858 = vcmp.eq.f32.partialorder %v7857, 8.507059e+37
    %v7859 = vand.u32 %v7438, 2147483648
    %v7860 = vor.u32 1.1754944e-38, %v7859
    %v7861 = vsel %vm7858, %v7860, %v7856
    %v7862 = vmul.f32 1.0, %v7861
    %v7863 = vrcp.pop %v7439
    %v7864 = vmul.f32 %v7439, %v7863
    %v7865 = vsub.f32 1.0, %v7864
    %v7866 = vmul.f32 %v7863, %v7865
    %v7867 = vadd.f32 %v7863, %v7866
    %vm7868 = vweird.f32 %v7439
    %vm7869 = vweird.f32 %v7863
    %vm7870 = vmor %vm7868, %vm7869
    %v7871 = vsel %vm7870, %v7863, %v7867
    %v7872 = vand.u32 2147483647, %v7439
    %vm7873 = vcmp.eq.f32.partialorder %v7872, 8.507059e+37
    %v7874 = vand.u32 %v7439, 2147483648
    %v7875 = vor.u32 1.1754944e-38, %v7874
    %v7876 = vsel %vm7873, %v7875, %v7871
    %v7877 = vmul.f32 1.0, %v7876
    %v7878 = vrcp.pop %v7440
    %v7879 = vmul.f32 %v7440, %v7878
    %v7880 = vsub.f32 1.0, %v7879
    %v7881 = vmul.f32 %v7878, %v7880
    %v7882 = vadd.f32 %v7878, %v7881
    %vm7883 = vweird.f32 %v7440
    %vm7884 = vweird.f32 %v7878
    %vm7885 = vmor %vm7883, %vm7884
    %v7886 = vsel %vm7885, %v7878, %v7882
    %v7887 = vand.u32 2147483647, %v7440
    %vm7888 = vcmp.eq.f32.partialorder %v7887, 8.507059e+37
    %v7889 = vand.u32 %v7440, 2147483648
    %v7890 = vor.u32 1.1754944e-38, %v7889
    %v7891 = vsel %vm7888, %v7890, %v7886
    %v7892 = vmul.f32 1.0, %v7891
    %v7893 = vrcp.pop %v7441
    %v7894 = vmul.f32 %v7441, %v7893
    %v7895 = vsub.f32 1.0, %v7894
    %v7896 = vmul.f32 %v7893, %v7895
    %v7897 = vadd.f32 %v7893, %v7896
    %vm7898 = vweird.f32 %v7441
    %vm7899 = vweird.f32 %v7893
    %vm7900 = vmor %vm7898, %vm7899
    %v7901 = vsel %vm7900, %v7893, %v7897
    %v7902 = vand.u32 2147483647, %v7441
    %vm7903 = vcmp.eq.f32.partialorder %v7902, 8.507059e+37
    %v7904 = vand.u32 %v7441, 2147483648
    %v7905 = vor.u32 1.1754944e-38, %v7904
    %v7906 = vsel %vm7903, %v7905, %v7901
    %v7907 = vmul.f32 1.0, %v7906
    %v7908 = vrcp.pop %v7442
    %v7909 = vmul.f32 %v7442, %v7908
    %v7910 = vsub.f32 1.0, %v7909
    %v7911 = vmul.f32 %v7908, %v7910
    %v7912 = vadd.f32 %v7908, %v7911
    %vm7913 = vweird.f32 %v7442
    %vm7914 = vweird.f32 %v7908
    %vm7915 = vmor %vm7913, %vm7914
    %v7916 = vsel %vm7915, %v7908, %v7912
    %v7917 = vand.u32 2147483647, %v7442
    %vm7918 = vcmp.eq.f32.partialorder %v7917, 8.507059e+37
    %v7919 = vand.u32 %v7442, 2147483648
    %v7920 = vor.u32 1.1754944e-38, %v7919
    %v7921 = vsel %vm7918, %v7920, %v7916
    %v7922 = vmul.f32 1.0, %v7921
    %v7923 = vmul.f32 %v7219, %v7457
    %v7924 = vmul.f32 %v7220, %v7472
    %v7925 = vmul.f32 %v7221, %v7487
    %v7926 = vmul.f32 %v7222, %v7502
    %v7927 = vmul.f32 %v7223, %v7517
    %v7928 = vmul.f32 %v7224, %v7532
    %v7929 = vmul.f32 %v7225, %v7547
    %v7930 = vmul.f32 %v7226, %v7562
    %v7931 = vmul.f32 %v7227, %v7577
    %v7932 = vmul.f32 %v7228, %v7592
    %v7933 = vmul.f32 %v7229, %v7607
    %v7934 = vmul.f32 %v7230, %v7622
    %v7935 = vmul.f32 %v7231, %v7637
    %v7936 = vmul.f32 %v7232, %v7652
    %v7937 = vmul.f32 %v7233, %v7667
    %v7938 = vmul.f32 %v7234, %v7682
    %v7939 = vmul.f32 %v7235, %v7697
    %v7940 = vmul.f32 %v7236, %v7712
    %v7941 = vmul.f32 %v7237, %v7727
    %v7942 = vmul.f32 %v7238, %v7742
    %v7943 = vmul.f32 %v7239, %v7757
    %v7944 = vmul.f32 %v7240, %v7772
    %v7945 = vmul.f32 %v7241, %v7787
    %v7946 = vmul.f32 %v7242, %v7802
    %v7947 = vmul.f32 %v7243, %v7817
    %v7948 = vmul.f32 %v7244, %v7832
    %v7949 = vmul.f32 %v7245, %v7847
    %v7950 = vmul.f32 %v7246, %v7862
    %v7951 = vmul.f32 %v7247, %v7877
    %v7952 = vmul.f32 %v7248, %v7892
    %v7953 = vmul.f32 %v7249, %v7907
    %v7954 = vmul.f32 %v7250, %v7922
    %s7955 = scalar_lea.vmem %s8, 384
    %v7956 = vld [vmem:[%s7955] sm:$0xff]
    %v7957 = vld [vmem:[%s7955 + $0x8] sm:$0xff]
    %v7958 = vld [vmem:[%s7955 + $0x10] sm:$0xff]
    %v7959 = vld [vmem:[%s7955 + $0x18] sm:$0xff]
    %v7960 = vld [vmem:[%s7955 + $0x20] sm:$0xff]
    %v7961 = vld [vmem:[%s7955 + $0x28] sm:$0xff]
    %v7962 = vld [vmem:[%s7955 + $0x30] sm:$0xff]
    %v7963 = vld [vmem:[%s7955 + $0x38] sm:$0xff]
    %v7964 = vld [vmem:[%s7955 + $0x40] sm:$0xff]
    %v7965 = vld [vmem:[%s7955 + $0x48] sm:$0xff]
    %v7966 = vld [vmem:[%s7955 + $0x50] sm:$0xff]
    %v7967 = vld [vmem:[%s7955 + $0x58] sm:$0xff]
    %v7968 = vld [vmem:[%s7955 + $0x60] sm:$0xff]
    %v7969 = vld [vmem:[%s7955 + $0x68] sm:$0xff]
    %v7970 = vld [vmem:[%s7955 + $0x70] sm:$0xff]
    %v7971 = vld [vmem:[%s7955 + $0x78] sm:$0xff]
    %s7972 = scalar_lea.vmem %s9, 3
    %v7973 = vld [vmem:[%s7972] sm:$0x1]
    %v7975 = vperm.slane %v7973, 0
    %7977 = vmatpush.msra.mxu0 %v7971
    %7978 = vmatpush.msra.mxu0 %v7970
    %7979 = vmatpush.msra.mxu0 %v7969
    %7980 = vmatpush.msra.mxu0 %v7968
    %7981 = vmatpush.msra.mxu0 %v7967
    %7982 = vmatpush.msra.mxu0 %v7966
    %7983 = vmatpush.msra.mxu0 %v7965
    %7984 = vmatpush.msra.mxu0 %v7964
    %7985 = vmatpush.msra.mxu0 %v7963
    %7986 = vmatpush.msra.mxu0 %v7962
    %7987 = vmatpush.msra.mxu0 %v7961
    %7988 = vmatpush.msra.mxu0 %v7960
    %7989 = vmatpush.msra.mxu0 %v7959
    %7990 = vmatpush.msra.mxu0 %v7958
    %7991 = vmatpush.msra.mxu0 %v7957
    %7992 = vmatpush.msra.mxu0 %v7956
    %7993 = vmatmul.f32.gmra.mxu0 %v7923
    %v7994 = vpop.f32.mrf.mxu0
    %v7995 = vadd.f32 %v7975, %v7994
    %7996 = vmatmul.f32.gmra.mxu0 %v7924
    %v7997 = vpop.f32.mrf.mxu0
    %v7998 = vadd.f32 %v7975, %v7997
    %7999 = vmatmul.f32.gmra.mxu0 %v7925
    %v8000 = vpop.f32.mrf.mxu0
    %v8001 = vadd.f32 %v7975, %v8000
    %8002 = vmatmul.f32.gmra.mxu0 %v7926
    %v8003 = vpop.f32.mrf.mxu0
    %v8004 = vadd.f32 %v7975, %v8003
    %8005 = vmatmul.f32.gmra.mxu0 %v7927
    %v8006 = vpop.f32.mrf.mxu0
    %v8007 = vadd.f32 %v7975, %v8006
    %8008 = vmatmul.f32.gmra.mxu0 %v7928
    %v8009 = vpop.f32.mrf.mxu0
    %v8010 = vadd.f32 %v7975, %v8009
    %8011 = vmatmul.f32.gmra.mxu0 %v7929
    %v8012 = vpop.f32.mrf.mxu0
    %v8013 = vadd.f32 %v7975, %v8012
    %8014 = vmatmul.f32.gmra.mxu0 %v7930
    %v8015 = vpop.f32.mrf.mxu0
    %v8016 = vadd.f32 %v7975, %v8015
    %8017 = vmatmul.f32.gmra.mxu0 %v7931
    %v8018 = vpop.f32.mrf.mxu0
    %v8019 = vadd.f32 %v7975, %v8018
    %8020 = vmatmul.f32.gmra.mxu0 %v7932
    %v8021 = vpop.f32.mrf.mxu0
    %v8022 = vadd.f32 %v7975, %v8021
    %8023 = vmatmul.f32.gmra.mxu0 %v7933
    %v8024 = vpop.f32.mrf.mxu0
    %v8025 = vadd.f32 %v7975, %v8024
    %8026 = vmatmul.f32.gmra.mxu0 %v7934
    %v8027 = vpop.f32.mrf.mxu0
    %v8028 = vadd.f32 %v7975, %v8027
    %8029 = vmatmul.f32.gmra.mxu0 %v7935
    %v8030 = vpop.f32.mrf.mxu0
    %v8031 = vadd.f32 %v7975, %v8030
    %8032 = vmatmul.f32.gmra.mxu0 %v7936
    %v8033 = vpop.f32.mrf.mxu0
    %v8034 = vadd.f32 %v7975, %v8033
    %8035 = vmatmul.f32.gmra.mxu0 %v7937
    %v8036 = vpop.f32.mrf.mxu0
    %v8037 = vadd.f32 %v7975, %v8036
    %8038 = vmatmul.f32.gmra.mxu0 %v7938
    %v8039 = vpop.f32.mrf.mxu0
    %v8040 = vadd.f32 %v7975, %v8039
    %8041 = vmatmul.f32.gmra.mxu0 %v7939
    %v8042 = vpop.f32.mrf.mxu0
    %v8043 = vadd.f32 %v7975, %v8042
    %8044 = vmatmul.f32.gmra.mxu0 %v7940
    %v8045 = vpop.f32.mrf.mxu0
    %v8046 = vadd.f32 %v7975, %v8045
    %8047 = vmatmul.f32.gmra.mxu0 %v7941
    %v8048 = vpop.f32.mrf.mxu0
    %v8049 = vadd.f32 %v7975, %v8048
    %8050 = vmatmul.f32.gmra.mxu0 %v7942
    %v8051 = vpop.f32.mrf.mxu0
    %v8052 = vadd.f32 %v7975, %v8051
    %8053 = vmatmul.f32.gmra.mxu0 %v7943
    %v8054 = vpop.f32.mrf.mxu0
    %v8055 = vadd.f32 %v7975, %v8054
    %8056 = vmatmul.f32.gmra.mxu0 %v7944
    %v8057 = vpop.f32.mrf.mxu0
    %v8058 = vadd.f32 %v7975, %v8057
    %8059 = vmatmul.f32.gmra.mxu0 %v7945
    %v8060 = vpop.f32.mrf.mxu0
    %v8061 = vadd.f32 %v7975, %v8060
    %8062 = vmatmul.f32.gmra.mxu0 %v7946
    %v8063 = vpop.f32.mrf.mxu0
    %v8064 = vadd.f32 %v7975, %v8063
    %8065 = vmatmul.f32.gmra.mxu0 %v7947
    %v8066 = vpop.f32.mrf.mxu0
    %v8067 = vadd.f32 %v7975, %v8066
    %8068 = vmatmul.f32.gmra.mxu0 %v7948
    %v8069 = vpop.f32.mrf.mxu0
    %v8070 = vadd.f32 %v7975, %v8069
    %8071 = vmatmul.f32.gmra.mxu0 %v7949
    %v8072 = vpop.f32.mrf.mxu0
    %v8073 = vadd.f32 %v7975, %v8072
    %8074 = vmatmul.f32.gmra.mxu0 %v7950
    %v8075 = vpop.f32.mrf.mxu0
    %v8076 = vadd.f32 %v7975, %v8075
    %8077 = vmatmul.f32.gmra.mxu0 %v7951
    %v8078 = vpop.f32.mrf.mxu0
    %v8079 = vadd.f32 %v7975, %v8078
    %8080 = vmatmul.f32.gmra.mxu0 %v7952
    %v8081 = vpop.f32.mrf.mxu0
    %v8082 = vadd.f32 %v7975, %v8081
    %8083 = vmatmul.f32.gmra.mxu0 %v7953
    %v8084 = vpop.f32.mrf.mxu0
    %v8085 = vadd.f32 %v7975, %v8084
    %8086 = vmatmul.f32.gmra.mxu0 %v7954
    %v8087 = vpop.f32.mrf.mxu0
    %v8088 = vadd.f32 %v7975, %v8087
    %8089 = vdwg.mxu0
    %v8090 = vadd.f32 %v6320, %v7995
    %v8091 = vadd.f32 %v6321, %v7998
    %v8092 = vadd.f32 %v6322, %v8001
    %v8093 = vadd.f32 %v6323, %v8004
    %v8094 = vadd.f32 %v6324, %v8007
    %v8095 = vadd.f32 %v6325, %v8010
    %v8096 = vadd.f32 %v6326, %v8013
    %v8097 = vadd.f32 %v6327, %v8016
    %v8098 = vadd.f32 %v6328, %v8019
    %v8099 = vadd.f32 %v6329, %v8022
    %v8100 = vadd.f32 %v6330, %v8025
    %v8101 = vadd.f32 %v6331, %v8028
    %v8102 = vadd.f32 %v6332, %v8031
    %v8103 = vadd.f32 %v6333, %v8034
    %v8104 = vadd.f32 %v6334, %v8037
    %v8105 = vadd.f32 %v6335, %v8040
    %v8106 = vadd.f32 %v6336, %v8043
    %v8107 = vadd.f32 %v6337, %v8046
    %v8108 = vadd.f32 %v6338, %v8049
    %v8109 = vadd.f32 %v6339, %v8052
    %v8110 = vadd.f32 %v6340, %v8055
    %v8111 = vadd.f32 %v6341, %v8058
    %v8112 = vadd.f32 %v6342, %v8061
    %v8113 = vadd.f32 %v6343, %v8064
    %v8114 = vadd.f32 %v6344, %v8067
    %v8115 = vadd.f32 %v6345, %v8070
    %v8116 = vadd.f32 %v6346, %v8073
    %v8117 = vadd.f32 %v6347, %v8076
    %v8118 = vadd.f32 %v6348, %v8079
    %v8119 = vadd.f32 %v6349, %v8082
    %v8120 = vadd.f32 %v6350, %v8085
    %v8121 = vadd.f32 %v6351, %v8088
    %v8122 = vmul.f32 %v8090, %v70
    %v8123 = vmul.f32 %v8091, %v70
    %v8124 = vmul.f32 %v8092, %v70
    %v8125 = vmul.f32 %v8093, %v70
    %v8126 = vmul.f32 %v8094, %v70
    %v8127 = vmul.f32 %v8095, %v70
    %v8128 = vmul.f32 %v8096, %v70
    %v8129 = vmul.f32 %v8097, %v70
    %v8130 = vmul.f32 %v8098, %v70
    %v8131 = vmul.f32 %v8099, %v70
    %v8132 = vmul.f32 %v8100, %v70
    %v8133 = vmul.f32 %v8101, %v70
    %v8134 = vmul.f32 %v8102, %v70
    %v8135 = vmul.f32 %v8103, %v70
    %v8136 = vmul.f32 %v8104, %v70
    %v8137 = vmul.f32 %v8105, %v70
    %v8138 = vmul.f32 %v8106, %v70
    %v8139 = vmul.f32 %v8107, %v70
    %v8140 = vmul.f32 %v8108, %v70
    %v8141 = vmul.f32 %v8109, %v70
    %v8142 = vmul.f32 %v8110, %v70
    %v8143 = vmul.f32 %v8111, %v70
    %v8144 = vmul.f32 %v8112, %v70
    %v8145 = vmul.f32 %v8113, %v70
    %v8146 = vmul.f32 %v8114, %v70
    %v8147 = vmul.f32 %v8115, %v70
    %v8148 = vmul.f32 %v8116, %v70
    %v8149 = vmul.f32 %v8117, %v70
    %v8150 = vmul.f32 %v8118, %v70
    %v8151 = vmul.f32 %v8119, %v70
    %v8152 = vmul.f32 %v8120, %v70
    %v8153 = vmul.f32 %v8121, %v70
    %v8154 = vsel %vm69, 1.0, 0.5
    %v8155 = vmul.f32 %v8122, %v8154
    %v8156 = vmul.f32 %v8123, %v8154
    %v8157 = vmul.f32 %v8124, %v8154
    %v8158 = vmul.f32 %v8125, %v8154
    %v8159 = vmul.f32 %v8126, %v8154
    %v8160 = vmul.f32 %v8127, %v8154
    %v8161 = vmul.f32 %v8128, %v8154
    %v8162 = vmul.f32 %v8129, %v8154
    %v8163 = vmul.f32 %v8130, %v8154
    %v8164 = vmul.f32 %v8131, %v8154
    %v8165 = vmul.f32 %v8132, %v8154
    %v8166 = vmul.f32 %v8133, %v8154
    %v8167 = vmul.f32 %v8134, %v8154
    %v8168 = vmul.f32 %v8135, %v8154
    %v8169 = vmul.f32 %v8136, %v8154
    %v8170 = vmul.f32 %v8137, %v8154
    %v8171 = vmul.f32 %v8138, %v8154
    %v8172 = vmul.f32 %v8139, %v8154
    %v8173 = vmul.f32 %v8140, %v8154
    %v8174 = vmul.f32 %v8141, %v8154
    %v8175 = vmul.f32 %v8142, %v8154
    %v8176 = vmul.f32 %v8143, %v8154
    %v8177 = vmul.f32 %v8144, %v8154
    %v8178 = vmul.f32 %v8145, %v8154
    %v8179 = vmul.f32 %v8146, %v8154
    %v8180 = vmul.f32 %v8147, %v8154
    %v8181 = vmul.f32 %v8148, %v8154
    %v8182 = vmul.f32 %v8149, %v8154
    %v8183 = vmul.f32 %v8150, %v8154
    %v8184 = vmul.f32 %v8151, %v8154
    %v8185 = vmul.f32 %v8152, %v8154
    %v8186 = vmul.f32 %v8153, %v8154
    %8187 = vst [vmem:[%s15] sm:$0xff] %v8155
    %8188 = vst [vmem:[%s15 + $0x8] sm:$0xff] %v8156
    %8189 = vst [vmem:[%s15 + $0x10] sm:$0xff] %v8157
    %8190 = vst [vmem:[%s15 + $0x18] sm:$0xff] %v8158
    %8191 = vst [vmem:[%s15 + $0x20] sm:$0xff] %v8159
    %8192 = vst [vmem:[%s15 + $0x28] sm:$0xff] %v8160
    %8193 = vst [vmem:[%s15 + $0x30] sm:$0xff] %v8161
    %8194 = vst [vmem:[%s15 + $0x38] sm:$0xff] %v8162
    %8195 = vst [vmem:[%s15 + $0x40] sm:$0xff] %v8163
    %8196 = vst [vmem:[%s15 + $0x48] sm:$0xff] %v8164
    %8197 = vst [vmem:[%s15 + $0x50] sm:$0xff] %v8165
    %8198 = vst [vmem:[%s15 + $0x58] sm:$0xff] %v8166
    %8199 = vst [vmem:[%s15 + $0x60] sm:$0xff] %v8167
    %8200 = vst [vmem:[%s15 + $0x68] sm:$0xff] %v8168
    %8201 = vst [vmem:[%s15 + $0x70] sm:$0xff] %v8169
    %8202 = vst [vmem:[%s15 + $0x78] sm:$0xff] %v8170
    %8203 = vst [vmem:[%s15 + $0x80] sm:$0xff] %v8171
    %8204 = vst [vmem:[%s15 + $0x88] sm:$0xff] %v8172
    %8205 = vst [vmem:[%s15 + $0x90] sm:$0xff] %v8173
    %8206 = vst [vmem:[%s15 + $0x98] sm:$0xff] %v8174
    %8207 = vst [vmem:[%s15 + $0xa0] sm:$0xff] %v8175
    %8208 = vst [vmem:[%s15 + $0xa8] sm:$0xff] %v8176
    %8209 = vst [vmem:[%s15 + $0xb0] sm:$0xff] %v8177
    %8210 = vst [vmem:[%s15 + $0xb8] sm:$0xff] %v8178
    %8211 = vst [vmem:[%s15 + $0xc0] sm:$0xff] %v8179
    %8212 = vst [vmem:[%s15 + $0xc8] sm:$0xff] %v8180
    %8213 = vst [vmem:[%s15 + $0xd0] sm:$0xff] %v8181
    %8214 = vst [vmem:[%s15 + $0xd8] sm:$0xff] %v8182
    %8215 = vst [vmem:[%s15 + $0xe0] sm:$0xff] %v8183
    %8216 = vst [vmem:[%s15 + $0xe8] sm:$0xff] %v8184
    %8217 = vst [vmem:[%s15 + $0xf0] sm:$0xff] %v8185
    %8218 = vst [vmem:[%s15 + $0xf8] sm:$0xff] %v8186
    %v8219 = vld [vmem:[%s10] sm:$0xff]
    %v8220 = vld [vmem:[%s10 + $0x8] sm:$0xff]
    %v8221 = vld [vmem:[%s10 + $0x10] sm:$0xff]
    %v8222 = vld [vmem:[%s10 + $0x18] sm:$0xff]
    %v8223 = vld [vmem:[%s10 + $0x20] sm:$0xff]
    %v8224 = vld [vmem:[%s10 + $0x28] sm:$0xff]
    %v8225 = vld [vmem:[%s10 + $0x30] sm:$0xff]
    %v8226 = vld [vmem:[%s10 + $0x38] sm:$0xff]
    %v8227 = vld [vmem:[%s10 + $0x40] sm:$0xff]
    %v8228 = vld [vmem:[%s10 + $0x48] sm:$0xff]
    %v8229 = vld [vmem:[%s10 + $0x50] sm:$0xff]
    %v8230 = vld [vmem:[%s10 + $0x58] sm:$0xff]
    %v8231 = vld [vmem:[%s10 + $0x60] sm:$0xff]
    %v8232 = vld [vmem:[%s10 + $0x68] sm:$0xff]
    %v8233 = vld [vmem:[%s10 + $0x70] sm:$0xff]
    %v8234 = vld [vmem:[%s10 + $0x78] sm:$0xff]
    %v8235 = vld [vmem:[%s11] sm:$0x1]
    %v8237 = vperm.slane %v8235, 0
    %8239 = vmatpush.msra.mxu0 %v8234
    %8240 = vmatpush.msra.mxu0 %v8233
    %8241 = vmatpush.msra.mxu0 %v8232
    %8242 = vmatpush.msra.mxu0 %v8231
    %8243 = vmatpush.msra.mxu0 %v8230
    %8244 = vmatpush.msra.mxu0 %v8229
    %8245 = vmatpush.msra.mxu0 %v8228
    %8246 = vmatpush.msra.mxu0 %v8227
    %8247 = vmatpush.msra.mxu0 %v8226
    %8248 = vmatpush.msra.mxu0 %v8225
    %8249 = vmatpush.msra.mxu0 %v8224
    %8250 = vmatpush.msra.mxu0 %v8223
    %8251 = vmatpush.msra.mxu0 %v8222
    %8252 = vmatpush.msra.mxu0 %v8221
    %8253 = vmatpush.msra.mxu0 %v8220
    %8254 = vmatpush.msra.mxu0 %v8219
    %8255 = vmatmul.f32.gmra.mxu0 %v8155
    %v8256 = vpop.f32.mrf.mxu0
    %v8257 = vadd.f32 %v8237, %v8256
    %8258 = vmatmul.f32.gmra.mxu0 %v8156
    %v8259 = vpop.f32.mrf.mxu0
    %v8260 = vadd.f32 %v8237, %v8259
    %8261 = vmatmul.f32.gmra.mxu0 %v8157
    %v8262 = vpop.f32.mrf.mxu0
    %v8263 = vadd.f32 %v8237, %v8262
    %8264 = vmatmul.f32.gmra.mxu0 %v8158
    %v8265 = vpop.f32.mrf.mxu0
    %v8266 = vadd.f32 %v8237, %v8265
    %8267 = vmatmul.f32.gmra.mxu0 %v8159
    %v8268 = vpop.f32.mrf.mxu0
    %v8269 = vadd.f32 %v8237, %v8268
    %8270 = vmatmul.f32.gmra.mxu0 %v8160
    %v8271 = vpop.f32.mrf.mxu0
    %v8272 = vadd.f32 %v8237, %v8271
    %8273 = vmatmul.f32.gmra.mxu0 %v8161
    %v8274 = vpop.f32.mrf.mxu0
    %v8275 = vadd.f32 %v8237, %v8274
    %8276 = vmatmul.f32.gmra.mxu0 %v8162
    %v8277 = vpop.f32.mrf.mxu0
    %v8278 = vadd.f32 %v8237, %v8277
    %8279 = vmatmul.f32.gmra.mxu0 %v8163
    %v8280 = vpop.f32.mrf.mxu0
    %v8281 = vadd.f32 %v8237, %v8280
    %8282 = vmatmul.f32.gmra.mxu0 %v8164
    %v8283 = vpop.f32.mrf.mxu0
    %v8284 = vadd.f32 %v8237, %v8283
    %8285 = vmatmul.f32.gmra.mxu0 %v8165
    %v8286 = vpop.f32.mrf.mxu0
    %v8287 = vadd.f32 %v8237, %v8286
    %8288 = vmatmul.f32.gmra.mxu0 %v8166
    %v8289 = vpop.f32.mrf.mxu0
    %v8290 = vadd.f32 %v8237, %v8289
    %8291 = vmatmul.f32.gmra.mxu0 %v8167
    %v8292 = vpop.f32.mrf.mxu0
    %v8293 = vadd.f32 %v8237, %v8292
    %8294 = vmatmul.f32.gmra.mxu0 %v8168
    %v8295 = vpop.f32.mrf.mxu0
    %v8296 = vadd.f32 %v8237, %v8295
    %8297 = vmatmul.f32.gmra.mxu0 %v8169
    %v8298 = vpop.f32.mrf.mxu0
    %v8299 = vadd.f32 %v8237, %v8298
    %8300 = vmatmul.f32.gmra.mxu0 %v8170
    %v8301 = vpop.f32.mrf.mxu0
    %v8302 = vadd.f32 %v8237, %v8301
    %8303 = vmatmul.f32.gmra.mxu0 %v8171
    %v8304 = vpop.f32.mrf.mxu0
    %v8305 = vadd.f32 %v8237, %v8304
    %8306 = vmatmul.f32.gmra.mxu0 %v8172
    %v8307 = vpop.f32.mrf.mxu0
    %v8308 = vadd.f32 %v8237, %v8307
    %8309 = vmatmul.f32.gmra.mxu0 %v8173
    %v8310 = vpop.f32.mrf.mxu0
    %v8311 = vadd.f32 %v8237, %v8310
    %8312 = vmatmul.f32.gmra.mxu0 %v8174
    %v8313 = vpop.f32.mrf.mxu0
    %v8314 = vadd.f32 %v8237, %v8313
    %8315 = vmatmul.f32.gmra.mxu0 %v8175
    %v8316 = vpop.f32.mrf.mxu0
    %v8317 = vadd.f32 %v8237, %v8316
    %8318 = vmatmul.f32.gmra.mxu0 %v8176
    %v8319 = vpop.f32.mrf.mxu0
    %v8320 = vadd.f32 %v8237, %v8319
    %8321 = vmatmul.f32.gmra.mxu0 %v8177
    %v8322 = vpop.f32.mrf.mxu0
    %v8323 = vadd.f32 %v8237, %v8322
    %8324 = vmatmul.f32.gmra.mxu0 %v8178
    %v8325 = vpop.f32.mrf.mxu0
    %v8326 = vadd.f32 %v8237, %v8325
    %8327 = vmatmul.f32.gmra.mxu0 %v8179
    %v8328 = vpop.f32.mrf.mxu0
    %v8329 = vadd.f32 %v8237, %v8328
    %8330 = vmatmul.f32.gmra.mxu0 %v8180
    %v8331 = vpop.f32.mrf.mxu0
    %v8332 = vadd.f32 %v8237, %v8331
    %8333 = vmatmul.f32.gmra.mxu0 %v8181
    %v8334 = vpop.f32.mrf.mxu0
    %v8335 = vadd.f32 %v8237, %v8334
    %8336 = vmatmul.f32.gmra.mxu0 %v8182
    %v8337 = vpop.f32.mrf.mxu0
    %v8338 = vadd.f32 %v8237, %v8337
    %8339 = vmatmul.f32.gmra.mxu0 %v8183
    %v8340 = vpop.f32.mrf.mxu0
    %v8341 = vadd.f32 %v8237, %v8340
    %8342 = vmatmul.f32.gmra.mxu0 %v8184
    %v8343 = vpop.f32.mrf.mxu0
    %v8344 = vadd.f32 %v8237, %v8343
    %8345 = vmatmul.f32.gmra.mxu0 %v8185
    %v8346 = vpop.f32.mrf.mxu0
    %v8347 = vadd.f32 %v8237, %v8346
    %8348 = vmatmul.f32.gmra.mxu0 %v8186
    %v8349 = vpop.f32.mrf.mxu0
    %v8350 = vadd.f32 %v8237, %v8349
    %8351 = vdwg.mxu0
    %v8352 = vmax.f32 %v8257, 0.0
    %v8353 = vmax.f32 %v8260, 0.0
    %v8354 = vmax.f32 %v8263, 0.0
    %v8355 = vmax.f32 %v8266, 0.0
    %v8356 = vmax.f32 %v8269, 0.0
    %v8357 = vmax.f32 %v8272, 0.0
    %v8358 = vmax.f32 %v8275, 0.0
    %v8359 = vmax.f32 %v8278, 0.0
    %v8360 = vmax.f32 %v8281, 0.0
    %v8361 = vmax.f32 %v8284, 0.0
    %v8362 = vmax.f32 %v8287, 0.0
    %v8363 = vmax.f32 %v8290, 0.0
    %v8364 = vmax.f32 %v8293, 0.0
    %v8365 = vmax.f32 %v8296, 0.0
    %v8366 = vmax.f32 %v8299, 0.0
    %v8367 = vmax.f32 %v8302, 0.0
    %v8368 = vmax.f32 %v8305, 0.0
    %v8369 = vmax.f32 %v8308, 0.0
    %v8370 = vmax.f32 %v8311, 0.0
    %v8371 = vmax.f32 %v8314, 0.0
    %v8372 = vmax.f32 %v8317, 0.0
    %v8373 = vmax.f32 %v8320, 0.0
    %v8374 = vmax.f32 %v8323, 0.0
    %v8375 = vmax.f32 %v8326, 0.0
    %v8376 = vmax.f32 %v8329, 0.0
    %v8377 = vmax.f32 %v8332, 0.0
    %v8378 = vmax.f32 %v8335, 0.0
    %v8379 = vmax.f32 %v8338, 0.0
    %v8380 = vmax.f32 %v8341, 0.0
    %v8381 = vmax.f32 %v8344, 0.0
    %v8382 = vmax.f32 %v8347, 0.0
    %v8383 = vmax.f32 %v8350, 0.0
    %v8384 = vld [vmem:[%s12] sm:$0x1]
    %v8386 = vperm.slane %v8384, 0
    %v8388 = vmul.f32 %v8352, %v8386
    %v8389 = vmul.f32 %v8353, %v8386
    %v8390 = vmul.f32 %v8354, %v8386
    %v8391 = vmul.f32 %v8355, %v8386
    %v8392 = vmul.f32 %v8356, %v8386
    %v8393 = vmul.f32 %v8357, %v8386
    %v8394 = vmul.f32 %v8358, %v8386
    %v8395 = vmul.f32 %v8359, %v8386
    %v8396 = vmul.f32 %v8360, %v8386
    %v8397 = vmul.f32 %v8361, %v8386
    %v8398 = vmul.f32 %v8362, %v8386
    %v8399 = vmul.f32 %v8363, %v8386
    %v8400 = vmul.f32 %v8364, %v8386
    %v8401 = vmul.f32 %v8365, %v8386
    %v8402 = vmul.f32 %v8366, %v8386
    %v8403 = vmul.f32 %v8367, %v8386
    %v8404 = vmul.f32 %v8368, %v8386
    %v8405 = vmul.f32 %v8369, %v8386
    %v8406 = vmul.f32 %v8370, %v8386
    %v8407 = vmul.f32 %v8371, %v8386
    %v8408 = vmul.f32 %v8372, %v8386
    %v8409 = vmul.f32 %v8373, %v8386
    %v8410 = vmul.f32 %v8374, %v8386
    %v8411 = vmul.f32 %v8375, %v8386
    %v8412 = vmul.f32 %v8376, %v8386
    %v8413 = vmul.f32 %v8377, %v8386
    %v8414 = vmul.f32 %v8378, %v8386
    %v8415 = vmul.f32 %v8379, %v8386
    %v8416 = vmul.f32 %v8380, %v8386
    %v8417 = vmul.f32 %v8381, %v8386
    %v8418 = vmul.f32 %v8382, %v8386
    %v8419 = vmul.f32 %v8383, %v8386
    %vm8420 = vcmask 523264
    %v8421 = vsel %vm8420, %v8388, 0.0
    %8422 = vadd.xlane.f32.xlu0 %v8421
    %v8423 = vpop.xlane.xlu0 %8422
    %v8424 = vsel %vm8420, %v8389, 0.0
    %8425 = vadd.xlane.f32.xlu0 %v8424
    %v8426 = vpop.xlane.xlu0 %8425
    %v8427 = vsel %vm8420, %v8390, 0.0
    %8428 = vadd.xlane.f32.xlu0 %v8427
    %v8429 = vpop.xlane.xlu0 %8428
    %v8430 = vsel %vm8420, %v8391, 0.0
    %8431 = vadd.xlane.f32.xlu0 %v8430
    %v8432 = vpop.xlane.xlu0 %8431
    %v8433 = vsel %vm8420, %v8392, 0.0
    %8434 = vadd.xlane.f32.xlu0 %v8433
    %v8435 = vpop.xlane.xlu0 %8434
    %v8436 = vsel %vm8420, %v8393, 0.0
    %8437 = vadd.xlane.f32.xlu0 %v8436
    %v8438 = vpop.xlane.xlu0 %8437
    %v8439 = vsel %vm8420, %v8394, 0.0
    %8440 = vadd.xlane.f32.xlu0 %v8439
    %v8441 = vpop.xlane.xlu0 %8440
    %v8442 = vsel %vm8420, %v8395, 0.0
    %8443 = vadd.xlane.f32.xlu0 %v8442
    %v8444 = vpop.xlane.xlu0 %8443
    %v8445 = vsel %vm8420, %v8396, 0.0
    %8446 = vadd.xlane.f32.xlu0 %v8445
    %v8447 = vpop.xlane.xlu0 %8446
    %v8448 = vsel %vm8420, %v8397, 0.0
    %8449 = vadd.xlane.f32.xlu0 %v8448
    %v8450 = vpop.xlane.xlu0 %8449
    %v8451 = vsel %vm8420, %v8398, 0.0
    %8452 = vadd.xlane.f32.xlu0 %v8451
    %v8453 = vpop.xlane.xlu0 %8452
    %v8454 = vsel %vm8420, %v8399, 0.0
    %8455 = vadd.xlane.f32.xlu0 %v8454
    %v8456 = vpop.xlane.xlu0 %8455
    %v8457 = vsel %vm8420, %v8400, 0.0
    %8458 = vadd.xlane.f32.xlu0 %v8457
    %v8459 = vpop.xlane.xlu0 %8458
    %v8460 = vsel %vm8420, %v8401, 0.0
    %8461 = vadd.xlane.f32.xlu0 %v8460
    %v8462 = vpop.xlane.xlu0 %8461
    %v8463 = vsel %vm8420, %v8402, 0.0
    %8464 = vadd.xlane.f32.xlu0 %v8463
    %v8465 = vpop.xlane.xlu0 %8464
    %v8466 = vsel %vm8420, %v8403, 0.0
    %8467 = vadd.xlane.f32.xlu0 %v8466
    %v8468 = vpop.xlane.xlu0 %8467
    %v8469 = vsel %vm8420, %v8404, 0.0
    %8470 = vadd.xlane.f32.xlu0 %v8469
    %v8471 = vpop.xlane.xlu0 %8470
    %v8472 = vsel %vm8420, %v8405, 0.0
    %8473 = vadd.xlane.f32.xlu0 %v8472
    %v8474 = vpop.xlane.xlu0 %8473
    %v8475 = vsel %vm8420, %v8406, 0.0
    %8476 = vadd.xlane.f32.xlu0 %v8475
    %v8477 = vpop.xlane.xlu0 %8476
    %v8478 = vsel %vm8420, %v8407, 0.0
    %8479 = vadd.xlane.f32.xlu0 %v8478
    %v8480 = vpop.xlane.xlu0 %8479
    %v8481 = vsel %vm8420, %v8408, 0.0
    %8482 = vadd.xlane.f32.xlu0 %v8481
    %v8483 = vpop.xlane.xlu0 %8482
    %v8484 = vsel %vm8420, %v8409, 0.0
    %8485 = vadd.xlane.f32.xlu0 %v8484
    %v8486 = vpop.xlane.xlu0 %8485
    %v8487 = vsel %vm8420, %v8410, 0.0
    %8488 = vadd.xlane.f32.xlu0 %v8487
    %v8489 = vpop.xlane.xlu0 %8488
    %v8490 = vsel %vm8420, %v8411, 0.0
    %8491 = vadd.xlane.f32.xlu0 %v8490
    %v8492 = vpop.xlane.xlu0 %8491
    %v8493 = vsel %vm8420, %v8412, 0.0
    %8494 = vadd.xlane.f32.xlu0 %v8493
    %v8495 = vpop.xlane.xlu0 %8494
    %v8496 = vsel %vm8420, %v8413, 0.0
    %8497 = vadd.xlane.f32.xlu0 %v8496
    %v8498 = vpop.xlane.xlu0 %8497
    %v8499 = vsel %vm8420, %v8414, 0.0
    %8500 = vadd.xlane.f32.xlu0 %v8499
    %v8501 = vpop.xlane.xlu0 %8500
    %v8502 = vsel %vm8420, %v8415, 0.0
    %8503 = vadd.xlane.f32.xlu0 %v8502
    %v8504 = vpop.xlane.xlu0 %8503
    %v8505 = vsel %vm8420, %v8416, 0.0
    %8506 = vadd.xlane.f32.xlu0 %v8505
    %v8507 = vpop.xlane.xlu0 %8506
    %v8508 = vsel %vm8420, %v8417, 0.0
    %8509 = vadd.xlane.f32.xlu0 %v8508
    %v8510 = vpop.xlane.xlu0 %8509
    %v8511 = vsel %vm8420, %v8418, 0.0
    %8512 = vadd.xlane.f32.xlu0 %v8511
    %v8513 = vpop.xlane.xlu0 %8512
    %v8514 = vsel %vm8420, %v8419, 0.0
    %8515 = vadd.xlane.f32.xlu0 %v8514
    %v8516 = vpop.xlane.xlu0 %8515
    %v8517 = vld [vmem:[#allocation2] sm:$0x1]
    %v8519 = vperm.slane %v8517, 0
    %v8521 = vadd.f32 %v8423, %v8519
    %v8522 = vadd.f32 %v8426, %v8519
    %v8523 = vadd.f32 %v8429, %v8519
    %v8524 = vadd.f32 %v8432, %v8519
    %v8525 = vadd.f32 %v8435, %v8519
    %v8526 = vadd.f32 %v8438, %v8519
    %v8527 = vadd.f32 %v8441, %v8519
    %v8528 = vadd.f32 %v8444, %v8519
    %v8529 = vadd.f32 %v8447, %v8519
    %v8530 = vadd.f32 %v8450, %v8519
    %v8531 = vadd.f32 %v8453, %v8519
    %v8532 = vadd.f32 %v8456, %v8519
    %v8533 = vadd.f32 %v8459, %v8519
    %v8534 = vadd.f32 %v8462, %v8519
    %v8535 = vadd.f32 %v8465, %v8519
    %v8536 = vadd.f32 %v8468, %v8519
    %v8537 = vadd.f32 %v8471, %v8519
    %v8538 = vadd.f32 %v8474, %v8519
    %v8539 = vadd.f32 %v8477, %v8519
    %v8540 = vadd.f32 %v8480, %v8519
    %v8541 = vadd.f32 %v8483, %v8519
    %v8542 = vadd.f32 %v8486, %v8519
    %v8543 = vadd.f32 %v8489, %v8519
    %v8544 = vadd.f32 %v8492, %v8519
    %v8545 = vadd.f32 %v8495, %v8519
    %v8546 = vadd.f32 %v8498, %v8519
    %v8547 = vadd.f32 %v8501, %v8519
    %v8548 = vadd.f32 %v8504, %v8519
    %v8549 = vadd.f32 %v8507, %v8519
    %v8550 = vadd.f32 %v8510, %v8519
    %v8551 = vadd.f32 %v8513, %v8519
    %v8552 = vadd.f32 %v8516, %v8519
    %vm8553 = vcmask 7168
    %8554 = vst.msk [vmem:[%s14] sm:$0xff] %vm8553, %v8521
    %8555 = vst.msk [vmem:[%s14 + $0x8] sm:$0xff] %vm8553, %v8522
    %8556 = vst.msk [vmem:[%s14 + $0x10] sm:$0xff] %vm8553, %v8523
    %8557 = vst.msk [vmem:[%s14 + $0x18] sm:$0xff] %vm8553, %v8524
    %8558 = vst.msk [vmem:[%s14 + $0x20] sm:$0xff] %vm8553, %v8525
    %8559 = vst.msk [vmem:[%s14 + $0x28] sm:$0xff] %vm8553, %v8526
    %8560 = vst.msk [vmem:[%s14 + $0x30] sm:$0xff] %vm8553, %v8527
    %8561 = vst.msk [vmem:[%s14 + $0x38] sm:$0xff] %vm8553, %v8528
    %8562 = vst.msk [vmem:[%s14 + $0x40] sm:$0xff] %vm8553, %v8529
    %8563 = vst.msk [vmem:[%s14 + $0x48] sm:$0xff] %vm8553, %v8530
    %8564 = vst.msk [vmem:[%s14 + $0x50] sm:$0xff] %vm8553, %v8531
    %8565 = vst.msk [vmem:[%s14 + $0x58] sm:$0xff] %vm8553, %v8532
    %8566 = vst.msk [vmem:[%s14 + $0x60] sm:$0xff] %vm8553, %v8533
    %8567 = vst.msk [vmem:[%s14 + $0x68] sm:$0xff] %vm8553, %v8534
    %8568 = vst.msk [vmem:[%s14 + $0x70] sm:$0xff] %vm8553, %v8535
    %8569 = vst.msk [vmem:[%s14 + $0x78] sm:$0xff] %vm8553, %v8536
    %8570 = vst.msk [vmem:[%s14 + $0x80] sm:$0xff] %vm8553, %v8537
    %8571 = vst.msk [vmem:[%s14 + $0x88] sm:$0xff] %vm8553, %v8538
    %8572 = vst.msk [vmem:[%s14 + $0x90] sm:$0xff] %vm8553, %v8539
    %8573 = vst.msk [vmem:[%s14 + $0x98] sm:$0xff] %vm8553, %v8540
    %8574 = vst.msk [vmem:[%s14 + $0xa0] sm:$0xff] %vm8553, %v8541
    %8575 = vst.msk [vmem:[%s14 + $0xa8] sm:$0xff] %vm8553, %v8542
    %8576 = vst.msk [vmem:[%s14 + $0xb0] sm:$0xff] %vm8553, %v8543
    %8577 = vst.msk [vmem:[%s14 + $0xb8] sm:$0xff] %vm8553, %v8544
    %8578 = vst.msk [vmem:[%s14 + $0xc0] sm:$0xff] %vm8553, %v8545
    %8579 = vst.msk [vmem:[%s14 + $0xc8] sm:$0xff] %vm8553, %v8546
    %8580 = vst.msk [vmem:[%s14 + $0xd0] sm:$0xff] %vm8553, %v8547
    %8581 = vst.msk [vmem:[%s14 + $0xd8] sm:$0xff] %vm8553, %v8548
    %8582 = vst.msk [vmem:[%s14 + $0xe0] sm:$0xff] %vm8553, %v8549
    %8583 = vst.msk [vmem:[%s14 + $0xe8] sm:$0xff] %vm8553, %v8550
    %8584 = vst.msk [vmem:[%s14 + $0xf0] sm:$0xff] %vm8553, %v8551
    %8585 = vst.msk [vmem:[%s14 + $0xf8] sm:$0xff] %vm8553, %v8552
    // Predicated region
    $region62: #{diffwave_forward.1} parent=1 // pred_check
      _
    $region63: #{diffwave_forward.1} parent=1 // pred_check_branch
      %8587 = sbr.rel (0) target = $region65
    $region64: #{diffwave_forward.1} parent=1 // pred_region
      _
    $region65: #{diffwave_forward.1} parent=1 // pred_fallthru
      _
    // Predicated region
    $region66: #{diffwave_forward.1} parent=1 // pred_check
      _
    $region67: #{diffwave_forward.1} parent=1 // pred_check_branch
      %8589 = sbr.rel (0) target = $region69
    $region68: #{diffwave_forward.1} parent=1 // pred_region
      _
    $region69: #{diffwave_forward.1} parent=1 // pred_fallthru
      _
    // Predicated region
    $region70: #{diffwave_forward.1} parent=1 // pred_check
      _
    $region71: #{diffwave_forward.1} parent=1 // pred_check_branch
      %8591 = sbr.rel (0) target = $region73
    $region72: #{diffwave_forward.1} parent=1 // pred_region
      _
    $region73: #{diffwave_forward.1} parent=1 // pred_fallthru
      _
    // Predicated region
    $region74: #{diffwave_forward.1} parent=1 // pred_check
      _
    $region75: #{diffwave_forward.1} parent=1 // pred_check_branch
      %8593 = sbr.rel (0) target = $region77
    $region76: #{diffwave_forward.1} parent=1 // pred_region
      _
    $region77: #{diffwave_forward.1} parent=1 // pred_fallthru
      _
    %8594 = vsyncpa [#allocation4], 1

</llo_original>
